<compile_context>
chip_gen: v6e
topology: v6e:2x2x1
jax: 0.10.0
libtpu: 0.0.40
codegen_flags: <defaults>
</compile_context>

<pallas_src>
import functools
import math

import jax
import jax.numpy as jnp
from jax.experimental import pallas as pl
from jax.experimental.pallas import tpu as pltpu

NUM_PRO_LIST = (2, 4, 6)
C_MODEL = 32     # stand-in for 256
SC_MODEL = 48    # stand-in for each resnet stage width (stage2/stage3 of 1536 total)

_LANE = 128
_K_TILE = 2048   # K-tiling threshold: single-shot matmul below, accumulator grid above
_TM_CAP = 256    # row-tile cap; M=512 layers -> 2 parallel grid steps (v7x dual TC)


def _round_up(x, m):
    return ((x + m - 1) // m) * m


# ---------------------------------------------------------------------------
# Pallas kernels
# ---------------------------------------------------------------------------
def _mm_simple_kernel(x_ref, w_ref, s_ref, b_ref, o_ref, *, relu):
    """(TM,K)bf16 @ (K,Np)bf16 -> f32 epilogue (folded BN scale, bias, ReLU)."""
    acc = jnp.dot(x_ref[...], w_ref[...], preferred_element_type=jnp.float32)
    acc = acc * s_ref[...] + b_ref[...]
    if relu:
        acc = jnp.maximum(acc, 0.0)
    o_ref[...] = acc.astype(o_ref.dtype)


def _mm_acc_kernel(x_ref, w_ref, s_ref, b_ref, o_ref, acc_ref, *, relu):
    """K-tiled variant with f32 VMEM accumulator (used when K > _K_TILE)."""
    @pl.when(pl.program_id(1) == 0)
    def _():
        acc_ref[...] = jnp.zeros_like(acc_ref)

    acc_ref[...] += jnp.dot(x_ref[...], w_ref[...], preferred_element_type=jnp.float32)

    @pl.when(pl.program_id(1) == pl.num_programs(1) - 1)
    def _():
        y = acc_ref[...] * s_ref[...] + b_ref[...]
        if relu:
            y = jnp.maximum(y, 0.0)
        o_ref[...] = y.astype(o_ref.dtype)


def matmul_scale_bias(x, pp, relu, *, out_dtype=jnp.float32):
    """y = relu?((x @ w) * scale + bias); w/scale/bias are pre-padded (prepare_params)."""
    M, K = x.shape
    Kp, Np = pp['w'].shape
    TM = min(_TM_CAP, _round_up(M, 8))
    Mp = _round_up(M, TM)

    xp = x.astype(jnp.bfloat16)
    if Mp != M or Kp != K:
        xp = jnp.pad(xp, ((0, Mp - M), (0, Kp - K)))

    if Kp <= _K_TILE:
        out = pl.pallas_call(
            functools.partial(_mm_simple_kernel, relu=relu),
            out_shape=jax.ShapeDtypeStruct((Mp, Np), out_dtype),
            grid=(Mp // TM,),
            in_specs=[
                pl.BlockSpec((TM, Kp), lambda i: (i, 0)),
                pl.BlockSpec((Kp, Np), lambda i: (0, 0)),
                pl.BlockSpec((1, Np), lambda i: (0, 0)),
                pl.BlockSpec((1, Np), lambda i: (0, 0)),
            ],
            out_specs=pl.BlockSpec((TM, Np), lambda i: (i, 0)),
            compiler_params=pltpu.CompilerParams(dimension_semantics=("parallel",)),
        )(xp, pp['w'], pp['scale'], pp['bias'])
    else:
        TK = _K_TILE
        kk = Kp // TK
        out = pl.pallas_call(
            functools.partial(_mm_acc_kernel, relu=relu),
            out_shape=jax.ShapeDtypeStruct((Mp, Np), out_dtype),
            grid=(Mp // TM, kk),
            in_specs=[
                pl.BlockSpec((TM, TK), lambda i, k: (i, k)),
                pl.BlockSpec((TK, Np), lambda i, k: (k, 0)),
                pl.BlockSpec((1, Np), lambda i, k: (0, 0)),
                pl.BlockSpec((1, Np), lambda i, k: (0, 0)),
            ],
            out_specs=pl.BlockSpec((TM, Np), lambda i, k: (i, 0)),
            scratch_shapes=[pltpu.VMEM((TM, Np), jnp.float32)],
            compiler_params=pltpu.CompilerParams(
                dimension_semantics=("parallel", "arbitrary"),
                vmem_limit_bytes=48 * 1024 * 1024),
        )(xp, pp['w'], pp['scale'], pp['bias'])

    return out[:M] if Mp != M else out


def _dapmm_kernel(sf_ref, wt_ref, qf_ref, proto_ref, sim_ref):
    """Whole-batch prototype extraction + cosine similarity in one grid step."""
    B, HW, _ = sf_ref.shape
    for b in range(B):                               # B=2: static unroll
        sf = sf_ref[b]                               # (HW, C)
        wt = wt_ref[b]                               # (K1p, HW)
        qf = qf_ref[b]                               # (HW, C)
        num = jnp.dot(wt, sf, preferred_element_type=jnp.float32)        # (K1p, C)
        den = jnp.sum(wt, axis=-1, keepdims=True)                        # (K1p, 1)
        protos = num / (den + 1e-6)
        proto_ref[b] = protos
        pn = protos * jax.lax.rsqrt(jnp.sum(protos * protos, axis=-1, keepdims=True) + 1e-6)
        qn = qf * jax.lax.rsqrt(jnp.sum(qf * qf, axis=-1, keepdims=True) + 1e-6)
        sim_ref[:, b * HW:(b + 1) * HW] = jax.lax.dot_general(
            pn, qn, (((1,), (1,)), ((), ())), preferred_element_type=jnp.float32)


def dapmm_prototypes(sfeat, wts_t, qfeat):
    B, HW, C = sfeat.shape
    K1p = wts_t.shape[1]
    return pl.pallas_call(
        _dapmm_kernel,
        out_shape=(jax.ShapeDtypeStruct((B, K1p, C), jnp.float32),
                   jax.ShapeDtypeStruct((K1p, B * HW), jnp.float32)),
        grid=(1,),
        in_specs=[
            pl.BlockSpec((B, HW, C), lambda i: (0, 0, 0)),
            pl.BlockSpec((B, K1p, HW), lambda i: (0, 0, 0)),
            pl.BlockSpec((B, HW, C), lambda i: (0, 0, 0)),
        ],
        out_specs=(pl.BlockSpec((B, K1p, C), lambda i: (0, 0, 0)),
                   pl.BlockSpec((K1p, B * HW), lambda i: (0, 0))),
        compiler_params=pltpu.CompilerParams(dimension_semantics=("arbitrary",)),
    )(sfeat, wts_t, qfeat)


def _layer55_fuse_kernel(q_ref, t_ref, inb_ref, s_ref, b_ref, o_ref, *, num):
    """exit_feat_in = sum_i relu((qpre + inb@T_i) * scale + bias), all in VMEM/vregs."""
    q = q_ref[0]                      # (HW, Np) f32
    s = s_ref[...]
    bb = b_ref[...]
    inb = inb_ref[...]                # (HW, 9) f32
    acc = jnp.zeros_like(q)
    for i in range(num):              # num in {2,4,6}: static unroll
        contrib = jnp.dot(inb, t_ref[i, 0], preferred_element_type=jnp.float32)
        acc = acc + jnp.maximum((q + contrib) * s + bb, 0.0)
    o_ref[0] = acc.astype(o_ref.dtype)


def _head_kernel(x_ref, w7_ref, s7_ref, b7_ref, w9_ref, b9_ref, o_ref):
    """layer7 (1x1 conv + BN + ReLU) fused with layer9 (1x1 conv to 1 channel)."""
    y7 = jnp.dot(x_ref[...], w7_ref[...], preferred_element_type=jnp.float32)
    y7 = jnp.maximum(y7 * s7_ref[...] + b7_ref[...], 0.0)
    o_ref[...] = jnp.sum(y7 * w9_ref[...], axis=-1, keepdims=True) + b9_ref[...]


def seg_head(x_flat, p7, p9):
    M, K = x_flat.shape
    Np = p7['w'].shape[1]
    TM = min(_TM_CAP, _round_up(M, 8))
    Mp = _round_up(M, TM)
    xp = x_flat.astype(jnp.bfloat16)
    if Mp != M:
        xp = jnp.pad(xp, ((0, Mp - M), (0, 0)))
    out = pl.pallas_call(
        _head_kernel,
        out_shape=jax.ShapeDtypeStruct((Mp, 1), jnp.float32),
        grid=(Mp // TM,),
        in_specs=[
            pl.BlockSpec((TM, K), lambda i: (i, 0)),
            pl.BlockSpec((K, Np), lambda i: (0, 0)),
            pl.BlockSpec((1, Np), lambda i: (0, 0)),
            pl.BlockSpec((1, Np), lambda i: (0, 0)),
            pl.BlockSpec((1, Np), lambda i: (0, 0)),
            pl.BlockSpec((1, 1), lambda i: (0, 0)),
        ],
        out_specs=pl.BlockSpec((TM, 1), lambda i: (i, 0)),
        compiler_params=pltpu.CompilerParams(dimension_semantics=("parallel",)),
    )(xp, p7['w'], p7['scale'], p7['bias'], p9['w_row'], p9['bias'])
    return out[:M] if Mp != M else out


# ---------------------------------------------------------------------------
# Convolution = bf16 im2col (glue) + Pallas matmul (hot path)
# ---------------------------------------------------------------------------
def _im2col(x, k, stride, padding, dilation, c=None):
    """Extract kxk patches; slices real channels and casts to bf16 inside the gather."""
    B, H, W, Ctot = x.shape
    C = Ctot if c is None else c
    if C != Ctot or x.dtype != jnp.bfloat16:
        x = x[..., :C].astype(jnp.bfloat16)
    xp = jnp.pad(x, ((0, 0), (padding, padding), (padding, padding), (0, 0))) if padding else x
    Ho = (H + 2 * padding - dilation * (k - 1) - 1) // stride + 1
    Wo = (W + 2 * padding - dilation * (k - 1) - 1) // stride + 1
    cols = []
    for i in range(k):
        for j in range(k):
            cols.append(jax.lax.slice(
                xp,
                (0, i * dilation, j * dilation, 0),
                (B, i * dilation + (Ho - 1) * stride + 1,
                 j * dilation + (Wo - 1) * stride + 1, C),
                (1, stride, stride, 1)))
    return jnp.concatenate(cols, axis=-1), Ho, Wo


def conv2d(x, pp, k, *, stride=1, padding=0, dilation=1, relu=False,
           in_ch=None, out_dtype=jnp.bfloat16):
    """kxk conv + folded-BN scale + bias (+ReLU). Output channels stay padded to 128."""
    # TODO(synk): back-to-back 3x3 conv pairs (stem2->stem3, residule a->b) could be
    # fused into one pallas_call keeping the (B,8,8,C) intermediate in VMEM with an
    # in-kernel 9-tap gather; kept as separate calls here for lowering robustness.
    B = x.shape[0]
    if k == 1:
        C = x.shape[-1] if in_ch is None else in_ch
        Ho, Wo = x.shape[1], x.shape[2]
        patches = x[..., :C].astype(jnp.bfloat16).reshape(B * Ho * Wo, C)
    else:
        patches, Ho, Wo = _im2col(x, k, stride, padding, dilation, c=in_ch)
        patches = patches.reshape(B * Ho * Wo, patches.shape[-1])
    y = matmul_scale_bias(patches, pp, relu, out_dtype=out_dtype)
    return y.reshape(B, Ho, Wo, y.shape[-1])


def _inbound_mask(Ho, Wo, Hin, Win, k, stride, pad, dil):
    """(Ho*Wo, k*k) f32 mask: which conv taps fall inside the (zero-padded) input."""
    oh = jnp.arange(Ho)
    ow = jnp.arange(Wo)
    cols = []
    for i in range(k):
        ih = oh * stride + i * dil - pad
        mh = (ih >= 0) & (ih < Hin)
        for j in range(k):
            iw = ow * stride + j * dil - pad
            mw = (iw >= 0) & (iw < Win)
            cols.append((mh[:, None] & mw[None, :]).astype(jnp.float32).reshape(-1))
    return jnp.stack(cols, axis=-1)


# ---------------------------------------------------------------------------
# layer55 prototype loop — algebraic fusion (query half computed once)
# ---------------------------------------------------------------------------
def make_layer55_qpre(query_feature, p55):
    B, H, W, _ = query_feature.shape
    patches, Ho, Wo = _im2col(query_feature, 3, 1, 2, 2, c=C_MODEL)
    M = B * Ho * Wo
    qpre = matmul_scale_bias(patches.reshape(M, -1), p55['wq'], relu=False,
                             out_dtype=jnp.float32)              # (M, 128)
    inb = _inbound_mask(Ho, Wo, H, W, 3, 1, 2, 2)                # (HW, 9)
    return {'qpre': qpre.reshape(B, Ho * Wo, qpre.shape[-1]),
            'inb': inb, 'H': Ho, 'W': Wo}


def layer55_prototype_sum(state, vecs, p55):
    """sum_i relu(BN(conv55(cat(qf, broadcast(vec_i))))) without re-running the conv."""
    num, B, _ = vecs.shape
    qpre = state['qpre']                                         # (B, HW, Np) f32
    _, HW, Np = qpre.shape
    H, W = state['H'], state['W']
    # Tiny (num,B,9,128) tensor; Wv is pre-padded on the output-channel axis.
    T = jnp.einsum('nbv,tvc->nbtc', vecs, p55['wv'])
    out = pl.pallas_call(
        functools.partial(_layer55_fuse_kernel, num=num),
        out_shape=jax.ShapeDtypeStruct((B, HW, Np), jnp.bfloat16),
        grid=(B,),
        in_specs=[
            pl.BlockSpec((1, HW, Np), lambda b: (b, 0, 0)),
            pl.BlockSpec((num, 1, 9, Np), lambda b: (0, b, 0, 0)),
            pl.BlockSpec((HW, 9), lambda b: (0, 0)),
            pl.BlockSpec((1, Np), lambda b: (0, 0)),
            pl.BlockSpec((1, Np), lambda b: (0, 0)),
        ],
        out_specs=pl.BlockSpec((1, HW, Np), lambda b: (b, 0, 0)),
        compiler_params=pltpu.CompilerParams(dimension_semantics=("parallel",)),
    )(qpre, T, state['inb'], p55['scale'], p55['bias'])
    return out.reshape(B, H, W, Np)


# ---------------------------------------------------------------------------
# Matrix-form resize / pooling (two small einsums instead of gather loops)
# ---------------------------------------------------------------------------
def _interp_matrix(out_n, in_n):
    if in_n == 1:
        return jnp.ones((out_n, 1), jnp.float32)
    if out_n == 1:
        return jnp.zeros((1, in_n), jnp.float32).at[0, 0].set(1.0)
    pos = jnp.arange(out_n, dtype=jnp.float32) * (in_n - 1) / (out_n - 1)
    lo = jnp.clip(jnp.floor(pos).astype(jnp.int32), 0, in_n - 2)
    w = pos - lo.astype(jnp.float32)
    rows = jnp.arange(out_n)
    m = jnp.zeros((out_n, in_n), jnp.float32)
    m = m.at[rows, lo].add(1.0 - w)
    m = m.at[rows, lo + 1].add(w)
    return m


def bilinear_resize(x, out_h, out_w):
    B, H, W, C = x.shape
    if H == out_h and W == out_w:
        return x
    Mh = _interp_matrix(out_h, H)
    Mw = _interp_matrix(out_w, W)
    y = jnp.einsum('oh,bhwc->bowc', Mh, x)
    return jnp.einsum('pw,bowc->bopc', Mw, y)


def _pool_matrix(out_n, in_n):
    rows = []
    for i in range(out_n):
        s = (i * in_n) // out_n
        e = -(-((i + 1) * in_n) // out_n)
        rows.append(jnp.zeros((in_n,), jnp.float32).at[s:e].set(1.0 / (e - s)))
    return jnp.stack(rows)


def adaptive_avg_pool(x, out):
    B, H, W, C = x.shape
    Ph = _pool_matrix(out, H)
    Pw = _pool_matrix(out, W)
    y = jnp.einsum('ih,bhwc->biwc', Ph, x)
    return jnp.einsum('jw,biwc->bijc', Pw, y)


# ---------------------------------------------------------------------------
# Parameters: raw synthetic init + one-time preparation (pad/cast) outside jit
# ---------------------------------------------------------------------------
def _make_conv(key, cin, cout, k=3, bn=True):
    kw_, kb_, kg_, kbe = jax.random.split(key, 4)
    w = jax.random.normal(kw_, (k * k * cin, cout), jnp.float32) / math.sqrt(k * k * cin)
    b = 0.01 * jax.random.normal(kb_, (cout,), jnp.float32)
    if bn:
        gamma = 1.0 + 0.1 * jax.random.normal(kg_, (cout,), jnp.float32)
        beta = 0.1 * jax.random.normal(kbe, (cout,), jnp.float32)
        scale, eff_bias = gamma, b * gamma + beta   # eval-mode BN folded (mean=0, var=1)
    else:
        scale, eff_bias = jnp.ones((cout,), jnp.float32), b
    return {'w': w, 'scale': scale, 'bias': eff_bias}


def init_params(key):
    C, SC = C_MODEL, SC_MODEL
    keys = jax.random.split(key, 18)
    p = {}
    p['stem1'] = _make_conv(keys[0], 3, SC, 3, bn=False)
    p['stem2'] = _make_conv(keys[1], SC, SC, 3, bn=False)
    p['stem3'] = _make_conv(keys[2], SC, SC, 3, bn=False)
    p['layer5'] = _make_conv(keys[3], 2 * SC, C, 3, bn=True)
    p['layer55'] = _make_conv(keys[4], C + (2 * C + 1), C, 3, bn=True)   # 512+256+1 scaled
    p['layer56'] = _make_conv(keys[5], C + 2, C, 3, bn=True)             # 256+2
    p['res1a'] = _make_conv(keys[6], C + 1, C, 3, bn=False)
    p['res1b'] = _make_conv(keys[7], C, C, 3, bn=False)
    p['res2a'] = _make_conv(keys[8], C, C, 3, bn=False)
    p['res2b'] = _make_conv(keys[9], C, C, 3, bn=False)
    p['res3a'] = _make_conv(keys[10], C, C, 3, bn=False)
    p['res3b'] = _make_conv(keys[11], C, C, 3, bn=False)
    p['psp'] = [_make_conv(keys[12 + i], C, C, 1, bn=True) for i in range(4)]
    p['layer7'] = _make_conv(keys[16], 5 * C, C, 1, bn=True)             # 1280 -> 256
    p['layer9'] = _make_conv(keys[17], C, 1, 1, bn=False)
    return p


def _prep_conv(p):
    """Pad to lane-dense Np=128, cast weight to bf16, pad K to the tile grid if needed."""
    K, N = p['w'].shape
    Np = _round_up(N, _LANE)
    Kp = K if K <= _K_TILE else _round_up(K, _K_TILE)
    return {
        'w': jnp.pad(p['w'], ((0, Kp - K), (0, Np - N))).astype(jnp.bfloat16),
        'scale': jnp.pad(p['scale'].reshape(1, N).astype(jnp.float32), ((0, 0), (0, Np - N))),
        'bias': jnp.pad(p['bias'].reshape(1, N).astype(jnp.float32), ((0, 0), (0, Np - N))),
    }


def prepare_params(p):
    """One-time parameter preparation (runs eagerly, before jit). Arrays only in pytree."""
    q = {}
    for name in ('stem1', 'stem2', 'stem3', 'layer5', 'layer56',
                 'res1a', 'res1b', 'res2a', 'res2b', 'res3a', 'res3b', 'layer7'):
        q[name] = _prep_conv(p[name])
    q['psp'] = [_prep_conv(e) for e in p['psp']]

    # layer55: split the conv weight into query-feature taps (Wq) and prototype-vector
    # taps (Wv); the conv is only ever applied through the algebraic fusion.
    C = C_MODEL
    w55 = p['layer55']['w']
    Cout = w55.shape[1]
    Cin_tot = w55.shape[0] // 9
    Wfull = w55.reshape(9, Cin_tot, Cout)
    Wq = Wfull[:, :C, :].reshape(9 * C, Cout)
    Wv = Wfull[:, C:, :]                                  # (9, 2C+1, Cout)
    Np = _round_up(Cout, _LANE)
    q['layer55'] = {
        'wq': {'w': jnp.pad(Wq, ((0, 0), (0, Np - Cout))).astype(jnp.bfloat16),
               'scale': jnp.pad(jnp.ones((1, Cout), jnp.float32), ((0, 0), (0, Np - Cout))),
               'bias': jnp.zeros((1, Np), jnp.float32)},
        'wv': jnp.pad(Wv, ((0, 0), (0, 0), (0, Np - Cout))),
        'scale': jnp.pad(p['layer55']['scale'].reshape(1, Cout), ((0, 0), (0, Np - Cout))),
        'bias': jnp.pad(p['layer55']['bias'].reshape(1, Cout), ((0, 0), (0, Np - Cout))),
    }

    # layer9 folded into the layer7 head kernel: row vector over layer7's padded lanes.
    w9 = p['layer9']['w']                                 # (Cout7, 1)
    Cout7 = w9.shape[0]
    Np7 = _round_up(Cout7, _LANE)
    q['layer9'] = {
        'w_row': jnp.pad(w9.reshape(1, Cout7), ((0, 0), (0, Np7 - Cout7))),
        'bias': p['layer9']['bias'].reshape(1, 1),
    }
    return q


# ---------------------------------------------------------------------------
# Model pieces
# ---------------------------------------------------------------------------
def extract_feature(p, rgb_nhwc):
    # TODO(synk): pretrained ResNet50-Deeplab backbone replaced by a small conv stub
    # producing two "stages" that get concatenated exactly like stage2/stage3.
    SC = SC_MODEL
    s1 = conv2d(rgb_nhwc, p['stem1'], 3, stride=2, padding=1, relu=True)
    stage2 = conv2d(s1, p['stem2'], 3, stride=2, padding=1, relu=True, in_ch=SC)
    stage3 = conv2d(stage2, p['stem3'], 3, stride=1, padding=1, relu=True, in_ch=SC)
    out_23 = jnp.concatenate([stage2[..., :SC], stage3[..., :SC]], axis=-1)
    return conv2d(out_23, p['layer5'], 3, padding=2, dilation=2, relu=True,
                  out_dtype=jnp.float32)                    # layer5, (B,8,8,128) real C


def dapmms_lite(support_feat, support_mask_nhwc, query_feat, k):
    # TODO(synk): DAPMMs EM/GMM internals approximated by mask-weighted band
    # prototypes + cosine-similarity probability map (same output interface).
    B, H, W, _ = support_feat.shape
    C = C_MODEL
    HW = H * W
    mask = bilinear_resize(support_mask_nhwc, H, W)                          # (B,H,W,1)
    rows = jnp.arange(H, dtype=jnp.float32)
    centers = (jnp.arange(k, dtype=jnp.float32) + 0.5) * H / k
    band = jax.nn.softmax(-((rows[None, :] - centers[:, None]) ** 2)
                          / (2.0 * (H / k) ** 2), axis=0)                    # (k,H)
    band_hw = jnp.broadcast_to(band[:, :, None], (k, H, W)).reshape(k, HW)
    m_flat = mask.reshape(B, 1, HW)
    fg_w = m_flat * band_hw[None]                                            # (B,k,HW)
    bg_w = 1.0 - m_flat                                                      # (B,1,HW)
    K1 = k + 1
    K1p = _round_up(K1, 8)
    wts_t = jnp.concatenate(
        [fg_w, bg_w, jnp.zeros((B, K1p - K1, HW), jnp.float32)], axis=1)     # (B,K1p,HW)

    sfeat = support_feat[..., :C].reshape(B, HW, C)
    qfeat = query_feat[..., :C].reshape(B, HW, C)
    protos, sim = dapmm_prototypes(sfeat, wts_t, qfeat)                      # Pallas
    sim = sim.reshape(K1p, B, HW).transpose(1, 0, 2)                         # (B,K1p,HW)

    fg_protos, bg_proto = protos[:, :k], protos[:, k]
    fg_sim, bg_sim = sim[:, :k, :], sim[:, k, :]
    prob = jax.nn.softmax(
        10.0 * jnp.stack([jnp.max(fg_sim, axis=1), bg_sim], axis=-1), axis=-1)
    prob_map = prob.reshape(B, H, W, 2)
    priors = jnp.mean(fg_sim, axis=-1)                                       # (B,k)
    vecs = jnp.concatenate(
        [fg_protos, jnp.broadcast_to(bg_proto[:, None, :], (B, k, C)),
         priors[:, :, None]], axis=-1)                                       # (B,k,2C+1)
    return jnp.transpose(vecs, (1, 0, 2)), prob_map                          # (k,B,2C+1)


def pspnet(x, p):
    # TODO(synk): ASPP.PSPnet internals unknown; standard 4-scale pyramid pooling
    # (input + 4 branches) so the concat width matches layer7's expectation.
    B, H, W, _ = x.shape
    C = C_MODEL
    xr = x[..., :C]
    outs = [xr]
    for conv_p, s in zip(p['psp'], (1, 2, 3, 6)):
        pooled = adaptive_avg_pool(xr, s)
        y = conv2d(pooled, conv_p, 1, relu=True, out_dtype=jnp.float32)[..., :C]
        outs.append(bilinear_resize(y, H, W))
    return jnp.concatenate(outs, axis=-1)                                    # (B,H,W,5C)


def residule(x, pa, pb, *, in_ch=None):
    # nn.Sequential(ReLU, Conv, ReLU, Conv)
    x = jnp.maximum(x, 0.0)
    x = conv2d(x, pa, 3, padding=1, relu=True, in_ch=in_ch, out_dtype=jnp.bfloat16)
    x = conv2d(x, pb, 3, padding=1, relu=False, in_ch=C_MODEL, out_dtype=jnp.float32)
    return x


def segmentation(p, feature, history_mask):
    B, H, W, _ = feature.shape
    C = C_MODEL
    hm = bilinear_resize(history_mask, H, W)
    out = feature                                                  # (B,H,W,128) f32, real C
    out = out + residule(jnp.concatenate([out[..., :C], hm], axis=-1), p['res1a'], p['res1b'])
    out = out + residule(out, p['res2a'], p['res2b'], in_ch=C)
    out = out + residule(out, p['res3a'], p['res3b'], in_ch=C)
    out = pspnet(out, p)                                           # layer6
    logits = seg_head(out.reshape(-1, out.shape[-1]),
                      p['layer7'], p['layer9']).reshape(B, H, W, 1)  # layer7+layer9 fused
    # NOTE: matches the original module — layer9 has a single output channel and
    # F.softmax over dim=1 of a 1-channel tensor is identically 1.0. Kept for fidelity.
    out_softmax = jax.nn.softmax(logits, axis=-1)
    return logits, out_softmax


def one_model_forward(p, query_rgb, support_rgb, support_mask):
    # inputs are NCHW (PyTorch); transpose to NHWC internally.
    q = jnp.transpose(query_rgb, (0, 2, 3, 1))
    s = jnp.transpose(support_rgb, (0, 2, 3, 1))
    m = jnp.transpose(support_mask, (0, 2, 3, 1))

    support_feature = extract_feature(p, s)
    query_feature = extract_feature(p, q)
    B = query_feature.shape[0]

    # layer55 query-side conv computed once; reused for every num in NUM_PRO_LIST.
    l55_state = make_layer55_qpre(query_feature, p['layer55'])

    pseudo_mask = jnp.zeros((B, 50, 50, 1), jnp.float32)          # torch.zeros(B,1,50,50)
    out_list = []
    out = None
    for num in NUM_PRO_LIST:
        vecs, prob_map = dapmms_lite(support_feature, m, query_feature, num)
        exit_feat = layer55_prototype_sum(l55_state, vecs, p['layer55'])     # bf16, padded
        feat56_in = jnp.concatenate(
            [exit_feat[..., :C_MODEL], prob_map.astype(jnp.bfloat16)], axis=-1)
        feat = conv2d(feat56_in, p['layer56'], 3, padding=1, relu=True,
                      out_dtype=jnp.float32)
        out, out_softmax = segmentation(p, feat, pseudo_mask)
        pseudo_mask = out_softmax
        out_list.append(out)

    to_nchw = lambda t: jnp.transpose(t, (0, 3, 1, 2))
    return (to_nchw(support_feature[..., :C_MODEL]), to_nchw(out_list[0]),
            to_nchw(out_list[1]), to_nchw(out))


if __name__ == "__main__":
    key = jax.random.PRNGKey(0)
    kp, kq, ks, km = jax.random.split(key, 4)
    raw_params = init_params(kp)
    params = prepare_params(raw_params)   # one-time pad/cast, outside jit

    query_rgb = jax.random.normal(kq, (2, 3, 32, 32), jnp.float32)
    support_rgb = jax.random.normal(ks, (2, 3, 32, 32), jnp.float32)
    support_mask = (jax.random.uniform(km, (2, 1, 32, 32)) > 0.5).astype(jnp.float32)

    fwd = jax.jit(one_model_forward)
    outs = fwd(params, query_rgb, support_rgb, support_mask)
    jax.block_until_ready(outs)
    print("KERNEL_OK")
</pallas_src>

<mosaic_0001>
module attributes {stable_mosaic.version = 11 : i64} {
  func.func private @main(%arg0: i32) attributes {dimension_semantics = [#tpu.dimension_semantics<core_parallel>], iteration_bounds = array<i64: 2>, tpu.core_type = #tpu.core_type<sc_scalar_subcore>, window_params = []} {
    return
  }
}

module attributes {stable_mosaic.version = 11 : i64} {
  func.func private @main(%arg0: i32) attributes {dimension_semantics = [#tpu.dimension_semantics<core_parallel>], iteration_bounds = array<i64: 2>, tpu.core_type = #tpu.core_type<sc_scalar_subcore>, window_params = []} {
    return
  }
}

module attributes {stable_mosaic.version = 11 : i64} {
  func.func @_mm_simple_kernel(%arg0: i32, %arg1: memref<256x27xbf16, #tpu.memory_space<vmem>>, %arg2: memref<27x128xbf16, #tpu.memory_space<vmem>>, %arg3: memref<1x128xf32, #tpu.memory_space<vmem>>, %arg4: memref<1x128xf32, #tpu.memory_space<vmem>>, %arg5: memref<256x128xbf16, #tpu.memory_space<vmem>>) attributes {dimension_semantics = [#tpu.dimension_semantics<parallel>], iteration_bounds = array<i64: 2>, scalar_prefetch = 0 : i64, scratch_operands = 0 : i64, tpu.core_type = #tpu.core_type<tc>, window_params = [{transform_indices = @transform_0, window_bounds = array<i64: 256, 27>}, {pipeline_mode = #tpu.pipeline_mode<synchronous>, transform_indices = @transform_1, window_bounds = array<i64: 27, 128>}, {pipeline_mode = #tpu.pipeline_mode<synchronous>, transform_indices = @transform_2, window_bounds = array<i64: 1, 128>}, {pipeline_mode = #tpu.pipeline_mode<synchronous>, transform_indices = @transform_3, window_bounds = array<i64: 1, 128>}, {transform_indices = @transform_4, window_bounds = array<i64: 256, 128>}]} {
    %c0 = arith.constant 0 : index
    %c0_0 = arith.constant 0 : index
    %0 = vector.load %arg1[%c0, %c0_0] : memref<256x27xbf16, #tpu.memory_space<vmem>>, vector<256x27xbf16>
    %c0_1 = arith.constant 0 : index
    %c0_2 = arith.constant 0 : index
    %1 = vector.load %arg2[%c0_1, %c0_2] : memref<27x128xbf16, #tpu.memory_space<vmem>>, vector<27x128xbf16>
    %cst = arith.constant dense<0.000000e+00> : vector<256x128xf32>
    %2 = tpu.matmul %0, %1, %cst {dimension_numbers = #tpu.dot_dimension_numbers<[1], [0], [0], [1], [0, 0, 1, 1], [], []>} : vector<256x27xbf16>, vector<27x128xbf16>, vector<256x128xf32> -> vector<256x128xf32>
    %c0_3 = arith.constant 0 : index
    %c0_4 = arith.constant 0 : index
    %3 = vector.load %arg3[%c0_3, %c0_4] : memref<1x128xf32, #tpu.memory_space<vmem>>, vector<1x128xf32>
    %4 = vector.broadcast %3 : vector<1x128xf32> to vector<256x128xf32>
    %5 = arith.mulf %2, %4 : vector<256x128xf32>
    %c0_5 = arith.constant 0 : index
    %c0_6 = arith.constant 0 : index
    %6 = vector.load %arg4[%c0_5, %c0_6] : memref<1x128xf32, #tpu.memory_space<vmem>>, vector<1x128xf32>
    %7 = vector.broadcast %6 : vector<1x128xf32> to vector<256x128xf32>
    %8 = arith.addf %5, %7 : vector<256x128xf32>
    %cst_7 = arith.constant 0.000000e+00 : f32
    %9 = vector.broadcast %cst_7 : f32 to vector<256x128xf32>
    %10 = arith.maximumf %8, %9 : vector<256x128xf32>
    %11 = arith.truncf %10 : vector<256x128xf32> to vector<256x128xbf16>
    %c0_8 = arith.constant 0 : index
    %c0_9 = arith.constant 0 : index
    %12 = vector.load %arg5[%c0_8, %c0_9] : memref<256x128xbf16, #tpu.memory_space<vmem>>, vector<256x128xbf16>
    tpu.vector_store %arg5[%c0_8, %c0_9], %11 {strides = array<i32>} : memref<256x128xbf16, #tpu.memory_space<vmem>>, vector<256x128xbf16>,
    return
  }
  func.func @transform_0(%arg0: i32) -> (i32, i32) {
    %c0_i32 = arith.constant 0 : i32
    %c0_i32_0 = arith.constant 0 : i32
    return %arg0, %c0_i32 : i32, i32
  }
  func.func @transform_1(%arg0: i32) -> (i32, i32) {
    %c0_i32 = arith.constant 0 : i32
    %c0_i32_0 = arith.constant 0 : i32
    %c0_i32_1 = arith.constant 0 : i32
    return %c0_i32, %c0_i32_0 : i32, i32
  }
  func.func @transform_2(%arg0: i32) -> (i32, i32) {
    %c0_i32 = arith.constant 0 : i32
    %c0_i32_0 = arith.constant 0 : i32
    %c0_i32_1 = arith.constant 0 : i32
    return %c0_i32, %c0_i32_0 : i32, i32
  }
  func.func @transform_3(%arg0: i32) -> (i32, i32) {
    %c0_i32 = arith.constant 0 : i32
    %c0_i32_0 = arith.constant 0 : i32
    %c0_i32_1 = arith.constant 0 : i32
    return %c0_i32, %c0_i32_0 : i32, i32
  }
  func.func @transform_4(%arg0: i32) -> (i32, i32) {
    %c0_i32 = arith.constant 0 : i32
    %c0_i32_0 = arith.constant 0 : i32
    return %arg0, %c0_i32 : i32, i32
  }
}

module attributes {stable_mosaic.version = 11 : i64} {
  func.func @_mm_simple_kernel(%arg0: i32, %arg1: memref<128x432xbf16, #tpu.memory_space<vmem>>, %arg2: memref<432x128xbf16, #tpu.memory_space<vmem>>, %arg3: memref<1x128xf32, #tpu.memory_space<vmem>>, %arg4: memref<1x128xf32, #tpu.memory_space<vmem>>, %arg5: memref<128x128xbf16, #tpu.memory_space<vmem>>) attributes {dimension_semantics = [#tpu.dimension_semantics<parallel>], iteration_bounds = array<i64: 1>, scalar_prefetch = 0 : i64, scratch_operands = 0 : i64, tpu.core_type = #tpu.core_type<tc>, window_params = [{transform_indices = @transform_0, window_bounds = array<i64: 128, 432>}, {pipeline_mode = #tpu.pipeline_mode<synchronous>, transform_indices = @transform_1, window_bounds = array<i64: 432, 128>}, {pipeline_mode = #tpu.pipeline_mode<synchronous>, transform_indices = @transform_2, window_bounds = array<i64: 1, 128>}, {pipeline_mode = #tpu.pipeline_mode<synchronous>, transform_indices = @transform_3, window_bounds = array<i64: 1, 128>}, {transform_indices = @transform_4, window_bounds = array<i64: 128, 128>}]} {
    %c0 = arith.constant 0 : index
    %c0_0 = arith.constant 0 : index
    %0 = vector.load %arg1[%c0, %c0_0] : memref<128x432xbf16, #tpu.memory_space<vmem>>, vector<128x432xbf16>
    %c0_1 = arith.constant 0 : index
    %c0_2 = arith.constant 0 : index
    %1 = vector.load %arg2[%c0_1, %c0_2] : memref<432x128xbf16, #tpu.memory_space<vmem>>, vector<432x128xbf16>
    %cst = arith.constant dense<0.000000e+00> : vector<128x128xf32>
    %2 = tpu.matmul %0, %1, %cst {dimension_numbers = #tpu.dot_dimension_numbers<[1], [0], [0], [1], [0, 0, 1, 1], [], []>} : vector<128x432xbf16>, vector<432x128xbf16>, vector<128x128xf32> -> vector<128x128xf32>
    %c0_3 = arith.constant 0 : index
    %c0_4 = arith.constant 0 : index
    %3 = vector.load %arg3[%c0_3, %c0_4] : memref<1x128xf32, #tpu.memory_space<vmem>>, vector<1x128xf32>
    %4 = vector.broadcast %3 : vector<1x128xf32> to vector<128x128xf32>
    %5 = arith.mulf %2, %4 : vector<128x128xf32>
    %c0_5 = arith.constant 0 : index
    %c0_6 = arith.constant 0 : index
    %6 = vector.load %arg4[%c0_5, %c0_6] : memref<1x128xf32, #tpu.memory_space<vmem>>, vector<1x128xf32>
    %7 = vector.broadcast %6 : vector<1x128xf32> to vector<128x128xf32>
    %8 = arith.addf %5, %7 : vector<128x128xf32>
    %cst_7 = arith.constant 0.000000e+00 : f32
    %9 = vector.broadcast %cst_7 : f32 to vector<128x128xf32>
    %10 = arith.maximumf %8, %9 : vector<128x128xf32>
    %11 = arith.truncf %10 : vector<128x128xf32> to vector<128x128xbf16>
    %c0_8 = arith.constant 0 : index
    %c0_9 = arith.constant 0 : index
    %12 = vector.load %arg5[%c0_8, %c0_9] : memref<128x128xbf16, #tpu.memory_space<vmem>>, vector<128x128xbf16>
    tpu.vector_store %arg5[%c0_8, %c0_9], %11 {strides = array<i32>} : memref<128x128xbf16, #tpu.memory_space<vmem>>, vector<128x128xbf16>,
    return
  }
  func.func @transform_0(%arg0: i32) -> (i32, i32) {
    %c0_i32 = arith.constant 0 : i32
    %c0_i32_0 = arith.constant 0 : i32
    return %arg0, %c0_i32 : i32, i32
  }
  func.func @transform_1(%arg0: i32) -> (i32, i32) {
    %c0_i32 = arith.constant 0 : i32
    %c0_i32_0 = arith.constant 0 : i32
    %c0_i32_1 = arith.constant 0 : i32
    return %c0_i32, %c0_i32_0 : i32, i32
  }
  func.func @transform_2(%arg0: i32) -> (i32, i32) {
    %c0_i32 = arith.constant 0 : i32
    %c0_i32_0 = arith.constant 0 : i32
    %c0_i32_1 = arith.constant 0 : i32
    return %c0_i32, %c0_i32_0 : i32, i32
  }
  func.func @transform_3(%arg0: i32) -> (i32, i32) {
    %c0_i32 = arith.constant 0 : i32
    %c0_i32_0 = arith.constant 0 : i32
    %c0_i32_1 = arith.constant 0 : i32
    return %c0_i32, %c0_i32_0 : i32, i32
  }
  func.func @transform_4(%arg0: i32) -> (i32, i32) {
    %c0_i32 = arith.constant 0 : i32
    %c0_i32_0 = arith.constant 0 : i32
    return %arg0, %c0_i32 : i32, i32
  }
}

module attributes {stable_mosaic.version = 11 : i64} {
  func.func @_mm_simple_kernel(%arg0: i32, %arg1: memref<128x864xbf16, #tpu.memory_space<vmem>>, %arg2: memref<864x128xbf16, #tpu.memory_space<vmem>>, %arg3: memref<1x128xf32, #tpu.memory_space<vmem>>, %arg4: memref<1x128xf32, #tpu.memory_space<vmem>>, %arg5: memref<128x128xf32, #tpu.memory_space<vmem>>) attributes {dimension_semantics = [#tpu.dimension_semantics<parallel>], iteration_bounds = array<i64: 1>, scalar_prefetch = 0 : i64, scratch_operands = 0 : i64, tpu.core_type = #tpu.core_type<tc>, window_params = [{transform_indices = @transform_0, window_bounds = array<i64: 128, 864>}, {pipeline_mode = #tpu.pipeline_mode<synchronous>, transform_indices = @transform_1, window_bounds = array<i64: 864, 128>}, {pipeline_mode = #tpu.pipeline_mode<synchronous>, transform_indices = @transform_2, window_bounds = array<i64: 1, 128>}, {pipeline_mode = #tpu.pipeline_mode<synchronous>, transform_indices = @transform_3, window_bounds = array<i64: 1, 128>}, {transform_indices = @transform_4, window_bounds = array<i64: 128, 128>}]} {
    %c0 = arith.constant 0 : index
    %c0_0 = arith.constant 0 : index
    %0 = vector.load %arg1[%c0, %c0_0] : memref<128x864xbf16, #tpu.memory_space<vmem>>, vector<128x864xbf16>
    %c0_1 = arith.constant 0 : index
    %c0_2 = arith.constant 0 : index
    %1 = vector.load %arg2[%c0_1, %c0_2] : memref<864x128xbf16, #tpu.memory_space<vmem>>, vector<864x128xbf16>
    %cst = arith.constant dense<0.000000e+00> : vector<128x128xf32>
    %2 = tpu.matmul %0, %1, %cst {dimension_numbers = #tpu.dot_dimension_numbers<[1], [0], [0], [1], [0, 0, 1, 1], [], []>} : vector<128x864xbf16>, vector<864x128xbf16>, vector<128x128xf32> -> vector<128x128xf32>
    %c0_3 = arith.constant 0 : index
    %c0_4 = arith.constant 0 : index
    %3 = vector.load %arg3[%c0_3, %c0_4] : memref<1x128xf32, #tpu.memory_space<vmem>>, vector<1x128xf32>
    %4 = vector.broadcast %3 : vector<1x128xf32> to vector<128x128xf32>
    %5 = arith.mulf %2, %4 : vector<128x128xf32>
    %c0_5 = arith.constant 0 : index
    %c0_6 = arith.constant 0 : index
    %6 = vector.load %arg4[%c0_5, %c0_6] : memref<1x128xf32, #tpu.memory_space<vmem>>, vector<1x128xf32>
    %7 = vector.broadcast %6 : vector<1x128xf32> to vector<128x128xf32>
    %8 = arith.addf %5, %7 : vector<128x128xf32>
    %cst_7 = arith.constant 0.000000e+00 : f32
    %9 = vector.broadcast %cst_7 : f32 to vector<128x128xf32>
    %10 = arith.maximumf %8, %9 : vector<128x128xf32>
    %c0_8 = arith.constant 0 : index
    %c0_9 = arith.constant 0 : index
    %11 = vector.load %arg5[%c0_8, %c0_9] : memref<128x128xf32, #tpu.memory_space<vmem>>, vector<128x128xf32>
    tpu.vector_store %arg5[%c0_8, %c0_9], %10 {strides = array<i32>} : memref<128x128xf32, #tpu.memory_space<vmem>>, vector<128x128xf32>,
    return
  }
  func.func @transform_0(%arg0: i32) -> (i32, i32) {
    %c0_i32 = arith.constant 0 : i32
    %c0_i32_0 = arith.constant 0 : i32
    return %arg0, %c0_i32 : i32, i32
  }
  func.func @transform_1(%arg0: i32) -> (i32, i32) {
    %c0_i32 = arith.constant 0 : i32
    %c0_i32_0 = arith.constant 0 : i32
    %c0_i32_1 = arith.constant 0 : i32
    return %c0_i32, %c0_i32_0 : i32, i32
  }
  func.func @transform_2(%arg0: i32) -> (i32, i32) {
    %c0_i32 = arith.constant 0 : i32
    %c0_i32_0 = arith.constant 0 : i32
    %c0_i32_1 = arith.constant 0 : i32
    return %c0_i32, %c0_i32_0 : i32, i32
  }
  func.func @transform_3(%arg0: i32) -> (i32, i32) {
    %c0_i32 = arith.constant 0 : i32
    %c0_i32_0 = arith.constant 0 : i32
    %c0_i32_1 = arith.constant 0 : i32
    return %c0_i32, %c0_i32_0 : i32, i32
  }
  func.func @transform_4(%arg0: i32) -> (i32, i32) {
    %c0_i32 = arith.constant 0 : i32
    %c0_i32_0 = arith.constant 0 : i32
    return %arg0, %c0_i32 : i32, i32
  }
}

module attributes {stable_mosaic.version = 11 : i64} {
  func.func @_mm_simple_kernel(%arg0: i32, %arg1: memref<128x288xbf16, #tpu.memory_space<vmem>>, %arg2: memref<288x128xbf16, #tpu.memory_space<vmem>>, %arg3: memref<1x128xf32, #tpu.memory_space<vmem>>, %arg4: memref<1x128xf32, #tpu.memory_space<vmem>>, %arg5: memref<128x128xf32, #tpu.memory_space<vmem>>) attributes {dimension_semantics = [#tpu.dimension_semantics<parallel>], iteration_bounds = array<i64: 1>, scalar_prefetch = 0 : i64, scratch_operands = 0 : i64, tpu.core_type = #tpu.core_type<tc>, window_params = [{transform_indices = @transform_0, window_bounds = array<i64: 128, 288>}, {pipeline_mode = #tpu.pipeline_mode<synchronous>, transform_indices = @transform_1, window_bounds = array<i64: 288, 128>}, {pipeline_mode = #tpu.pipeline_mode<synchronous>, transform_indices = @transform_2, window_bounds = array<i64: 1, 128>}, {pipeline_mode = #tpu.pipeline_mode<synchronous>, transform_indices = @transform_3, window_bounds = array<i64: 1, 128>}, {transform_indices = @transform_4, window_bounds = array<i64: 128, 128>}]} {
    %c0 = arith.constant 0 : index
    %c0_0 = arith.constant 0 : index
    %0 = vector.load %arg1[%c0, %c0_0] : memref<128x288xbf16, #tpu.memory_space<vmem>>, vector<128x288xbf16>
    %c0_1 = arith.constant 0 : index
    %c0_2 = arith.constant 0 : index
    %1 = vector.load %arg2[%c0_1, %c0_2] : memref<288x128xbf16, #tpu.memory_space<vmem>>, vector<288x128xbf16>
    %cst = arith.constant dense<0.000000e+00> : vector<128x128xf32>
    %2 = tpu.matmul %0, %1, %cst {dimension_numbers = #tpu.dot_dimension_numbers<[1], [0], [0], [1], [0, 0, 1, 1], [], []>} : vector<128x288xbf16>, vector<288x128xbf16>, vector<128x128xf32> -> vector<128x128xf32>
    %c0_3 = arith.constant 0 : index
    %c0_4 = arith.constant 0 : index
    %3 = vector.load %arg3[%c0_3, %c0_4] : memref<1x128xf32, #tpu.memory_space<vmem>>, vector<1x128xf32>
    %4 = vector.broadcast %3 : vector<1x128xf32> to vector<128x128xf32>
    %5 = arith.mulf %2, %4 : vector<128x128xf32>
    %c0_5 = arith.constant 0 : index
    %c0_6 = arith.constant 0 : index
    %6 = vector.load %arg4[%c0_5, %c0_6] : memref<1x128xf32, #tpu.memory_space<vmem>>, vector<1x128xf32>
    %7 = vector.broadcast %6 : vector<1x128xf32> to vector<128x128xf32>
    %8 = arith.addf %5, %7 : vector<128x128xf32>
    %c0_7 = arith.constant 0 : index
    %c0_8 = arith.constant 0 : index
    %9 = vector.load %arg5[%c0_7, %c0_8] : memref<128x128xf32, #tpu.memory_space<vmem>>, vector<128x128xf32>
    tpu.vector_store %arg5[%c0_7, %c0_8], %8 {strides = array<i32>} : memref<128x128xf32, #tpu.memory_space<vmem>>, vector<128x128xf32>,
    return
  }
  func.func @transform_0(%arg0: i32) -> (i32, i32) {
    %c0_i32 = arith.constant 0 : i32
    %c0_i32_0 = arith.constant 0 : i32
    return %arg0, %c0_i32 : i32, i32
  }
  func.func @transform_1(%arg0: i32) -> (i32, i32) {
    %c0_i32 = arith.constant 0 : i32
    %c0_i32_0 = arith.constant 0 : i32
    %c0_i32_1 = arith.constant 0 : i32
    return %c0_i32, %c0_i32_0 : i32, i32
  }
  func.func @transform_2(%arg0: i32) -> (i32, i32) {
    %c0_i32 = arith.constant 0 : i32
    %c0_i32_0 = arith.constant 0 : i32
    %c0_i32_1 = arith.constant 0 : i32
    return %c0_i32, %c0_i32_0 : i32, i32
  }
  func.func @transform_3(%arg0: i32) -> (i32, i32) {
    %c0_i32 = arith.constant 0 : i32
    %c0_i32_0 = arith.constant 0 : i32
    %c0_i32_1 = arith.constant 0 : i32
    return %c0_i32, %c0_i32_0 : i32, i32
  }
  func.func @transform_4(%arg0: i32) -> (i32, i32) {
    %c0_i32 = arith.constant 0 : i32
    %c0_i32_0 = arith.constant 0 : i32
    return %arg0, %c0_i32 : i32, i32
  }
}

module attributes {stable_mosaic.version = 11 : i64} {
  func.func @_dapmm_kernel(%arg0: i32, %arg1: memref<2x64x32xf32, #tpu.memory_space<vmem>>, %arg2: memref<2x8x64xf32, #tpu.memory_space<vmem>>, %arg3: memref<2x64x32xf32, #tpu.memory_space<vmem>>, %arg4: memref<2x8x32xf32, #tpu.memory_space<vmem>>, %arg5: memref<8x128xf32, #tpu.memory_space<vmem>>) attributes {dimension_semantics = [#tpu.dimension_semantics<arbitrary>], iteration_bounds = array<i64: 1>, scalar_prefetch = 0 : i64, scratch_operands = 0 : i64, tpu.core_type = #tpu.core_type<tc>, window_params = [{pipeline_mode = #tpu.pipeline_mode<synchronous>, transform_indices = @transform_0, window_bounds = array<i64: 2, 64, 32>}, {pipeline_mode = #tpu.pipeline_mode<synchronous>, transform_indices = @transform_1, window_bounds = array<i64: 2, 8, 64>}, {pipeline_mode = #tpu.pipeline_mode<synchronous>, transform_indices = @transform_2, window_bounds = array<i64: 2, 64, 32>}, {pipeline_mode = #tpu.pipeline_mode<synchronous>, transform_indices = @transform_3, window_bounds = array<i64: 2, 8, 32>}, {pipeline_mode = #tpu.pipeline_mode<synchronous>, transform_indices = @transform_4, window_bounds = array<i64: 8, 128>}]} {
    %c0 = arith.constant 0 : index
    %c0_0 = arith.constant 0 : index
    %c0_1 = arith.constant 0 : index
    %0 = vector.load %arg1[%c0, %c0_0, %c0_1] : memref<2x64x32xf32, #tpu.memory_space<vmem>>, vector<1x64x32xf32>
    %1 = vector.shape_cast %0 : vector<1x64x32xf32> to vector<64x32xf32>
    %c0_2 = arith.constant 0 : index
    %c0_3 = arith.constant 0 : index
    %c0_4 = arith.constant 0 : index
    %2 = vector.load %arg2[%c0_2, %c0_3, %c0_4] : memref<2x8x64xf32, #tpu.memory_space<vmem>>, vector<1x8x64xf32>
    %3 = vector.shape_cast %2 : vector<1x8x64xf32> to vector<8x64xf32>
    %c0_5 = arith.constant 0 : index
    %c0_6 = arith.constant 0 : index
    %c0_7 = arith.constant 0 : index
    %4 = vector.load %arg3[%c0_5, %c0_6, %c0_7] : memref<2x64x32xf32, #tpu.memory_space<vmem>>, vector<1x64x32xf32>
    %5 = vector.shape_cast %4 : vector<1x64x32xf32> to vector<64x32xf32>
    %cst = arith.constant dense<0.000000e+00> : vector<8x32xf32>
    %6 = tpu.matmul %3, %1, %cst {dimension_numbers = #tpu.dot_dimension_numbers<[1], [0], [0], [1], [0, 0, 1, 1], [], []>} : vector<8x64xf32>, vector<64x32xf32>, vector<8x32xf32> -> vector<8x32xf32>
    %cst_8 = arith.constant dense<0.000000e+00> : vector<8xf32>
    %7 = vector.multi_reduction <add>, %3, %cst_8 [1] : vector<8x64xf32> to vector<8xf32>
    %8 = vector.shape_cast %7 : vector<8xf32> to vector<8x1xf32>
    %cst_9 = arith.constant 9.99999997E-7 : f32
    %9 = vector.broadcast %cst_9 : f32 to vector<8x1xf32>
    %10 = arith.addf %8, %9 : vector<8x1xf32>
    %11 = vector.broadcast %10 : vector<8x1xf32> to vector<8x32xf32>
    %12 = arith.divf %6, %11 : vector<8x32xf32>
    %c0_10 = arith.constant 0 : index
    %c0_11 = arith.constant 0 : index
    %c0_12 = arith.constant 0 : index
    %13 = vector.load %arg4[%c0_10, %c0_11, %c0_12] : memref<2x8x32xf32, #tpu.memory_space<vmem>>, vector<1x8x32xf32>
    %14 = vector.shape_cast %13 : vector<1x8x32xf32> to vector<8x32xf32>
    %15 = vector.shape_cast %12 : vector<8x32xf32> to vector<1x8x32xf32>
    tpu.vector_store %arg4[%c0_10, %c0_11, %c0_12], %15 {strides = array<i32>} : memref<2x8x32xf32, #tpu.memory_space<vmem>>, vector<1x8x32xf32>,
    %16 = arith.mulf %12, %12 : vector<8x32xf32>
    %cst_13 = arith.constant dense<0.000000e+00> : vector<8xf32>
    %17 = vector.multi_reduction <add>, %16, %cst_13 [1] : vector<8x32xf32> to vector<8xf32>
    %18 = vector.shape_cast %17 : vector<8xf32> to vector<8x1xf32>
    %cst_14 = arith.constant 9.99999997E-7 : f32
    %19 = vector.broadcast %cst_14 : f32 to vector<8x1xf32>
    %20 = arith.addf %18, %19 : vector<8x1xf32>
    %21 = math.rsqrt %20 : vector<8x1xf32>
    %22 = vector.broadcast %21 : vector<8x1xf32> to vector<8x32xf32>
    %23 = arith.mulf %12, %22 : vector<8x32xf32>
    %24 = arith.mulf %5, %5 : vector<64x32xf32>
    %cst_15 = arith.constant dense<0.000000e+00> : vector<64xf32>
    %25 = vector.multi_reduction <add>, %24, %cst_15 [1] : vector<64x32xf32> to vector<64xf32>
    %26 = vector.shape_cast %25 : vector<64xf32> to vector<64x1xf32>
    %cst_16 = arith.constant 9.99999997E-7 : f32
    %27 = vector.broadcast %cst_16 : f32 to vector<64x1xf32>
    %28 = arith.addf %26, %27 : vector<64x1xf32>
    %29 = math.rsqrt %28 : vector<64x1xf32>
    %30 = vector.broadcast %29 : vector<64x1xf32> to vector<64x32xf32>
    %31 = arith.mulf %5, %30 : vector<64x32xf32>
    %cst_17 = arith.constant dense<0.000000e+00> : vector<8x64xf32>
    %32 = tpu.matmul %23, %31, %cst_17 {dimension_numbers = #tpu.dot_dimension_numbers<[1], [1], [0], [0], [0, 0, 1, 0], [], []>} : vector<8x32xf32>, vector<64x32xf32>, vector<8x64xf32> -> vector<8x64xf32>
    %c0_18 = arith.constant 0 : index
    %c0_19 = arith.constant 0 : index
    %33 = vector.load %arg5[%c0_18, %c0_19] : memref<8x128xf32, #tpu.memory_space<vmem>>, vector<8x64xf32>
    tpu.vector_store %arg5[%c0_18, %c0_19], %32 {strides = array<i32>} : memref<8x128xf32, #tpu.memory_space<vmem>>, vector<8x64xf32>,
    %c1 = arith.constant 1 : index
    %c0_20 = arith.constant 0 : index
    %c0_21 = arith.constant 0 : index
    %34 = vector.load %arg1[%c1, %c0_20, %c0_21] : memref<2x64x32xf32, #tpu.memory_space<vmem>>, vector<1x64x32xf32>
    %35 = vector.shape_cast %34 : vector<1x64x32xf32> to vector<64x32xf32>
    %c1_22 = arith.constant 1 : index
    %c0_23 = arith.constant 0 : index
    %c0_24 = arith.constant 0 : index
    %36 = vector.load %arg2[%c1_22, %c0_23, %c0_24] : memref<2x8x64xf32, #tpu.memory_space<vmem>>, vector<1x8x64xf32>
    %37 = vector.shape_cast %36 : vector<1x8x64xf32> to vector<8x64xf32>
    %c1_25 = arith.constant 1 : index
    %c0_26 = arith.constant 0 : index
    %c0_27 = arith.constant 0 : index
    %38 = vector.load %arg3[%c1_25, %c0_26, %c0_27] : memref<2x64x32xf32, #tpu.memory_space<vmem>>, vector<1x64x32xf32>
    %39 = vector.shape_cast %38 : vector<1x64x32xf32> to vector<64x32xf32>
    %cst_28 = arith.constant dense<0.000000e+00> : vector<8x32xf32>
    %40 = tpu.matmul %37, %35, %cst_28 {dimension_numbers = #tpu.dot_dimension_numbers<[1], [0], [0], [1], [0, 0, 1, 1], [], []>} : vector<8x64xf32>, vector<64x32xf32>, vector<8x32xf32> -> vector<8x32xf32>
    %cst_29 = arith.constant dense<0.000000e+00> : vector<8xf32>
    %41 = vector.multi_reduction <add>, %37, %cst_29 [1] : vector<8x64xf32> to vector<8xf32>
    %42 = vector.shape_cast %41 : vector<8xf32> to vector<8x1xf32>
    %cst_30 = arith.constant 9.99999997E-7 : f32
    %43 = vector.broadcast %cst_30 : f32 to vector<8x1xf32>
    %44 = arith.addf %42, %43 : vector<8x1xf32>
    %45 = vector.broadcast %44 : vector<8x1xf32> to vector<8x32xf32>
    %46 = arith.divf %40, %45 : vector<8x32xf32>
    %c1_31 = arith.constant 1 : index
    %c0_32 = arith.constant 0 : index
    %c0_33 = arith.constant 0 : index
    %47 = vector.load %arg4[%c1_31, %c0_32, %c0_33] : memref<2x8x32xf32, #tpu.memory_space<vmem>>, vector<1x8x32xf32>
    %48 = vector.shape_cast %47 : vector<1x8x32xf32> to vector<8x32xf32>
    %49 = vector.shape_cast %46 : vector<8x32xf32> to vector<1x8x32xf32>
    tpu.vector_store %arg4[%c1_31, %c0_32, %c0_33], %49 {strides = array<i32>} : memref<2x8x32xf32, #tpu.memory_space<vmem>>, vector<1x8x32xf32>,
    %50 = arith.mulf %46, %46 : vector<8x32xf32>
    %cst_34 = arith.constant dense<0.000000e+00> : vector<8xf32>
    %51 = vector.multi_reduction <add>, %50, %cst_34 [1] : vector<8x32xf32> to vector<8xf32>
    %52 = vector.shape_cast %51 : vector<8xf32> to vector<8x1xf32>
    %cst_35 = arith.constant 9.99999997E-7 : f32
    %53 = vector.broadcast %cst_35 : f32 to vector<8x1xf32>
    %54 = arith.addf %52, %53 : vector<8x1xf32>
    %55 = math.rsqrt %54 : vector<8x1xf32>
    %56 = vector.broadcast %55 : vector<8x1xf32> to vector<8x32xf32>
    %57 = arith.mulf %46, %56 : vector<8x32xf32>
    %58 = arith.mulf %39, %39 : vector<64x32xf32>
    %cst_36 = arith.constant dense<0.000000e+00> : vector<64xf32>
    %59 = vector.multi_reduction <add>, %58, %cst_36 [1] : vector<64x32xf32> to vector<64xf32>
    %60 = vector.shape_cast %59 : vector<64xf32> to vector<64x1xf32>
    %cst_37 = arith.constant 9.99999997E-7 : f32
    %61 = vector.broadcast %cst_37 : f32 to vector<64x1xf32>
    %62 = arith.addf %60, %61 : vector<64x1xf32>
    %63 = math.rsqrt %62 : vector<64x1xf32>
    %64 = vector.broadcast %63 : vector<64x1xf32> to vector<64x32xf32>
    %65 = arith.mulf %39, %64 : vector<64x32xf32>
    %cst_38 = arith.constant dense<0.000000e+00> : vector<8x64xf32>
    %66 = tpu.matmul %57, %65, %cst_38 {dimension_numbers = #tpu.dot_dimension_numbers<[1], [1], [0], [0], [0, 0, 1, 0], [], []>} : vector<8x32xf32>, vector<64x32xf32>, vector<8x64xf32> -> vector<8x64xf32>
    %c0_39 = arith.constant 0 : index
    %c64 = arith.constant 64 : index
    %67 = vector.load %arg5[%c0_39, %c64] : memref<8x128xf32, #tpu.memory_space<vmem>>, vector<8x64xf32>
    tpu.vector_store %arg5[%c0_39, %c64], %66 {strides = array<i32>} : memref<8x128xf32, #tpu.memory_space<vmem>>, vector<8x64xf32>,
    return
  }
  func.func @transform_0(%arg0: i32) -> (i32, i32, i32) {
    %c0_i32 = arith.constant 0 : i32
    %c0_i32_0 = arith.constant 0 : i32
    %c0_i32_1 = arith.constant 0 : i32
    %c0_i32_2 = arith.constant 0 : i32
    return %c0_i32, %c0_i32_0, %c0_i32_1 : i32, i32, i32
  }
  func.func @transform_1(%arg0: i32) -> (i32, i32, i32) {
    %c0_i32 = arith.constant 0 : i32
    %c0_i32_0 = arith.constant 0 : i32
    %c0_i32_1 = arith.constant 0 : i32
    %c0_i32_2 = arith.constant 0 : i32
    return %c0_i32, %c0_i32_0, %c0_i32_1 : i32, i32, i32
  }
  func.func @transform_2(%arg0: i32) -> (i32, i32, i32) {
    %c0_i32 = arith.constant 0 : i32
    %c0_i32_0 = arith.constant 0 : i32
    %c0_i32_1 = arith.constant 0 : i32
    %c0_i32_2 = arith.constant 0 : i32
    return %c0_i32, %c0_i32_0, %c0_i32_1 : i32, i32, i32
  }
  func.func @transform_3(%arg0: i32) -> (i32, i32, i32) {
    %c0_i32 = arith.constant 0 : i32
    %c0_i32_0 = arith.constant 0 : i32
    %c0_i32_1 = arith.constant 0 : i32
    %c0_i32_2 = arith.constant 0 : i32
    return %c0_i32, %c0_i32_0, %c0_i32_1 : i32, i32, i32
  }
  func.func @transform_4(%arg0: i32) -> (i32, i32) {
    %c0_i32 = arith.constant 0 : i32
    %c0_i32_0 = arith.constant 0 : i32
    %c0_i32_1 = arith.constant 0 : i32
    return %c0_i32, %c0_i32_0 : i32, i32
  }
}

module attributes {stable_mosaic.version = 11 : i64} {
  func.func @_layer55_fuse_kernel(%arg0: i32, %arg1: memref<1x64x128xf32, #tpu.memory_space<vmem>>, %arg2: memref<2x1x9x128xf32, #tpu.memory_space<vmem>>, %arg3: memref<64x9xf32, #tpu.memory_space<vmem>>, %arg4: memref<1x128xf32, #tpu.memory_space<vmem>>, %arg5: memref<1x128xf32, #tpu.memory_space<vmem>>, %arg6: memref<1x64x128xbf16, #tpu.memory_space<vmem>>) attributes {dimension_semantics = [#tpu.dimension_semantics<parallel>], iteration_bounds = array<i64: 2>, scalar_prefetch = 0 : i64, scratch_operands = 0 : i64, tpu.core_type = #tpu.core_type<tc>, window_params = [{transform_indices = @transform_0, window_bounds = array<i64: 1, 64, 128>}, {transform_indices = @transform_1, window_bounds = array<i64: 2, 1, 9, 128>}, {pipeline_mode = #tpu.pipeline_mode<synchronous>, transform_indices = @transform_2, window_bounds = array<i64: 64, 9>}, {pipeline_mode = #tpu.pipeline_mode<synchronous>, transform_indices = @transform_3, window_bounds = array<i64: 1, 128>}, {pipeline_mode = #tpu.pipeline_mode<synchronous>, transform_indices = @transform_4, window_bounds = array<i64: 1, 128>}, {transform_indices = @transform_5, window_bounds = array<i64: 1, 64, 128>}]} {
    %c0 = arith.constant 0 : index
    %c0_0 = arith.constant 0 : index
    %c0_1 = arith.constant 0 : index
    %0 = vector.load %arg1[%c0, %c0_0, %c0_1] : memref<1x64x128xf32, #tpu.memory_space<vmem>>, vector<1x64x128xf32>
    %1 = vector.shape_cast %0 : vector<1x64x128xf32> to vector<64x128xf32>
    %c0_2 = arith.constant 0 : index
    %c0_3 = arith.constant 0 : index
    %2 = vector.load %arg4[%c0_2, %c0_3] : memref<1x128xf32, #tpu.memory_space<vmem>>, vector<1x128xf32>
    %c0_4 = arith.constant 0 : index
    %c0_5 = arith.constant 0 : index
    %3 = vector.load %arg5[%c0_4, %c0_5] : memref<1x128xf32, #tpu.memory_space<vmem>>, vector<1x128xf32>
    %c0_6 = arith.constant 0 : index
    %c0_7 = arith.constant 0 : index
    %4 = vector.load %arg3[%c0_6, %c0_7] : memref<64x9xf32, #tpu.memory_space<vmem>>, vector<64x9xf32>
    %cst = arith.constant 0.000000e+00 : f32
    %5 = vector.broadcast %cst : f32 to vector<64x128xf32>
    %c0_8 = arith.constant 0 : index
    %c0_9 = arith.constant 0 : index
    %c0_10 = arith.constant 0 : index
    %c0_11 = arith.constant 0 : index
    %6 = vector.load %arg2[%c0_8, %c0_9, %c0_10, %c0_11] : memref<2x1x9x128xf32, #tpu.memory_space<vmem>>, vector<1x1x9x128xf32>
    %7 = vector.shape_cast %6 : vector<1x1x9x128xf32> to vector<9x128xf32>
    %cst_12 = arith.constant dense<0.000000e+00> : vector<64x128xf32>
    %8 = tpu.matmul %4, %7, %cst_12 {dimension_numbers = #tpu.dot_dimension_numbers<[1], [0], [0], [1], [0, 0, 1, 1], [], []>} : vector<64x9xf32>, vector<9x128xf32>, vector<64x128xf32> -> vector<64x128xf32>
    %9 = arith.addf %1, %8 : vector<64x128xf32>
    %10 = vector.broadcast %2 : vector<1x128xf32> to vector<64x128xf32>
    %11 = arith.mulf %9, %10 : vector<64x128xf32>
    %12 = vector.broadcast %3 : vector<1x128xf32> to vector<64x128xf32>
    %13 = arith.addf %11, %12 : vector<64x128xf32>
    %cst_13 = arith.constant 0.000000e+00 : f32
    %14 = vector.broadcast %cst_13 : f32 to vector<64x128xf32>
    %15 = arith.maximumf %13, %14 : vector<64x128xf32>
    %16 = arith.addf %5, %15 : vector<64x128xf32>
    %c1 = arith.constant 1 : index
    %c0_14 = arith.constant 0 : index
    %c0_15 = arith.constant 0 : index
    %c0_16 = arith.constant 0 : index
    %17 = vector.load %arg2[%c1, %c0_14, %c0_15, %c0_16] : memref<2x1x9x128xf32, #tpu.memory_space<vmem>>, vector<1x1x9x128xf32>
    %18 = vector.shape_cast %17 : vector<1x1x9x128xf32> to vector<9x128xf32>
    %cst_17 = arith.constant dense<0.000000e+00> : vector<64x128xf32>
    %19 = tpu.matmul %4, %18, %cst_17 {dimension_numbers = #tpu.dot_dimension_numbers<[1], [0], [0], [1], [0, 0, 1, 1], [], []>} : vector<64x9xf32>, vector<9x128xf32>, vector<64x128xf32> -> vector<64x128xf32>
    %20 = arith.addf %1, %19 : vector<64x128xf32>
    %21 = vector.broadcast %2 : vector<1x128xf32> to vector<64x128xf32>
    %22 = arith.mulf %20, %21 : vector<64x128xf32>
    %23 = vector.broadcast %3 : vector<1x128xf32> to vector<64x128xf32>
    %24 = arith.addf %22, %23 : vector<64x128xf32>
    %cst_18 = arith.constant 0.000000e+00 : f32
    %25 = vector.broadcast %cst_18 : f32 to vector<64x128xf32>
    %26 = arith.maximumf %24, %25 : vector<64x128xf32>
    %27 = arith.addf %16, %26 : vector<64x128xf32>
    %28 = arith.truncf %27 : vector<64x128xf32> to vector<64x128xbf16>
    %c0_19 = arith.constant 0 : index
    %c0_20 = arith.constant 0 : index
    %c0_21 = arith.constant 0 : index
    %29 = vector.load %arg6[%c0_19, %c0_20, %c0_21] : memref<1x64x128xbf16, #tpu.memory_space<vmem>>, vector<1x64x128xbf16>
    %30 = vector.shape_cast %29 : vector<1x64x128xbf16> to vector<64x128xbf16>
    %31 = vector.shape_cast %28 : vector<64x128xbf16> to vector<1x64x128xbf16>
    tpu.vector_store %arg6[%c0_19, %c0_20, %c0_21], %31 {strides = array<i32>} : memref<1x64x128xbf16, #tpu.memory_space<vmem>>, vector<1x64x128xbf16>,
    return
  }
  func.func @transform_0(%arg0: i32) -> (i32, i32, i32) {
    %c0_i32 = arith.constant 0 : i32
    %c0_i32_0 = arith.constant 0 : i32
    %c0_i32_1 = arith.constant 0 : i32
    return %arg0, %c0_i32, %c0_i32_0 : i32, i32, i32
  }
  func.func @transform_1(%arg0: i32) -> (i32, i32, i32, i32) {
    %c0_i32 = arith.constant 0 : i32
    %c0_i32_0 = arith.constant 0 : i32
    %c0_i32_1 = arith.constant 0 : i32
    %c0_i32_2 = arith.constant 0 : i32
    return %c0_i32, %arg0, %c0_i32_0, %c0_i32_1 : i32, i32, i32, i32
  }
  func.func @transform_2(%arg0: i32) -> (i32, i32) {
    %c0_i32 = arith.constant 0 : i32
    %c0_i32_0 = arith.constant 0 : i32
    %c0_i32_1 = arith.constant 0 : i32
    return %c0_i32, %c0_i32_0 : i32, i32
  }
  func.func @transform_3(%arg0: i32) -> (i32, i32) {
    %c0_i32 = arith.constant 0 : i32
    %c0_i32_0 = arith.constant 0 : i32
    %c0_i32_1 = arith.constant 0 : i32
    return %c0_i32, %c0_i32_0 : i32, i32
  }
  func.func @transform_4(%arg0: i32) -> (i32, i32) {
    %c0_i32 = arith.constant 0 : i32
    %c0_i32_0 = arith.constant 0 : i32
    %c0_i32_1 = arith.constant 0 : i32
    return %c0_i32, %c0_i32_0 : i32, i32
  }
  func.func @transform_5(%arg0: i32) -> (i32, i32, i32) {
    %c0_i32 = arith.constant 0 : i32
    %c0_i32_0 = arith.constant 0 : i32
    %c0_i32_1 = arith.constant 0 : i32
    return %arg0, %c0_i32, %c0_i32_0 : i32, i32, i32
  }
}

module attributes {stable_mosaic.version = 11 : i64} {
  func.func @_mm_simple_kernel(%arg0: i32, %arg1: memref<128x306xbf16, #tpu.memory_space<vmem>>, %arg2: memref<306x128xbf16, #tpu.memory_space<vmem>>, %arg3: memref<1x128xf32, #tpu.memory_space<vmem>>, %arg4: memref<1x128xf32, #tpu.memory_space<vmem>>, %arg5: memref<128x128xf32, #tpu.memory_space<vmem>>) attributes {dimension_semantics = [#tpu.dimension_semantics<parallel>], iteration_bounds = array<i64: 1>, scalar_prefetch = 0 : i64, scratch_operands = 0 : i64, tpu.core_type = #tpu.core_type<tc>, window_params = [{transform_indices = @transform_0, window_bounds = array<i64: 128, 306>}, {pipeline_mode = #tpu.pipeline_mode<synchronous>, transform_indices = @transform_1, window_bounds = array<i64: 306, 128>}, {pipeline_mode = #tpu.pipeline_mode<synchronous>, transform_indices = @transform_2, window_bounds = array<i64: 1, 128>}, {pipeline_mode = #tpu.pipeline_mode<synchronous>, transform_indices = @transform_3, window_bounds = array<i64: 1, 128>}, {transform_indices = @transform_4, window_bounds = array<i64: 128, 128>}]} {
    %c0 = arith.constant 0 : index
    %c0_0 = arith.constant 0 : index
    %0 = vector.load %arg1[%c0, %c0_0] : memref<128x306xbf16, #tpu.memory_space<vmem>>, vector<128x306xbf16>
    %c0_1 = arith.constant 0 : index
    %c0_2 = arith.constant 0 : index
    %1 = vector.load %arg2[%c0_1, %c0_2] : memref<306x128xbf16, #tpu.memory_space<vmem>>, vector<306x128xbf16>
    %cst = arith.constant dense<0.000000e+00> : vector<128x128xf32>
    %2 = tpu.matmul %0, %1, %cst {dimension_numbers = #tpu.dot_dimension_numbers<[1], [0], [0], [1], [0, 0, 1, 1], [], []>} : vector<128x306xbf16>, vector<306x128xbf16>, vector<128x128xf32> -> vector<128x128xf32>
    %c0_3 = arith.constant 0 : index
    %c0_4 = arith.constant 0 : index
    %3 = vector.load %arg3[%c0_3, %c0_4] : memref<1x128xf32, #tpu.memory_space<vmem>>, vector<1x128xf32>
    %4 = vector.broadcast %3 : vector<1x128xf32> to vector<128x128xf32>
    %5 = arith.mulf %2, %4 : vector<128x128xf32>
    %c0_5 = arith.constant 0 : index
    %c0_6 = arith.constant 0 : index
    %6 = vector.load %arg4[%c0_5, %c0_6] : memref<1x128xf32, #tpu.memory_space<vmem>>, vector<1x128xf32>
    %7 = vector.broadcast %6 : vector<1x128xf32> to vector<128x128xf32>
    %8 = arith.addf %5, %7 : vector<128x128xf32>
    %cst_7 = arith.constant 0.000000e+00 : f32
    %9 = vector.broadcast %cst_7 : f32 to vector<128x128xf32>
    %10 = arith.maximumf %8, %9 : vector<128x128xf32>
    %c0_8 = arith.constant 0 : index
    %c0_9 = arith.constant 0 : index
    %11 = vector.load %arg5[%c0_8, %c0_9] : memref<128x128xf32, #tpu.memory_space<vmem>>, vector<128x128xf32>
    tpu.vector_store %arg5[%c0_8, %c0_9], %10 {strides = array<i32>} : memref<128x128xf32, #tpu.memory_space<vmem>>, vector<128x128xf32>,
    return
  }
  func.func @transform_0(%arg0: i32) -> (i32, i32) {
    %c0_i32 = arith.constant 0 : i32
    %c0_i32_0 = arith.constant 0 : i32
    return %arg0, %c0_i32 : i32, i32
  }
  func.func @transform_1(%arg0: i32) -> (i32, i32) {
    %c0_i32 = arith.constant 0 : i32
    %c0_i32_0 = arith.constant 0 : i32
    %c0_i32_1 = arith.constant 0 : i32
    return %c0_i32, %c0_i32_0 : i32, i32
  }
  func.func @transform_2(%arg0: i32) -> (i32, i32) {
    %c0_i32 = arith.constant 0 : i32
    %c0_i32_0 = arith.constant 0 : i32
    %c0_i32_1 = arith.constant 0 : i32
    return %c0_i32, %c0_i32_0 : i32, i32
  }
  func.func @transform_3(%arg0: i32) -> (i32, i32) {
    %c0_i32 = arith.constant 0 : i32
    %c0_i32_0 = arith.constant 0 : i32
    %c0_i32_1 = arith.constant 0 : i32
    return %c0_i32, %c0_i32_0 : i32, i32
  }
  func.func @transform_4(%arg0: i32) -> (i32, i32) {
    %c0_i32 = arith.constant 0 : i32
    %c0_i32_0 = arith.constant 0 : i32
    return %arg0, %c0_i32 : i32, i32
  }
}

module attributes {stable_mosaic.version = 11 : i64} {
  func.func @_mm_simple_kernel(%arg0: i32, %arg1: memref<128x297xbf16, #tpu.memory_space<vmem>>, %arg2: memref<297x128xbf16, #tpu.memory_space<vmem>>, %arg3: memref<1x128xf32, #tpu.memory_space<vmem>>, %arg4: memref<1x128xf32, #tpu.memory_space<vmem>>, %arg5: memref<128x128xbf16, #tpu.memory_space<vmem>>) attributes {dimension_semantics = [#tpu.dimension_semantics<parallel>], iteration_bounds = array<i64: 1>, scalar_prefetch = 0 : i64, scratch_operands = 0 : i64, tpu.core_type = #tpu.core_type<tc>, window_params = [{transform_indices = @transform_0, window_bounds = array<i64: 128, 297>}, {pipeline_mode = #tpu.pipeline_mode<synchronous>, transform_indices = @transform_1, window_bounds = array<i64: 297, 128>}, {pipeline_mode = #tpu.pipeline_mode<synchronous>, transform_indices = @transform_2, window_bounds = array<i64: 1, 128>}, {pipeline_mode = #tpu.pipeline_mode<synchronous>, transform_indices = @transform_3, window_bounds = array<i64: 1, 128>}, {transform_indices = @transform_4, window_bounds = array<i64: 128, 128>}]} {
    %c0 = arith.constant 0 : index
    %c0_0 = arith.constant 0 : index
    %0 = vector.load %arg1[%c0, %c0_0] : memref<128x297xbf16, #tpu.memory_space<vmem>>, vector<128x297xbf16>
    %c0_1 = arith.constant 0 : index
    %c0_2 = arith.constant 0 : index
    %1 = vector.load %arg2[%c0_1, %c0_2] : memref<297x128xbf16, #tpu.memory_space<vmem>>, vector<297x128xbf16>
    %cst = arith.constant dense<0.000000e+00> : vector<128x128xf32>
    %2 = tpu.matmul %0, %1, %cst {dimension_numbers = #tpu.dot_dimension_numbers<[1], [0], [0], [1], [0, 0, 1, 1], [], []>} : vector<128x297xbf16>, vector<297x128xbf16>, vector<128x128xf32> -> vector<128x128xf32>
    %c0_3 = arith.constant 0 : index
    %c0_4 = arith.constant 0 : index
    %3 = vector.load %arg3[%c0_3, %c0_4] : memref<1x128xf32, #tpu.memory_space<vmem>>, vector<1x128xf32>
    %4 = vector.broadcast %3 : vector<1x128xf32> to vector<128x128xf32>
    %5 = arith.mulf %2, %4 : vector<128x128xf32>
    %c0_5 = arith.constant 0 : index
    %c0_6 = arith.constant 0 : index
    %6 = vector.load %arg4[%c0_5, %c0_6] : memref<1x128xf32, #tpu.memory_space<vmem>>, vector<1x128xf32>
    %7 = vector.broadcast %6 : vector<1x128xf32> to vector<128x128xf32>
    %8 = arith.addf %5, %7 : vector<128x128xf32>
    %cst_7 = arith.constant 0.000000e+00 : f32
    %9 = vector.broadcast %cst_7 : f32 to vector<128x128xf32>
    %10 = arith.maximumf %8, %9 : vector<128x128xf32>
    %11 = arith.truncf %10 : vector<128x128xf32> to vector<128x128xbf16>
    %c0_8 = arith.constant 0 : index
    %c0_9 = arith.constant 0 : index
    %12 = vector.load %arg5[%c0_8, %c0_9] : memref<128x128xbf16, #tpu.memory_space<vmem>>, vector<128x128xbf16>
    tpu.vector_store %arg5[%c0_8, %c0_9], %11 {strides = array<i32>} : memref<128x128xbf16, #tpu.memory_space<vmem>>, vector<128x128xbf16>,
    return
  }
  func.func @transform_0(%arg0: i32) -> (i32, i32) {
    %c0_i32 = arith.constant 0 : i32
    %c0_i32_0 = arith.constant 0 : i32
    return %arg0, %c0_i32 : i32, i32
  }
  func.func @transform_1(%arg0: i32) -> (i32, i32) {
    %c0_i32 = arith.constant 0 : i32
    %c0_i32_0 = arith.constant 0 : i32
    %c0_i32_1 = arith.constant 0 : i32
    return %c0_i32, %c0_i32_0 : i32, i32
  }
  func.func @transform_2(%arg0: i32) -> (i32, i32) {
    %c0_i32 = arith.constant 0 : i32
    %c0_i32_0 = arith.constant 0 : i32
    %c0_i32_1 = arith.constant 0 : i32
    return %c0_i32, %c0_i32_0 : i32, i32
  }
  func.func @transform_3(%arg0: i32) -> (i32, i32) {
    %c0_i32 = arith.constant 0 : i32
    %c0_i32_0 = arith.constant 0 : i32
    %c0_i32_1 = arith.constant 0 : i32
    return %c0_i32, %c0_i32_0 : i32, i32
  }
  func.func @transform_4(%arg0: i32) -> (i32, i32) {
    %c0_i32 = arith.constant 0 : i32
    %c0_i32_0 = arith.constant 0 : i32
    return %arg0, %c0_i32 : i32, i32
  }
}

module attributes {stable_mosaic.version = 11 : i64} {
  func.func @_mm_simple_kernel(%arg0: i32, %arg1: memref<128x288xbf16, #tpu.memory_space<vmem>>, %arg2: memref<288x128xbf16, #tpu.memory_space<vmem>>, %arg3: memref<1x128xf32, #tpu.memory_space<vmem>>, %arg4: memref<1x128xf32, #tpu.memory_space<vmem>>, %arg5: memref<128x128xbf16, #tpu.memory_space<vmem>>) attributes {dimension_semantics = [#tpu.dimension_semantics<parallel>], iteration_bounds = array<i64: 1>, scalar_prefetch = 0 : i64, scratch_operands = 0 : i64, tpu.core_type = #tpu.core_type<tc>, window_params = [{transform_indices = @transform_0, window_bounds = array<i64: 128, 288>}, {pipeline_mode = #tpu.pipeline_mode<synchronous>, transform_indices = @transform_1, window_bounds = array<i64: 288, 128>}, {pipeline_mode = #tpu.pipeline_mode<synchronous>, transform_indices = @transform_2, window_bounds = array<i64: 1, 128>}, {pipeline_mode = #tpu.pipeline_mode<synchronous>, transform_indices = @transform_3, window_bounds = array<i64: 1, 128>}, {transform_indices = @transform_4, window_bounds = array<i64: 128, 128>}]} {
    %c0 = arith.constant 0 : index
    %c0_0 = arith.constant 0 : index
    %0 = vector.load %arg1[%c0, %c0_0] : memref<128x288xbf16, #tpu.memory_space<vmem>>, vector<128x288xbf16>
    %c0_1 = arith.constant 0 : index
    %c0_2 = arith.constant 0 : index
    %1 = vector.load %arg2[%c0_1, %c0_2] : memref<288x128xbf16, #tpu.memory_space<vmem>>, vector<288x128xbf16>
    %cst = arith.constant dense<0.000000e+00> : vector<128x128xf32>
    %2 = tpu.matmul %0, %1, %cst {dimension_numbers = #tpu.dot_dimension_numbers<[1], [0], [0], [1], [0, 0, 1, 1], [], []>} : vector<128x288xbf16>, vector<288x128xbf16>, vector<128x128xf32> -> vector<128x128xf32>
    %c0_3 = arith.constant 0 : index
    %c0_4 = arith.constant 0 : index
    %3 = vector.load %arg3[%c0_3, %c0_4] : memref<1x128xf32, #tpu.memory_space<vmem>>, vector<1x128xf32>
    %4 = vector.broadcast %3 : vector<1x128xf32> to vector<128x128xf32>
    %5 = arith.mulf %2, %4 : vector<128x128xf32>
    %c0_5 = arith.constant 0 : index
    %c0_6 = arith.constant 0 : index
    %6 = vector.load %arg4[%c0_5, %c0_6] : memref<1x128xf32, #tpu.memory_space<vmem>>, vector<1x128xf32>
    %7 = vector.broadcast %6 : vector<1x128xf32> to vector<128x128xf32>
    %8 = arith.addf %5, %7 : vector<128x128xf32>
    %cst_7 = arith.constant 0.000000e+00 : f32
    %9 = vector.broadcast %cst_7 : f32 to vector<128x128xf32>
    %10 = arith.maximumf %8, %9 : vector<128x128xf32>
    %11 = arith.truncf %10 : vector<128x128xf32> to vector<128x128xbf16>
    %c0_8 = arith.constant 0 : index
    %c0_9 = arith.constant 0 : index
    %12 = vector.load %arg5[%c0_8, %c0_9] : memref<128x128xbf16, #tpu.memory_space<vmem>>, vector<128x128xbf16>
    tpu.vector_store %arg5[%c0_8, %c0_9], %11 {strides = array<i32>} : memref<128x128xbf16, #tpu.memory_space<vmem>>, vector<128x128xbf16>,
    return
  }
  func.func @transform_0(%arg0: i32) -> (i32, i32) {
    %c0_i32 = arith.constant 0 : i32
    %c0_i32_0 = arith.constant 0 : i32
    return %arg0, %c0_i32 : i32, i32
  }
  func.func @transform_1(%arg0: i32) -> (i32, i32) {
    %c0_i32 = arith.constant 0 : i32
    %c0_i32_0 = arith.constant 0 : i32
    %c0_i32_1 = arith.constant 0 : i32
    return %c0_i32, %c0_i32_0 : i32, i32
  }
  func.func @transform_2(%arg0: i32) -> (i32, i32) {
    %c0_i32 = arith.constant 0 : i32
    %c0_i32_0 = arith.constant 0 : i32
    %c0_i32_1 = arith.constant 0 : i32
    return %c0_i32, %c0_i32_0 : i32, i32
  }
  func.func @transform_3(%arg0: i32) -> (i32, i32) {
    %c0_i32 = arith.constant 0 : i32
    %c0_i32_0 = arith.constant 0 : i32
    %c0_i32_1 = arith.constant 0 : i32
    return %c0_i32, %c0_i32_0 : i32, i32
  }
  func.func @transform_4(%arg0: i32) -> (i32, i32) {
    %c0_i32 = arith.constant 0 : i32
    %c0_i32_0 = arith.constant 0 : i32
    return %arg0, %c0_i32 : i32, i32
  }
}

module attributes {stable_mosaic.version = 11 : i64} {
  func.func @_mm_simple_kernel(%arg0: i32, %arg1: memref<8x32xbf16, #tpu.memory_space<vmem>>, %arg2: memref<32x128xbf16, #tpu.memory_space<vmem>>, %arg3: memref<1x128xf32, #tpu.memory_space<vmem>>, %arg4: memref<1x128xf32, #tpu.memory_space<vmem>>, %arg5: memref<8x128xf32, #tpu.memory_space<vmem>>) attributes {dimension_semantics = [#tpu.dimension_semantics<parallel>], iteration_bounds = array<i64: 1>, scalar_prefetch = 0 : i64, scratch_operands = 0 : i64, tpu.core_type = #tpu.core_type<tc>, window_params = [{transform_indices = @transform_0, window_bounds = array<i64: 8, 32>}, {pipeline_mode = #tpu.pipeline_mode<synchronous>, transform_indices = @transform_1, window_bounds = array<i64: 32, 128>}, {pipeline_mode = #tpu.pipeline_mode<synchronous>, transform_indices = @transform_2, window_bounds = array<i64: 1, 128>}, {pipeline_mode = #tpu.pipeline_mode<synchronous>, transform_indices = @transform_3, window_bounds = array<i64: 1, 128>}, {transform_indices = @transform_4, window_bounds = array<i64: 8, 128>}]} {
    %c0 = arith.constant 0 : index
    %c0_0 = arith.constant 0 : index
    %0 = vector.load %arg1[%c0, %c0_0] : memref<8x32xbf16, #tpu.memory_space<vmem>>, vector<8x32xbf16>
    %c0_1 = arith.constant 0 : index
    %c0_2 = arith.constant 0 : index
    %1 = vector.load %arg2[%c0_1, %c0_2] : memref<32x128xbf16, #tpu.memory_space<vmem>>, vector<32x128xbf16>
    %cst = arith.constant dense<0.000000e+00> : vector<8x128xf32>
    %2 = tpu.matmul %0, %1, %cst {dimension_numbers = #tpu.dot_dimension_numbers<[1], [0], [0], [1], [0, 0, 1, 1], [], []>} : vector<8x32xbf16>, vector<32x128xbf16>, vector<8x128xf32> -> vector<8x128xf32>
    %c0_3 = arith.constant 0 : index
    %c0_4 = arith.constant 0 : index
    %3 = vector.load %arg3[%c0_3, %c0_4] : memref<1x128xf32, #tpu.memory_space<vmem>>, vector<1x128xf32>
    %4 = vector.broadcast %3 : vector<1x128xf32> to vector<8x128xf32>
    %5 = arith.mulf %2, %4 : vector<8x128xf32>
    %c0_5 = arith.constant 0 : index
    %c0_6 = arith.constant 0 : index
    %6 = vector.load %arg4[%c0_5, %c0_6] : memref<1x128xf32, #tpu.memory_space<vmem>>, vector<1x128xf32>
    %7 = vector.broadcast %6 : vector<1x128xf32> to vector<8x128xf32>
    %8 = arith.addf %5, %7 : vector<8x128xf32>
    %cst_7 = arith.constant 0.000000e+00 : f32
    %9 = vector.broadcast %cst_7 : f32 to vector<8x128xf32>
    %10 = arith.maximumf %8, %9 : vector<8x128xf32>
    %c0_8 = arith.constant 0 : index
    %c0_9 = arith.constant 0 : index
    %11 = vector.load %arg5[%c0_8, %c0_9] : memref<8x128xf32, #tpu.memory_space<vmem>>, vector<8x128xf32>
    tpu.vector_store %arg5[%c0_8, %c0_9], %10 {strides = array<i32>} : memref<8x128xf32, #tpu.memory_space<vmem>>, vector<8x128xf32>,
    return
  }
  func.func @transform_0(%arg0: i32) -> (i32, i32) {
    %c0_i32 = arith.constant 0 : i32
    %c0_i32_0 = arith.constant 0 : i32
    return %arg0, %c0_i32 : i32, i32
  }
  func.func @transform_1(%arg0: i32) -> (i32, i32) {
    %c0_i32 = arith.constant 0 : i32
    %c0_i32_0 = arith.constant 0 : i32
    %c0_i32_1 = arith.constant 0 : i32
    return %c0_i32, %c0_i32_0 : i32, i32
  }
  func.func @transform_2(%arg0: i32) -> (i32, i32) {
    %c0_i32 = arith.constant 0 : i32
    %c0_i32_0 = arith.constant 0 : i32
    %c0_i32_1 = arith.constant 0 : i32
    return %c0_i32, %c0_i32_0 : i32, i32
  }
  func.func @transform_3(%arg0: i32) -> (i32, i32) {
    %c0_i32 = arith.constant 0 : i32
    %c0_i32_0 = arith.constant 0 : i32
    %c0_i32_1 = arith.constant 0 : i32
    return %c0_i32, %c0_i32_0 : i32, i32
  }
  func.func @transform_4(%arg0: i32) -> (i32, i32) {
    %c0_i32 = arith.constant 0 : i32
    %c0_i32_0 = arith.constant 0 : i32
    return %arg0, %c0_i32 : i32, i32
  }
}

module attributes {stable_mosaic.version = 11 : i64} {
  func.func @_mm_simple_kernel(%arg0: i32, %arg1: memref<24x32xbf16, #tpu.memory_space<vmem>>, %arg2: memref<32x128xbf16, #tpu.memory_space<vmem>>, %arg3: memref<1x128xf32, #tpu.memory_space<vmem>>, %arg4: memref<1x128xf32, #tpu.memory_space<vmem>>, %arg5: memref<24x128xf32, #tpu.memory_space<vmem>>) attributes {dimension_semantics = [#tpu.dimension_semantics<parallel>], iteration_bounds = array<i64: 1>, scalar_prefetch = 0 : i64, scratch_operands = 0 : i64, tpu.core_type = #tpu.core_type<tc>, window_params = [{transform_indices = @transform_0, window_bounds = array<i64: 24, 32>}, {pipeline_mode = #tpu.pipeline_mode<synchronous>, transform_indices = @transform_1, window_bounds = array<i64: 32, 128>}, {pipeline_mode = #tpu.pipeline_mode<synchronous>, transform_indices = @transform_2, window_bounds = array<i64: 1, 128>}, {pipeline_mode = #tpu.pipeline_mode<synchronous>, transform_indices = @transform_3, window_bounds = array<i64: 1, 128>}, {transform_indices = @transform_4, window_bounds = array<i64: 24, 128>}]} {
    %c0 = arith.constant 0 : index
    %c0_0 = arith.constant 0 : index
    %0 = vector.load %arg1[%c0, %c0_0] : memref<24x32xbf16, #tpu.memory_space<vmem>>, vector<24x32xbf16>
    %c0_1 = arith.constant 0 : index
    %c0_2 = arith.constant 0 : index
    %1 = vector.load %arg2[%c0_1, %c0_2] : memref<32x128xbf16, #tpu.memory_space<vmem>>, vector<32x128xbf16>
    %cst = arith.constant dense<0.000000e+00> : vector<24x128xf32>
    %2 = tpu.matmul %0, %1, %cst {dimension_numbers = #tpu.dot_dimension_numbers<[1], [0], [0], [1], [0, 0, 1, 1], [], []>} : vector<24x32xbf16>, vector<32x128xbf16>, vector<24x128xf32> -> vector<24x128xf32>
    %c0_3 = arith.constant 0 : index
    %c0_4 = arith.constant 0 : index
    %3 = vector.load %arg3[%c0_3, %c0_4] : memref<1x128xf32, #tpu.memory_space<vmem>>, vector<1x128xf32>
    %4 = vector.broadcast %3 : vector<1x128xf32> to vector<24x128xf32>
    %5 = arith.mulf %2, %4 : vector<24x128xf32>
    %c0_5 = arith.constant 0 : index
    %c0_6 = arith.constant 0 : index
    %6 = vector.load %arg4[%c0_5, %c0_6] : memref<1x128xf32, #tpu.memory_space<vmem>>, vector<1x128xf32>
    %7 = vector.broadcast %6 : vector<1x128xf32> to vector<24x128xf32>
    %8 = arith.addf %5, %7 : vector<24x128xf32>
    %cst_7 = arith.constant 0.000000e+00 : f32
    %9 = vector.broadcast %cst_7 : f32 to vector<24x128xf32>
    %10 = arith.maximumf %8, %9 : vector<24x128xf32>
    %c0_8 = arith.constant 0 : index
    %c0_9 = arith.constant 0 : index
    %11 = vector.load %arg5[%c0_8, %c0_9] : memref<24x128xf32, #tpu.memory_space<vmem>>, vector<24x128xf32>
    tpu.vector_store %arg5[%c0_8, %c0_9], %10 {strides = array<i32>} : memref<24x128xf32, #tpu.memory_space<vmem>>, vector<24x128xf32>,
    return
  }
  func.func @transform_0(%arg0: i32) -> (i32, i32) {
    %c0_i32 = arith.constant 0 : i32
    %c0_i32_0 = arith.constant 0 : i32
    return %arg0, %c0_i32 : i32, i32
  }
  func.func @transform_1(%arg0: i32) -> (i32, i32) {
    %c0_i32 = arith.constant 0 : i32
    %c0_i32_0 = arith.constant 0 : i32
    %c0_i32_1 = arith.constant 0 : i32
    return %c0_i32, %c0_i32_0 : i32, i32
  }
  func.func @transform_2(%arg0: i32) -> (i32, i32) {
    %c0_i32 = arith.constant 0 : i32
    %c0_i32_0 = arith.constant 0 : i32
    %c0_i32_1 = arith.constant 0 : i32
    return %c0_i32, %c0_i32_0 : i32, i32
  }
  func.func @transform_3(%arg0: i32) -> (i32, i32) {
    %c0_i32 = arith.constant 0 : i32
    %c0_i32_0 = arith.constant 0 : i32
    %c0_i32_1 = arith.constant 0 : i32
    return %c0_i32, %c0_i32_0 : i32, i32
  }
  func.func @transform_4(%arg0: i32) -> (i32, i32) {
    %c0_i32 = arith.constant 0 : i32
    %c0_i32_0 = arith.constant 0 : i32
    return %arg0, %c0_i32 : i32, i32
  }
}

module attributes {stable_mosaic.version = 11 : i64} {
  func.func @_mm_simple_kernel(%arg0: i32, %arg1: memref<72x32xbf16, #tpu.memory_space<vmem>>, %arg2: memref<32x128xbf16, #tpu.memory_space<vmem>>, %arg3: memref<1x128xf32, #tpu.memory_space<vmem>>, %arg4: memref<1x128xf32, #tpu.memory_space<vmem>>, %arg5: memref<72x128xf32, #tpu.memory_space<vmem>>) attributes {dimension_semantics = [#tpu.dimension_semantics<parallel>], iteration_bounds = array<i64: 1>, scalar_prefetch = 0 : i64, scratch_operands = 0 : i64, tpu.core_type = #tpu.core_type<tc>, window_params = [{transform_indices = @transform_0, window_bounds = array<i64: 72, 32>}, {pipeline_mode = #tpu.pipeline_mode<synchronous>, transform_indices = @transform_1, window_bounds = array<i64: 32, 128>}, {pipeline_mode = #tpu.pipeline_mode<synchronous>, transform_indices = @transform_2, window_bounds = array<i64: 1, 128>}, {pipeline_mode = #tpu.pipeline_mode<synchronous>, transform_indices = @transform_3, window_bounds = array<i64: 1, 128>}, {transform_indices = @transform_4, window_bounds = array<i64: 72, 128>}]} {
    %c0 = arith.constant 0 : index
    %c0_0 = arith.constant 0 : index
    %0 = vector.load %arg1[%c0, %c0_0] : memref<72x32xbf16, #tpu.memory_space<vmem>>, vector<72x32xbf16>
    %c0_1 = arith.constant 0 : index
    %c0_2 = arith.constant 0 : index
    %1 = vector.load %arg2[%c0_1, %c0_2] : memref<32x128xbf16, #tpu.memory_space<vmem>>, vector<32x128xbf16>
    %cst = arith.constant dense<0.000000e+00> : vector<72x128xf32>
    %2 = tpu.matmul %0, %1, %cst {dimension_numbers = #tpu.dot_dimension_numbers<[1], [0], [0], [1], [0, 0, 1, 1], [], []>} : vector<72x32xbf16>, vector<32x128xbf16>, vector<72x128xf32> -> vector<72x128xf32>
    %c0_3 = arith.constant 0 : index
    %c0_4 = arith.constant 0 : index
    %3 = vector.load %arg3[%c0_3, %c0_4] : memref<1x128xf32, #tpu.memory_space<vmem>>, vector<1x128xf32>
    %4 = vector.broadcast %3 : vector<1x128xf32> to vector<72x128xf32>
    %5 = arith.mulf %2, %4 : vector<72x128xf32>
    %c0_5 = arith.constant 0 : index
    %c0_6 = arith.constant 0 : index
    %6 = vector.load %arg4[%c0_5, %c0_6] : memref<1x128xf32, #tpu.memory_space<vmem>>, vector<1x128xf32>
    %7 = vector.broadcast %6 : vector<1x128xf32> to vector<72x128xf32>
    %8 = arith.addf %5, %7 : vector<72x128xf32>
    %cst_7 = arith.constant 0.000000e+00 : f32
    %9 = vector.broadcast %cst_7 : f32 to vector<72x128xf32>
    %10 = arith.maximumf %8, %9 : vector<72x128xf32>
    %c0_8 = arith.constant 0 : index
    %c0_9 = arith.constant 0 : index
    %11 = vector.load %arg5[%c0_8, %c0_9] : memref<72x128xf32, #tpu.memory_space<vmem>>, vector<72x128xf32>
    tpu.vector_store %arg5[%c0_8, %c0_9], %10 {strides = array<i32>} : memref<72x128xf32, #tpu.memory_space<vmem>>, vector<72x128xf32>,
    return
  }
  func.func @transform_0(%arg0: i32) -> (i32, i32) {
    %c0_i32 = arith.constant 0 : i32
    %c0_i32_0 = arith.constant 0 : i32
    return %arg0, %c0_i32 : i32, i32
  }
  func.func @transform_1(%arg0: i32) -> (i32, i32) {
    %c0_i32 = arith.constant 0 : i32
    %c0_i32_0 = arith.constant 0 : i32
    %c0_i32_1 = arith.constant 0 : i32
    return %c0_i32, %c0_i32_0 : i32, i32
  }
  func.func @transform_2(%arg0: i32) -> (i32, i32) {
    %c0_i32 = arith.constant 0 : i32
    %c0_i32_0 = arith.constant 0 : i32
    %c0_i32_1 = arith.constant 0 : i32
    return %c0_i32, %c0_i32_0 : i32, i32
  }
  func.func @transform_3(%arg0: i32) -> (i32, i32) {
    %c0_i32 = arith.constant 0 : i32
    %c0_i32_0 = arith.constant 0 : i32
    %c0_i32_1 = arith.constant 0 : i32
    return %c0_i32, %c0_i32_0 : i32, i32
  }
  func.func @transform_4(%arg0: i32) -> (i32, i32) {
    %c0_i32 = arith.constant 0 : i32
    %c0_i32_0 = arith.constant 0 : i32
    return %arg0, %c0_i32 : i32, i32
  }
}

module attributes {stable_mosaic.version = 11 : i64} {
  func.func @_head_kernel(%arg0: i32, %arg1: memref<128x160xbf16, #tpu.memory_space<vmem>>, %arg2: memref<160x128xbf16, #tpu.memory_space<vmem>>, %arg3: memref<1x128xf32, #tpu.memory_space<vmem>>, %arg4: memref<1x128xf32, #tpu.memory_space<vmem>>, %arg5: memref<1x128xf32, #tpu.memory_space<vmem>>, %arg6: memref<1x1xf32, #tpu.memory_space<vmem>>, %arg7: memref<128x1xf32, #tpu.memory_space<vmem>>) attributes {dimension_semantics = [#tpu.dimension_semantics<parallel>], iteration_bounds = array<i64: 1>, scalar_prefetch = 0 : i64, scratch_operands = 0 : i64, tpu.core_type = #tpu.core_type<tc>, window_params = [{transform_indices = @transform_0, window_bounds = array<i64: 128, 160>}, {pipeline_mode = #tpu.pipeline_mode<synchronous>, transform_indices = @transform_1, window_bounds = array<i64: 160, 128>}, {pipeline_mode = #tpu.pipeline_mode<synchronous>, transform_indices = @transform_2, window_bounds = array<i64: 1, 128>}, {pipeline_mode = #tpu.pipeline_mode<synchronous>, transform_indices = @transform_3, window_bounds = array<i64: 1, 128>}, {pipeline_mode = #tpu.pipeline_mode<synchronous>, transform_indices = @transform_4, window_bounds = array<i64: 1, 128>}, {pipeline_mode = #tpu.pipeline_mode<synchronous>, transform_indices = @transform_5, window_bounds = array<i64: 1, 1>}, {transform_indices = @transform_6, window_bounds = array<i64: 128, 1>}]} {
    %c0 = arith.constant 0 : index
    %c0_0 = arith.constant 0 : index
    %0 = vector.load %arg1[%c0, %c0_0] : memref<128x160xbf16, #tpu.memory_space<vmem>>, vector<128x160xbf16>
    %c0_1 = arith.constant 0 : index
    %c0_2 = arith.constant 0 : index
    %1 = vector.load %arg2[%c0_1, %c0_2] : memref<160x128xbf16, #tpu.memory_space<vmem>>, vector<160x128xbf16>
    %cst = arith.constant dense<0.000000e+00> : vector<128x128xf32>
    %2 = tpu.matmul %0, %1, %cst {dimension_numbers = #tpu.dot_dimension_numbers<[1], [0], [0], [1], [0, 0, 1, 1], [], []>} : vector<128x160xbf16>, vector<160x128xbf16>, vector<128x128xf32> -> vector<128x128xf32>
    %c0_3 = arith.constant 0 : index
    %c0_4 = arith.constant 0 : index
    %3 = vector.load %arg3[%c0_3, %c0_4] : memref<1x128xf32, #tpu.memory_space<vmem>>, vector<1x128xf32>
    %4 = vector.broadcast %3 : vector<1x128xf32> to vector<128x128xf32>
    %5 = arith.mulf %2, %4 : vector<128x128xf32>
    %c0_5 = arith.constant 0 : index
    %c0_6 = arith.constant 0 : index
    %6 = vector.load %arg4[%c0_5, %c0_6] : memref<1x128xf32, #tpu.memory_space<vmem>>, vector<1x128xf32>
    %7 = vector.broadcast %6 : vector<1x128xf32> to vector<128x128xf32>
    %8 = arith.addf %5, %7 : vector<128x128xf32>
    %cst_7 = arith.constant 0.000000e+00 : f32
    %9 = vector.broadcast %cst_7 : f32 to vector<128x128xf32>
    %10 = arith.maximumf %8, %9 : vector<128x128xf32>
    %c0_8 = arith.constant 0 : index
    %c0_9 = arith.constant 0 : index
    %11 = vector.load %arg5[%c0_8, %c0_9] : memref<1x128xf32, #tpu.memory_space<vmem>>, vector<1x128xf32>
    %12 = vector.broadcast %11 : vector<1x128xf32> to vector<128x128xf32>
    %13 = arith.mulf %10, %12 : vector<128x128xf32>
    %cst_10 = arith.constant dense<0.000000e+00> : vector<128xf32>
    %14 = vector.multi_reduction <add>, %13, %cst_10 [1] : vector<128x128xf32> to vector<128xf32>
    %15 = vector.shape_cast %14 : vector<128xf32> to vector<128x1xf32>
    %c0_11 = arith.constant 0 : index
    %c0_12 = arith.constant 0 : index
    %16 = vector.load %arg6[%c0_11, %c0_12] : memref<1x1xf32, #tpu.memory_space<vmem>>, vector<1x1xf32>
    %17 = vector.broadcast %16 : vector<1x1xf32> to vector<128x1xf32>
    %18 = arith.addf %15, %17 : vector<128x1xf32>
    %c0_13 = arith.constant 0 : index
    %c0_14 = arith.constant 0 : index
    %19 = vector.load %arg7[%c0_13, %c0_14] : memref<128x1xf32, #tpu.memory_space<vmem>>, vector<128x1xf32>
    tpu.vector_store %arg7[%c0_13, %c0_14], %18 {strides = array<i32>} : memref<128x1xf32, #tpu.memory_space<vmem>>, vector<128x1xf32>,
    return
  }
  func.func @transform_0(%arg0: i32) -> (i32, i32) {
    %c0_i32 = arith.constant 0 : i32
    %c0_i32_0 = arith.constant 0 : i32
    return %arg0, %c0_i32 : i32, i32
  }
  func.func @transform_1(%arg0: i32) -> (i32, i32) {
    %c0_i32 = arith.constant 0 : i32
    %c0_i32_0 = arith.constant 0 : i32
    %c0_i32_1 = arith.constant 0 : i32
    return %c0_i32, %c0_i32_0 : i32, i32
  }
  func.func @transform_2(%arg0: i32) -> (i32, i32) {
    %c0_i32 = arith.constant 0 : i32
    %c0_i32_0 = arith.constant 0 : i32
    %c0_i32_1 = arith.constant 0 : i32
    return %c0_i32, %c0_i32_0 : i32, i32
  }
  func.func @transform_3(%arg0: i32) -> (i32, i32) {
    %c0_i32 = arith.constant 0 : i32
    %c0_i32_0 = arith.constant 0 : i32
    %c0_i32_1 = arith.constant 0 : i32
    return %c0_i32, %c0_i32_0 : i32, i32
  }
  func.func @transform_4(%arg0: i32) -> (i32, i32) {
    %c0_i32 = arith.constant 0 : i32
    %c0_i32_0 = arith.constant 0 : i32
    %c0_i32_1 = arith.constant 0 : i32
    return %c0_i32, %c0_i32_0 : i32, i32
  }
  func.func @transform_5(%arg0: i32) -> (i32, i32) {
    %c0_i32 = arith.constant 0 : i32
    %c0_i32_0 = arith.constant 0 : i32
    %c0_i32_1 = arith.constant 0 : i32
    return %c0_i32, %c0_i32_0 : i32, i32
  }
  func.func @transform_6(%arg0: i32) -> (i32, i32) {
    %c0_i32 = arith.constant 0 : i32
    %c0_i32_0 = arith.constant 0 : i32
    return %arg0, %c0_i32 : i32, i32
  }
}

module attributes {stable_mosaic.version = 11 : i64} {
  func.func @_layer55_fuse_kernel(%arg0: i32, %arg1: memref<1x64x128xf32, #tpu.memory_space<vmem>>, %arg2: memref<4x1x9x128xf32, #tpu.memory_space<vmem>>, %arg3: memref<64x9xf32, #tpu.memory_space<vmem>>, %arg4: memref<1x128xf32, #tpu.memory_space<vmem>>, %arg5: memref<1x128xf32, #tpu.memory_space<vmem>>, %arg6: memref<1x64x128xbf16, #tpu.memory_space<vmem>>) attributes {dimension_semantics = [#tpu.dimension_semantics<parallel>], iteration_bounds = array<i64: 2>, scalar_prefetch = 0 : i64, scratch_operands = 0 : i64, tpu.core_type = #tpu.core_type<tc>, window_params = [{transform_indices = @transform_0, window_bounds = array<i64: 1, 64, 128>}, {transform_indices = @transform_1, window_bounds = array<i64: 4, 1, 9, 128>}, {pipeline_mode = #tpu.pipeline_mode<synchronous>, transform_indices = @transform_2, window_bounds = array<i64: 64, 9>}, {pipeline_mode = #tpu.pipeline_mode<synchronous>, transform_indices = @transform_3, window_bounds = array<i64: 1, 128>}, {pipeline_mode = #tpu.pipeline_mode<synchronous>, transform_indices = @transform_4, window_bounds = array<i64: 1, 128>}, {transform_indices = @transform_5, window_bounds = array<i64: 1, 64, 128>}]} {
    %c0 = arith.constant 0 : index
    %c0_0 = arith.constant 0 : index
    %c0_1 = arith.constant 0 : index
    %0 = vector.load %arg1[%c0, %c0_0, %c0_1] : memref<1x64x128xf32, #tpu.memory_space<vmem>>, vector<1x64x128xf32>
    %1 = vector.shape_cast %0 : vector<1x64x128xf32> to vector<64x128xf32>
    %c0_2 = arith.constant 0 : index
    %c0_3 = arith.constant 0 : index
    %2 = vector.load %arg4[%c0_2, %c0_3] : memref<1x128xf32, #tpu.memory_space<vmem>>, vector<1x128xf32>
    %c0_4 = arith.constant 0 : index
    %c0_5 = arith.constant 0 : index
    %3 = vector.load %arg5[%c0_4, %c0_5] : memref<1x128xf32, #tpu.memory_space<vmem>>, vector<1x128xf32>
    %c0_6 = arith.constant 0 : index
    %c0_7 = arith.constant 0 : index
    %4 = vector.load %arg3[%c0_6, %c0_7] : memref<64x9xf32, #tpu.memory_space<vmem>>, vector<64x9xf32>
    %cst = arith.constant 0.000000e+00 : f32
    %5 = vector.broadcast %cst : f32 to vector<64x128xf32>
    %c0_8 = arith.constant 0 : index
    %c0_9 = arith.constant 0 : index
    %c0_10 = arith.constant 0 : index
    %c0_11 = arith.constant 0 : index
    %6 = vector.load %arg2[%c0_8, %c0_9, %c0_10, %c0_11] : memref<4x1x9x128xf32, #tpu.memory_space<vmem>>, vector<1x1x9x128xf32>
    %7 = vector.shape_cast %6 : vector<1x1x9x128xf32> to vector<9x128xf32>
    %cst_12 = arith.constant dense<0.000000e+00> : vector<64x128xf32>
    %8 = tpu.matmul %4, %7, %cst_12 {dimension_numbers = #tpu.dot_dimension_numbers<[1], [0], [0], [1], [0, 0, 1, 1], [], []>} : vector<64x9xf32>, vector<9x128xf32>, vector<64x128xf32> -> vector<64x128xf32>
    %9 = arith.addf %1, %8 : vector<64x128xf32>
    %10 = vector.broadcast %2 : vector<1x128xf32> to vector<64x128xf32>
    %11 = arith.mulf %9, %10 : vector<64x128xf32>
    %12 = vector.broadcast %3 : vector<1x128xf32> to vector<64x128xf32>
    %13 = arith.addf %11, %12 : vector<64x128xf32>
    %cst_13 = arith.constant 0.000000e+00 : f32
    %14 = vector.broadcast %cst_13 : f32 to vector<64x128xf32>
    %15 = arith.maximumf %13, %14 : vector<64x128xf32>
    %16 = arith.addf %5, %15 : vector<64x128xf32>
    %c1 = arith.constant 1 : index
    %c0_14 = arith.constant 0 : index
    %c0_15 = arith.constant 0 : index
    %c0_16 = arith.constant 0 : index
    %17 = vector.load %arg2[%c1, %c0_14, %c0_15, %c0_16] : memref<4x1x9x128xf32, #tpu.memory_space<vmem>>, vector<1x1x9x128xf32>
    %18 = vector.shape_cast %17 : vector<1x1x9x128xf32> to vector<9x128xf32>
    %cst_17 = arith.constant dense<0.000000e+00> : vector<64x128xf32>
    %19 = tpu.matmul %4, %18, %cst_17 {dimension_numbers = #tpu.dot_dimension_numbers<[1], [0], [0], [1], [0, 0, 1, 1], [], []>} : vector<64x9xf32>, vector<9x128xf32>, vector<64x128xf32> -> vector<64x128xf32>
    %20 = arith.addf %1, %19 : vector<64x128xf32>
    %21 = vector.broadcast %2 : vector<1x128xf32> to vector<64x128xf32>
    %22 = arith.mulf %20, %21 : vector<64x128xf32>
    %23 = vector.broadcast %3 : vector<1x128xf32> to vector<64x128xf32>
    %24 = arith.addf %22, %23 : vector<64x128xf32>
    %cst_18 = arith.constant 0.000000e+00 : f32
    %25 = vector.broadcast %cst_18 : f32 to vector<64x128xf32>
    %26 = arith.maximumf %24, %25 : vector<64x128xf32>
    %27 = arith.addf %16, %26 : vector<64x128xf32>
    %c2 = arith.constant 2 : index
    %c0_19 = arith.constant 0 : index
    %c0_20 = arith.constant 0 : index
    %c0_21 = arith.constant 0 : index
    %28 = vector.load %arg2[%c2, %c0_19, %c0_20, %c0_21] : memref<4x1x9x128xf32, #tpu.memory_space<vmem>>, vector<1x1x9x128xf32>
    %29 = vector.shape_cast %28 : vector<1x1x9x128xf32> to vector<9x128xf32>
    %cst_22 = arith.constant dense<0.000000e+00> : vector<64x128xf32>
    %30 = tpu.matmul %4, %29, %cst_22 {dimension_numbers = #tpu.dot_dimension_numbers<[1], [0], [0], [1], [0, 0, 1, 1], [], []>} : vector<64x9xf32>, vector<9x128xf32>, vector<64x128xf32> -> vector<64x128xf32>
    %31 = arith.addf %1, %30 : vector<64x128xf32>
    %32 = vector.broadcast %2 : vector<1x128xf32> to vector<64x128xf32>
    %33 = arith.mulf %31, %32 : vector<64x128xf32>
    %34 = vector.broadcast %3 : vector<1x128xf32> to vector<64x128xf32>
    %35 = arith.addf %33, %34 : vector<64x128xf32>
    %cst_23 = arith.constant 0.000000e+00 : f32
    %36 = vector.broadcast %cst_23 : f32 to vector<64x128xf32>
    %37 = arith.maximumf %35, %36 : vector<64x128xf32>
    %38 = arith.addf %27, %37 : vector<64x128xf32>
    %c3 = arith.constant 3 : index
    %c0_24 = arith.constant 0 : index
    %c0_25 = arith.constant 0 : index
    %c0_26 = arith.constant 0 : index
    %39 = vector.load %arg2[%c3, %c0_24, %c0_25, %c0_26] : memref<4x1x9x128xf32, #tpu.memory_space<vmem>>, vector<1x1x9x128xf32>
    %40 = vector.shape_cast %39 : vector<1x1x9x128xf32> to vector<9x128xf32>
    %cst_27 = arith.constant dense<0.000000e+00> : vector<64x128xf32>
    %41 = tpu.matmul %4, %40, %cst_27 {dimension_numbers = #tpu.dot_dimension_numbers<[1], [0], [0], [1], [0, 0, 1, 1], [], []>} : vector<64x9xf32>, vector<9x128xf32>, vector<64x128xf32> -> vector<64x128xf32>
    %42 = arith.addf %1, %41 : vector<64x128xf32>
    %43 = vector.broadcast %2 : vector<1x128xf32> to vector<64x128xf32>
    %44 = arith.mulf %42, %43 : vector<64x128xf32>
    %45 = vector.broadcast %3 : vector<1x128xf32> to vector<64x128xf32>
    %46 = arith.addf %44, %45 : vector<64x128xf32>
    %cst_28 = arith.constant 0.000000e+00 : f32
    %47 = vector.broadcast %cst_28 : f32 to vector<64x128xf32>
    %48 = arith.maximumf %46, %47 : vector<64x128xf32>
    %49 = arith.addf %38, %48 : vector<64x128xf32>
    %50 = arith.truncf %49 : vector<64x128xf32> to vector<64x128xbf16>
    %c0_29 = arith.constant 0 : index
    %c0_30 = arith.constant 0 : index
    %c0_31 = arith.constant 0 : index
    %51 = vector.load %arg6[%c0_29, %c0_30, %c0_31] : memref<1x64x128xbf16, #tpu.memory_space<vmem>>, vector<1x64x128xbf16>
    %52 = vector.shape_cast %51 : vector<1x64x128xbf16> to vector<64x128xbf16>
    %53 = vector.shape_cast %50 : vector<64x128xbf16> to vector<1x64x128xbf16>
    tpu.vector_store %arg6[%c0_29, %c0_30, %c0_31], %53 {strides = array<i32>} : memref<1x64x128xbf16, #tpu.memory_space<vmem>>, vector<1x64x128xbf16>,
    return
  }
  func.func @transform_0(%arg0: i32) -> (i32, i32, i32) {
    %c0_i32 = arith.constant 0 : i32
    %c0_i32_0 = arith.constant 0 : i32
    %c0_i32_1 = arith.constant 0 : i32
    return %arg0, %c0_i32, %c0_i32_0 : i32, i32, i32
  }
  func.func @transform_1(%arg0: i32) -> (i32, i32, i32, i32) {
    %c0_i32 = arith.constant 0 : i32
    %c0_i32_0 = arith.constant 0 : i32
    %c0_i32_1 = arith.constant 0 : i32
    %c0_i32_2 = arith.constant 0 : i32
    return %c0_i32, %arg0, %c0_i32_0, %c0_i32_1 : i32, i32, i32, i32
  }
  func.func @transform_2(%arg0: i32) -> (i32, i32) {
    %c0_i32 = arith.constant 0 : i32
    %c0_i32_0 = arith.constant 0 : i32
    %c0_i32_1 = arith.constant 0 : i32
    return %c0_i32, %c0_i32_0 : i32, i32
  }
  func.func @transform_3(%arg0: i32) -> (i32, i32) {
    %c0_i32 = arith.constant 0 : i32
    %c0_i32_0 = arith.constant 0 : i32
    %c0_i32_1 = arith.constant 0 : i32
    return %c0_i32, %c0_i32_0 : i32, i32
  }
  func.func @transform_4(%arg0: i32) -> (i32, i32) {
    %c0_i32 = arith.constant 0 : i32
    %c0_i32_0 = arith.constant 0 : i32
    %c0_i32_1 = arith.constant 0 : i32
    return %c0_i32, %c0_i32_0 : i32, i32
  }
  func.func @transform_5(%arg0: i32) -> (i32, i32, i32) {
    %c0_i32 = arith.constant 0 : i32
    %c0_i32_0 = arith.constant 0 : i32
    %c0_i32_1 = arith.constant 0 : i32
    return %arg0, %c0_i32, %c0_i32_0 : i32, i32, i32
  }
}

module attributes {stable_mosaic.version = 11 : i64} {
  func.func @_layer55_fuse_kernel(%arg0: i32, %arg1: memref<1x64x128xf32, #tpu.memory_space<vmem>>, %arg2: memref<6x1x9x128xf32, #tpu.memory_space<vmem>>, %arg3: memref<64x9xf32, #tpu.memory_space<vmem>>, %arg4: memref<1x128xf32, #tpu.memory_space<vmem>>, %arg5: memref<1x128xf32, #tpu.memory_space<vmem>>, %arg6: memref<1x64x128xbf16, #tpu.memory_space<vmem>>) attributes {dimension_semantics = [#tpu.dimension_semantics<parallel>], iteration_bounds = array<i64: 2>, scalar_prefetch = 0 : i64, scratch_operands = 0 : i64, tpu.core_type = #tpu.core_type<tc>, window_params = [{transform_indices = @transform_0, window_bounds = array<i64: 1, 64, 128>}, {transform_indices = @transform_1, window_bounds = array<i64: 6, 1, 9, 128>}, {pipeline_mode = #tpu.pipeline_mode<synchronous>, transform_indices = @transform_2, window_bounds = array<i64: 64, 9>}, {pipeline_mode = #tpu.pipeline_mode<synchronous>, transform_indices = @transform_3, window_bounds = array<i64: 1, 128>}, {pipeline_mode = #tpu.pipeline_mode<synchronous>, transform_indices = @transform_4, window_bounds = array<i64: 1, 128>}, {transform_indices = @transform_5, window_bounds = array<i64: 1, 64, 128>}]} {
    %c0 = arith.constant 0 : index
    %c0_0 = arith.constant 0 : index
    %c0_1 = arith.constant 0 : index
    %0 = vector.load %arg1[%c0, %c0_0, %c0_1] : memref<1x64x128xf32, #tpu.memory_space<vmem>>, vector<1x64x128xf32>
    %1 = vector.shape_cast %0 : vector<1x64x128xf32> to vector<64x128xf32>
    %c0_2 = arith.constant 0 : index
    %c0_3 = arith.constant 0 : index
    %2 = vector.load %arg4[%c0_2, %c0_3] : memref<1x128xf32, #tpu.memory_space<vmem>>, vector<1x128xf32>
    %c0_4 = arith.constant 0 : index
    %c0_5 = arith.constant 0 : index
    %3 = vector.load %arg5[%c0_4, %c0_5] : memref<1x128xf32, #tpu.memory_space<vmem>>, vector<1x128xf32>
    %c0_6 = arith.constant 0 : index
    %c0_7 = arith.constant 0 : index
    %4 = vector.load %arg3[%c0_6, %c0_7] : memref<64x9xf32, #tpu.memory_space<vmem>>, vector<64x9xf32>
    %cst = arith.constant 0.000000e+00 : f32
    %5 = vector.broadcast %cst : f32 to vector<64x128xf32>
    %c0_8 = arith.constant 0 : index
    %c0_9 = arith.constant 0 : index
    %c0_10 = arith.constant 0 : index
    %c0_11 = arith.constant 0 : index
    %6 = vector.load %arg2[%c0_8, %c0_9, %c0_10, %c0_11] : memref<6x1x9x128xf32, #tpu.memory_space<vmem>>, vector<1x1x9x128xf32>
    %7 = vector.shape_cast %6 : vector<1x1x9x128xf32> to vector<9x128xf32>
    %cst_12 = arith.constant dense<0.000000e+00> : vector<64x128xf32>
    %8 = tpu.matmul %4, %7, %cst_12 {dimension_numbers = #tpu.dot_dimension_numbers<[1], [0], [0], [1], [0, 0, 1, 1], [], []>} : vector<64x9xf32>, vector<9x128xf32>, vector<64x128xf32> -> vector<64x128xf32>
    %9 = arith.addf %1, %8 : vector<64x128xf32>
    %10 = vector.broadcast %2 : vector<1x128xf32> to vector<64x128xf32>
    %11 = arith.mulf %9, %10 : vector<64x128xf32>
    %12 = vector.broadcast %3 : vector<1x128xf32> to vector<64x128xf32>
    %13 = arith.addf %11, %12 : vector<64x128xf32>
    %cst_13 = arith.constant 0.000000e+00 : f32
    %14 = vector.broadcast %cst_13 : f32 to vector<64x128xf32>
    %15 = arith.maximumf %13, %14 : vector<64x128xf32>
    %16 = arith.addf %5, %15 : vector<64x128xf32>
    %c1 = arith.constant 1 : index
    %c0_14 = arith.constant 0 : index
    %c0_15 = arith.constant 0 : index
    %c0_16 = arith.constant 0 : index
    %17 = vector.load %arg2[%c1, %c0_14, %c0_15, %c0_16] : memref<6x1x9x128xf32, #tpu.memory_space<vmem>>, vector<1x1x9x128xf32>
    %18 = vector.shape_cast %17 : vector<1x1x9x128xf32> to vector<9x128xf32>
    %cst_17 = arith.constant dense<0.000000e+00> : vector<64x128xf32>
    %19 = tpu.matmul %4, %18, %cst_17 {dimension_numbers = #tpu.dot_dimension_numbers<[1], [0], [0], [1], [0, 0, 1, 1], [], []>} : vector<64x9xf32>, vector<9x128xf32>, vector<64x128xf32> -> vector<64x128xf32>
    %20 = arith.addf %1, %19 : vector<64x128xf32>
    %21 = vector.broadcast %2 : vector<1x128xf32> to vector<64x128xf32>
    %22 = arith.mulf %20, %21 : vector<64x128xf32>
    %23 = vector.broadcast %3 : vector<1x128xf32> to vector<64x128xf32>
    %24 = arith.addf %22, %23 : vector<64x128xf32>
    %cst_18 = arith.constant 0.000000e+00 : f32
    %25 = vector.broadcast %cst_18 : f32 to vector<64x128xf32>
    %26 = arith.maximumf %24, %25 : vector<64x128xf32>
    %27 = arith.addf %16, %26 : vector<64x128xf32>
    %c2 = arith.constant 2 : index
    %c0_19 = arith.constant 0 : index
    %c0_20 = arith.constant 0 : index
    %c0_21 = arith.constant 0 : index
    %28 = vector.load %arg2[%c2, %c0_19, %c0_20, %c0_21] : memref<6x1x9x128xf32, #tpu.memory_space<vmem>>, vector<1x1x9x128xf32>
    %29 = vector.shape_cast %28 : vector<1x1x9x128xf32> to vector<9x128xf32>
    %cst_22 = arith.constant dense<0.000000e+00> : vector<64x128xf32>
    %30 = tpu.matmul %4, %29, %cst_22 {dimension_numbers = #tpu.dot_dimension_numbers<[1], [0], [0], [1], [0, 0, 1, 1], [], []>} : vector<64x9xf32>, vector<9x128xf32>, vector<64x128xf32> -> vector<64x128xf32>
    %31 = arith.addf %1, %30 : vector<64x128xf32>
    %32 = vector.broadcast %2 : vector<1x128xf32> to vector<64x128xf32>
    %33 = arith.mulf %31, %32 : vector<64x128xf32>
    %34 = vector.broadcast %3 : vector<1x128xf32> to vector<64x128xf32>
    %35 = arith.addf %33, %34 : vector<64x128xf32>
    %cst_23 = arith.constant 0.000000e+00 : f32
    %36 = vector.broadcast %cst_23 : f32 to vector<64x128xf32>
    %37 = arith.maximumf %35, %36 : vector<64x128xf32>
    %38 = arith.addf %27, %37 : vector<64x128xf32>
    %c3 = arith.constant 3 : index
    %c0_24 = arith.constant 0 : index
    %c0_25 = arith.constant 0 : index
    %c0_26 = arith.constant 0 : index
    %39 = vector.load %arg2[%c3, %c0_24, %c0_25, %c0_26] : memref<6x1x9x128xf32, #tpu.memory_space<vmem>>, vector<1x1x9x128xf32>
    %40 = vector.shape_cast %39 : vector<1x1x9x128xf32> to vector<9x128xf32>
    %cst_27 = arith.constant dense<0.000000e+00> : vector<64x128xf32>
    %41 = tpu.matmul %4, %40, %cst_27 {dimension_numbers = #tpu.dot_dimension_numbers<[1], [0], [0], [1], [0, 0, 1, 1], [], []>} : vector<64x9xf32>, vector<9x128xf32>, vector<64x128xf32> -> vector<64x128xf32>
    %42 = arith.addf %1, %41 : vector<64x128xf32>
    %43 = vector.broadcast %2 : vector<1x128xf32> to vector<64x128xf32>
    %44 = arith.mulf %42, %43 : vector<64x128xf32>
    %45 = vector.broadcast %3 : vector<1x128xf32> to vector<64x128xf32>
    %46 = arith.addf %44, %45 : vector<64x128xf32>
    %cst_28 = arith.constant 0.000000e+00 : f32
    %47 = vector.broadcast %cst_28 : f32 to vector<64x128xf32>
    %48 = arith.maximumf %46, %47 : vector<64x128xf32>
    %49 = arith.addf %38, %48 : vector<64x128xf32>
    %c4 = arith.constant 4 : index
    %c0_29 = arith.constant 0 : index
    %c0_30 = arith.constant 0 : index
    %c0_31 = arith.constant 0 : index
    %50 = vector.load %arg2[%c4, %c0_29, %c0_30, %c0_31] : memref<6x1x9x128xf32, #tpu.memory_space<vmem>>, vector<1x1x9x128xf32>
    %51 = vector.shape_cast %50 : vector<1x1x9x128xf32> to vector<9x128xf32>
    %cst_32 = arith.constant dense<0.000000e+00> : vector<64x128xf32>
    %52 = tpu.matmul %4, %51, %cst_32 {dimension_numbers = #tpu.dot_dimension_numbers<[1], [0], [0], [1], [0, 0, 1, 1], [], []>} : vector<64x9xf32>, vector<9x128xf32>, vector<64x128xf32> -> vector<64x128xf32>
    %53 = arith.addf %1, %52 : vector<64x128xf32>
    %54 = vector.broadcast %2 : vector<1x128xf32> to vector<64x128xf32>
    %55 = arith.mulf %53, %54 : vector<64x128xf32>
    %56 = vector.broadcast %3 : vector<1x128xf32> to vector<64x128xf32>
    %57 = arith.addf %55, %56 : vector<64x128xf32>
    %cst_33 = arith.constant 0.000000e+00 : f32
    %58 = vector.broadcast %cst_33 : f32 to vector<64x128xf32>
    %59 = arith.maximumf %57, %58 : vector<64x128xf32>
    %60 = arith.addf %49, %59 : vector<64x128xf32>
    %c5 = arith.constant 5 : index
    %c0_34 = arith.constant 0 : index
    %c0_35 = arith.constant 0 : index
    %c0_36 = arith.constant 0 : index
    %61 = vector.load %arg2[%c5, %c0_34, %c0_35, %c0_36] : memref<6x1x9x128xf32, #tpu.memory_space<vmem>>, vector<1x1x9x128xf32>
    %62 = vector.shape_cast %61 : vector<1x1x9x128xf32> to vector<9x128xf32>
    %cst_37 = arith.constant dense<0.000000e+00> : vector<64x128xf32>
    %63 = tpu.matmul %4, %62, %cst_37 {dimension_numbers = #tpu.dot_dimension_numbers<[1], [0], [0], [1], [0, 0, 1, 1], [], []>} : vector<64x9xf32>, vector<9x128xf32>, vector<64x128xf32> -> vector<64x128xf32>
    %64 = arith.addf %1, %63 : vector<64x128xf32>
    %65 = vector.broadcast %2 : vector<1x128xf32> to vector<64x128xf32>
    %66 = arith.mulf %64, %65 : vector<64x128xf32>
    %67 = vector.broadcast %3 : vector<1x128xf32> to vector<64x128xf32>
    %68 = arith.addf %66, %67 : vector<64x128xf32>
    %cst_38 = arith.constant 0.000000e+00 : f32
    %69 = vector.broadcast %cst_38 : f32 to vector<64x128xf32>
    %70 = arith.maximumf %68, %69 : vector<64x128xf32>
    %71 = arith.addf %60, %70 : vector<64x128xf32>
    %72 = arith.truncf %71 : vector<64x128xf32> to vector<64x128xbf16>
    %c0_39 = arith.constant 0 : index
    %c0_40 = arith.constant 0 : index
    %c0_41 = arith.constant 0 : index
    %73 = vector.load %arg6[%c0_39, %c0_40, %c0_41] : memref<1x64x128xbf16, #tpu.memory_space<vmem>>, vector<1x64x128xbf16>
    %74 = vector.shape_cast %73 : vector<1x64x128xbf16> to vector<64x128xbf16>
    %75 = vector.shape_cast %72 : vector<64x128xbf16> to vector<1x64x128xbf16>
    tpu.vector_store %arg6[%c0_39, %c0_40, %c0_41], %75 {strides = array<i32>} : memref<1x64x128xbf16, #tpu.memory_space<vmem>>, vector<1x64x128xbf16>,
    return
  }
  func.func @transform_0(%arg0: i32) -> (i32, i32, i32) {
    %c0_i32 = arith.constant 0 : i32
    %c0_i32_0 = arith.constant 0 : i32
    %c0_i32_1 = arith.constant 0 : i32
    return %arg0, %c0_i32, %c0_i32_0 : i32, i32, i32
  }
  func.func @transform_1(%arg0: i32) -> (i32, i32, i32, i32) {
    %c0_i32 = arith.constant 0 : i32
    %c0_i32_0 = arith.constant 0 : i32
    %c0_i32_1 = arith.constant 0 : i32
    %c0_i32_2 = arith.constant 0 : i32
    return %c0_i32, %arg0, %c0_i32_0, %c0_i32_1 : i32, i32, i32, i32
  }
  func.func @transform_2(%arg0: i32) -> (i32, i32) {
    %c0_i32 = arith.constant 0 : i32
    %c0_i32_0 = arith.constant 0 : i32
    %c0_i32_1 = arith.constant 0 : i32
    return %c0_i32, %c0_i32_0 : i32, i32
  }
  func.func @transform_3(%arg0: i32) -> (i32, i32) {
    %c0_i32 = arith.constant 0 : i32
    %c0_i32_0 = arith.constant 0 : i32
    %c0_i32_1 = arith.constant 0 : i32
    return %c0_i32, %c0_i32_0 : i32, i32
  }
  func.func @transform_4(%arg0: i32) -> (i32, i32) {
    %c0_i32 = arith.constant 0 : i32
    %c0_i32_0 = arith.constant 0 : i32
    %c0_i32_1 = arith.constant 0 : i32
    return %c0_i32, %c0_i32_0 : i32, i32
  }
  func.func @transform_5(%arg0: i32) -> (i32, i32, i32) {
    %c0_i32 = arith.constant 0 : i32
    %c0_i32_0 = arith.constant 0 : i32
    %c0_i32_1 = arith.constant 0 : i32
    return %arg0, %c0_i32, %c0_i32_0 : i32, i32, i32
  }
}

</mosaic_0001>

<llo_original>
// kernel: one_model_forward.51
$region0: #{one_model_forward.51}
  #allocation0 [shape = 'u32[]', space=smem, size = 0x4, offset = 0x4, fixed_abs, tag = 'smem constant byte address 0x4 - core index']
  #allocation1 [shape = 'u32[144,128]{1,0:T(1,128)}', space=vmem, size = 0x12000, scoped, tag = 'internal scratch']
  %s0 = inlined_call_operand.vmem [shape: bf16[512,27], index: 0, kind: input, shape index: {}]
  %s1 = inlined_call_operand.vmem [shape: bf16[27,128], index: 1, kind: input, shape index: {}]
  %s2 = inlined_call_operand.vmem [shape: f32[1,128], index: 2, kind: input, shape index: {}]
  %s3 = inlined_call_operand.vmem [shape: f32[1,128], index: 3, kind: input, shape index: {}]
  %s4 = inlined_call_operand.vmem [shape: bf16[512,128], index: 4, kind: output, shape index: {}]
  %s5 = sld [smem:[#allocation0]]
  $region49: #{one_model_forward.51} parent=0
    _
  %s7 = ssub.s32 1, %s5
  %s8 = scalar_select 0, %s7, %s5
  loop: start=0, step=1, limit=4
  $region2: #{one_model_forward.51} parent=0 // loop_pre_header
    _
  $region3: #{one_model_forward.51} parent=0 // loop_header
    %s10 = sphi 0, %s14
    %p11 = scmp.ge.s32.totalorder %s10, 4
    %s20 = sphi 0, %s22
    %s23 = sphi 0, %s20
    %s24 = sphi 0, %s23
    %s40 = sphi 0, %s24
    %s44 = sphi 0, %s44
    %s46 = sphi 0, %s44
    %s47 = sphi 0, %s46
    %s61 = sphi 0, %s47
    %s65 = sphi 0, %s65
    %s67 = sphi 0, %s65
    %s68 = sphi 0, %s67
    %s82 = sphi 0, %s68
    %s86 = sphi 0, %s86
    %s88 = sphi 0, %s86
    %s89 = sphi 0, %s88
    %s103 = sphi 0, %s89
    %s109 = sphi 0, %s111
    %s112 = sphi 0, %s109
    %s113 = sphi 0, %s112
    %s129 = sphi 0, %s113
  $region4: #{one_model_forward.51} parent=0 // loop_header_branch
    %13 = sbr.rel (%p11) target = $region8
  $region5: #{one_model_forward.51} parent=0 // loop_body
    %s15 = ssub.s32 %s10, 1
    %s16 = ssub.s32 %s10, 2
    %s17 = sadd.s32 %s10, 1
    %s18 = ssub.s32 %s10, %s17
    %p19 = scmp.eq.s32.totalorder %s18, 0
    %s21 = sadd.s32 %s20, 1
    %s22 = scalar_select %p19, %s20, %s21
    %p25 = pneg %p19
    %p26 = scmp.eq.s32.totalorder %s10, 1
    %p27 = por %p25, %p26
    %p28 = scmp.ne.s32.totalorder %s20, %s23
    %p29 = scmp.eq.s32.totalorder %s10, 0
    %p30 = por %p28, %p29
    %p31 = scmp.ne.s32.totalorder %s20, %s23
    %p32 = scmp.eq.s32.totalorder %s15, 1
    %p33 = por %p31, %p32
    %p34 = scmp.ne.s32.totalorder %s23, %s24
    %p35 = scmp.eq.s32.totalorder %s15, 0
    %p36 = por %p34, %p35
    %p37 = scmp.ne.s32.totalorder %s23, %s24
    %p38 = scmp.eq.s32.totalorder %s16, 1
    %p39 = por %p37, %p38
    %p41 = scmp.ne.s32.totalorder %s24, %s40
    %p42 = scmp.eq.s32.totalorder %s16, 0
    %p43 = por %p41, %p42
    %s45 = sadd.s32 %s44, 1
    %p48 = scmp.eq.s32.totalorder %s10, 1
    %p49 = scmp.ne.s32.totalorder %s44, %s46
    %p50 = scmp.eq.s32.totalorder %s10, 0
    %p51 = por %p49, %p50
    %p52 = scmp.ne.s32.totalorder %s44, %s46
    %p53 = scmp.eq.s32.totalorder %s15, 1
    %p54 = por %p52, %p53
    %p55 = scmp.ne.s32.totalorder %s46, %s47
    %p56 = scmp.eq.s32.totalorder %s15, 0
    %p57 = por %p55, %p56
    %p58 = scmp.ne.s32.totalorder %s46, %s47
    %p59 = scmp.eq.s32.totalorder %s16, 1
    %p60 = por %p58, %p59
    %p62 = scmp.ne.s32.totalorder %s47, %s61
    %p63 = scmp.eq.s32.totalorder %s16, 0
    %p64 = por %p62, %p63
    %s66 = sadd.s32 %s65, 1
    %p69 = scmp.eq.s32.totalorder %s10, 1
    %p70 = scmp.ne.s32.totalorder %s65, %s67
    %p71 = scmp.eq.s32.totalorder %s10, 0
    %p72 = por %p70, %p71
    %p73 = scmp.ne.s32.totalorder %s65, %s67
    %p74 = scmp.eq.s32.totalorder %s15, 1
    %p75 = por %p73, %p74
    %p76 = scmp.ne.s32.totalorder %s67, %s68
    %p77 = scmp.eq.s32.totalorder %s15, 0
    %p78 = por %p76, %p77
    %p79 = scmp.ne.s32.totalorder %s67, %s68
    %p80 = scmp.eq.s32.totalorder %s16, 1
    %p81 = por %p79, %p80
    %p83 = scmp.ne.s32.totalorder %s68, %s82
    %p84 = scmp.eq.s32.totalorder %s16, 0
    %p85 = por %p83, %p84
    %s87 = sadd.s32 %s86, 1
    %p90 = scmp.eq.s32.totalorder %s10, 1
    %p91 = scmp.ne.s32.totalorder %s86, %s88
    %p92 = scmp.eq.s32.totalorder %s10, 0
    %p93 = por %p91, %p92
    %p94 = scmp.ne.s32.totalorder %s86, %s88
    %p95 = scmp.eq.s32.totalorder %s15, 1
    %p96 = por %p94, %p95
    %p97 = scmp.ne.s32.totalorder %s88, %s89
    %p98 = scmp.eq.s32.totalorder %s15, 0
    %p99 = por %p97, %p98
    %p100 = scmp.ne.s32.totalorder %s88, %s89
    %p101 = scmp.eq.s32.totalorder %s16, 1
    %p102 = por %p100, %p101
    %p104 = scmp.ne.s32.totalorder %s89, %s103
    %p105 = scmp.eq.s32.totalorder %s16, 0
    %p106 = por %p104, %p105
    %s107 = ssub.s32 %s10, %s17
    %p108 = scmp.eq.s32.totalorder %s107, 0
    %s110 = sadd.s32 %s109, 1
    %s111 = scalar_select %p108, %s109, %s110
    %p114 = pneg %p108
    %p115 = scmp.eq.s32.totalorder %s10, 1
    %p116 = por %p114, %p115
    %p117 = scmp.ne.s32.totalorder %s109, %s112
    %p118 = scmp.eq.s32.totalorder %s10, 0
    %p119 = por %p117, %p118
    %p120 = scmp.ne.s32.totalorder %s109, %s112
    %p121 = scmp.eq.s32.totalorder %s15, 1
    %p122 = por %p120, %p121
    %p123 = scmp.ne.s32.totalorder %s112, %s113
    %p124 = scmp.eq.s32.totalorder %s15, 0
    %p125 = por %p123, %p124
    %p126 = scmp.ne.s32.totalorder %s112, %s113
    %p127 = scmp.eq.s32.totalorder %s16, 1
    %p128 = por %p126, %p127
    %p130 = scmp.ne.s32.totalorder %s113, %s129
    %p131 = scmp.eq.s32.totalorder %s16, 0
    %p132 = por %p130, %p131
    %p133 = scmp.le.s32.totalorder 1, %s10
    %p134 = scmp.lt.s32.totalorder %s10, 3
    %p135 = pnand %p133, %p134
    %p136 = pneg %p135
    // Predicated region
    $region9: #{one_model_forward.51} parent=5 // pred_check
      _
    $region10: #{one_model_forward.51} parent=5 // pred_check_branch
      %138 = sbr.rel (%p135) target = $region12
    $region11: #{one_model_forward.51} parent=5 // pred_region
      %s139 = ssub.s32 %s10, 1
      // Predicated region
      $region13: #{one_model_forward.51} parent=11 // pred_check
        %p140 = pneg %p57
      $region14: #{one_model_forward.51} parent=11 // pred_check_branch
        %142 = sbr.rel (%p140) target = $region16
      $region15: #{one_model_forward.51} parent=11 // pred_region
        _
      $region16: #{one_model_forward.51} parent=11 // pred_fallthru
        _
      // Predicated region
      $region17: #{one_model_forward.51} parent=11 // pred_check
        %p143 = pneg %p78
      $region18: #{one_model_forward.51} parent=11 // pred_check_branch
        %145 = sbr.rel (%p143) target = $region20
      $region19: #{one_model_forward.51} parent=11 // pred_region
        _
      $region20: #{one_model_forward.51} parent=11 // pred_fallthru
        _
      // Predicated region
      $region21: #{one_model_forward.51} parent=11 // pred_check
        %p146 = pneg %p99
      $region22: #{one_model_forward.51} parent=11 // pred_check_branch
        %148 = sbr.rel (%p146) target = $region24
      $region23: #{one_model_forward.51} parent=11 // pred_region
        _
      $region24: #{one_model_forward.51} parent=11 // pred_fallthru
        _
    $region12: #{one_model_forward.51} parent=5 // pred_fallthru
      _
    %p149 = scmp.lt.s32.totalorder %s10, 2
    // Predicated region
    $region25: #{one_model_forward.51} parent=5 // pred_check
      %p150 = pneg %p149
    $region26: #{one_model_forward.51} parent=5 // pred_check_branch
      %152 = sbr.rel (%p150) target = $region28
    $region27: #{one_model_forward.51} parent=5 // pred_region
      // Predicated region
      $region29: #{one_model_forward.51} parent=27 // pred_check
        %p153 = pneg %p30
      $region30: #{one_model_forward.51} parent=27 // pred_check_branch
        %155 = sbr.rel (%p153) target = $region32
      $region31: #{one_model_forward.51} parent=27 // pred_region
        %s156 = smul.u32 32, %s10
        %p157 = scmp.lt.s32.totalorder %s156, 63
        %s158 = scalar_select %p157, %s156, 63
        %s159 = smul.addr %s158, 4
        %s160 = scalar_lea.vmem %s0, %s159
        %s161 = smul.u32 32, %s10
      $region32: #{one_model_forward.51} parent=27 // pred_fallthru
        _
    $region28: #{one_model_forward.51} parent=5 // pred_fallthru
      _
    %p162 = scmp.le.s32.totalorder 1, %s10
    %p163 = scmp.lt.s32.totalorder %s10, 3
    %p164 = pnand %p162, %p163
    %p165 = pneg %p164
    // Predicated region
    $region33: #{one_model_forward.51} parent=5 // pred_check
      _
    $region34: #{one_model_forward.51} parent=5 // pred_check_branch
      %167 = sbr.rel (%p164) target = $region36
    $region35: #{one_model_forward.51} parent=5 // pred_region
      %s168 = ssub.s32 %s10, 1
      %s169 = smul.u32 32, %s15
      %p170 = scmp.lt.s32.totalorder %s169, 63
      %s171 = scalar_select %p170, %s169, 63
      %s172 = smul.addr %s171, 4
      %s173 = scalar_lea.vmem %s0, %s172
      %p174 = pneg %p36
      %p175 = pneg %p33
      %p176 = pneg %p57
      %p177 = pneg %p54
      %p178 = pneg %p78
      %p179 = pneg %p75
      %p180 = pneg %p99
      %p181 = pneg %p96
      %p182 = pneg %p125
      %p183 = pneg %p122
      %s184 = smul.u32 32, %s15
      %p185 = scmp.lt.s32.totalorder %s184, 63
      %s186 = scalar_select %p185, %s184, 63
      %s187 = smul.addr %s186, 4
      %s188 = scalar_lea.vmem %s4, %s187
      %s189 = smul.u32 32, %s15
      %p190 = scmp.lt.s32.totalorder %s189, 63
      %s191 = scalar_select %p190, %s189, 63
      %s192 = smul.addr %s191, 4
      %s193 = scalar_lea.vmem %s0, %s192
      %s194 = smul.u32 32, %s15
      %s195 = smul.u32 32, %s15
      %p196 = scmp.lt.s32.totalorder %s195, 63
      %s197 = scalar_select %p196, %s195, 63
      %s198 = smul.addr %s197, 4
      %s199 = scalar_lea.vmem %s4, %s198
      %s200 = smul.u32 32, %s15
      %v202 = vld [vmem:[%s193] sm:$0xf]
      %v203 = vld [vmem:[%s193 + $0x4] sm:$0xf]
      %v204 = vld [vmem:[%s193 + $0x8] sm:$0xf]
      %v205 = vld [vmem:[%s193 + $0xc] sm:$0xf]
      %v206 = vld [vmem:[%s193 + $0x10] sm:$0xf]
      %v207 = vld [vmem:[%s193 + $0x14] sm:$0xf]
      %v208 = vld [vmem:[%s193 + $0x18] sm:$0xf]
      %v209 = vld [vmem:[%s193 + $0x1c] sm:$0xf]
      %v210 = vld [vmem:[%s193 + $0x20] sm:$0xf]
      %v211 = vld [vmem:[%s193 + $0x24] sm:$0xf]
      %v212 = vld [vmem:[%s193 + $0x28] sm:$0xf]
      %v213 = vld [vmem:[%s193 + $0x2c] sm:$0xf]
      %v214 = vld [vmem:[%s193 + $0x30] sm:$0xf]
      %v215 = vld [vmem:[%s193 + $0x34] sm:$0xf]
      %v216 = vld [vmem:[%s193 + $0x38] sm:$0xf]
      %v217 = vld [vmem:[%s193 + $0x3c] sm:$0xf]
      %v218 = vld [vmem:[%s193 + $0x40] sm:$0xf]
      %v219 = vld [vmem:[%s193 + $0x44] sm:$0xf]
      %v220 = vld [vmem:[%s193 + $0x48] sm:$0xf]
      %v221 = vld [vmem:[%s193 + $0x4c] sm:$0xf]
      %v222 = vld [vmem:[%s193 + $0x50] sm:$0xf]
      %v223 = vld [vmem:[%s193 + $0x54] sm:$0xf]
      %v224 = vld [vmem:[%s193 + $0x58] sm:$0xf]
      %v225 = vld [vmem:[%s193 + $0x5c] sm:$0xf]
      %v226 = vld [vmem:[%s193 + $0x60] sm:$0xf]
      %v227 = vld [vmem:[%s193 + $0x64] sm:$0xf]
      %v228 = vld [vmem:[%s193 + $0x68] sm:$0xf]
      %v229 = vld [vmem:[%s193 + $0x6c] sm:$0xf]
      %v230 = vld [vmem:[%s193 + $0x70] sm:$0xf]
      %v231 = vld [vmem:[%s193 + $0x74] sm:$0xf]
      %v232 = vld [vmem:[%s193 + $0x78] sm:$0xf]
      %v233 = vld [vmem:[%s193 + $0x7c] sm:$0xf]
      %v234 = vld [vmem:[%s1] sm:$0xf]
      %v235 = vld [vmem:[%s1 + $0x4] sm:$0xf]
      %v236 = vld [vmem:[%s1 + $0x8] sm:$0xf]
      %v237 = vld [vmem:[%s1 + $0xc] sm:$0x3]
      %v270 = vunpack.c.l.b16 %v202
      %v271 = vunpack.c.l.b16 %v203
      %v272 = vunpack.c.l.b16 %v204
      %v273 = vunpack.c.l.b16 %v205
      %v274 = vunpack.c.l.b16 %v206
      %v275 = vunpack.c.l.b16 %v207
      %v276 = vunpack.c.l.b16 %v208
      %v277 = vunpack.c.l.b16 %v209
      %v278 = vunpack.c.l.b16 %v210
      %v279 = vunpack.c.l.b16 %v211
      %v280 = vunpack.c.l.b16 %v212
      %v281 = vunpack.c.l.b16 %v213
      %v282 = vunpack.c.l.b16 %v214
      %v283 = vunpack.c.l.b16 %v215
      %v284 = vunpack.c.l.b16 %v216
      %v285 = vunpack.c.l.b16 %v217
      %v286 = vunpack.c.l.b16 %v218
      %v287 = vunpack.c.l.b16 %v219
      %v288 = vunpack.c.l.b16 %v220
      %v289 = vunpack.c.l.b16 %v221
      %v290 = vunpack.c.l.b16 %v222
      %v291 = vunpack.c.l.b16 %v223
      %v292 = vunpack.c.l.b16 %v224
      %v293 = vunpack.c.l.b16 %v225
      %v294 = vunpack.c.l.b16 %v226
      %v295 = vunpack.c.l.b16 %v227
      %v296 = vunpack.c.l.b16 %v228
      %v297 = vunpack.c.l.b16 %v229
      %v298 = vunpack.c.l.b16 %v230
      %v299 = vunpack.c.l.b16 %v231
      %v300 = vunpack.c.l.b16 %v232
      %v301 = vunpack.c.l.b16 %v233
      %v302 = vpack.c.b16 %v271, %v270
      %v303 = vpack.c.b16 %v273, %v272
      %v304 = vpack.c.b16 %v275, %v274
      %v305 = vpack.c.b16 %v277, %v276
      %v306 = vpack.c.b16 %v279, %v278
      %v307 = vpack.c.b16 %v281, %v280
      %v308 = vpack.c.b16 %v283, %v282
      %v309 = vpack.c.b16 %v285, %v284
      %v310 = vpack.c.b16 %v287, %v286
      %v311 = vpack.c.b16 %v289, %v288
      %v312 = vpack.c.b16 %v291, %v290
      %v313 = vpack.c.b16 %v293, %v292
      %v314 = vpack.c.b16 %v295, %v294
      %v315 = vpack.c.b16 %v297, %v296
      %v316 = vpack.c.b16 %v299, %v298
      %v317 = vpack.c.b16 %v301, %v300
      %v322 = vunpack.c.l.b16 %v234
      %v323 = vunpack.c.l.b16 %v235
      %v324 = vunpack.c.l.b16 %v236
      %v325 = vunpack.c.l.b16 %v237
      %v326 = vpack.c.b16 %v323, %v322
      %v327 = vpack.c.b16 %v325, %v324
      %vm329 = vcmask 220160
      %v331 = vsel %vm329, %v302, 0
      %v334 = vsel %vm329, %v303, 0
      %v337 = vsel %vm329, %v304, 0
      %v340 = vsel %vm329, %v305, 0
      %v343 = vsel %vm329, %v306, 0
      %v346 = vsel %vm329, %v307, 0
      %v349 = vsel %vm329, %v308, 0
      %v352 = vsel %vm329, %v309, 0
      %v355 = vsel %vm329, %v310, 0
      %v358 = vsel %vm329, %v311, 0
      %v361 = vsel %vm329, %v312, 0
      %v364 = vsel %vm329, %v313, 0
      %v367 = vsel %vm329, %v314, 0
      %v370 = vsel %vm329, %v315, 0
      %v373 = vsel %vm329, %v316, 0
      %v376 = vsel %vm329, %v317, 0
      %vm378 = vcmask 1044480
      %vm379 = vcmask 1045504
      %v380 = vsel %vm378, 4294967295, 65535
      %v381 = vsel %vm379, %v380, 0
      %v383 = vand.u32 %v327, %v381
      %385 = vmatprep.subr.bf16.mxu0 0
      %386 = vmatpush1.bf16.msra.mxu0 0
      %387 = vmatprep.subr.bf16.mxu0 0
      %388 = vmatpush1.bf16.msra.mxu0 0
      %389 = vmatprep.subr.bf16.mxu0 0
      %390 = vmatpush1.bf16.msra.mxu0 0
      %391 = vmatprep.subr.bf16.mxu0 0
      %392 = vmatpush1.bf16.msra.mxu0 0
      %393 = vmatprep.subr.bf16.mxu0 0
      %394 = vmatpush1.bf16.msra.mxu0 0
      %395 = vmatprep.subr.bf16.mxu0 0
      %396 = vmatpush1.bf16.msra.mxu0 0
      %397 = vmatprep.subr.bf16.mxu0 0
      %398 = vmatpush1.bf16.msra.mxu0 %v383
      %399 = vmatprep.subr.bf16.mxu0 0
      %400 = vmatpush1.bf16.msra.mxu0 %v326
      %401 = vmatprep.subr.bf16.mxu0 0
      %402 = vmatpush2.bf16.msra.mxu0 0
      %403 = vmatprep.subr.bf16.mxu0 0
      %404 = vmatpush2.bf16.msra.mxu0 0
      %405 = vmatprep.subr.bf16.mxu0 0
      %406 = vmatpush2.bf16.msra.mxu0 0
      %407 = vmatprep.subr.bf16.mxu0 0
      %408 = vmatpush2.bf16.msra.mxu0 0
      %409 = vmatprep.subr.bf16.mxu0 0
      %410 = vmatpush2.bf16.msra.mxu0 0
      %411 = vmatprep.subr.bf16.mxu0 0
      %412 = vmatpush2.bf16.msra.mxu0 0
      %413 = vmatprep.subr.bf16.mxu0 0
      %414 = vmatpush2.bf16.msra.mxu0 0
      %415 = vmatprep.subr.bf16.mxu0 0
      %416 = vmatpush2.bf16.msra.mxu0 0
      %417 = vmatprep.mubr.bf16.mxu0 0
      %418 = vmatmul.mubr.bf16.gmra.mxu0 %v331
      %v419 = vpop.f32.mrf.mxu0
      %v420 = vadd.f32 0.0, %v419
      %v421 = vpop.f32.mrf.mxu0
      %v422 = vpop.f32.mrf.mxu0
      %v423 = vadd.f32 0.0, %v422
      %v424 = vpop.f32.mrf.mxu0
      %425 = vmatprep.mubr.bf16.mxu0 0
      %426 = vmatmul.mubr.bf16.gmra.mxu0 %v334
      %v427 = vpop.f32.mrf.mxu0
      %v428 = vadd.f32 0.0, %v427
      %v429 = vpop.f32.mrf.mxu0
      %v430 = vpop.f32.mrf.mxu0
      %v431 = vadd.f32 0.0, %v430
      %v432 = vpop.f32.mrf.mxu0
      %433 = vmatprep.mubr.bf16.mxu0 0
      %434 = vmatmul.mubr.bf16.gmra.mxu0 %v337
      %v435 = vpop.f32.mrf.mxu0
      %v436 = vadd.f32 0.0, %v435
      %v437 = vpop.f32.mrf.mxu0
      %v438 = vpop.f32.mrf.mxu0
      %v439 = vadd.f32 0.0, %v438
      %v440 = vpop.f32.mrf.mxu0
      %441 = vmatprep.mubr.bf16.mxu0 0
      %442 = vmatmul.mubr.bf16.gmra.mxu0 %v340
      %v443 = vpop.f32.mrf.mxu0
      %v444 = vadd.f32 0.0, %v443
      %v445 = vpop.f32.mrf.mxu0
      %v446 = vpop.f32.mrf.mxu0
      %v447 = vadd.f32 0.0, %v446
      %v448 = vpop.f32.mrf.mxu0
      %449 = vmatprep.mubr.bf16.mxu0 0
      %450 = vmatmul.mubr.bf16.gmra.mxu0 %v343
      %v451 = vpop.f32.mrf.mxu0
      %v452 = vadd.f32 0.0, %v451
      %v453 = vpop.f32.mrf.mxu0
      %v454 = vpop.f32.mrf.mxu0
      %v455 = vadd.f32 0.0, %v454
      %v456 = vpop.f32.mrf.mxu0
      %457 = vmatprep.mubr.bf16.mxu0 0
      %458 = vmatmul.mubr.bf16.gmra.mxu0 %v346
      %v459 = vpop.f32.mrf.mxu0
      %v460 = vadd.f32 0.0, %v459
      %v461 = vpop.f32.mrf.mxu0
      %v462 = vpop.f32.mrf.mxu0
      %v463 = vadd.f32 0.0, %v462
      %v464 = vpop.f32.mrf.mxu0
      %465 = vmatprep.mubr.bf16.mxu0 0
      %466 = vmatmul.mubr.bf16.gmra.mxu0 %v349
      %v467 = vpop.f32.mrf.mxu0
      %v468 = vadd.f32 0.0, %v467
      %v469 = vpop.f32.mrf.mxu0
      %v470 = vpop.f32.mrf.mxu0
      %v471 = vadd.f32 0.0, %v470
      %v472 = vpop.f32.mrf.mxu0
      %473 = vmatprep.mubr.bf16.mxu0 0
      %474 = vmatmul.mubr.bf16.gmra.mxu0 %v352
      %v475 = vpop.f32.mrf.mxu0
      %v476 = vadd.f32 0.0, %v475
      %v477 = vpop.f32.mrf.mxu0
      %v478 = vpop.f32.mrf.mxu0
      %v479 = vadd.f32 0.0, %v478
      %v480 = vpop.f32.mrf.mxu0
      %481 = vmatprep.mubr.bf16.mxu0 0
      %482 = vmatmul.mubr.bf16.gmra.mxu0 %v355
      %v483 = vpop.f32.mrf.mxu0
      %v484 = vadd.f32 0.0, %v483
      %v485 = vpop.f32.mrf.mxu0
      %v486 = vpop.f32.mrf.mxu0
      %v487 = vadd.f32 0.0, %v486
      %v488 = vpop.f32.mrf.mxu0
      %489 = vmatprep.mubr.bf16.mxu0 0
      %490 = vmatmul.mubr.bf16.gmra.mxu0 %v358
      %v491 = vpop.f32.mrf.mxu0
      %v492 = vadd.f32 0.0, %v491
      %v493 = vpop.f32.mrf.mxu0
      %v494 = vpop.f32.mrf.mxu0
      %v495 = vadd.f32 0.0, %v494
      %v496 = vpop.f32.mrf.mxu0
      %497 = vmatprep.mubr.bf16.mxu0 0
      %498 = vmatmul.mubr.bf16.gmra.mxu0 %v361
      %v499 = vpop.f32.mrf.mxu0
      %v500 = vadd.f32 0.0, %v499
      %v501 = vpop.f32.mrf.mxu0
      %v502 = vpop.f32.mrf.mxu0
      %v503 = vadd.f32 0.0, %v502
      %v504 = vpop.f32.mrf.mxu0
      %505 = vmatprep.mubr.bf16.mxu0 0
      %506 = vmatmul.mubr.bf16.gmra.mxu0 %v364
      %v507 = vpop.f32.mrf.mxu0
      %v508 = vadd.f32 0.0, %v507
      %v509 = vpop.f32.mrf.mxu0
      %v510 = vpop.f32.mrf.mxu0
      %v511 = vadd.f32 0.0, %v510
      %v512 = vpop.f32.mrf.mxu0
      %513 = vmatprep.mubr.bf16.mxu0 0
      %514 = vmatmul.mubr.bf16.gmra.mxu0 %v367
      %v515 = vpop.f32.mrf.mxu0
      %v516 = vadd.f32 0.0, %v515
      %v517 = vpop.f32.mrf.mxu0
      %v518 = vpop.f32.mrf.mxu0
      %v519 = vadd.f32 0.0, %v518
      %v520 = vpop.f32.mrf.mxu0
      %521 = vmatprep.mubr.bf16.mxu0 0
      %522 = vmatmul.mubr.bf16.gmra.mxu0 %v370
      %v523 = vpop.f32.mrf.mxu0
      %v524 = vadd.f32 0.0, %v523
      %v525 = vpop.f32.mrf.mxu0
      %v526 = vpop.f32.mrf.mxu0
      %v527 = vadd.f32 0.0, %v526
      %v528 = vpop.f32.mrf.mxu0
      %529 = vmatprep.mubr.bf16.mxu0 0
      %530 = vmatmul.mubr.bf16.gmra.mxu0 %v373
      %v531 = vpop.f32.mrf.mxu0
      %v532 = vadd.f32 0.0, %v531
      %v533 = vpop.f32.mrf.mxu0
      %v534 = vpop.f32.mrf.mxu0
      %v535 = vadd.f32 0.0, %v534
      %v536 = vpop.f32.mrf.mxu0
      %537 = vmatprep.mubr.bf16.mxu0 0
      %538 = vmatmul.mubr.bf16.gmra.mxu0 %v376
      %v539 = vpop.f32.mrf.mxu0
      %v540 = vadd.f32 0.0, %v539
      %v541 = vpop.f32.mrf.mxu0
      %v542 = vpop.f32.mrf.mxu0
      %v543 = vadd.f32 0.0, %v542
      %v544 = vpop.f32.mrf.mxu0
      %545 = vdwg.mxu0
      %v546 = vld [vmem:[%s2] sm:$0x1]
      %v548 = vlaneseq
      %v549 = vshrl.u32 %v548, 7
      %v550 = vsub.s32 0, %v549
      %v551 = vrot.slane %v546, %v550
      %v553 = vmul.f32 %v420, %v551
      %v554 = vmul.f32 %v423, %v551
      %v555 = vmul.f32 %v428, %v551
      %v556 = vmul.f32 %v431, %v551
      %v557 = vmul.f32 %v436, %v551
      %v558 = vmul.f32 %v439, %v551
      %v559 = vmul.f32 %v444, %v551
      %v560 = vmul.f32 %v447, %v551
      %v561 = vmul.f32 %v452, %v551
      %v562 = vmul.f32 %v455, %v551
      %v563 = vmul.f32 %v460, %v551
      %v564 = vmul.f32 %v463, %v551
      %v565 = vmul.f32 %v468, %v551
      %v566 = vmul.f32 %v471, %v551
      %v567 = vmul.f32 %v476, %v551
      %v568 = vmul.f32 %v479, %v551
      %v569 = vmul.f32 %v484, %v551
      %v570 = vmul.f32 %v487, %v551
      %v571 = vmul.f32 %v492, %v551
      %v572 = vmul.f32 %v495, %v551
      %v573 = vmul.f32 %v500, %v551
      %v574 = vmul.f32 %v503, %v551
      %v575 = vmul.f32 %v508, %v551
      %v576 = vmul.f32 %v511, %v551
      %v577 = vmul.f32 %v516, %v551
      %v578 = vmul.f32 %v519, %v551
      %v579 = vmul.f32 %v524, %v551
      %v580 = vmul.f32 %v527, %v551
      %v581 = vmul.f32 %v532, %v551
      %v582 = vmul.f32 %v535, %v551
      %v583 = vmul.f32 %v540, %v551
      %v584 = vmul.f32 %v543, %v551
      %v585 = vld [vmem:[%s3] sm:$0x1]
      %v587 = vlaneseq
      %v588 = vshrl.u32 %v587, 7
      %v589 = vsub.s32 0, %v588
      %v590 = vrot.slane %v585, %v589
      %v592 = vadd.f32 %v553, %v590
      %v593 = vadd.f32 %v554, %v590
      %v594 = vadd.f32 %v555, %v590
      %v595 = vadd.f32 %v556, %v590
      %v596 = vadd.f32 %v557, %v590
      %v597 = vadd.f32 %v558, %v590
      %v598 = vadd.f32 %v559, %v590
      %v599 = vadd.f32 %v560, %v590
      %v600 = vadd.f32 %v561, %v590
      %v601 = vadd.f32 %v562, %v590
      %v602 = vadd.f32 %v563, %v590
      %v603 = vadd.f32 %v564, %v590
      %v604 = vadd.f32 %v565, %v590
      %v605 = vadd.f32 %v566, %v590
      %v606 = vadd.f32 %v567, %v590
      %v607 = vadd.f32 %v568, %v590
      %v608 = vadd.f32 %v569, %v590
      %v609 = vadd.f32 %v570, %v590
      %v610 = vadd.f32 %v571, %v590
      %v611 = vadd.f32 %v572, %v590
      %v612 = vadd.f32 %v573, %v590
      %v613 = vadd.f32 %v574, %v590
      %v614 = vadd.f32 %v575, %v590
      %v615 = vadd.f32 %v576, %v590
      %v616 = vadd.f32 %v577, %v590
      %v617 = vadd.f32 %v578, %v590
      %v618 = vadd.f32 %v579, %v590
      %v619 = vadd.f32 %v580, %v590
      %v620 = vadd.f32 %v581, %v590
      %v621 = vadd.f32 %v582, %v590
      %v622 = vadd.f32 %v583, %v590
      %v623 = vadd.f32 %v584, %v590
      %v624 = vmax.f32 %v592, 0.0
      %v625 = vmax.f32 %v593, 0.0
      %v626 = vmax.f32 %v594, 0.0
      %v627 = vmax.f32 %v595, 0.0
      %v628 = vmax.f32 %v596, 0.0
      %v629 = vmax.f32 %v597, 0.0
      %v630 = vmax.f32 %v598, 0.0
      %v631 = vmax.f32 %v599, 0.0
      %v632 = vmax.f32 %v600, 0.0
      %v633 = vmax.f32 %v601, 0.0
      %v634 = vmax.f32 %v602, 0.0
      %v635 = vmax.f32 %v603, 0.0
      %v636 = vmax.f32 %v604, 0.0
      %v637 = vmax.f32 %v605, 0.0
      %v638 = vmax.f32 %v606, 0.0
      %v639 = vmax.f32 %v607, 0.0
      %v640 = vmax.f32 %v608, 0.0
      %v641 = vmax.f32 %v609, 0.0
      %v642 = vmax.f32 %v610, 0.0
      %v643 = vmax.f32 %v611, 0.0
      %v644 = vmax.f32 %v612, 0.0
      %v645 = vmax.f32 %v613, 0.0
      %v646 = vmax.f32 %v614, 0.0
      %v647 = vmax.f32 %v615, 0.0
      %v648 = vmax.f32 %v616, 0.0
      %v649 = vmax.f32 %v617, 0.0
      %v650 = vmax.f32 %v618, 0.0
      %v651 = vmax.f32 %v619, 0.0
      %v652 = vmax.f32 %v620, 0.0
      %v653 = vmax.f32 %v621, 0.0
      %v654 = vmax.f32 %v622, 0.0
      %v655 = vmax.f32 %v623, 0.0
      %v656 = vpack.c.bf16 %v625, %v624
      %v657 = vpack.c.bf16 %v627, %v626
      %v658 = vpack.c.bf16 %v629, %v628
      %v659 = vpack.c.bf16 %v631, %v630
      %v660 = vpack.c.bf16 %v633, %v632
      %v661 = vpack.c.bf16 %v635, %v634
      %v662 = vpack.c.bf16 %v637, %v636
      %v663 = vpack.c.bf16 %v639, %v638
      %v664 = vpack.c.bf16 %v641, %v640
      %v665 = vpack.c.bf16 %v643, %v642
      %v666 = vpack.c.bf16 %v645, %v644
      %v667 = vpack.c.bf16 %v647, %v646
      %v668 = vpack.c.bf16 %v649, %v648
      %v669 = vpack.c.bf16 %v651, %v650
      %v670 = vpack.c.bf16 %v653, %v652
      %v671 = vpack.c.bf16 %v655, %v654
      %v688 = vunpack.c.l.b16 %v656
      %v689 = vunpack.c.h.b16 %v656
      %v690 = vunpack.c.l.b16 %v657
      %v691 = vunpack.c.h.b16 %v657
      %v692 = vunpack.c.l.b16 %v658
      %v693 = vunpack.c.h.b16 %v658
      %v694 = vunpack.c.l.b16 %v659
      %v695 = vunpack.c.h.b16 %v659
      %v696 = vunpack.c.l.b16 %v660
      %v697 = vunpack.c.h.b16 %v660
      %v698 = vunpack.c.l.b16 %v661
      %v699 = vunpack.c.h.b16 %v661
      %v700 = vunpack.c.l.b16 %v662
      %v701 = vunpack.c.h.b16 %v662
      %v702 = vunpack.c.l.b16 %v663
      %v703 = vunpack.c.h.b16 %v663
      %v704 = vunpack.c.l.b16 %v664
      %v705 = vunpack.c.h.b16 %v664
      %v706 = vunpack.c.l.b16 %v665
      %v707 = vunpack.c.h.b16 %v665
      %v708 = vunpack.c.l.b16 %v666
      %v709 = vunpack.c.h.b16 %v666
      %v710 = vunpack.c.l.b16 %v667
      %v711 = vunpack.c.h.b16 %v667
      %v712 = vunpack.c.l.b16 %v668
      %v713 = vunpack.c.h.b16 %v668
      %v714 = vunpack.c.l.b16 %v669
      %v715 = vunpack.c.h.b16 %v669
      %v716 = vunpack.c.l.b16 %v670
      %v717 = vunpack.c.h.b16 %v670
      %v718 = vunpack.c.l.b16 %v671
      %v719 = vunpack.c.h.b16 %v671
      %v720 = vpack.c.b16 %v688, %v688
      %v721 = vpack.c.b16 %v689, %v689
      %v722 = vpack.c.b16 %v690, %v690
      %v723 = vpack.c.b16 %v691, %v691
      %v724 = vpack.c.b16 %v692, %v692
      %v725 = vpack.c.b16 %v693, %v693
      %v726 = vpack.c.b16 %v694, %v694
      %v727 = vpack.c.b16 %v695, %v695
      %v728 = vpack.c.b16 %v696, %v696
      %v729 = vpack.c.b16 %v697, %v697
      %v730 = vpack.c.b16 %v698, %v698
      %v731 = vpack.c.b16 %v699, %v699
      %v732 = vpack.c.b16 %v700, %v700
      %v733 = vpack.c.b16 %v701, %v701
      %v734 = vpack.c.b16 %v702, %v702
      %v735 = vpack.c.b16 %v703, %v703
      %v736 = vpack.c.b16 %v704, %v704
      %v737 = vpack.c.b16 %v705, %v705
      %v738 = vpack.c.b16 %v706, %v706
      %v739 = vpack.c.b16 %v707, %v707
      %v740 = vpack.c.b16 %v708, %v708
      %v741 = vpack.c.b16 %v709, %v709
      %v742 = vpack.c.b16 %v710, %v710
      %v743 = vpack.c.b16 %v711, %v711
      %v744 = vpack.c.b16 %v712, %v712
      %v745 = vpack.c.b16 %v713, %v713
      %v746 = vpack.c.b16 %v714, %v714
      %v747 = vpack.c.b16 %v715, %v715
      %v748 = vpack.c.b16 %v716, %v716
      %v749 = vpack.c.b16 %v717, %v717
      %v750 = vpack.c.b16 %v718, %v718
      %v751 = vpack.c.b16 %v719, %v719
      %784 = vst [vmem:[%s199] sm:$0xf] %v720
      %785 = vst [vmem:[%s199 + $0x4] sm:$0xf] %v721
      %786 = vst [vmem:[%s199 + $0x8] sm:$0xf] %v722
      %787 = vst [vmem:[%s199 + $0xc] sm:$0xf] %v723
      %788 = vst [vmem:[%s199 + $0x10] sm:$0xf] %v724
      %789 = vst [vmem:[%s199 + $0x14] sm:$0xf] %v725
      %790 = vst [vmem:[%s199 + $0x18] sm:$0xf] %v726
      %791 = vst [vmem:[%s199 + $0x1c] sm:$0xf] %v727
      %792 = vst [vmem:[%s199 + $0x20] sm:$0xf] %v728
      %793 = vst [vmem:[%s199 + $0x24] sm:$0xf] %v729
      %794 = vst [vmem:[%s199 + $0x28] sm:$0xf] %v730
      %795 = vst [vmem:[%s199 + $0x2c] sm:$0xf] %v731
      %796 = vst [vmem:[%s199 + $0x30] sm:$0xf] %v732
      %797 = vst [vmem:[%s199 + $0x34] sm:$0xf] %v733
      %798 = vst [vmem:[%s199 + $0x38] sm:$0xf] %v734
      %799 = vst [vmem:[%s199 + $0x3c] sm:$0xf] %v735
      %800 = vst [vmem:[%s199 + $0x40] sm:$0xf] %v736
      %801 = vst [vmem:[%s199 + $0x44] sm:$0xf] %v737
      %802 = vst [vmem:[%s199 + $0x48] sm:$0xf] %v738
      %803 = vst [vmem:[%s199 + $0x4c] sm:$0xf] %v739
      %804 = vst [vmem:[%s199 + $0x50] sm:$0xf] %v740
      %805 = vst [vmem:[%s199 + $0x54] sm:$0xf] %v741
      %806 = vst [vmem:[%s199 + $0x58] sm:$0xf] %v742
      %807 = vst [vmem:[%s199 + $0x5c] sm:$0xf] %v743
      %808 = vst [vmem:[%s199 + $0x60] sm:$0xf] %v744
      %809 = vst [vmem:[%s199 + $0x64] sm:$0xf] %v745
      %810 = vst [vmem:[%s199 + $0x68] sm:$0xf] %v746
      %811 = vst [vmem:[%s199 + $0x6c] sm:$0xf] %v747
      %812 = vst [vmem:[%s199 + $0x70] sm:$0xf] %v748
      %813 = vst [vmem:[%s199 + $0x74] sm:$0xf] %v749
      %814 = vst [vmem:[%s199 + $0x78] sm:$0xf] %v750
      %815 = vst [vmem:[%s199 + $0x7c] sm:$0xf] %v751
      %s816 = smul.u32 32, %s15
      %p817 = scmp.lt.s32.totalorder %s816, 63
      %s818 = scalar_select %p817, %s816, 63
      %s819 = smul.addr %s818, 4
      %s820 = scalar_lea.vmem %s4, %s819
      // Predicated region
      $region37: #{one_model_forward.51} parent=35 // pred_check
        %p821 = pneg %p122
      $region38: #{one_model_forward.51} parent=35 // pred_check_branch
        %823 = sbr.rel (%p821) target = $region40
      $region39: #{one_model_forward.51} parent=35 // pred_region
        %s824 = smul.u32 32, %s15
      $region40: #{one_model_forward.51} parent=35 // pred_fallthru
        _
    $region36: #{one_model_forward.51} parent=5 // pred_fallthru
      _
    %p825 = scmp.le.s32.totalorder 2, %s10
    // Predicated region
    $region41: #{one_model_forward.51} parent=5 // pred_check
      %p826 = pneg %p825
    $region42: #{one_model_forward.51} parent=5 // pred_check_branch
      %828 = sbr.rel (%p826) target = $region44
    $region43: #{one_model_forward.51} parent=5 // pred_region
      %s829 = ssub.s32 %s10, 2
      // Predicated region
      $region45: #{one_model_forward.51} parent=43 // pred_check
        %p830 = pneg %p128
      $region46: #{one_model_forward.51} parent=43 // pred_check_branch
        %832 = sbr.rel (%p830) target = $region48
      $region47: #{one_model_forward.51} parent=43 // pred_region
        %s833 = smul.u32 32, %s16
        %p834 = scmp.lt.s32.totalorder %s833, 63
        %s835 = scalar_select %p834, %s833, 63
        %s836 = smul.addr %s835, 4
        %s837 = scalar_lea.vmem %s4, %s836
      $region48: #{one_model_forward.51} parent=43 // pred_fallthru
        _
    $region44: #{one_model_forward.51} parent=5 // pred_fallthru
      _
  $region6: #{one_model_forward.51} parent=0 // loop_footer
    %s14 = sadd.s32 1, %s10
  $region7: #{one_model_forward.51} parent=0 // loop_footer_branch
    %9 = sbr.rel target = $region3
  $region8: #{one_model_forward.51} parent=0 // loop_exit
    _

// kernel: one_model_forward.52
$region0: #{one_model_forward.52}
  #allocation0 [shape = 'u32[]', space=smem, size = 0x4, offset = 0x4, fixed_abs, tag = 'smem constant byte address 0x4 - core index']
  #allocation1 [shape = 'u32[144,128]{1,0:T(1,128)}', space=vmem, size = 0x12000, scoped, tag = 'internal scratch']
  %s0 = inlined_call_operand.vmem [shape: bf16[128,432], index: 0, kind: input, shape index: {}]
  %s1 = inlined_call_operand.vmem [shape: bf16[432,128], index: 1, kind: input, shape index: {}]
  %s2 = inlined_call_operand.vmem [shape: f32[1,128], index: 2, kind: input, shape index: {}]
  %s3 = inlined_call_operand.vmem [shape: f32[1,128], index: 3, kind: input, shape index: {}]
  %s4 = inlined_call_operand.vmem [shape: bf16[128,128], index: 4, kind: output, shape index: {}]
  %s5 = sld [smem:[#allocation0]]
  $region26: #{one_model_forward.52} parent=0
    _
  %s7 = ssub.s32 1, %s5
  %s8 = scalar_select 0, %s7, %s5
  // Predicated region
  $region2: #{one_model_forward.52} parent=0 // pred_check
    _
  $region3: #{one_model_forward.52} parent=0 // pred_check_branch
    %10 = sbr.rel (0) target = $region5
  $region4: #{one_model_forward.52} parent=0 // pred_region
    _
  $region5: #{one_model_forward.52} parent=0 // pred_fallthru
    _
  // Predicated region
  $region6: #{one_model_forward.52} parent=0 // pred_check
    _
  $region7: #{one_model_forward.52} parent=0 // pred_check_branch
    %12 = sbr.rel (0) target = $region9
  $region8: #{one_model_forward.52} parent=0 // pred_region
    _
  $region9: #{one_model_forward.52} parent=0 // pred_fallthru
    _
  // Predicated region
  $region10: #{one_model_forward.52} parent=0 // pred_check
    _
  $region11: #{one_model_forward.52} parent=0 // pred_check_branch
    %14 = sbr.rel (0) target = $region13
  $region12: #{one_model_forward.52} parent=0 // pred_region
    _
  $region13: #{one_model_forward.52} parent=0 // pred_fallthru
    _
  // Predicated region
  $region14: #{one_model_forward.52} parent=0 // pred_check
    _
  $region15: #{one_model_forward.52} parent=0 // pred_check_branch
    %16 = sbr.rel (0) target = $region17
  $region16: #{one_model_forward.52} parent=0 // pred_region
    _
  $region17: #{one_model_forward.52} parent=0 // pred_fallthru
    _
  %v18 = vld [vmem:[%s0] sm:$0xff]
  %v19 = vld [vmem:[%s0 + $0x8] sm:$0xff]
  %v20 = vld [vmem:[%s0 + $0x10] sm:$0xff]
  %v21 = vld [vmem:[%s0 + $0x18] sm:$0xff]
  %v22 = vld [vmem:[%s0 + $0x20] sm:$0xff]
  %v23 = vld [vmem:[%s0 + $0x28] sm:$0xff]
  %v24 = vld [vmem:[%s0 + $0x30] sm:$0xff]
  %v25 = vld [vmem:[%s0 + $0x38] sm:$0xff]
  %v26 = vld [vmem:[%s0 + $0x40] sm:$0xff]
  %v27 = vld [vmem:[%s0 + $0x48] sm:$0xff]
  %v28 = vld [vmem:[%s0 + $0x50] sm:$0xff]
  %v29 = vld [vmem:[%s0 + $0x58] sm:$0xff]
  %v30 = vld [vmem:[%s0 + $0x60] sm:$0xff]
  %v31 = vld [vmem:[%s0 + $0x68] sm:$0xff]
  %v32 = vld [vmem:[%s0 + $0x70] sm:$0xff]
  %v33 = vld [vmem:[%s0 + $0x78] sm:$0xff]
  %v34 = vld [vmem:[%s0 + $0x80] sm:$0xff]
  %v35 = vld [vmem:[%s0 + $0x88] sm:$0xff]
  %v36 = vld [vmem:[%s0 + $0x90] sm:$0xff]
  %v37 = vld [vmem:[%s0 + $0x98] sm:$0xff]
  %v38 = vld [vmem:[%s0 + $0xa0] sm:$0xff]
  %v39 = vld [vmem:[%s0 + $0xa8] sm:$0xff]
  %v40 = vld [vmem:[%s0 + $0xb0] sm:$0xff]
  %v41 = vld [vmem:[%s0 + $0xb8] sm:$0xff]
  %v42 = vld [vmem:[%s0 + $0xc0] sm:$0xff]
  %v43 = vld [vmem:[%s0 + $0xc8] sm:$0xff]
  %v44 = vld [vmem:[%s0 + $0xd0] sm:$0xff]
  %v45 = vld [vmem:[%s0 + $0xd8] sm:$0xff]
  %v46 = vld [vmem:[%s0 + $0xe0] sm:$0xff]
  %v47 = vld [vmem:[%s0 + $0xe8] sm:$0xff]
  %v48 = vld [vmem:[%s0 + $0xf0] sm:$0xff]
  %v49 = vld [vmem:[%s0 + $0xf8] sm:$0xff]
  %v50 = vld [vmem:[%s1] sm:$0xf]
  %v51 = vld [vmem:[%s1 + $0x4] sm:$0xf]
  %v52 = vld [vmem:[%s1 + $0x8] sm:$0xf]
  %v53 = vld [vmem:[%s1 + $0xc] sm:$0xf]
  %v54 = vld [vmem:[%s1 + $0x10] sm:$0xf]
  %v55 = vld [vmem:[%s1 + $0x14] sm:$0xf]
  %v56 = vld [vmem:[%s1 + $0x18] sm:$0xf]
  %v57 = vld [vmem:[%s1 + $0x1c] sm:$0xf]
  %v58 = vld [vmem:[%s1 + $0x20] sm:$0xf]
  %v59 = vld [vmem:[%s1 + $0x24] sm:$0xf]
  %v60 = vld [vmem:[%s1 + $0x28] sm:$0xf]
  %v61 = vld [vmem:[%s1 + $0x2c] sm:$0xf]
  %v62 = vld [vmem:[%s1 + $0x30] sm:$0xf]
  %v63 = vld [vmem:[%s1 + $0x34] sm:$0xf]
  %v64 = vld [vmem:[%s1 + $0x38] sm:$0xf]
  %v65 = vld [vmem:[%s1 + $0x3c] sm:$0xf]
  %v66 = vld [vmem:[%s1 + $0x40] sm:$0xf]
  %v67 = vld [vmem:[%s1 + $0x44] sm:$0xf]
  %v68 = vld [vmem:[%s1 + $0x48] sm:$0xf]
  %v69 = vld [vmem:[%s1 + $0x4c] sm:$0xf]
  %v70 = vld [vmem:[%s1 + $0x50] sm:$0xf]
  %v71 = vld [vmem:[%s1 + $0x54] sm:$0xf]
  %v72 = vld [vmem:[%s1 + $0x58] sm:$0xf]
  %v73 = vld [vmem:[%s1 + $0x5c] sm:$0xf]
  %v74 = vld [vmem:[%s1 + $0x60] sm:$0xf]
  %v75 = vld [vmem:[%s1 + $0x64] sm:$0xf]
  %v76 = vld [vmem:[%s1 + $0x68] sm:$0xf]
  %v77 = vld [vmem:[%s1 + $0x6c] sm:$0xf]
  %v78 = vld [vmem:[%s1 + $0x70] sm:$0xf]
  %v79 = vld [vmem:[%s1 + $0x74] sm:$0xf]
  %v80 = vld [vmem:[%s1 + $0x78] sm:$0xf]
  %v81 = vld [vmem:[%s1 + $0x7c] sm:$0xf]
  %v82 = vld [vmem:[%s1 + $0x80] sm:$0xf]
  %v83 = vld [vmem:[%s1 + $0x84] sm:$0xf]
  %v84 = vld [vmem:[%s1 + $0x88] sm:$0xf]
  %v85 = vld [vmem:[%s1 + $0x8c] sm:$0xf]
  %v86 = vld [vmem:[%s1 + $0x90] sm:$0xf]
  %v87 = vld [vmem:[%s1 + $0x94] sm:$0xf]
  %v88 = vld [vmem:[%s1 + $0x98] sm:$0xf]
  %v89 = vld [vmem:[%s1 + $0x9c] sm:$0xf]
  %v90 = vld [vmem:[%s1 + $0xa0] sm:$0xf]
  %v91 = vld [vmem:[%s1 + $0xa4] sm:$0xf]
  %v92 = vld [vmem:[%s1 + $0xa8] sm:$0xf]
  %v93 = vld [vmem:[%s1 + $0xac] sm:$0xf]
  %v94 = vld [vmem:[%s1 + $0xb0] sm:$0xf]
  %v95 = vld [vmem:[%s1 + $0xb4] sm:$0xf]
  %v96 = vld [vmem:[%s1 + $0xb8] sm:$0xf]
  %v97 = vld [vmem:[%s1 + $0xbc] sm:$0xf]
  %v98 = vld [vmem:[%s1 + $0xc0] sm:$0xf]
  %v99 = vld [vmem:[%s1 + $0xc4] sm:$0xf]
  %v100 = vld [vmem:[%s1 + $0xc8] sm:$0xf]
  %v101 = vld [vmem:[%s1 + $0xcc] sm:$0xf]
  %v102 = vld [vmem:[%s1 + $0xd0] sm:$0xf]
  %v103 = vld [vmem:[%s1 + $0xd4] sm:$0xf]
  %v136 = vunpack.c.l.b16 %v18
  %v137 = vunpack.c.h.b16 %v18
  %v138 = vunpack.c.l.b16 %v19
  %v139 = vunpack.c.h.b16 %v19
  %v140 = vunpack.c.l.b16 %v20
  %v141 = vunpack.c.h.b16 %v20
  %v142 = vunpack.c.l.b16 %v21
  %v143 = vunpack.c.h.b16 %v21
  %v144 = vunpack.c.l.b16 %v22
  %v145 = vunpack.c.h.b16 %v22
  %v146 = vunpack.c.l.b16 %v23
  %v147 = vunpack.c.h.b16 %v23
  %v148 = vunpack.c.l.b16 %v24
  %v149 = vunpack.c.h.b16 %v24
  %v150 = vunpack.c.l.b16 %v25
  %v151 = vunpack.c.h.b16 %v25
  %v152 = vunpack.c.l.b16 %v26
  %v153 = vunpack.c.h.b16 %v26
  %v154 = vunpack.c.l.b16 %v27
  %v155 = vunpack.c.h.b16 %v27
  %v156 = vunpack.c.l.b16 %v28
  %v157 = vunpack.c.h.b16 %v28
  %v158 = vunpack.c.l.b16 %v29
  %v159 = vunpack.c.h.b16 %v29
  %v160 = vunpack.c.l.b16 %v30
  %v161 = vunpack.c.h.b16 %v30
  %v162 = vunpack.c.l.b16 %v31
  %v163 = vunpack.c.h.b16 %v31
  %v164 = vunpack.c.l.b16 %v32
  %v165 = vunpack.c.h.b16 %v32
  %v166 = vunpack.c.l.b16 %v33
  %v167 = vunpack.c.h.b16 %v33
  %v168 = vunpack.c.l.b16 %v34
  %v169 = vunpack.c.h.b16 %v34
  %v170 = vunpack.c.l.b16 %v35
  %v171 = vunpack.c.h.b16 %v35
  %v172 = vunpack.c.l.b16 %v36
  %v173 = vunpack.c.h.b16 %v36
  %v174 = vunpack.c.l.b16 %v37
  %v175 = vunpack.c.h.b16 %v37
  %v176 = vunpack.c.l.b16 %v38
  %v177 = vunpack.c.h.b16 %v38
  %v178 = vunpack.c.l.b16 %v39
  %v179 = vunpack.c.h.b16 %v39
  %v180 = vunpack.c.l.b16 %v40
  %v181 = vunpack.c.h.b16 %v40
  %v182 = vunpack.c.l.b16 %v41
  %v183 = vunpack.c.h.b16 %v41
  %v184 = vunpack.c.l.b16 %v42
  %v185 = vunpack.c.h.b16 %v42
  %v186 = vunpack.c.l.b16 %v43
  %v187 = vunpack.c.h.b16 %v43
  %v188 = vunpack.c.l.b16 %v44
  %v189 = vunpack.c.h.b16 %v44
  %v190 = vunpack.c.l.b16 %v45
  %v191 = vunpack.c.h.b16 %v45
  %v192 = vunpack.c.l.b16 %v46
  %v193 = vunpack.c.h.b16 %v46
  %v194 = vunpack.c.l.b16 %v47
  %v195 = vunpack.c.h.b16 %v47
  %v196 = vunpack.c.l.b16 %v48
  %v197 = vunpack.c.h.b16 %v48
  %v198 = vunpack.c.l.b16 %v49
  %v199 = vunpack.c.h.b16 %v49
  %v200 = vpack.c.b16 %v140, %v136
  %v201 = vpack.c.b16 %v141, %v137
  %v202 = vpack.c.b16 %v142, %v138
  %v203 = vpack.c.b16 %v143, %v139
  %v204 = vpack.c.b16 %v148, %v144
  %v205 = vpack.c.b16 %v149, %v145
  %v206 = vpack.c.b16 %v150, %v146
  %v207 = vpack.c.b16 %v151, %v147
  %v208 = vpack.c.b16 %v156, %v152
  %v209 = vpack.c.b16 %v157, %v153
  %v210 = vpack.c.b16 %v158, %v154
  %v211 = vpack.c.b16 %v159, %v155
  %v212 = vpack.c.b16 %v164, %v160
  %v213 = vpack.c.b16 %v165, %v161
  %v214 = vpack.c.b16 %v166, %v162
  %v215 = vpack.c.b16 %v167, %v163
  %v216 = vpack.c.b16 %v172, %v168
  %v217 = vpack.c.b16 %v173, %v169
  %v218 = vpack.c.b16 %v174, %v170
  %v219 = vpack.c.b16 %v175, %v171
  %v220 = vpack.c.b16 %v180, %v176
  %v221 = vpack.c.b16 %v181, %v177
  %v222 = vpack.c.b16 %v182, %v178
  %v223 = vpack.c.b16 %v183, %v179
  %v224 = vpack.c.b16 %v188, %v184
  %v225 = vpack.c.b16 %v189, %v185
  %v226 = vpack.c.b16 %v190, %v186
  %v227 = vpack.c.b16 %v191, %v187
  %v228 = vpack.c.b16 %v196, %v192
  %v229 = vpack.c.b16 %v197, %v193
  %v230 = vpack.c.b16 %v198, %v194
  %v231 = vpack.c.b16 %v199, %v195
  %v310 = vunpack.c.l.b16 %v50
  %v311 = vunpack.c.l.b16 %v51
  %v312 = vunpack.c.l.b16 %v52
  %v313 = vunpack.c.l.b16 %v53
  %v314 = vunpack.c.l.b16 %v54
  %v315 = vunpack.c.l.b16 %v55
  %v316 = vunpack.c.l.b16 %v56
  %v317 = vunpack.c.l.b16 %v57
  %v318 = vunpack.c.l.b16 %v58
  %v319 = vunpack.c.l.b16 %v59
  %v320 = vunpack.c.l.b16 %v60
  %v321 = vunpack.c.l.b16 %v61
  %v322 = vunpack.c.l.b16 %v62
  %v323 = vunpack.c.l.b16 %v63
  %v324 = vunpack.c.l.b16 %v64
  %v325 = vunpack.c.l.b16 %v65
  %v326 = vunpack.c.l.b16 %v66
  %v327 = vunpack.c.l.b16 %v67
  %v328 = vunpack.c.l.b16 %v68
  %v329 = vunpack.c.l.b16 %v69
  %v330 = vunpack.c.l.b16 %v70
  %v331 = vunpack.c.l.b16 %v71
  %v332 = vunpack.c.l.b16 %v72
  %v333 = vunpack.c.l.b16 %v73
  %v334 = vunpack.c.l.b16 %v74
  %v335 = vunpack.c.l.b16 %v75
  %v336 = vunpack.c.l.b16 %v76
  %v337 = vunpack.c.l.b16 %v77
  %v338 = vunpack.c.l.b16 %v78
  %v339 = vunpack.c.l.b16 %v79
  %v340 = vunpack.c.l.b16 %v80
  %v341 = vunpack.c.l.b16 %v81
  %v342 = vunpack.c.l.b16 %v82
  %v343 = vunpack.c.l.b16 %v83
  %v344 = vunpack.c.l.b16 %v84
  %v345 = vunpack.c.l.b16 %v85
  %v346 = vunpack.c.l.b16 %v86
  %v347 = vunpack.c.l.b16 %v87
  %v348 = vunpack.c.l.b16 %v88
  %v349 = vunpack.c.l.b16 %v89
  %v350 = vunpack.c.l.b16 %v90
  %v351 = vunpack.c.l.b16 %v91
  %v352 = vunpack.c.l.b16 %v92
  %v353 = vunpack.c.l.b16 %v93
  %v354 = vunpack.c.l.b16 %v94
  %v355 = vunpack.c.l.b16 %v95
  %v356 = vunpack.c.l.b16 %v96
  %v357 = vunpack.c.l.b16 %v97
  %v358 = vunpack.c.l.b16 %v98
  %v359 = vunpack.c.l.b16 %v99
  %v360 = vunpack.c.l.b16 %v100
  %v361 = vunpack.c.l.b16 %v101
  %v362 = vunpack.c.l.b16 %v102
  %v363 = vunpack.c.l.b16 %v103
  %v364 = vpack.c.b16 %v311, %v310
  %v365 = vpack.c.b16 %v313, %v312
  %v366 = vpack.c.b16 %v315, %v314
  %v367 = vpack.c.b16 %v317, %v316
  %v368 = vpack.c.b16 %v319, %v318
  %v369 = vpack.c.b16 %v321, %v320
  %v370 = vpack.c.b16 %v323, %v322
  %v371 = vpack.c.b16 %v325, %v324
  %v372 = vpack.c.b16 %v327, %v326
  %v373 = vpack.c.b16 %v329, %v328
  %v374 = vpack.c.b16 %v331, %v330
  %v375 = vpack.c.b16 %v333, %v332
  %v376 = vpack.c.b16 %v335, %v334
  %v377 = vpack.c.b16 %v337, %v336
  %v378 = vpack.c.b16 %v339, %v338
  %v379 = vpack.c.b16 %v341, %v340
  %v380 = vpack.c.b16 %v343, %v342
  %v381 = vpack.c.b16 %v345, %v344
  %v382 = vpack.c.b16 %v347, %v346
  %v383 = vpack.c.b16 %v349, %v348
  %v384 = vpack.c.b16 %v351, %v350
  %v385 = vpack.c.b16 %v353, %v352
  %v386 = vpack.c.b16 %v355, %v354
  %v387 = vpack.c.b16 %v357, %v356
  %v388 = vpack.c.b16 %v359, %v358
  %v389 = vpack.c.b16 %v361, %v360
  %v390 = vpack.c.b16 %v363, %v362
  %vm418 = vcmask 392192
  %v420 = vsel %vm418, %v203, 0
  %v423 = vsel %vm418, %v207, 0
  %v426 = vsel %vm418, %v211, 0
  %v429 = vsel %vm418, %v215, 0
  %v432 = vsel %vm418, %v219, 0
  %v435 = vsel %vm418, %v223, 0
  %v438 = vsel %vm418, %v227, 0
  %v441 = vsel %vm418, %v231, 0
  %443 = vmatprep.subr.bf16.mxu0 0
  %444 = vmatpush1.bf16.msra.mxu0 %v371
  %445 = vmatprep.subr.bf16.mxu0 0
  %446 = vmatpush1.bf16.msra.mxu0 %v370
  %447 = vmatprep.subr.bf16.mxu0 0
  %448 = vmatpush1.bf16.msra.mxu0 %v369
  %449 = vmatprep.subr.bf16.mxu0 0
  %450 = vmatpush1.bf16.msra.mxu0 %v368
  %451 = vmatprep.subr.bf16.mxu0 0
  %452 = vmatpush1.bf16.msra.mxu0 %v367
  %453 = vmatprep.subr.bf16.mxu0 0
  %454 = vmatpush1.bf16.msra.mxu0 %v366
  %455 = vmatprep.subr.bf16.mxu0 0
  %456 = vmatpush1.bf16.msra.mxu0 %v365
  %457 = vmatprep.subr.bf16.mxu0 0
  %458 = vmatpush1.bf16.msra.mxu0 %v364
  %459 = vmatprep.subr.bf16.mxu0 0
  %460 = vmatpush2.bf16.msra.mxu0 %v379
  %461 = vmatprep.subr.bf16.mxu0 0
  %462 = vmatpush2.bf16.msra.mxu0 %v378
  %463 = vmatprep.subr.bf16.mxu0 0
  %464 = vmatpush2.bf16.msra.mxu0 %v377
  %465 = vmatprep.subr.bf16.mxu0 0
  %466 = vmatpush2.bf16.msra.mxu0 %v376
  %467 = vmatprep.subr.bf16.mxu0 0
  %468 = vmatpush2.bf16.msra.mxu0 %v375
  %469 = vmatprep.subr.bf16.mxu0 0
  %470 = vmatpush2.bf16.msra.mxu0 %v374
  %471 = vmatprep.subr.bf16.mxu0 0
  %472 = vmatpush2.bf16.msra.mxu0 %v373
  %473 = vmatprep.subr.bf16.mxu0 0
  %474 = vmatpush2.bf16.msra.mxu0 %v372
  %475 = vmatprep.mubr.bf16.mxu0 %v201
  %476 = vmatmul.mubr.bf16.gmra.mxu0 %v200
  %v477 = vpop.f32.mrf.mxu0
  %v478 = vadd.f32 0.0, %v477
  %v479 = vpop.f32.mrf.mxu0
  %v480 = vpop.f32.mrf.mxu0
  %v481 = vadd.f32 0.0, %v480
  %v482 = vpop.f32.mrf.mxu0
  %483 = vmatprep.mubr.bf16.mxu0 %v205
  %484 = vmatmul.mubr.bf16.gmra.mxu0 %v204
  %v485 = vpop.f32.mrf.mxu0
  %v486 = vadd.f32 0.0, %v485
  %v487 = vpop.f32.mrf.mxu0
  %v488 = vpop.f32.mrf.mxu0
  %v489 = vadd.f32 0.0, %v488
  %v490 = vpop.f32.mrf.mxu0
  %491 = vmatprep.mubr.bf16.mxu0 %v209
  %492 = vmatmul.mubr.bf16.gmra.mxu0 %v208
  %v493 = vpop.f32.mrf.mxu0
  %v494 = vadd.f32 0.0, %v493
  %v495 = vpop.f32.mrf.mxu0
  %v496 = vpop.f32.mrf.mxu0
  %v497 = vadd.f32 0.0, %v496
  %v498 = vpop.f32.mrf.mxu0
  %499 = vmatprep.mubr.bf16.mxu0 %v213
  %500 = vmatmul.mubr.bf16.gmra.mxu0 %v212
  %v501 = vpop.f32.mrf.mxu0
  %v502 = vadd.f32 0.0, %v501
  %v503 = vpop.f32.mrf.mxu0
  %v504 = vpop.f32.mrf.mxu0
  %v505 = vadd.f32 0.0, %v504
  %v506 = vpop.f32.mrf.mxu0
  %507 = vmatprep.mubr.bf16.mxu0 %v217
  %508 = vmatmul.mubr.bf16.gmra.mxu0 %v216
  %v509 = vpop.f32.mrf.mxu0
  %v510 = vadd.f32 0.0, %v509
  %v511 = vpop.f32.mrf.mxu0
  %v512 = vpop.f32.mrf.mxu0
  %v513 = vadd.f32 0.0, %v512
  %v514 = vpop.f32.mrf.mxu0
  %515 = vmatprep.mubr.bf16.mxu0 %v221
  %516 = vmatmul.mubr.bf16.gmra.mxu0 %v220
  %v517 = vpop.f32.mrf.mxu0
  %v518 = vadd.f32 0.0, %v517
  %v519 = vpop.f32.mrf.mxu0
  %v520 = vpop.f32.mrf.mxu0
  %v521 = vadd.f32 0.0, %v520
  %v522 = vpop.f32.mrf.mxu0
  %523 = vmatprep.mubr.bf16.mxu0 %v225
  %524 = vmatmul.mubr.bf16.gmra.mxu0 %v224
  %v525 = vpop.f32.mrf.mxu0
  %v526 = vadd.f32 0.0, %v525
  %v527 = vpop.f32.mrf.mxu0
  %v528 = vpop.f32.mrf.mxu0
  %v529 = vadd.f32 0.0, %v528
  %v530 = vpop.f32.mrf.mxu0
  %531 = vmatprep.mubr.bf16.mxu0 %v229
  %532 = vmatmul.mubr.bf16.gmra.mxu0 %v228
  %v533 = vpop.f32.mrf.mxu0
  %v534 = vadd.f32 0.0, %v533
  %v535 = vpop.f32.mrf.mxu0
  %v536 = vpop.f32.mrf.mxu0
  %v537 = vadd.f32 0.0, %v536
  %v538 = vpop.f32.mrf.mxu0
  %539 = vdwg.mxu0
  %540 = vmatprep.subr.bf16.mxu0 0
  %541 = vmatpush1.bf16.msra.mxu0 %v387
  %542 = vmatprep.subr.bf16.mxu0 0
  %543 = vmatpush1.bf16.msra.mxu0 %v386
  %544 = vmatprep.subr.bf16.mxu0 0
  %545 = vmatpush1.bf16.msra.mxu0 %v385
  %546 = vmatprep.subr.bf16.mxu0 0
  %547 = vmatpush1.bf16.msra.mxu0 %v384
  %548 = vmatprep.subr.bf16.mxu0 0
  %549 = vmatpush1.bf16.msra.mxu0 %v383
  %550 = vmatprep.subr.bf16.mxu0 0
  %551 = vmatpush1.bf16.msra.mxu0 %v382
  %552 = vmatprep.subr.bf16.mxu0 0
  %553 = vmatpush1.bf16.msra.mxu0 %v381
  %554 = vmatprep.subr.bf16.mxu0 0
  %555 = vmatpush1.bf16.msra.mxu0 %v380
  %556 = vmatprep.subr.bf16.mxu0 0
  %557 = vmatpush2.bf16.msra.mxu0 0
  %558 = vmatprep.subr.bf16.mxu0 0
  %559 = vmatpush2.bf16.msra.mxu0 0
  %560 = vmatprep.subr.bf16.mxu0 0
  %561 = vmatpush2.bf16.msra.mxu0 0
  %562 = vmatprep.subr.bf16.mxu0 0
  %563 = vmatpush2.bf16.msra.mxu0 0
  %564 = vmatprep.subr.bf16.mxu0 0
  %565 = vmatpush2.bf16.msra.mxu0 0
  %566 = vmatprep.subr.bf16.mxu0 0
  %567 = vmatpush2.bf16.msra.mxu0 %v390
  %568 = vmatprep.subr.bf16.mxu0 0
  %569 = vmatpush2.bf16.msra.mxu0 %v389
  %570 = vmatprep.subr.bf16.mxu0 0
  %571 = vmatpush2.bf16.msra.mxu0 %v388
  %572 = vmatprep.mubr.bf16.mxu0 %v420
  %573 = vmatmul.mubr.bf16.gmra.mxu0 %v202
  %v574 = vpop.f32.mrf.mxu0
  %v575 = vadd.f32 %v478, %v574
  %v576 = vpop.f32.mrf.mxu0
  %v577 = vpop.f32.mrf.mxu0
  %v578 = vadd.f32 %v481, %v577
  %v579 = vpop.f32.mrf.mxu0
  %580 = vmatprep.mubr.bf16.mxu0 %v423
  %581 = vmatmul.mubr.bf16.gmra.mxu0 %v206
  %v582 = vpop.f32.mrf.mxu0
  %v583 = vadd.f32 %v486, %v582
  %v584 = vpop.f32.mrf.mxu0
  %v585 = vpop.f32.mrf.mxu0
  %v586 = vadd.f32 %v489, %v585
  %v587 = vpop.f32.mrf.mxu0
  %588 = vmatprep.mubr.bf16.mxu0 %v426
  %589 = vmatmul.mubr.bf16.gmra.mxu0 %v210
  %v590 = vpop.f32.mrf.mxu0
  %v591 = vadd.f32 %v494, %v590
  %v592 = vpop.f32.mrf.mxu0
  %v593 = vpop.f32.mrf.mxu0
  %v594 = vadd.f32 %v497, %v593
  %v595 = vpop.f32.mrf.mxu0
  %596 = vmatprep.mubr.bf16.mxu0 %v429
  %597 = vmatmul.mubr.bf16.gmra.mxu0 %v214
  %v598 = vpop.f32.mrf.mxu0
  %v599 = vadd.f32 %v502, %v598
  %v600 = vpop.f32.mrf.mxu0
  %v601 = vpop.f32.mrf.mxu0
  %v602 = vadd.f32 %v505, %v601
  %v603 = vpop.f32.mrf.mxu0
  %604 = vmatprep.mubr.bf16.mxu0 %v432
  %605 = vmatmul.mubr.bf16.gmra.mxu0 %v218
  %v606 = vpop.f32.mrf.mxu0
  %v607 = vadd.f32 %v510, %v606
  %v608 = vpop.f32.mrf.mxu0
  %v609 = vpop.f32.mrf.mxu0
  %v610 = vadd.f32 %v513, %v609
  %v611 = vpop.f32.mrf.mxu0
  %612 = vmatprep.mubr.bf16.mxu0 %v435
  %613 = vmatmul.mubr.bf16.gmra.mxu0 %v222
  %v614 = vpop.f32.mrf.mxu0
  %v615 = vadd.f32 %v518, %v614
  %v616 = vpop.f32.mrf.mxu0
  %v617 = vpop.f32.mrf.mxu0
  %v618 = vadd.f32 %v521, %v617
  %v619 = vpop.f32.mrf.mxu0
  %620 = vmatprep.mubr.bf16.mxu0 %v438
  %621 = vmatmul.mubr.bf16.gmra.mxu0 %v226
  %v622 = vpop.f32.mrf.mxu0
  %v623 = vadd.f32 %v526, %v622
  %v624 = vpop.f32.mrf.mxu0
  %v625 = vpop.f32.mrf.mxu0
  %v626 = vadd.f32 %v529, %v625
  %v627 = vpop.f32.mrf.mxu0
  %628 = vmatprep.mubr.bf16.mxu0 %v441
  %629 = vmatmul.mubr.bf16.gmra.mxu0 %v230
  %v630 = vpop.f32.mrf.mxu0
  %v631 = vadd.f32 %v534, %v630
  %v632 = vpop.f32.mrf.mxu0
  %v633 = vpop.f32.mrf.mxu0
  %v634 = vadd.f32 %v537, %v633
  %v635 = vpop.f32.mrf.mxu0
  %636 = vdwg.mxu0
  %v637 = vld [vmem:[%s2] sm:$0x1]
  %v639 = vlaneseq
  %v640 = vshrl.u32 %v639, 7
  %v641 = vsub.s32 0, %v640
  %v642 = vrot.slane %v637, %v641
  %v644 = vmul.f32 %v575, %v642
  %v645 = vmul.f32 %v578, %v642
  %v646 = vmul.f32 %v583, %v642
  %v647 = vmul.f32 %v586, %v642
  %v648 = vmul.f32 %v591, %v642
  %v649 = vmul.f32 %v594, %v642
  %v650 = vmul.f32 %v599, %v642
  %v651 = vmul.f32 %v602, %v642
  %v652 = vmul.f32 %v607, %v642
  %v653 = vmul.f32 %v610, %v642
  %v654 = vmul.f32 %v615, %v642
  %v655 = vmul.f32 %v618, %v642
  %v656 = vmul.f32 %v623, %v642
  %v657 = vmul.f32 %v626, %v642
  %v658 = vmul.f32 %v631, %v642
  %v659 = vmul.f32 %v634, %v642
  %v660 = vld [vmem:[%s3] sm:$0x1]
  %v662 = vlaneseq
  %v663 = vshrl.u32 %v662, 7
  %v664 = vsub.s32 0, %v663
  %v665 = vrot.slane %v660, %v664
  %v667 = vadd.f32 %v644, %v665
  %v668 = vadd.f32 %v645, %v665
  %v669 = vadd.f32 %v646, %v665
  %v670 = vadd.f32 %v647, %v665
  %v671 = vadd.f32 %v648, %v665
  %v672 = vadd.f32 %v649, %v665
  %v673 = vadd.f32 %v650, %v665
  %v674 = vadd.f32 %v651, %v665
  %v675 = vadd.f32 %v652, %v665
  %v676 = vadd.f32 %v653, %v665
  %v677 = vadd.f32 %v654, %v665
  %v678 = vadd.f32 %v655, %v665
  %v679 = vadd.f32 %v656, %v665
  %v680 = vadd.f32 %v657, %v665
  %v681 = vadd.f32 %v658, %v665
  %v682 = vadd.f32 %v659, %v665
  %v683 = vmax.f32 %v667, 0.0
  %v684 = vmax.f32 %v668, 0.0
  %v685 = vmax.f32 %v669, 0.0
  %v686 = vmax.f32 %v670, 0.0
  %v687 = vmax.f32 %v671, 0.0
  %v688 = vmax.f32 %v672, 0.0
  %v689 = vmax.f32 %v673, 0.0
  %v690 = vmax.f32 %v674, 0.0
  %v691 = vmax.f32 %v675, 0.0
  %v692 = vmax.f32 %v676, 0.0
  %v693 = vmax.f32 %v677, 0.0
  %v694 = vmax.f32 %v678, 0.0
  %v695 = vmax.f32 %v679, 0.0
  %v696 = vmax.f32 %v680, 0.0
  %v697 = vmax.f32 %v681, 0.0
  %v698 = vmax.f32 %v682, 0.0
  %v699 = vpack.c.bf16 %v684, %v683
  %v700 = vpack.c.bf16 %v686, %v685
  %v701 = vpack.c.bf16 %v688, %v687
  %v702 = vpack.c.bf16 %v690, %v689
  %v703 = vpack.c.bf16 %v692, %v691
  %v704 = vpack.c.bf16 %v694, %v693
  %v705 = vpack.c.bf16 %v696, %v695
  %v706 = vpack.c.bf16 %v698, %v697
  %v715 = vunpack.c.l.b16 %v699
  %v716 = vunpack.c.h.b16 %v699
  %v717 = vunpack.c.l.b16 %v700
  %v718 = vunpack.c.h.b16 %v700
  %v719 = vunpack.c.l.b16 %v701
  %v720 = vunpack.c.h.b16 %v701
  %v721 = vunpack.c.l.b16 %v702
  %v722 = vunpack.c.h.b16 %v702
  %v723 = vunpack.c.l.b16 %v703
  %v724 = vunpack.c.h.b16 %v703
  %v725 = vunpack.c.l.b16 %v704
  %v726 = vunpack.c.h.b16 %v704
  %v727 = vunpack.c.l.b16 %v705
  %v728 = vunpack.c.h.b16 %v705
  %v729 = vunpack.c.l.b16 %v706
  %v730 = vunpack.c.h.b16 %v706
  %v731 = vpack.c.b16 %v715, %v715
  %v732 = vpack.c.b16 %v716, %v716
  %v733 = vpack.c.b16 %v717, %v717
  %v734 = vpack.c.b16 %v718, %v718
  %v735 = vpack.c.b16 %v719, %v719
  %v736 = vpack.c.b16 %v720, %v720
  %v737 = vpack.c.b16 %v721, %v721
  %v738 = vpack.c.b16 %v722, %v722
  %v739 = vpack.c.b16 %v723, %v723
  %v740 = vpack.c.b16 %v724, %v724
  %v741 = vpack.c.b16 %v725, %v725
  %v742 = vpack.c.b16 %v726, %v726
  %v743 = vpack.c.b16 %v727, %v727
  %v744 = vpack.c.b16 %v728, %v728
  %v745 = vpack.c.b16 %v729, %v729
  %v746 = vpack.c.b16 %v730, %v730
  %763 = vst [vmem:[%s4] sm:$0xf] %v731
  %764 = vst [vmem:[%s4 + $0x4] sm:$0xf] %v732
  %765 = vst [vmem:[%s4 + $0x8] sm:$0xf] %v733
  %766 = vst [vmem:[%s4 + $0xc] sm:$0xf] %v734
  %767 = vst [vmem:[%s4 + $0x10] sm:$0xf] %v735
  %768 = vst [vmem:[%s4 + $0x14] sm:$0xf] %v736
  %769 = vst [vmem:[%s4 + $0x18] sm:$0xf] %v737
  %770 = vst [vmem:[%s4 + $0x1c] sm:$0xf] %v738
  %771 = vst [vmem:[%s4 + $0x20] sm:$0xf] %v739
  %772 = vst [vmem:[%s4 + $0x24] sm:$0xf] %v740
  %773 = vst [vmem:[%s4 + $0x28] sm:$0xf] %v741
  %774 = vst [vmem:[%s4 + $0x2c] sm:$0xf] %v742
  %775 = vst [vmem:[%s4 + $0x30] sm:$0xf] %v743
  %776 = vst [vmem:[%s4 + $0x34] sm:$0xf] %v744
  %777 = vst [vmem:[%s4 + $0x38] sm:$0xf] %v745
  %778 = vst [vmem:[%s4 + $0x3c] sm:$0xf] %v746
  // Predicated region
  $region18: #{one_model_forward.52} parent=0 // pred_check
    _
  $region19: #{one_model_forward.52} parent=0 // pred_check_branch
    %780 = sbr.rel (0) target = $region21
  $region20: #{one_model_forward.52} parent=0 // pred_region
    _
  $region21: #{one_model_forward.52} parent=0 // pred_fallthru
    _
  // Predicated region
  $region22: #{one_model_forward.52} parent=0 // pred_check
    _
  $region23: #{one_model_forward.52} parent=0 // pred_check_branch
    %782 = sbr.rel (0) target = $region25
  $region24: #{one_model_forward.52} parent=0 // pred_region
    _
  $region25: #{one_model_forward.52} parent=0 // pred_fallthru
    _

// kernel: mul.86
$region0: #{mul.86}
  %s0 = inlined_call_operand.vmem [shape: f32[6,8,8], index: 0, kind: input, shape index: {}]
  %s1 = inlined_call_operand.vmem [shape: f32[6,64], index: 1, kind: output, shape index: {}]
  %v2 = vld [vmem:[%s0] ss:$8 sm:$0xf]
  %s3 = smov 48
  %v4 = vld [vmem:[%s0] ss:$8 sm:%s3]
  %vm5 = vcmask 1045508
  %v6 = vsel %vm5, %v4, %v2
  %vm7 = vcmask 64512
  %8 = vst.msk [vmem:[%s1] sm:$0x3f] %vm7, %v6
  %s9 = scalar_lea.vmem %s0, 7
  %v10 = vld [vmem:[%s9] ss:$8 sm:$0xf]
  %s11 = scalar_lea.vmem %s0, 7
  %s12 = smov 48
  %v13 = vld [vmem:[%s11] ss:$8 sm:%s12]
  %vm14 = vcmask 1045508
  %v15 = vsel %vm14, %v13, %v10
  %16 = vrot.lane.b32.xlu0 %v15, 56
  %v17 = vpop.permute.xlu0 %16
  %vm18 = vcmask 523712
  %19 = vst.msk [vmem:[%s1] sm:$0x3f] %vm18, %v17
  %s20 = scalar_lea.vmem %s0, 6
  %v21 = vld [vmem:[%s20] ss:$8 sm:$0xf]
  %s22 = scalar_lea.vmem %s0, 6
  %s23 = smov 48
  %v24 = vld [vmem:[%s22] ss:$8 sm:%s23]
  %vm25 = vcmask 1045508
  %v26 = vsel %vm25, %v24, %v21
  %27 = vrot.lane.b32.xlu0 %v26, 48
  %v28 = vpop.permute.xlu0 %27
  %vm29 = vcmask 458112
  %30 = vst.msk [vmem:[%s1] sm:$0x3f] %vm29, %v28
  %s31 = scalar_lea.vmem %s0, 5
  %v32 = vld [vmem:[%s31] ss:$8 sm:$0xf]
  %s33 = scalar_lea.vmem %s0, 5
  %s34 = smov 48
  %v35 = vld [vmem:[%s33] ss:$8 sm:%s34]
  %vm36 = vcmask 1045508
  %v37 = vsel %vm36, %v35, %v32
  %38 = vrot.lane.b32.xlu0 %v37, 40
  %v39 = vpop.permute.xlu0 %38
  %vm40 = vcmask 392512
  %41 = vst.msk [vmem:[%s1] sm:$0x3f] %vm40, %v39
  %s42 = scalar_lea.vmem %s0, 4
  %v43 = vld [vmem:[%s42] ss:$8 sm:$0xf]
  %s44 = scalar_lea.vmem %s0, 4
  %s45 = smov 48
  %v46 = vld [vmem:[%s44] ss:$8 sm:%s45]
  %vm47 = vcmask 1045508
  %v48 = vsel %vm47, %v46, %v43
  %49 = vrot.lane.b32.xlu0 %v48, 32
  %v50 = vpop.permute.xlu0 %49
  %vm51 = vcmask 326912
  %52 = vst.msk [vmem:[%s1] sm:$0x3f] %vm51, %v50
  %s53 = scalar_lea.vmem %s0, 3
  %v54 = vld [vmem:[%s53] ss:$8 sm:$0xf]
  %s55 = scalar_lea.vmem %s0, 3
  %s56 = smov 48
  %v57 = vld [vmem:[%s55] ss:$8 sm:%s56]
  %vm58 = vcmask 1045508
  %v59 = vsel %vm58, %v57, %v54
  %60 = vrot.lane.b32.xlu0 %v59, 24
  %v61 = vpop.permute.xlu0 %60
  %vm62 = vcmask 261312
  %63 = vst.msk [vmem:[%s1] sm:$0x3f] %vm62, %v61
  %s64 = scalar_lea.vmem %s0, 2
  %v65 = vld [vmem:[%s64] ss:$8 sm:$0xf]
  %s66 = scalar_lea.vmem %s0, 2
  %s67 = smov 48
  %v68 = vld [vmem:[%s66] ss:$8 sm:%s67]
  %vm69 = vcmask 1045508
  %v70 = vsel %vm69, %v68, %v65
  %71 = vrot.lane.b32.xlu0 %v70, 16
  %v72 = vpop.permute.xlu0 %71
  %vm73 = vcmask 195712
  %74 = vst.msk [vmem:[%s1] sm:$0x3f] %vm73, %v72
  %s75 = scalar_lea.vmem %s0, 1
  %v76 = vld [vmem:[%s75] ss:$8 sm:$0xf]
  %s77 = scalar_lea.vmem %s0, 1
  %s78 = smov 48
  %v79 = vld [vmem:[%s77] ss:$8 sm:%s78]
  %vm80 = vcmask 1045508
  %v81 = vsel %vm80, %v79, %v76
  %82 = vrot.lane.b32.xlu0 %v81, 8
  %v83 = vpop.permute.xlu0 %82
  %vm84 = vcmask 130112
  %85 = vst.msk [vmem:[%s1] sm:$0x3f] %vm84, %v83

// kernel: mul.71
$region0: #{mul.71}
  %s0 = inlined_call_operand.vmem [shape: f32[4,8,8], index: 0, kind: input, shape index: {}]
  %s1 = inlined_call_operand.vmem [shape: f32[4,64], index: 1, kind: output, shape index: {}]
  $region1: #{mul.71} parent=0
    #allocation0 [shape = 'u8[4096]{0}', space=vmem, size = 0x1000, scoped, tag = 'scoped mem for output reshape']
    %v2 = vld [vmem:[%s0] ss:$8 sm:$0xf]
    %vm3 = vcmask 64512
    %4 = vst.msk [vmem:[#allocation0] sm:$0xf] %vm3, %v2
    %s5 = scalar_lea.vmem %s0, 7
    %v6 = vld [vmem:[%s5] ss:$8 sm:$0xf]
    %7 = vrot.lane.b32.xlu0 %v6, 56
    %v8 = vpop.permute.xlu0 %7
    %vm9 = vcmask 523712
    %10 = vst.msk [vmem:[#allocation0] sm:$0xf] %vm9, %v8
    %s11 = scalar_lea.vmem %s0, 6
    %v12 = vld [vmem:[%s11] ss:$8 sm:$0xf]
    %13 = vrot.lane.b32.xlu0 %v12, 48
    %v14 = vpop.permute.xlu0 %13
    %vm15 = vcmask 458112
    %16 = vst.msk [vmem:[#allocation0] sm:$0xf] %vm15, %v14
    %s17 = scalar_lea.vmem %s0, 5
    %v18 = vld [vmem:[%s17] ss:$8 sm:$0xf]
    %19 = vrot.lane.b32.xlu0 %v18, 40
    %v20 = vpop.permute.xlu0 %19
    %vm21 = vcmask 392512
    %22 = vst.msk [vmem:[#allocation0] sm:$0xf] %vm21, %v20
    %s23 = scalar_lea.vmem %s0, 4
    %v24 = vld [vmem:[%s23] ss:$8 sm:$0xf]
    %25 = vrot.lane.b32.xlu0 %v24, 32
    %v26 = vpop.permute.xlu0 %25
    %vm27 = vcmask 326912
    %28 = vst.msk [vmem:[#allocation0] sm:$0xf] %vm27, %v26
    %s29 = scalar_lea.vmem %s0, 3
    %v30 = vld [vmem:[%s29] ss:$8 sm:$0xf]
    %31 = vrot.lane.b32.xlu0 %v30, 24
    %v32 = vpop.permute.xlu0 %31
    %vm33 = vcmask 261312
    %34 = vst.msk [vmem:[#allocation0] sm:$0xf] %vm33, %v32
    %s35 = scalar_lea.vmem %s0, 2
    %v36 = vld [vmem:[%s35] ss:$8 sm:$0xf]
    %37 = vrot.lane.b32.xlu0 %v36, 16
    %v38 = vpop.permute.xlu0 %37
    %vm39 = vcmask 195712
    %40 = vst.msk [vmem:[#allocation0] sm:$0xf] %vm39, %v38
    %s41 = scalar_lea.vmem %s0, 1
    %v42 = vld [vmem:[%s41] ss:$8 sm:$0xf]
    %43 = vrot.lane.b32.xlu0 %v42, 8
    %v44 = vpop.permute.xlu0 %43
    %vm45 = vcmask 130112
    %46 = vst.msk [vmem:[#allocation0] sm:$0xf] %vm45, %v44
    %s48 = sshll.u32 1, 4
    %s49 = ssub.s32 %s48, 1
    %v51 = vld [vmem:[#allocation0] sm:%s49]
    %s52 = sshll.u32 1, 4
    %s53 = ssub.s32 %s52, 1
    %54 = vst [vmem:[%s1] sm:%s53] %v51

// kernel: mul.54
$region0: #{mul.54}
  %s0 = inlined_call_operand.vmem [shape: f32[2,8,8], index: 0, kind: input, shape index: {}]
  %s1 = inlined_call_operand.vmem [shape: f32[2,64], index: 1, kind: output, shape index: {}]
  $region1: #{mul.54} parent=0
    #allocation0 [shape = 'u8[4096]{0}', space=vmem, size = 0x1000, scoped, tag = 'scoped mem for output reshape']
    %s2 = smov 3
    %v3 = vld [vmem:[%s0] ss:$8 sm:%s2]
    %vm4 = vcmask 64512
    %5 = vst.msk [vmem:[#allocation0] sm:$0x3] %vm4, %v3
    %s6 = scalar_lea.vmem %s0, 7
    %s7 = smov 3
    %v8 = vld [vmem:[%s6] ss:$8 sm:%s7]
    %9 = vrot.lane.b32.xlu0 %v8, 56
    %v10 = vpop.permute.xlu0 %9
    %vm11 = vcmask 523712
    %12 = vst.msk [vmem:[#allocation0] sm:$0x3] %vm11, %v10
    %s13 = scalar_lea.vmem %s0, 6
    %s14 = smov 3
    %v15 = vld [vmem:[%s13] ss:$8 sm:%s14]
    %16 = vrot.lane.b32.xlu0 %v15, 48
    %v17 = vpop.permute.xlu0 %16
    %vm18 = vcmask 458112
    %19 = vst.msk [vmem:[#allocation0] sm:$0x3] %vm18, %v17
    %s20 = scalar_lea.vmem %s0, 5
    %s21 = smov 3
    %v22 = vld [vmem:[%s20] ss:$8 sm:%s21]
    %23 = vrot.lane.b32.xlu0 %v22, 40
    %v24 = vpop.permute.xlu0 %23
    %vm25 = vcmask 392512
    %26 = vst.msk [vmem:[#allocation0] sm:$0x3] %vm25, %v24
    %s27 = scalar_lea.vmem %s0, 4
    %s28 = smov 3
    %v29 = vld [vmem:[%s27] ss:$8 sm:%s28]
    %30 = vrot.lane.b32.xlu0 %v29, 32
    %v31 = vpop.permute.xlu0 %30
    %vm32 = vcmask 326912
    %33 = vst.msk [vmem:[#allocation0] sm:$0x3] %vm32, %v31
    %s34 = scalar_lea.vmem %s0, 3
    %s35 = smov 3
    %v36 = vld [vmem:[%s34] ss:$8 sm:%s35]
    %37 = vrot.lane.b32.xlu0 %v36, 24
    %v38 = vpop.permute.xlu0 %37
    %vm39 = vcmask 261312
    %40 = vst.msk [vmem:[#allocation0] sm:$0x3] %vm39, %v38
    %s41 = scalar_lea.vmem %s0, 2
    %s42 = smov 3
    %v43 = vld [vmem:[%s41] ss:$8 sm:%s42]
    %44 = vrot.lane.b32.xlu0 %v43, 16
    %v45 = vpop.permute.xlu0 %44
    %vm46 = vcmask 195712
    %47 = vst.msk [vmem:[#allocation0] sm:$0x3] %vm46, %v45
    %s48 = scalar_lea.vmem %s0, 1
    %s49 = smov 3
    %v50 = vld [vmem:[%s48] ss:$8 sm:%s49]
    %51 = vrot.lane.b32.xlu0 %v50, 8
    %v52 = vpop.permute.xlu0 %51
    %vm53 = vcmask 130112
    %54 = vst.msk [vmem:[#allocation0] sm:$0x3] %vm53, %v52
    %s56 = sshll.u32 1, 2
    %s57 = ssub.s32 %s56, 1
    %v59 = vld [vmem:[#allocation0] sm:%s57]
    %s60 = sshll.u32 1, 2
    %s61 = ssub.s32 %s60, 1
    %62 = vst [vmem:[%s1] sm:%s61] %v59

// kernel: one_model_forward.54
$region0: #{one_model_forward.54}
  #allocation0 [shape = 'u32[]', space=smem, size = 0x4, offset = 0x4, fixed_abs, tag = 'smem constant byte address 0x4 - core index']
  #allocation1 [shape = 'u32[144,128]{1,0:T(1,128)}', space=vmem, size = 0x12000, scoped, tag = 'internal scratch']
  %s0 = inlined_call_operand.vmem [shape: bf16[128,864], index: 0, kind: input, shape index: {}]
  %s1 = inlined_call_operand.vmem [shape: bf16[864,128], index: 1, kind: input, shape index: {}]
  %s2 = inlined_call_operand.vmem [shape: f32[1,128], index: 2, kind: input, shape index: {}]
  %s3 = inlined_call_operand.vmem [shape: f32[1,128], index: 3, kind: input, shape index: {}]
  %s4 = inlined_call_operand.vmem [shape: f32[128,128], index: 4, kind: output, shape index: {}]
  %s5 = sld [smem:[#allocation0]]
  $region26: #{one_model_forward.54} parent=0
    _
  %s7 = ssub.s32 1, %s5
  %s8 = scalar_select 0, %s7, %s5
  // Predicated region
  $region2: #{one_model_forward.54} parent=0 // pred_check
    _
  $region3: #{one_model_forward.54} parent=0 // pred_check_branch
    %10 = sbr.rel (0) target = $region5
  $region4: #{one_model_forward.54} parent=0 // pred_region
    _
  $region5: #{one_model_forward.54} parent=0 // pred_fallthru
    _
  // Predicated region
  $region6: #{one_model_forward.54} parent=0 // pred_check
    _
  $region7: #{one_model_forward.54} parent=0 // pred_check_branch
    %12 = sbr.rel (0) target = $region9
  $region8: #{one_model_forward.54} parent=0 // pred_region
    _
  $region9: #{one_model_forward.54} parent=0 // pred_fallthru
    _
  // Predicated region
  $region10: #{one_model_forward.54} parent=0 // pred_check
    _
  $region11: #{one_model_forward.54} parent=0 // pred_check_branch
    %14 = sbr.rel (0) target = $region13
  $region12: #{one_model_forward.54} parent=0 // pred_region
    _
  $region13: #{one_model_forward.54} parent=0 // pred_fallthru
    _
  // Predicated region
  $region14: #{one_model_forward.54} parent=0 // pred_check
    _
  $region15: #{one_model_forward.54} parent=0 // pred_check_branch
    %16 = sbr.rel (0) target = $region17
  $region16: #{one_model_forward.54} parent=0 // pred_region
    _
  $region17: #{one_model_forward.54} parent=0 // pred_fallthru
    _
  %v18 = vld [vmem:[%s0] sm:$0xff]
  %v19 = vld [vmem:[%s0 + $0x8] sm:$0xff]
  %v20 = vld [vmem:[%s0 + $0x10] sm:$0xff]
  %v21 = vld [vmem:[%s0 + $0x18] sm:$0xf]
  %v22 = vld [vmem:[%s0 + $0x1c] sm:$0xff]
  %v23 = vld [vmem:[%s0 + $0x24] sm:$0xff]
  %v24 = vld [vmem:[%s0 + $0x2c] sm:$0xff]
  %v25 = vld [vmem:[%s0 + $0x34] sm:$0xf]
  %v26 = vld [vmem:[%s0 + $0x38] sm:$0xff]
  %v27 = vld [vmem:[%s0 + $0x40] sm:$0xff]
  %v28 = vld [vmem:[%s0 + $0x48] sm:$0xff]
  %v29 = vld [vmem:[%s0 + $0x50] sm:$0xf]
  %v30 = vld [vmem:[%s0 + $0x54] sm:$0xff]
  %v31 = vld [vmem:[%s0 + $0x5c] sm:$0xff]
  %v32 = vld [vmem:[%s0 + $0x64] sm:$0xff]
  %v33 = vld [vmem:[%s0 + $0x6c] sm:$0xf]
  %v34 = vld [vmem:[%s0 + $0x70] sm:$0xff]
  %v35 = vld [vmem:[%s0 + $0x78] sm:$0xff]
  %v36 = vld [vmem:[%s0 + $0x80] sm:$0xff]
  %v37 = vld [vmem:[%s0 + $0x88] sm:$0xf]
  %v38 = vld [vmem:[%s0 + $0x8c] sm:$0xff]
  %v39 = vld [vmem:[%s0 + $0x94] sm:$0xff]
  %v40 = vld [vmem:[%s0 + $0x9c] sm:$0xff]
  %v41 = vld [vmem:[%s0 + $0xa4] sm:$0xf]
  %v42 = vld [vmem:[%s0 + $0xa8] sm:$0xff]
  %v43 = vld [vmem:[%s0 + $0xb0] sm:$0xff]
  %v44 = vld [vmem:[%s0 + $0xb8] sm:$0xff]
  %v45 = vld [vmem:[%s0 + $0xc0] sm:$0xf]
  %v46 = vld [vmem:[%s0 + $0xc4] sm:$0xff]
  %v47 = vld [vmem:[%s0 + $0xcc] sm:$0xff]
  %v48 = vld [vmem:[%s0 + $0xd4] sm:$0xff]
  %v49 = vld [vmem:[%s0 + $0xdc] sm:$0xf]
  %v50 = vld [vmem:[%s0 + $0xe0] sm:$0xff]
  %v51 = vld [vmem:[%s0 + $0xe8] sm:$0xff]
  %v52 = vld [vmem:[%s0 + $0xf0] sm:$0xff]
  %v53 = vld [vmem:[%s0 + $0xf8] sm:$0xf]
  %v54 = vld [vmem:[%s0 + $0xfc] sm:$0xff]
  %v55 = vld [vmem:[%s0 + $0x104] sm:$0xff]
  %v56 = vld [vmem:[%s0 + $0x10c] sm:$0xff]
  %v57 = vld [vmem:[%s0 + $0x114] sm:$0xf]
  %v58 = vld [vmem:[%s0 + $0x118] sm:$0xff]
  %v59 = vld [vmem:[%s0 + $0x120] sm:$0xff]
  %v60 = vld [vmem:[%s0 + $0x128] sm:$0xff]
  %v61 = vld [vmem:[%s0 + $0x130] sm:$0xf]
  %v62 = vld [vmem:[%s0 + $0x134] sm:$0xff]
  %v63 = vld [vmem:[%s0 + $0x13c] sm:$0xff]
  %v64 = vld [vmem:[%s0 + $0x144] sm:$0xff]
  %v65 = vld [vmem:[%s0 + $0x14c] sm:$0xf]
  %v66 = vld [vmem:[%s0 + $0x150] sm:$0xff]
  %v67 = vld [vmem:[%s0 + $0x158] sm:$0xff]
  %v68 = vld [vmem:[%s0 + $0x160] sm:$0xff]
  %v69 = vld [vmem:[%s0 + $0x168] sm:$0xf]
  %v70 = vld [vmem:[%s0 + $0x16c] sm:$0xff]
  %v71 = vld [vmem:[%s0 + $0x174] sm:$0xff]
  %v72 = vld [vmem:[%s0 + $0x17c] sm:$0xff]
  %v73 = vld [vmem:[%s0 + $0x184] sm:$0xf]
  %v74 = vld [vmem:[%s0 + $0x188] sm:$0xff]
  %v75 = vld [vmem:[%s0 + $0x190] sm:$0xff]
  %v76 = vld [vmem:[%s0 + $0x198] sm:$0xff]
  %v77 = vld [vmem:[%s0 + $0x1a0] sm:$0xf]
  %v78 = vld [vmem:[%s0 + $0x1a4] sm:$0xff]
  %v79 = vld [vmem:[%s0 + $0x1ac] sm:$0xff]
  %v80 = vld [vmem:[%s0 + $0x1b4] sm:$0xff]
  %v81 = vld [vmem:[%s0 + $0x1bc] sm:$0xf]
  %v82 = vld [vmem:[%s1] sm:$0xf]
  %v83 = vld [vmem:[%s1 + $0x4] sm:$0xf]
  %v84 = vld [vmem:[%s1 + $0x8] sm:$0xf]
  %v85 = vld [vmem:[%s1 + $0xc] sm:$0xf]
  %v86 = vld [vmem:[%s1 + $0x10] sm:$0xf]
  %v87 = vld [vmem:[%s1 + $0x14] sm:$0xf]
  %v88 = vld [vmem:[%s1 + $0x18] sm:$0xf]
  %v89 = vld [vmem:[%s1 + $0x1c] sm:$0xf]
  %v90 = vld [vmem:[%s1 + $0x20] sm:$0xf]
  %v91 = vld [vmem:[%s1 + $0x24] sm:$0xf]
  %v92 = vld [vmem:[%s1 + $0x28] sm:$0xf]
  %v93 = vld [vmem:[%s1 + $0x2c] sm:$0xf]
  %v94 = vld [vmem:[%s1 + $0x30] sm:$0xf]
  %v95 = vld [vmem:[%s1 + $0x34] sm:$0xf]
  %v96 = vld [vmem:[%s1 + $0x38] sm:$0xf]
  %v97 = vld [vmem:[%s1 + $0x3c] sm:$0xf]
  %v98 = vld [vmem:[%s1 + $0x40] sm:$0xf]
  %v99 = vld [vmem:[%s1 + $0x44] sm:$0xf]
  %v100 = vld [vmem:[%s1 + $0x48] sm:$0xf]
  %v101 = vld [vmem:[%s1 + $0x4c] sm:$0xf]
  %v102 = vld [vmem:[%s1 + $0x50] sm:$0xf]
  %v103 = vld [vmem:[%s1 + $0x54] sm:$0xf]
  %v104 = vld [vmem:[%s1 + $0x58] sm:$0xf]
  %v105 = vld [vmem:[%s1 + $0x5c] sm:$0xf]
  %v106 = vld [vmem:[%s1 + $0x60] sm:$0xf]
  %v107 = vld [vmem:[%s1 + $0x64] sm:$0xf]
  %v108 = vld [vmem:[%s1 + $0x68] sm:$0xf]
  %v109 = vld [vmem:[%s1 + $0x6c] sm:$0xf]
  %v110 = vld [vmem:[%s1 + $0x70] sm:$0xf]
  %v111 = vld [vmem:[%s1 + $0x74] sm:$0xf]
  %v112 = vld [vmem:[%s1 + $0x78] sm:$0xf]
  %v113 = vld [vmem:[%s1 + $0x7c] sm:$0xf]
  %v114 = vld [vmem:[%s1 + $0x80] sm:$0xf]
  %v115 = vld [vmem:[%s1 + $0x84] sm:$0xf]
  %v116 = vld [vmem:[%s1 + $0x88] sm:$0xf]
  %v117 = vld [vmem:[%s1 + $0x8c] sm:$0xf]
  %v118 = vld [vmem:[%s1 + $0x90] sm:$0xf]
  %v119 = vld [vmem:[%s1 + $0x94] sm:$0xf]
  %v120 = vld [vmem:[%s1 + $0x98] sm:$0xf]
  %v121 = vld [vmem:[%s1 + $0x9c] sm:$0xf]
  %v122 = vld [vmem:[%s1 + $0xa0] sm:$0xf]
  %v123 = vld [vmem:[%s1 + $0xa4] sm:$0xf]
  %v124 = vld [vmem:[%s1 + $0xa8] sm:$0xf]
  %v125 = vld [vmem:[%s1 + $0xac] sm:$0xf]
  %v126 = vld [vmem:[%s1 + $0xb0] sm:$0xf]
  %v127 = vld [vmem:[%s1 + $0xb4] sm:$0xf]
  %v128 = vld [vmem:[%s1 + $0xb8] sm:$0xf]
  %v129 = vld [vmem:[%s1 + $0xbc] sm:$0xf]
  %v130 = vld [vmem:[%s1 + $0xc0] sm:$0xf]
  %v131 = vld [vmem:[%s1 + $0xc4] sm:$0xf]
  %v132 = vld [vmem:[%s1 + $0xc8] sm:$0xf]
  %v133 = vld [vmem:[%s1 + $0xcc] sm:$0xf]
  %v134 = vld [vmem:[%s1 + $0xd0] sm:$0xf]
  %v135 = vld [vmem:[%s1 + $0xd4] sm:$0xf]
  %v136 = vld [vmem:[%s1 + $0xd8] sm:$0xf]
  %v137 = vld [vmem:[%s1 + $0xdc] sm:$0xf]
  %v138 = vld [vmem:[%s1 + $0xe0] sm:$0xf]
  %v139 = vld [vmem:[%s1 + $0xe4] sm:$0xf]
  %v140 = vld [vmem:[%s1 + $0xe8] sm:$0xf]
  %v141 = vld [vmem:[%s1 + $0xec] sm:$0xf]
  %v142 = vld [vmem:[%s1 + $0xf0] sm:$0xf]
  %v143 = vld [vmem:[%s1 + $0xf4] sm:$0xf]
  %v144 = vld [vmem:[%s1 + $0xf8] sm:$0xf]
  %v145 = vld [vmem:[%s1 + $0xfc] sm:$0xf]
  %v146 = vld [vmem:[%s1 + $0x100] sm:$0xf]
  %v147 = vld [vmem:[%s1 + $0x104] sm:$0xf]
  %v148 = vld [vmem:[%s1 + $0x108] sm:$0xf]
  %v149 = vld [vmem:[%s1 + $0x10c] sm:$0xf]
  %v150 = vld [vmem:[%s1 + $0x110] sm:$0xf]
  %v151 = vld [vmem:[%s1 + $0x114] sm:$0xf]
  %v152 = vld [vmem:[%s1 + $0x118] sm:$0xf]
  %v153 = vld [vmem:[%s1 + $0x11c] sm:$0xf]
  %v154 = vld [vmem:[%s1 + $0x120] sm:$0xf]
  %v155 = vld [vmem:[%s1 + $0x124] sm:$0xf]
  %v156 = vld [vmem:[%s1 + $0x128] sm:$0xf]
  %v157 = vld [vmem:[%s1 + $0x12c] sm:$0xf]
  %v158 = vld [vmem:[%s1 + $0x130] sm:$0xf]
  %v159 = vld [vmem:[%s1 + $0x134] sm:$0xf]
  %v160 = vld [vmem:[%s1 + $0x138] sm:$0xf]
  %v161 = vld [vmem:[%s1 + $0x13c] sm:$0xf]
  %v162 = vld [vmem:[%s1 + $0x140] sm:$0xf]
  %v163 = vld [vmem:[%s1 + $0x144] sm:$0xf]
  %v164 = vld [vmem:[%s1 + $0x148] sm:$0xf]
  %v165 = vld [vmem:[%s1 + $0x14c] sm:$0xf]
  %v166 = vld [vmem:[%s1 + $0x150] sm:$0xf]
  %v167 = vld [vmem:[%s1 + $0x154] sm:$0xf]
  %v168 = vld [vmem:[%s1 + $0x158] sm:$0xf]
  %v169 = vld [vmem:[%s1 + $0x15c] sm:$0xf]
  %v170 = vld [vmem:[%s1 + $0x160] sm:$0xf]
  %v171 = vld [vmem:[%s1 + $0x164] sm:$0xf]
  %v172 = vld [vmem:[%s1 + $0x168] sm:$0xf]
  %v173 = vld [vmem:[%s1 + $0x16c] sm:$0xf]
  %v174 = vld [vmem:[%s1 + $0x170] sm:$0xf]
  %v175 = vld [vmem:[%s1 + $0x174] sm:$0xf]
  %v176 = vld [vmem:[%s1 + $0x178] sm:$0xf]
  %v177 = vld [vmem:[%s1 + $0x17c] sm:$0xf]
  %v178 = vld [vmem:[%s1 + $0x180] sm:$0xf]
  %v179 = vld [vmem:[%s1 + $0x184] sm:$0xf]
  %v180 = vld [vmem:[%s1 + $0x188] sm:$0xf]
  %v181 = vld [vmem:[%s1 + $0x18c] sm:$0xf]
  %v182 = vld [vmem:[%s1 + $0x190] sm:$0xf]
  %v183 = vld [vmem:[%s1 + $0x194] sm:$0xf]
  %v184 = vld [vmem:[%s1 + $0x198] sm:$0xf]
  %v185 = vld [vmem:[%s1 + $0x19c] sm:$0xf]
  %v186 = vld [vmem:[%s1 + $0x1a0] sm:$0xf]
  %v187 = vld [vmem:[%s1 + $0x1a4] sm:$0xf]
  %v188 = vld [vmem:[%s1 + $0x1a8] sm:$0xf]
  %v189 = vld [vmem:[%s1 + $0x1ac] sm:$0xf]
  %v254 = vunpack.c.l.b16 %v18
  %v255 = vunpack.c.h.b16 %v18
  %v256 = vunpack.c.l.b16 %v19
  %v257 = vunpack.c.h.b16 %v19
  %v258 = vunpack.c.l.b16 %v20
  %v259 = vunpack.c.h.b16 %v20
  %v260 = vunpack.c.l.b16 %v21
  %v261 = vunpack.c.l.b16 %v22
  %v262 = vunpack.c.h.b16 %v22
  %v263 = vunpack.c.l.b16 %v23
  %v264 = vunpack.c.h.b16 %v23
  %v265 = vunpack.c.l.b16 %v24
  %v266 = vunpack.c.h.b16 %v24
  %v267 = vunpack.c.l.b16 %v25
  %v268 = vunpack.c.l.b16 %v26
  %v269 = vunpack.c.h.b16 %v26
  %v270 = vunpack.c.l.b16 %v27
  %v271 = vunpack.c.h.b16 %v27
  %v272 = vunpack.c.l.b16 %v28
  %v273 = vunpack.c.h.b16 %v28
  %v274 = vunpack.c.l.b16 %v29
  %v275 = vunpack.c.l.b16 %v30
  %v276 = vunpack.c.h.b16 %v30
  %v277 = vunpack.c.l.b16 %v31
  %v278 = vunpack.c.h.b16 %v31
  %v279 = vunpack.c.l.b16 %v32
  %v280 = vunpack.c.h.b16 %v32
  %v281 = vunpack.c.l.b16 %v33
  %v282 = vunpack.c.l.b16 %v34
  %v283 = vunpack.c.h.b16 %v34
  %v284 = vunpack.c.l.b16 %v35
  %v285 = vunpack.c.h.b16 %v35
  %v286 = vunpack.c.l.b16 %v36
  %v287 = vunpack.c.h.b16 %v36
  %v288 = vunpack.c.l.b16 %v37
  %v289 = vunpack.c.l.b16 %v38
  %v290 = vunpack.c.h.b16 %v38
  %v291 = vunpack.c.l.b16 %v39
  %v292 = vunpack.c.h.b16 %v39
  %v293 = vunpack.c.l.b16 %v40
  %v294 = vunpack.c.h.b16 %v40
  %v295 = vunpack.c.l.b16 %v41
  %v296 = vunpack.c.l.b16 %v42
  %v297 = vunpack.c.h.b16 %v42
  %v298 = vunpack.c.l.b16 %v43
  %v299 = vunpack.c.h.b16 %v43
  %v300 = vunpack.c.l.b16 %v44
  %v301 = vunpack.c.h.b16 %v44
  %v302 = vunpack.c.l.b16 %v45
  %v303 = vunpack.c.l.b16 %v46
  %v304 = vunpack.c.h.b16 %v46
  %v305 = vunpack.c.l.b16 %v47
  %v306 = vunpack.c.h.b16 %v47
  %v307 = vunpack.c.l.b16 %v48
  %v308 = vunpack.c.h.b16 %v48
  %v309 = vunpack.c.l.b16 %v49
  %v310 = vunpack.c.l.b16 %v50
  %v311 = vunpack.c.h.b16 %v50
  %v312 = vunpack.c.l.b16 %v51
  %v313 = vunpack.c.h.b16 %v51
  %v314 = vunpack.c.l.b16 %v52
  %v315 = vunpack.c.h.b16 %v52
  %v316 = vunpack.c.l.b16 %v53
  %v317 = vunpack.c.l.b16 %v54
  %v318 = vunpack.c.h.b16 %v54
  %v319 = vunpack.c.l.b16 %v55
  %v320 = vunpack.c.h.b16 %v55
  %v321 = vunpack.c.l.b16 %v56
  %v322 = vunpack.c.h.b16 %v56
  %v323 = vunpack.c.l.b16 %v57
  %v324 = vunpack.c.l.b16 %v58
  %v325 = vunpack.c.h.b16 %v58
  %v326 = vunpack.c.l.b16 %v59
  %v327 = vunpack.c.h.b16 %v59
  %v328 = vunpack.c.l.b16 %v60
  %v329 = vunpack.c.h.b16 %v60
  %v330 = vunpack.c.l.b16 %v61
  %v331 = vunpack.c.l.b16 %v62
  %v332 = vunpack.c.h.b16 %v62
  %v333 = vunpack.c.l.b16 %v63
  %v334 = vunpack.c.h.b16 %v63
  %v335 = vunpack.c.l.b16 %v64
  %v336 = vunpack.c.h.b16 %v64
  %v337 = vunpack.c.l.b16 %v65
  %v338 = vunpack.c.l.b16 %v66
  %v339 = vunpack.c.h.b16 %v66
  %v340 = vunpack.c.l.b16 %v67
  %v341 = vunpack.c.h.b16 %v67
  %v342 = vunpack.c.l.b16 %v68
  %v343 = vunpack.c.h.b16 %v68
  %v344 = vunpack.c.l.b16 %v69
  %v345 = vunpack.c.l.b16 %v70
  %v346 = vunpack.c.h.b16 %v70
  %v347 = vunpack.c.l.b16 %v71
  %v348 = vunpack.c.h.b16 %v71
  %v349 = vunpack.c.l.b16 %v72
  %v350 = vunpack.c.h.b16 %v72
  %v351 = vunpack.c.l.b16 %v73
  %v352 = vunpack.c.l.b16 %v74
  %v353 = vunpack.c.h.b16 %v74
  %v354 = vunpack.c.l.b16 %v75
  %v355 = vunpack.c.h.b16 %v75
  %v356 = vunpack.c.l.b16 %v76
  %v357 = vunpack.c.h.b16 %v76
  %v358 = vunpack.c.l.b16 %v77
  %v359 = vunpack.c.l.b16 %v78
  %v360 = vunpack.c.h.b16 %v78
  %v361 = vunpack.c.l.b16 %v79
  %v362 = vunpack.c.h.b16 %v79
  %v363 = vunpack.c.l.b16 %v80
  %v364 = vunpack.c.h.b16 %v80
  %v365 = vunpack.c.l.b16 %v81
  %v366 = vpack.c.b16 %v261, %v254
  %v367 = vpack.c.b16 %v262, %v255
  %v368 = vpack.c.b16 %v263, %v256
  %v369 = vpack.c.b16 %v264, %v257
  %v370 = vpack.c.b16 %v265, %v258
  %v371 = vpack.c.b16 %v266, %v259
  %v372 = vpack.c.b16 %v267, %v260
  %v373 = vpack.c.b16 %v275, %v268
  %v374 = vpack.c.b16 %v276, %v269
  %v375 = vpack.c.b16 %v277, %v270
  %v376 = vpack.c.b16 %v278, %v271
  %v377 = vpack.c.b16 %v279, %v272
  %v378 = vpack.c.b16 %v280, %v273
  %v379 = vpack.c.b16 %v281, %v274
  %v380 = vpack.c.b16 %v289, %v282
  %v381 = vpack.c.b16 %v290, %v283
  %v382 = vpack.c.b16 %v291, %v284
  %v383 = vpack.c.b16 %v292, %v285
  %v384 = vpack.c.b16 %v293, %v286
  %v385 = vpack.c.b16 %v294, %v287
  %v386 = vpack.c.b16 %v295, %v288
  %v387 = vpack.c.b16 %v303, %v296
  %v388 = vpack.c.b16 %v304, %v297
  %v389 = vpack.c.b16 %v305, %v298
  %v390 = vpack.c.b16 %v306, %v299
  %v391 = vpack.c.b16 %v307, %v300
  %v392 = vpack.c.b16 %v308, %v301
  %v393 = vpack.c.b16 %v309, %v302
  %v394 = vpack.c.b16 %v317, %v310
  %v395 = vpack.c.b16 %v318, %v311
  %v396 = vpack.c.b16 %v319, %v312
  %v397 = vpack.c.b16 %v320, %v313
  %v398 = vpack.c.b16 %v321, %v314
  %v399 = vpack.c.b16 %v322, %v315
  %v400 = vpack.c.b16 %v323, %v316
  %v401 = vpack.c.b16 %v331, %v324
  %v402 = vpack.c.b16 %v332, %v325
  %v403 = vpack.c.b16 %v333, %v326
  %v404 = vpack.c.b16 %v334, %v327
  %v405 = vpack.c.b16 %v335, %v328
  %v406 = vpack.c.b16 %v336, %v329
  %v407 = vpack.c.b16 %v337, %v330
  %v408 = vpack.c.b16 %v345, %v338
  %v409 = vpack.c.b16 %v346, %v339
  %v410 = vpack.c.b16 %v347, %v340
  %v411 = vpack.c.b16 %v348, %v341
  %v412 = vpack.c.b16 %v349, %v342
  %v413 = vpack.c.b16 %v350, %v343
  %v414 = vpack.c.b16 %v351, %v344
  %v415 = vpack.c.b16 %v359, %v352
  %v416 = vpack.c.b16 %v360, %v353
  %v417 = vpack.c.b16 %v361, %v354
  %v418 = vpack.c.b16 %v362, %v355
  %v419 = vpack.c.b16 %v363, %v356
  %v420 = vpack.c.b16 %v364, %v357
  %v421 = vpack.c.b16 %v365, %v358
  %v578 = vunpack.c.l.b16 %v82
  %v579 = vunpack.c.l.b16 %v83
  %v580 = vunpack.c.l.b16 %v84
  %v581 = vunpack.c.l.b16 %v85
  %v582 = vunpack.c.l.b16 %v86
  %v583 = vunpack.c.l.b16 %v87
  %v584 = vunpack.c.l.b16 %v88
  %v585 = vunpack.c.l.b16 %v89
  %v586 = vunpack.c.l.b16 %v90
  %v587 = vunpack.c.l.b16 %v91
  %v588 = vunpack.c.l.b16 %v92
  %v589 = vunpack.c.l.b16 %v93
  %v590 = vunpack.c.l.b16 %v94
  %v591 = vunpack.c.l.b16 %v95
  %v592 = vunpack.c.l.b16 %v96
  %v593 = vunpack.c.l.b16 %v97
  %v594 = vunpack.c.l.b16 %v98
  %v595 = vunpack.c.l.b16 %v99
  %v596 = vunpack.c.l.b16 %v100
  %v597 = vunpack.c.l.b16 %v101
  %v598 = vunpack.c.l.b16 %v102
  %v599 = vunpack.c.l.b16 %v103
  %v600 = vunpack.c.l.b16 %v104
  %v601 = vunpack.c.l.b16 %v105
  %v602 = vunpack.c.l.b16 %v106
  %v603 = vunpack.c.l.b16 %v107
  %v604 = vunpack.c.l.b16 %v108
  %v605 = vunpack.c.l.b16 %v109
  %v606 = vunpack.c.l.b16 %v110
  %v607 = vunpack.c.l.b16 %v111
  %v608 = vunpack.c.l.b16 %v112
  %v609 = vunpack.c.l.b16 %v113
  %v610 = vunpack.c.l.b16 %v114
  %v611 = vunpack.c.l.b16 %v115
  %v612 = vunpack.c.l.b16 %v116
  %v613 = vunpack.c.l.b16 %v117
  %v614 = vunpack.c.l.b16 %v118
  %v615 = vunpack.c.l.b16 %v119
  %v616 = vunpack.c.l.b16 %v120
  %v617 = vunpack.c.l.b16 %v121
  %v618 = vunpack.c.l.b16 %v122
  %v619 = vunpack.c.l.b16 %v123
  %v620 = vunpack.c.l.b16 %v124
  %v621 = vunpack.c.l.b16 %v125
  %v622 = vunpack.c.l.b16 %v126
  %v623 = vunpack.c.l.b16 %v127
  %v624 = vunpack.c.l.b16 %v128
  %v625 = vunpack.c.l.b16 %v129
  %v626 = vunpack.c.l.b16 %v130
  %v627 = vunpack.c.l.b16 %v131
  %v628 = vunpack.c.l.b16 %v132
  %v629 = vunpack.c.l.b16 %v133
  %v630 = vunpack.c.l.b16 %v134
  %v631 = vunpack.c.l.b16 %v135
  %v632 = vunpack.c.l.b16 %v136
  %v633 = vunpack.c.l.b16 %v137
  %v634 = vunpack.c.l.b16 %v138
  %v635 = vunpack.c.l.b16 %v139
  %v636 = vunpack.c.l.b16 %v140
  %v637 = vunpack.c.l.b16 %v141
  %v638 = vunpack.c.l.b16 %v142
  %v639 = vunpack.c.l.b16 %v143
  %v640 = vunpack.c.l.b16 %v144
  %v641 = vunpack.c.l.b16 %v145
  %v642 = vunpack.c.l.b16 %v146
  %v643 = vunpack.c.l.b16 %v147
  %v644 = vunpack.c.l.b16 %v148
  %v645 = vunpack.c.l.b16 %v149
  %v646 = vunpack.c.l.b16 %v150
  %v647 = vunpack.c.l.b16 %v151
  %v648 = vunpack.c.l.b16 %v152
  %v649 = vunpack.c.l.b16 %v153
  %v650 = vunpack.c.l.b16 %v154
  %v651 = vunpack.c.l.b16 %v155
  %v652 = vunpack.c.l.b16 %v156
  %v653 = vunpack.c.l.b16 %v157
  %v654 = vunpack.c.l.b16 %v158
  %v655 = vunpack.c.l.b16 %v159
  %v656 = vunpack.c.l.b16 %v160
  %v657 = vunpack.c.l.b16 %v161
  %v658 = vunpack.c.l.b16 %v162
  %v659 = vunpack.c.l.b16 %v163
  %v660 = vunpack.c.l.b16 %v164
  %v661 = vunpack.c.l.b16 %v165
  %v662 = vunpack.c.l.b16 %v166
  %v663 = vunpack.c.l.b16 %v167
  %v664 = vunpack.c.l.b16 %v168
  %v665 = vunpack.c.l.b16 %v169
  %v666 = vunpack.c.l.b16 %v170
  %v667 = vunpack.c.l.b16 %v171
  %v668 = vunpack.c.l.b16 %v172
  %v669 = vunpack.c.l.b16 %v173
  %v670 = vunpack.c.l.b16 %v174
  %v671 = vunpack.c.l.b16 %v175
  %v672 = vunpack.c.l.b16 %v176
  %v673 = vunpack.c.l.b16 %v177
  %v674 = vunpack.c.l.b16 %v178
  %v675 = vunpack.c.l.b16 %v179
  %v676 = vunpack.c.l.b16 %v180
  %v677 = vunpack.c.l.b16 %v181
  %v678 = vunpack.c.l.b16 %v182
  %v679 = vunpack.c.l.b16 %v183
  %v680 = vunpack.c.l.b16 %v184
  %v681 = vunpack.c.l.b16 %v185
  %v682 = vunpack.c.l.b16 %v186
  %v683 = vunpack.c.l.b16 %v187
  %v684 = vunpack.c.l.b16 %v188
  %v685 = vunpack.c.l.b16 %v189
  %v686 = vpack.c.b16 %v579, %v578
  %v687 = vpack.c.b16 %v581, %v580
  %v688 = vpack.c.b16 %v583, %v582
  %v689 = vpack.c.b16 %v585, %v584
  %v690 = vpack.c.b16 %v587, %v586
  %v691 = vpack.c.b16 %v589, %v588
  %v692 = vpack.c.b16 %v591, %v590
  %v693 = vpack.c.b16 %v593, %v592
  %v694 = vpack.c.b16 %v595, %v594
  %v695 = vpack.c.b16 %v597, %v596
  %v696 = vpack.c.b16 %v599, %v598
  %v697 = vpack.c.b16 %v601, %v600
  %v698 = vpack.c.b16 %v603, %v602
  %v699 = vpack.c.b16 %v605, %v604
  %v700 = vpack.c.b16 %v607, %v606
  %v701 = vpack.c.b16 %v609, %v608
  %v702 = vpack.c.b16 %v611, %v610
  %v703 = vpack.c.b16 %v613, %v612
  %v704 = vpack.c.b16 %v615, %v614
  %v705 = vpack.c.b16 %v617, %v616
  %v706 = vpack.c.b16 %v619, %v618
  %v707 = vpack.c.b16 %v621, %v620
  %v708 = vpack.c.b16 %v623, %v622
  %v709 = vpack.c.b16 %v625, %v624
  %v710 = vpack.c.b16 %v627, %v626
  %v711 = vpack.c.b16 %v629, %v628
  %v712 = vpack.c.b16 %v631, %v630
  %v713 = vpack.c.b16 %v633, %v632
  %v714 = vpack.c.b16 %v635, %v634
  %v715 = vpack.c.b16 %v637, %v636
  %v716 = vpack.c.b16 %v639, %v638
  %v717 = vpack.c.b16 %v641, %v640
  %v718 = vpack.c.b16 %v643, %v642
  %v719 = vpack.c.b16 %v645, %v644
  %v720 = vpack.c.b16 %v647, %v646
  %v721 = vpack.c.b16 %v649, %v648
  %v722 = vpack.c.b16 %v651, %v650
  %v723 = vpack.c.b16 %v653, %v652
  %v724 = vpack.c.b16 %v655, %v654
  %v725 = vpack.c.b16 %v657, %v656
  %v726 = vpack.c.b16 %v659, %v658
  %v727 = vpack.c.b16 %v661, %v660
  %v728 = vpack.c.b16 %v663, %v662
  %v729 = vpack.c.b16 %v665, %v664
  %v730 = vpack.c.b16 %v667, %v666
  %v731 = vpack.c.b16 %v669, %v668
  %v732 = vpack.c.b16 %v671, %v670
  %v733 = vpack.c.b16 %v673, %v672
  %v734 = vpack.c.b16 %v675, %v674
  %v735 = vpack.c.b16 %v677, %v676
  %v736 = vpack.c.b16 %v679, %v678
  %v737 = vpack.c.b16 %v681, %v680
  %v738 = vpack.c.b16 %v683, %v682
  %v739 = vpack.c.b16 %v685, %v684
  %vm794 = vcmask 785408
  %v796 = vsel %vm794, %v372, 0
  %v799 = vsel %vm794, %v379, 0
  %v802 = vsel %vm794, %v386, 0
  %v805 = vsel %vm794, %v393, 0
  %v808 = vsel %vm794, %v400, 0
  %v811 = vsel %vm794, %v407, 0
  %v814 = vsel %vm794, %v414, 0
  %v817 = vsel %vm794, %v421, 0
  %819 = vmatprep.subr.bf16.mxu0 0
  %820 = vmatpush1.bf16.msra.mxu0 %v693
  %821 = vmatprep.subr.bf16.mxu0 0
  %822 = vmatpush1.bf16.msra.mxu0 %v692
  %823 = vmatprep.subr.bf16.mxu0 0
  %824 = vmatpush1.bf16.msra.mxu0 %v691
  %825 = vmatprep.subr.bf16.mxu0 0
  %826 = vmatpush1.bf16.msra.mxu0 %v690
  %827 = vmatprep.subr.bf16.mxu0 0
  %828 = vmatpush1.bf16.msra.mxu0 %v689
  %829 = vmatprep.subr.bf16.mxu0 0
  %830 = vmatpush1.bf16.msra.mxu0 %v688
  %831 = vmatprep.subr.bf16.mxu0 0
  %832 = vmatpush1.bf16.msra.mxu0 %v687
  %833 = vmatprep.subr.bf16.mxu0 0
  %834 = vmatpush1.bf16.msra.mxu0 %v686
  %835 = vmatprep.subr.bf16.mxu0 0
  %836 = vmatpush2.bf16.msra.mxu0 %v701
  %837 = vmatprep.subr.bf16.mxu0 0
  %838 = vmatpush2.bf16.msra.mxu0 %v700
  %839 = vmatprep.subr.bf16.mxu0 0
  %840 = vmatpush2.bf16.msra.mxu0 %v699
  %841 = vmatprep.subr.bf16.mxu0 0
  %842 = vmatpush2.bf16.msra.mxu0 %v698
  %843 = vmatprep.subr.bf16.mxu0 0
  %844 = vmatpush2.bf16.msra.mxu0 %v697
  %845 = vmatprep.subr.bf16.mxu0 0
  %846 = vmatpush2.bf16.msra.mxu0 %v696
  %847 = vmatprep.subr.bf16.mxu0 0
  %848 = vmatpush2.bf16.msra.mxu0 %v695
  %849 = vmatprep.subr.bf16.mxu0 0
  %850 = vmatpush2.bf16.msra.mxu0 %v694
  %851 = vmatprep.mubr.bf16.mxu0 %v367
  %852 = vmatmul.mubr.bf16.gmra.mxu0 %v366
  %v853 = vpop.f32.mrf.mxu0
  %v854 = vadd.f32 0.0, %v853
  %v855 = vpop.f32.mrf.mxu0
  %v856 = vpop.f32.mrf.mxu0
  %v857 = vadd.f32 0.0, %v856
  %v858 = vpop.f32.mrf.mxu0
  %859 = vmatprep.mubr.bf16.mxu0 %v374
  %860 = vmatmul.mubr.bf16.gmra.mxu0 %v373
  %v861 = vpop.f32.mrf.mxu0
  %v862 = vadd.f32 0.0, %v861
  %v863 = vpop.f32.mrf.mxu0
  %v864 = vpop.f32.mrf.mxu0
  %v865 = vadd.f32 0.0, %v864
  %v866 = vpop.f32.mrf.mxu0
  %867 = vmatprep.mubr.bf16.mxu0 %v381
  %868 = vmatmul.mubr.bf16.gmra.mxu0 %v380
  %v869 = vpop.f32.mrf.mxu0
  %v870 = vadd.f32 0.0, %v869
  %v871 = vpop.f32.mrf.mxu0
  %v872 = vpop.f32.mrf.mxu0
  %v873 = vadd.f32 0.0, %v872
  %v874 = vpop.f32.mrf.mxu0
  %875 = vmatprep.mubr.bf16.mxu0 %v388
  %876 = vmatmul.mubr.bf16.gmra.mxu0 %v387
  %v877 = vpop.f32.mrf.mxu0
  %v878 = vadd.f32 0.0, %v877
  %v879 = vpop.f32.mrf.mxu0
  %v880 = vpop.f32.mrf.mxu0
  %v881 = vadd.f32 0.0, %v880
  %v882 = vpop.f32.mrf.mxu0
  %883 = vmatprep.mubr.bf16.mxu0 %v395
  %884 = vmatmul.mubr.bf16.gmra.mxu0 %v394
  %v885 = vpop.f32.mrf.mxu0
  %v886 = vadd.f32 0.0, %v885
  %v887 = vpop.f32.mrf.mxu0
  %v888 = vpop.f32.mrf.mxu0
  %v889 = vadd.f32 0.0, %v888
  %v890 = vpop.f32.mrf.mxu0
  %891 = vmatprep.mubr.bf16.mxu0 %v402
  %892 = vmatmul.mubr.bf16.gmra.mxu0 %v401
  %v893 = vpop.f32.mrf.mxu0
  %v894 = vadd.f32 0.0, %v893
  %v895 = vpop.f32.mrf.mxu0
  %v896 = vpop.f32.mrf.mxu0
  %v897 = vadd.f32 0.0, %v896
  %v898 = vpop.f32.mrf.mxu0
  %899 = vmatprep.mubr.bf16.mxu0 %v409
  %900 = vmatmul.mubr.bf16.gmra.mxu0 %v408
  %v901 = vpop.f32.mrf.mxu0
  %v902 = vadd.f32 0.0, %v901
  %v903 = vpop.f32.mrf.mxu0
  %v904 = vpop.f32.mrf.mxu0
  %v905 = vadd.f32 0.0, %v904
  %v906 = vpop.f32.mrf.mxu0
  %907 = vmatprep.mubr.bf16.mxu0 %v416
  %908 = vmatmul.mubr.bf16.gmra.mxu0 %v415
  %v909 = vpop.f32.mrf.mxu0
  %v910 = vadd.f32 0.0, %v909
  %v911 = vpop.f32.mrf.mxu0
  %v912 = vpop.f32.mrf.mxu0
  %v913 = vadd.f32 0.0, %v912
  %v914 = vpop.f32.mrf.mxu0
  %915 = vdwg.mxu0
  %916 = vmatprep.subr.bf16.mxu0 0
  %917 = vmatpush1.bf16.msra.mxu0 %v709
  %918 = vmatprep.subr.bf16.mxu0 0
  %919 = vmatpush1.bf16.msra.mxu0 %v708
  %920 = vmatprep.subr.bf16.mxu0 0
  %921 = vmatpush1.bf16.msra.mxu0 %v707
  %922 = vmatprep.subr.bf16.mxu0 0
  %923 = vmatpush1.bf16.msra.mxu0 %v706
  %924 = vmatprep.subr.bf16.mxu0 0
  %925 = vmatpush1.bf16.msra.mxu0 %v705
  %926 = vmatprep.subr.bf16.mxu0 0
  %927 = vmatpush1.bf16.msra.mxu0 %v704
  %928 = vmatprep.subr.bf16.mxu0 0
  %929 = vmatpush1.bf16.msra.mxu0 %v703
  %930 = vmatprep.subr.bf16.mxu0 0
  %931 = vmatpush1.bf16.msra.mxu0 %v702
  %932 = vmatprep.subr.bf16.mxu0 0
  %933 = vmatpush2.bf16.msra.mxu0 %v717
  %934 = vmatprep.subr.bf16.mxu0 0
  %935 = vmatpush2.bf16.msra.mxu0 %v716
  %936 = vmatprep.subr.bf16.mxu0 0
  %937 = vmatpush2.bf16.msra.mxu0 %v715
  %938 = vmatprep.subr.bf16.mxu0 0
  %939 = vmatpush2.bf16.msra.mxu0 %v714
  %940 = vmatprep.subr.bf16.mxu0 0
  %941 = vmatpush2.bf16.msra.mxu0 %v713
  %942 = vmatprep.subr.bf16.mxu0 0
  %943 = vmatpush2.bf16.msra.mxu0 %v712
  %944 = vmatprep.subr.bf16.mxu0 0
  %945 = vmatpush2.bf16.msra.mxu0 %v711
  %946 = vmatprep.subr.bf16.mxu0 0
  %947 = vmatpush2.bf16.msra.mxu0 %v710
  %948 = vmatprep.mubr.bf16.mxu0 %v369
  %949 = vmatmul.mubr.bf16.gmra.mxu0 %v368
  %v950 = vpop.f32.mrf.mxu0
  %v951 = vadd.f32 %v854, %v950
  %v952 = vpop.f32.mrf.mxu0
  %v953 = vpop.f32.mrf.mxu0
  %v954 = vadd.f32 %v857, %v953
  %v955 = vpop.f32.mrf.mxu0
  %956 = vmatprep.mubr.bf16.mxu0 %v376
  %957 = vmatmul.mubr.bf16.gmra.mxu0 %v375
  %v958 = vpop.f32.mrf.mxu0
  %v959 = vadd.f32 %v862, %v958
  %v960 = vpop.f32.mrf.mxu0
  %v961 = vpop.f32.mrf.mxu0
  %v962 = vadd.f32 %v865, %v961
  %v963 = vpop.f32.mrf.mxu0
  %964 = vmatprep.mubr.bf16.mxu0 %v383
  %965 = vmatmul.mubr.bf16.gmra.mxu0 %v382
  %v966 = vpop.f32.mrf.mxu0
  %v967 = vadd.f32 %v870, %v966
  %v968 = vpop.f32.mrf.mxu0
  %v969 = vpop.f32.mrf.mxu0
  %v970 = vadd.f32 %v873, %v969
  %v971 = vpop.f32.mrf.mxu0
  %972 = vmatprep.mubr.bf16.mxu0 %v390
  %973 = vmatmul.mubr.bf16.gmra.mxu0 %v389
  %v974 = vpop.f32.mrf.mxu0
  %v975 = vadd.f32 %v878, %v974
  %v976 = vpop.f32.mrf.mxu0
  %v977 = vpop.f32.mrf.mxu0
  %v978 = vadd.f32 %v881, %v977
  %v979 = vpop.f32.mrf.mxu0
  %980 = vmatprep.mubr.bf16.mxu0 %v397
  %981 = vmatmul.mubr.bf16.gmra.mxu0 %v396
  %v982 = vpop.f32.mrf.mxu0
  %v983 = vadd.f32 %v886, %v982
  %v984 = vpop.f32.mrf.mxu0
  %v985 = vpop.f32.mrf.mxu0
  %v986 = vadd.f32 %v889, %v985
  %v987 = vpop.f32.mrf.mxu0
  %988 = vmatprep.mubr.bf16.mxu0 %v404
  %989 = vmatmul.mubr.bf16.gmra.mxu0 %v403
  %v990 = vpop.f32.mrf.mxu0
  %v991 = vadd.f32 %v894, %v990
  %v992 = vpop.f32.mrf.mxu0
  %v993 = vpop.f32.mrf.mxu0
  %v994 = vadd.f32 %v897, %v993
  %v995 = vpop.f32.mrf.mxu0
  %996 = vmatprep.mubr.bf16.mxu0 %v411
  %997 = vmatmul.mubr.bf16.gmra.mxu0 %v410
  %v998 = vpop.f32.mrf.mxu0
  %v999 = vadd.f32 %v902, %v998
  %v1000 = vpop.f32.mrf.mxu0
  %v1001 = vpop.f32.mrf.mxu0
  %v1002 = vadd.f32 %v905, %v1001
  %v1003 = vpop.f32.mrf.mxu0
  %1004 = vmatprep.mubr.bf16.mxu0 %v418
  %1005 = vmatmul.mubr.bf16.gmra.mxu0 %v417
  %v1006 = vpop.f32.mrf.mxu0
  %v1007 = vadd.f32 %v910, %v1006
  %v1008 = vpop.f32.mrf.mxu0
  %v1009 = vpop.f32.mrf.mxu0
  %v1010 = vadd.f32 %v913, %v1009
  %v1011 = vpop.f32.mrf.mxu0
  %1012 = vdwg.mxu0
  %1013 = vmatprep.subr.bf16.mxu0 0
  %1014 = vmatpush1.bf16.msra.mxu0 %v725
  %1015 = vmatprep.subr.bf16.mxu0 0
  %1016 = vmatpush1.bf16.msra.mxu0 %v724
  %1017 = vmatprep.subr.bf16.mxu0 0
  %1018 = vmatpush1.bf16.msra.mxu0 %v723
  %1019 = vmatprep.subr.bf16.mxu0 0
  %1020 = vmatpush1.bf16.msra.mxu0 %v722
  %1021 = vmatprep.subr.bf16.mxu0 0
  %1022 = vmatpush1.bf16.msra.mxu0 %v721
  %1023 = vmatprep.subr.bf16.mxu0 0
  %1024 = vmatpush1.bf16.msra.mxu0 %v720
  %1025 = vmatprep.subr.bf16.mxu0 0
  %1026 = vmatpush1.bf16.msra.mxu0 %v719
  %1027 = vmatprep.subr.bf16.mxu0 0
  %1028 = vmatpush1.bf16.msra.mxu0 %v718
  %1029 = vmatprep.subr.bf16.mxu0 0
  %1030 = vmatpush2.bf16.msra.mxu0 %v733
  %1031 = vmatprep.subr.bf16.mxu0 0
  %1032 = vmatpush2.bf16.msra.mxu0 %v732
  %1033 = vmatprep.subr.bf16.mxu0 0
  %1034 = vmatpush2.bf16.msra.mxu0 %v731
  %1035 = vmatprep.subr.bf16.mxu0 0
  %1036 = vmatpush2.bf16.msra.mxu0 %v730
  %1037 = vmatprep.subr.bf16.mxu0 0
  %1038 = vmatpush2.bf16.msra.mxu0 %v729
  %1039 = vmatprep.subr.bf16.mxu0 0
  %1040 = vmatpush2.bf16.msra.mxu0 %v728
  %1041 = vmatprep.subr.bf16.mxu0 0
  %1042 = vmatpush2.bf16.msra.mxu0 %v727
  %1043 = vmatprep.subr.bf16.mxu0 0
  %1044 = vmatpush2.bf16.msra.mxu0 %v726
  %1045 = vmatprep.mubr.bf16.mxu0 %v371
  %1046 = vmatmul.mubr.bf16.gmra.mxu0 %v370
  %v1047 = vpop.f32.mrf.mxu0
  %v1048 = vadd.f32 %v951, %v1047
  %v1049 = vpop.f32.mrf.mxu0
  %v1050 = vpop.f32.mrf.mxu0
  %v1051 = vadd.f32 %v954, %v1050
  %v1052 = vpop.f32.mrf.mxu0
  %1053 = vmatprep.mubr.bf16.mxu0 %v378
  %1054 = vmatmul.mubr.bf16.gmra.mxu0 %v377
  %v1055 = vpop.f32.mrf.mxu0
  %v1056 = vadd.f32 %v959, %v1055
  %v1057 = vpop.f32.mrf.mxu0
  %v1058 = vpop.f32.mrf.mxu0
  %v1059 = vadd.f32 %v962, %v1058
  %v1060 = vpop.f32.mrf.mxu0
  %1061 = vmatprep.mubr.bf16.mxu0 %v385
  %1062 = vmatmul.mubr.bf16.gmra.mxu0 %v384
  %v1063 = vpop.f32.mrf.mxu0
  %v1064 = vadd.f32 %v967, %v1063
  %v1065 = vpop.f32.mrf.mxu0
  %v1066 = vpop.f32.mrf.mxu0
  %v1067 = vadd.f32 %v970, %v1066
  %v1068 = vpop.f32.mrf.mxu0
  %1069 = vmatprep.mubr.bf16.mxu0 %v392
  %1070 = vmatmul.mubr.bf16.gmra.mxu0 %v391
  %v1071 = vpop.f32.mrf.mxu0
  %v1072 = vadd.f32 %v975, %v1071
  %v1073 = vpop.f32.mrf.mxu0
  %v1074 = vpop.f32.mrf.mxu0
  %v1075 = vadd.f32 %v978, %v1074
  %v1076 = vpop.f32.mrf.mxu0
  %1077 = vmatprep.mubr.bf16.mxu0 %v399
  %1078 = vmatmul.mubr.bf16.gmra.mxu0 %v398
  %v1079 = vpop.f32.mrf.mxu0
  %v1080 = vadd.f32 %v983, %v1079
  %v1081 = vpop.f32.mrf.mxu0
  %v1082 = vpop.f32.mrf.mxu0
  %v1083 = vadd.f32 %v986, %v1082
  %v1084 = vpop.f32.mrf.mxu0
  %1085 = vmatprep.mubr.bf16.mxu0 %v406
  %1086 = vmatmul.mubr.bf16.gmra.mxu0 %v405
  %v1087 = vpop.f32.mrf.mxu0
  %v1088 = vadd.f32 %v991, %v1087
  %v1089 = vpop.f32.mrf.mxu0
  %v1090 = vpop.f32.mrf.mxu0
  %v1091 = vadd.f32 %v994, %v1090
  %v1092 = vpop.f32.mrf.mxu0
  %1093 = vmatprep.mubr.bf16.mxu0 %v413
  %1094 = vmatmul.mubr.bf16.gmra.mxu0 %v412
  %v1095 = vpop.f32.mrf.mxu0
  %v1096 = vadd.f32 %v999, %v1095
  %v1097 = vpop.f32.mrf.mxu0
  %v1098 = vpop.f32.mrf.mxu0
  %v1099 = vadd.f32 %v1002, %v1098
  %v1100 = vpop.f32.mrf.mxu0
  %1101 = vmatprep.mubr.bf16.mxu0 %v420
  %1102 = vmatmul.mubr.bf16.gmra.mxu0 %v419
  %v1103 = vpop.f32.mrf.mxu0
  %v1104 = vadd.f32 %v1007, %v1103
  %v1105 = vpop.f32.mrf.mxu0
  %v1106 = vpop.f32.mrf.mxu0
  %v1107 = vadd.f32 %v1010, %v1106
  %v1108 = vpop.f32.mrf.mxu0
  %1109 = vdwg.mxu0
  %1110 = vmatprep.subr.bf16.mxu0 0
  %1111 = vmatpush1.bf16.msra.mxu0 0
  %1112 = vmatprep.subr.bf16.mxu0 0
  %1113 = vmatpush1.bf16.msra.mxu0 0
  %1114 = vmatprep.subr.bf16.mxu0 0
  %1115 = vmatpush1.bf16.msra.mxu0 %v739
  %1116 = vmatprep.subr.bf16.mxu0 0
  %1117 = vmatpush1.bf16.msra.mxu0 %v738
  %1118 = vmatprep.subr.bf16.mxu0 0
  %1119 = vmatpush1.bf16.msra.mxu0 %v737
  %1120 = vmatprep.subr.bf16.mxu0 0
  %1121 = vmatpush1.bf16.msra.mxu0 %v736
  %1122 = vmatprep.subr.bf16.mxu0 0
  %1123 = vmatpush1.bf16.msra.mxu0 %v735
  %1124 = vmatprep.subr.bf16.mxu0 0
  %1125 = vmatpush1.bf16.msra.mxu0 %v734
  %1126 = vmatprep.subr.bf16.mxu0 0
  %1127 = vmatpush2.bf16.msra.mxu0 0
  %1128 = vmatprep.subr.bf16.mxu0 0
  %1129 = vmatpush2.bf16.msra.mxu0 0
  %1130 = vmatprep.subr.bf16.mxu0 0
  %1131 = vmatpush2.bf16.msra.mxu0 0
  %1132 = vmatprep.subr.bf16.mxu0 0
  %1133 = vmatpush2.bf16.msra.mxu0 0
  %1134 = vmatprep.subr.bf16.mxu0 0
  %1135 = vmatpush2.bf16.msra.mxu0 0
  %1136 = vmatprep.subr.bf16.mxu0 0
  %1137 = vmatpush2.bf16.msra.mxu0 0
  %1138 = vmatprep.subr.bf16.mxu0 0
  %1139 = vmatpush2.bf16.msra.mxu0 0
  %1140 = vmatprep.subr.bf16.mxu0 0
  %1141 = vmatpush2.bf16.msra.mxu0 0
  %1142 = vmatprep.mubr.bf16.mxu0 0
  %1143 = vmatmul.mubr.bf16.gmra.mxu0 %v796
  %v1144 = vpop.f32.mrf.mxu0
  %v1145 = vadd.f32 %v1048, %v1144
  %v1146 = vpop.f32.mrf.mxu0
  %v1147 = vpop.f32.mrf.mxu0
  %v1148 = vadd.f32 %v1051, %v1147
  %v1149 = vpop.f32.mrf.mxu0
  %1150 = vmatprep.mubr.bf16.mxu0 0
  %1151 = vmatmul.mubr.bf16.gmra.mxu0 %v799
  %v1152 = vpop.f32.mrf.mxu0
  %v1153 = vadd.f32 %v1056, %v1152
  %v1154 = vpop.f32.mrf.mxu0
  %v1155 = vpop.f32.mrf.mxu0
  %v1156 = vadd.f32 %v1059, %v1155
  %v1157 = vpop.f32.mrf.mxu0
  %1158 = vmatprep.mubr.bf16.mxu0 0
  %1159 = vmatmul.mubr.bf16.gmra.mxu0 %v802
  %v1160 = vpop.f32.mrf.mxu0
  %v1161 = vadd.f32 %v1064, %v1160
  %v1162 = vpop.f32.mrf.mxu0
  %v1163 = vpop.f32.mrf.mxu0
  %v1164 = vadd.f32 %v1067, %v1163
  %v1165 = vpop.f32.mrf.mxu0
  %1166 = vmatprep.mubr.bf16.mxu0 0
  %1167 = vmatmul.mubr.bf16.gmra.mxu0 %v805
  %v1168 = vpop.f32.mrf.mxu0
  %v1169 = vadd.f32 %v1072, %v1168
  %v1170 = vpop.f32.mrf.mxu0
  %v1171 = vpop.f32.mrf.mxu0
  %v1172 = vadd.f32 %v1075, %v1171
  %v1173 = vpop.f32.mrf.mxu0
  %1174 = vmatprep.mubr.bf16.mxu0 0
  %1175 = vmatmul.mubr.bf16.gmra.mxu0 %v808
  %v1176 = vpop.f32.mrf.mxu0
  %v1177 = vadd.f32 %v1080, %v1176
  %v1178 = vpop.f32.mrf.mxu0
  %v1179 = vpop.f32.mrf.mxu0
  %v1180 = vadd.f32 %v1083, %v1179
  %v1181 = vpop.f32.mrf.mxu0
  %1182 = vmatprep.mubr.bf16.mxu0 0
  %1183 = vmatmul.mubr.bf16.gmra.mxu0 %v811
  %v1184 = vpop.f32.mrf.mxu0
  %v1185 = vadd.f32 %v1088, %v1184
  %v1186 = vpop.f32.mrf.mxu0
  %v1187 = vpop.f32.mrf.mxu0
  %v1188 = vadd.f32 %v1091, %v1187
  %v1189 = vpop.f32.mrf.mxu0
  %1190 = vmatprep.mubr.bf16.mxu0 0
  %1191 = vmatmul.mubr.bf16.gmra.mxu0 %v814
  %v1192 = vpop.f32.mrf.mxu0
  %v1193 = vadd.f32 %v1096, %v1192
  %v1194 = vpop.f32.mrf.mxu0
  %v1195 = vpop.f32.mrf.mxu0
  %v1196 = vadd.f32 %v1099, %v1195
  %v1197 = vpop.f32.mrf.mxu0
  %1198 = vmatprep.mubr.bf16.mxu0 0
  %1199 = vmatmul.mubr.bf16.gmra.mxu0 %v817
  %v1200 = vpop.f32.mrf.mxu0
  %v1201 = vadd.f32 %v1104, %v1200
  %v1202 = vpop.f32.mrf.mxu0
  %v1203 = vpop.f32.mrf.mxu0
  %v1204 = vadd.f32 %v1107, %v1203
  %v1205 = vpop.f32.mrf.mxu0
  %1206 = vdwg.mxu0
  %v1207 = vld [vmem:[%s2] sm:$0x1]
  %v1209 = vlaneseq
  %v1210 = vshrl.u32 %v1209, 7
  %v1211 = vsub.s32 0, %v1210
  %v1212 = vrot.slane %v1207, %v1211
  %v1214 = vmul.f32 %v1145, %v1212
  %v1215 = vmul.f32 %v1148, %v1212
  %v1216 = vmul.f32 %v1153, %v1212
  %v1217 = vmul.f32 %v1156, %v1212
  %v1218 = vmul.f32 %v1161, %v1212
  %v1219 = vmul.f32 %v1164, %v1212
  %v1220 = vmul.f32 %v1169, %v1212
  %v1221 = vmul.f32 %v1172, %v1212
  %v1222 = vmul.f32 %v1177, %v1212
  %v1223 = vmul.f32 %v1180, %v1212
  %v1224 = vmul.f32 %v1185, %v1212
  %v1225 = vmul.f32 %v1188, %v1212
  %v1226 = vmul.f32 %v1193, %v1212
  %v1227 = vmul.f32 %v1196, %v1212
  %v1228 = vmul.f32 %v1201, %v1212
  %v1229 = vmul.f32 %v1204, %v1212
  %v1230 = vld [vmem:[%s3] sm:$0x1]
  %v1232 = vlaneseq
  %v1233 = vshrl.u32 %v1232, 7
  %v1234 = vsub.s32 0, %v1233
  %v1235 = vrot.slane %v1230, %v1234
  %v1237 = vadd.f32 %v1214, %v1235
  %v1238 = vadd.f32 %v1215, %v1235
  %v1239 = vadd.f32 %v1216, %v1235
  %v1240 = vadd.f32 %v1217, %v1235
  %v1241 = vadd.f32 %v1218, %v1235
  %v1242 = vadd.f32 %v1219, %v1235
  %v1243 = vadd.f32 %v1220, %v1235
  %v1244 = vadd.f32 %v1221, %v1235
  %v1245 = vadd.f32 %v1222, %v1235
  %v1246 = vadd.f32 %v1223, %v1235
  %v1247 = vadd.f32 %v1224, %v1235
  %v1248 = vadd.f32 %v1225, %v1235
  %v1249 = vadd.f32 %v1226, %v1235
  %v1250 = vadd.f32 %v1227, %v1235
  %v1251 = vadd.f32 %v1228, %v1235
  %v1252 = vadd.f32 %v1229, %v1235
  %v1253 = vmax.f32 %v1237, 0.0
  %v1254 = vmax.f32 %v1238, 0.0
  %v1255 = vmax.f32 %v1239, 0.0
  %v1256 = vmax.f32 %v1240, 0.0
  %v1257 = vmax.f32 %v1241, 0.0
  %v1258 = vmax.f32 %v1242, 0.0
  %v1259 = vmax.f32 %v1243, 0.0
  %v1260 = vmax.f32 %v1244, 0.0
  %v1261 = vmax.f32 %v1245, 0.0
  %v1262 = vmax.f32 %v1246, 0.0
  %v1263 = vmax.f32 %v1247, 0.0
  %v1264 = vmax.f32 %v1248, 0.0
  %v1265 = vmax.f32 %v1249, 0.0
  %v1266 = vmax.f32 %v1250, 0.0
  %v1267 = vmax.f32 %v1251, 0.0
  %v1268 = vmax.f32 %v1252, 0.0
  %1269 = vst [vmem:[%s4] sm:$0xff] %v1253
  %1270 = vst [vmem:[%s4 + $0x8] sm:$0xff] %v1254
  %1271 = vst [vmem:[%s4 + $0x10] sm:$0xff] %v1255
  %1272 = vst [vmem:[%s4 + $0x18] sm:$0xff] %v1256
  %1273 = vst [vmem:[%s4 + $0x20] sm:$0xff] %v1257
  %1274 = vst [vmem:[%s4 + $0x28] sm:$0xff] %v1258
  %1275 = vst [vmem:[%s4 + $0x30] sm:$0xff] %v1259
  %1276 = vst [vmem:[%s4 + $0x38] sm:$0xff] %v1260
  %1277 = vst [vmem:[%s4 + $0x40] sm:$0xff] %v1261
  %1278 = vst [vmem:[%s4 + $0x48] sm:$0xff] %v1262
  %1279 = vst [vmem:[%s4 + $0x50] sm:$0xff] %v1263
  %1280 = vst [vmem:[%s4 + $0x58] sm:$0xff] %v1264
  %1281 = vst [vmem:[%s4 + $0x60] sm:$0xff] %v1265
  %1282 = vst [vmem:[%s4 + $0x68] sm:$0xff] %v1266
  %1283 = vst [vmem:[%s4 + $0x70] sm:$0xff] %v1267
  %1284 = vst [vmem:[%s4 + $0x78] sm:$0xff] %v1268
  // Predicated region
  $region18: #{one_model_forward.54} parent=0 // pred_check
    _
  $region19: #{one_model_forward.54} parent=0 // pred_check_branch
    %1286 = sbr.rel (0) target = $region21
  $region20: #{one_model_forward.54} parent=0 // pred_region
    _
  $region21: #{one_model_forward.54} parent=0 // pred_fallthru
    _
  // Predicated region
  $region22: #{one_model_forward.54} parent=0 // pred_check
    _
  $region23: #{one_model_forward.54} parent=0 // pred_check_branch
    %1288 = sbr.rel (0) target = $region25
  $region24: #{one_model_forward.54} parent=0 // pred_region
    _
  $region25: #{one_model_forward.54} parent=0 // pred_fallthru
    _

// kernel: one_model_forward.59
$region0: #{one_model_forward.59}
  #allocation0 [shape = 'u32[]', space=smem, size = 0x4, offset = 0x4, fixed_abs, tag = 'smem constant byte address 0x4 - core index']
  #allocation1 [shape = 'u32[144,128]{1,0:T(1,128)}', space=vmem, size = 0x12000, scoped, tag = 'internal scratch']
  %s0 = inlined_call_operand.vmem [shape: bf16[128,288], index: 0, kind: input, shape index: {}]
  %s1 = inlined_call_operand.vmem [shape: bf16[288,128], index: 1, kind: input, shape index: {}]
  %s2 = inlined_call_operand.vmem [shape: f32[1,128], index: 2, kind: input, shape index: {}]
  %s3 = inlined_call_operand.vmem [shape: f32[1,128], index: 3, kind: input, shape index: {}]
  %s4 = inlined_call_operand.vmem [shape: f32[128,128], index: 4, kind: output, shape index: {}]
  %s5 = sld [smem:[#allocation0]]
  $region26: #{one_model_forward.59} parent=0
    _
  %s7 = ssub.s32 1, %s5
  %s8 = scalar_select 0, %s7, %s5
  // Predicated region
  $region2: #{one_model_forward.59} parent=0 // pred_check
    _
  $region3: #{one_model_forward.59} parent=0 // pred_check_branch
    %10 = sbr.rel (0) target = $region5
  $region4: #{one_model_forward.59} parent=0 // pred_region
    _
  $region5: #{one_model_forward.59} parent=0 // pred_fallthru
    _
  // Predicated region
  $region6: #{one_model_forward.59} parent=0 // pred_check
    _
  $region7: #{one_model_forward.59} parent=0 // pred_check_branch
    %12 = sbr.rel (0) target = $region9
  $region8: #{one_model_forward.59} parent=0 // pred_region
    _
  $region9: #{one_model_forward.59} parent=0 // pred_fallthru
    _
  // Predicated region
  $region10: #{one_model_forward.59} parent=0 // pred_check
    _
  $region11: #{one_model_forward.59} parent=0 // pred_check_branch
    %14 = sbr.rel (0) target = $region13
  $region12: #{one_model_forward.59} parent=0 // pred_region
    _
  $region13: #{one_model_forward.59} parent=0 // pred_fallthru
    _
  // Predicated region
  $region14: #{one_model_forward.59} parent=0 // pred_check
    _
  $region15: #{one_model_forward.59} parent=0 // pred_check_branch
    %16 = sbr.rel (0) target = $region17
  $region16: #{one_model_forward.59} parent=0 // pred_region
    _
  $region17: #{one_model_forward.59} parent=0 // pred_fallthru
    _
  %v18 = vld [vmem:[%s0] sm:$0xff]
  %v19 = vld [vmem:[%s0 + $0x8] sm:$0xf]
  %v20 = vld [vmem:[%s0 + $0xc] sm:$0xff]
  %v21 = vld [vmem:[%s0 + $0x14] sm:$0xf]
  %v22 = vld [vmem:[%s0 + $0x18] sm:$0xff]
  %v23 = vld [vmem:[%s0 + $0x20] sm:$0xf]
  %v24 = vld [vmem:[%s0 + $0x24] sm:$0xff]
  %v25 = vld [vmem:[%s0 + $0x2c] sm:$0xf]
  %v26 = vld [vmem:[%s0 + $0x30] sm:$0xff]
  %v27 = vld [vmem:[%s0 + $0x38] sm:$0xf]
  %v28 = vld [vmem:[%s0 + $0x3c] sm:$0xff]
  %v29 = vld [vmem:[%s0 + $0x44] sm:$0xf]
  %v30 = vld [vmem:[%s0 + $0x48] sm:$0xff]
  %v31 = vld [vmem:[%s0 + $0x50] sm:$0xf]
  %v32 = vld [vmem:[%s0 + $0x54] sm:$0xff]
  %v33 = vld [vmem:[%s0 + $0x5c] sm:$0xf]
  %v34 = vld [vmem:[%s0 + $0x60] sm:$0xff]
  %v35 = vld [vmem:[%s0 + $0x68] sm:$0xf]
  %v36 = vld [vmem:[%s0 + $0x6c] sm:$0xff]
  %v37 = vld [vmem:[%s0 + $0x74] sm:$0xf]
  %v38 = vld [vmem:[%s0 + $0x78] sm:$0xff]
  %v39 = vld [vmem:[%s0 + $0x80] sm:$0xf]
  %v40 = vld [vmem:[%s0 + $0x84] sm:$0xff]
  %v41 = vld [vmem:[%s0 + $0x8c] sm:$0xf]
  %v42 = vld [vmem:[%s0 + $0x90] sm:$0xff]
  %v43 = vld [vmem:[%s0 + $0x98] sm:$0xf]
  %v44 = vld [vmem:[%s0 + $0x9c] sm:$0xff]
  %v45 = vld [vmem:[%s0 + $0xa4] sm:$0xf]
  %v46 = vld [vmem:[%s0 + $0xa8] sm:$0xff]
  %v47 = vld [vmem:[%s0 + $0xb0] sm:$0xf]
  %v48 = vld [vmem:[%s0 + $0xb4] sm:$0xff]
  %v49 = vld [vmem:[%s0 + $0xbc] sm:$0xf]
  %v50 = vld [vmem:[%s1] sm:$0xf]
  %v51 = vld [vmem:[%s1 + $0x4] sm:$0xf]
  %v52 = vld [vmem:[%s1 + $0x8] sm:$0xf]
  %v53 = vld [vmem:[%s1 + $0xc] sm:$0xf]
  %v54 = vld [vmem:[%s1 + $0x10] sm:$0xf]
  %v55 = vld [vmem:[%s1 + $0x14] sm:$0xf]
  %v56 = vld [vmem:[%s1 + $0x18] sm:$0xf]
  %v57 = vld [vmem:[%s1 + $0x1c] sm:$0xf]
  %v58 = vld [vmem:[%s1 + $0x20] sm:$0xf]
  %v59 = vld [vmem:[%s1 + $0x24] sm:$0xf]
  %v60 = vld [vmem:[%s1 + $0x28] sm:$0xf]
  %v61 = vld [vmem:[%s1 + $0x2c] sm:$0xf]
  %v62 = vld [vmem:[%s1 + $0x30] sm:$0xf]
  %v63 = vld [vmem:[%s1 + $0x34] sm:$0xf]
  %v64 = vld [vmem:[%s1 + $0x38] sm:$0xf]
  %v65 = vld [vmem:[%s1 + $0x3c] sm:$0xf]
  %v66 = vld [vmem:[%s1 + $0x40] sm:$0xf]
  %v67 = vld [vmem:[%s1 + $0x44] sm:$0xf]
  %v68 = vld [vmem:[%s1 + $0x48] sm:$0xf]
  %v69 = vld [vmem:[%s1 + $0x4c] sm:$0xf]
  %v70 = vld [vmem:[%s1 + $0x50] sm:$0xf]
  %v71 = vld [vmem:[%s1 + $0x54] sm:$0xf]
  %v72 = vld [vmem:[%s1 + $0x58] sm:$0xf]
  %v73 = vld [vmem:[%s1 + $0x5c] sm:$0xf]
  %v74 = vld [vmem:[%s1 + $0x60] sm:$0xf]
  %v75 = vld [vmem:[%s1 + $0x64] sm:$0xf]
  %v76 = vld [vmem:[%s1 + $0x68] sm:$0xf]
  %v77 = vld [vmem:[%s1 + $0x6c] sm:$0xf]
  %v78 = vld [vmem:[%s1 + $0x70] sm:$0xf]
  %v79 = vld [vmem:[%s1 + $0x74] sm:$0xf]
  %v80 = vld [vmem:[%s1 + $0x78] sm:$0xf]
  %v81 = vld [vmem:[%s1 + $0x7c] sm:$0xf]
  %v82 = vld [vmem:[%s1 + $0x80] sm:$0xf]
  %v83 = vld [vmem:[%s1 + $0x84] sm:$0xf]
  %v84 = vld [vmem:[%s1 + $0x88] sm:$0xf]
  %v85 = vld [vmem:[%s1 + $0x8c] sm:$0xf]
  %v118 = vunpack.c.l.b16 %v18
  %v119 = vunpack.c.h.b16 %v18
  %v120 = vunpack.c.l.b16 %v19
  %v121 = vunpack.c.l.b16 %v20
  %v122 = vunpack.c.h.b16 %v20
  %v123 = vunpack.c.l.b16 %v21
  %v124 = vunpack.c.l.b16 %v22
  %v125 = vunpack.c.h.b16 %v22
  %v126 = vunpack.c.l.b16 %v23
  %v127 = vunpack.c.l.b16 %v24
  %v128 = vunpack.c.h.b16 %v24
  %v129 = vunpack.c.l.b16 %v25
  %v130 = vunpack.c.l.b16 %v26
  %v131 = vunpack.c.h.b16 %v26
  %v132 = vunpack.c.l.b16 %v27
  %v133 = vunpack.c.l.b16 %v28
  %v134 = vunpack.c.h.b16 %v28
  %v135 = vunpack.c.l.b16 %v29
  %v136 = vunpack.c.l.b16 %v30
  %v137 = vunpack.c.h.b16 %v30
  %v138 = vunpack.c.l.b16 %v31
  %v139 = vunpack.c.l.b16 %v32
  %v140 = vunpack.c.h.b16 %v32
  %v141 = vunpack.c.l.b16 %v33
  %v142 = vunpack.c.l.b16 %v34
  %v143 = vunpack.c.h.b16 %v34
  %v144 = vunpack.c.l.b16 %v35
  %v145 = vunpack.c.l.b16 %v36
  %v146 = vunpack.c.h.b16 %v36
  %v147 = vunpack.c.l.b16 %v37
  %v148 = vunpack.c.l.b16 %v38
  %v149 = vunpack.c.h.b16 %v38
  %v150 = vunpack.c.l.b16 %v39
  %v151 = vunpack.c.l.b16 %v40
  %v152 = vunpack.c.h.b16 %v40
  %v153 = vunpack.c.l.b16 %v41
  %v154 = vunpack.c.l.b16 %v42
  %v155 = vunpack.c.h.b16 %v42
  %v156 = vunpack.c.l.b16 %v43
  %v157 = vunpack.c.l.b16 %v44
  %v158 = vunpack.c.h.b16 %v44
  %v159 = vunpack.c.l.b16 %v45
  %v160 = vunpack.c.l.b16 %v46
  %v161 = vunpack.c.h.b16 %v46
  %v162 = vunpack.c.l.b16 %v47
  %v163 = vunpack.c.l.b16 %v48
  %v164 = vunpack.c.h.b16 %v48
  %v165 = vunpack.c.l.b16 %v49
  %v166 = vpack.c.b16 %v121, %v118
  %v167 = vpack.c.b16 %v122, %v119
  %v168 = vpack.c.b16 %v123, %v120
  %v169 = vpack.c.b16 %v127, %v124
  %v170 = vpack.c.b16 %v128, %v125
  %v171 = vpack.c.b16 %v129, %v126
  %v172 = vpack.c.b16 %v133, %v130
  %v173 = vpack.c.b16 %v134, %v131
  %v174 = vpack.c.b16 %v135, %v132
  %v175 = vpack.c.b16 %v139, %v136
  %v176 = vpack.c.b16 %v140, %v137
  %v177 = vpack.c.b16 %v141, %v138
  %v178 = vpack.c.b16 %v145, %v142
  %v179 = vpack.c.b16 %v146, %v143
  %v180 = vpack.c.b16 %v147, %v144
  %v181 = vpack.c.b16 %v151, %v148
  %v182 = vpack.c.b16 %v152, %v149
  %v183 = vpack.c.b16 %v153, %v150
  %v184 = vpack.c.b16 %v157, %v154
  %v185 = vpack.c.b16 %v158, %v155
  %v186 = vpack.c.b16 %v159, %v156
  %v187 = vpack.c.b16 %v163, %v160
  %v188 = vpack.c.b16 %v164, %v161
  %v189 = vpack.c.b16 %v165, %v162
  %v242 = vunpack.c.l.b16 %v50
  %v243 = vunpack.c.l.b16 %v51
  %v244 = vunpack.c.l.b16 %v52
  %v245 = vunpack.c.l.b16 %v53
  %v246 = vunpack.c.l.b16 %v54
  %v247 = vunpack.c.l.b16 %v55
  %v248 = vunpack.c.l.b16 %v56
  %v249 = vunpack.c.l.b16 %v57
  %v250 = vunpack.c.l.b16 %v58
  %v251 = vunpack.c.l.b16 %v59
  %v252 = vunpack.c.l.b16 %v60
  %v253 = vunpack.c.l.b16 %v61
  %v254 = vunpack.c.l.b16 %v62
  %v255 = vunpack.c.l.b16 %v63
  %v256 = vunpack.c.l.b16 %v64
  %v257 = vunpack.c.l.b16 %v65
  %v258 = vunpack.c.l.b16 %v66
  %v259 = vunpack.c.l.b16 %v67
  %v260 = vunpack.c.l.b16 %v68
  %v261 = vunpack.c.l.b16 %v69
  %v262 = vunpack.c.l.b16 %v70
  %v263 = vunpack.c.l.b16 %v71
  %v264 = vunpack.c.l.b16 %v72
  %v265 = vunpack.c.l.b16 %v73
  %v266 = vunpack.c.l.b16 %v74
  %v267 = vunpack.c.l.b16 %v75
  %v268 = vunpack.c.l.b16 %v76
  %v269 = vunpack.c.l.b16 %v77
  %v270 = vunpack.c.l.b16 %v78
  %v271 = vunpack.c.l.b16 %v79
  %v272 = vunpack.c.l.b16 %v80
  %v273 = vunpack.c.l.b16 %v81
  %v274 = vunpack.c.l.b16 %v82
  %v275 = vunpack.c.l.b16 %v83
  %v276 = vunpack.c.l.b16 %v84
  %v277 = vunpack.c.l.b16 %v85
  %v278 = vpack.c.b16 %v243, %v242
  %v279 = vpack.c.b16 %v245, %v244
  %v280 = vpack.c.b16 %v247, %v246
  %v281 = vpack.c.b16 %v249, %v248
  %v282 = vpack.c.b16 %v251, %v250
  %v283 = vpack.c.b16 %v253, %v252
  %v284 = vpack.c.b16 %v255, %v254
  %v285 = vpack.c.b16 %v257, %v256
  %v286 = vpack.c.b16 %v259, %v258
  %v287 = vpack.c.b16 %v261, %v260
  %v288 = vpack.c.b16 %v263, %v262
  %v289 = vpack.c.b16 %v265, %v264
  %v290 = vpack.c.b16 %v267, %v266
  %v291 = vpack.c.b16 %v269, %v268
  %v292 = vpack.c.b16 %v271, %v270
  %v293 = vpack.c.b16 %v273, %v272
  %v294 = vpack.c.b16 %v275, %v274
  %v295 = vpack.c.b16 %v277, %v276
  %vm314 = vcmask 261120
  %v316 = vsel %vm314, %v168, 0
  %v319 = vsel %vm314, %v171, 0
  %v322 = vsel %vm314, %v174, 0
  %v325 = vsel %vm314, %v177, 0
  %v328 = vsel %vm314, %v180, 0
  %v331 = vsel %vm314, %v183, 0
  %v334 = vsel %vm314, %v186, 0
  %v337 = vsel %vm314, %v189, 0
  %339 = vmatprep.subr.bf16.mxu0 0
  %340 = vmatpush1.bf16.msra.mxu0 %v285
  %341 = vmatprep.subr.bf16.mxu0 0
  %342 = vmatpush1.bf16.msra.mxu0 %v284
  %343 = vmatprep.subr.bf16.mxu0 0
  %344 = vmatpush1.bf16.msra.mxu0 %v283
  %345 = vmatprep.subr.bf16.mxu0 0
  %346 = vmatpush1.bf16.msra.mxu0 %v282
  %347 = vmatprep.subr.bf16.mxu0 0
  %348 = vmatpush1.bf16.msra.mxu0 %v281
  %349 = vmatprep.subr.bf16.mxu0 0
  %350 = vmatpush1.bf16.msra.mxu0 %v280
  %351 = vmatprep.subr.bf16.mxu0 0
  %352 = vmatpush1.bf16.msra.mxu0 %v279
  %353 = vmatprep.subr.bf16.mxu0 0
  %354 = vmatpush1.bf16.msra.mxu0 %v278
  %355 = vmatprep.subr.bf16.mxu0 0
  %356 = vmatpush2.bf16.msra.mxu0 %v293
  %357 = vmatprep.subr.bf16.mxu0 0
  %358 = vmatpush2.bf16.msra.mxu0 %v292
  %359 = vmatprep.subr.bf16.mxu0 0
  %360 = vmatpush2.bf16.msra.mxu0 %v291
  %361 = vmatprep.subr.bf16.mxu0 0
  %362 = vmatpush2.bf16.msra.mxu0 %v290
  %363 = vmatprep.subr.bf16.mxu0 0
  %364 = vmatpush2.bf16.msra.mxu0 %v289
  %365 = vmatprep.subr.bf16.mxu0 0
  %366 = vmatpush2.bf16.msra.mxu0 %v288
  %367 = vmatprep.subr.bf16.mxu0 0
  %368 = vmatpush2.bf16.msra.mxu0 %v287
  %369 = vmatprep.subr.bf16.mxu0 0
  %370 = vmatpush2.bf16.msra.mxu0 %v286
  %371 = vmatprep.mubr.bf16.mxu0 %v167
  %372 = vmatmul.mubr.bf16.gmra.mxu0 %v166
  %v373 = vpop.f32.mrf.mxu0
  %v374 = vadd.f32 0.0, %v373
  %v375 = vpop.f32.mrf.mxu0
  %v376 = vpop.f32.mrf.mxu0
  %v377 = vadd.f32 0.0, %v376
  %v378 = vpop.f32.mrf.mxu0
  %379 = vmatprep.mubr.bf16.mxu0 %v170
  %380 = vmatmul.mubr.bf16.gmra.mxu0 %v169
  %v381 = vpop.f32.mrf.mxu0
  %v382 = vadd.f32 0.0, %v381
  %v383 = vpop.f32.mrf.mxu0
  %v384 = vpop.f32.mrf.mxu0
  %v385 = vadd.f32 0.0, %v384
  %v386 = vpop.f32.mrf.mxu0
  %387 = vmatprep.mubr.bf16.mxu0 %v173
  %388 = vmatmul.mubr.bf16.gmra.mxu0 %v172
  %v389 = vpop.f32.mrf.mxu0
  %v390 = vadd.f32 0.0, %v389
  %v391 = vpop.f32.mrf.mxu0
  %v392 = vpop.f32.mrf.mxu0
  %v393 = vadd.f32 0.0, %v392
  %v394 = vpop.f32.mrf.mxu0
  %395 = vmatprep.mubr.bf16.mxu0 %v176
  %396 = vmatmul.mubr.bf16.gmra.mxu0 %v175
  %v397 = vpop.f32.mrf.mxu0
  %v398 = vadd.f32 0.0, %v397
  %v399 = vpop.f32.mrf.mxu0
  %v400 = vpop.f32.mrf.mxu0
  %v401 = vadd.f32 0.0, %v400
  %v402 = vpop.f32.mrf.mxu0
  %403 = vmatprep.mubr.bf16.mxu0 %v179
  %404 = vmatmul.mubr.bf16.gmra.mxu0 %v178
  %v405 = vpop.f32.mrf.mxu0
  %v406 = vadd.f32 0.0, %v405
  %v407 = vpop.f32.mrf.mxu0
  %v408 = vpop.f32.mrf.mxu0
  %v409 = vadd.f32 0.0, %v408
  %v410 = vpop.f32.mrf.mxu0
  %411 = vmatprep.mubr.bf16.mxu0 %v182
  %412 = vmatmul.mubr.bf16.gmra.mxu0 %v181
  %v413 = vpop.f32.mrf.mxu0
  %v414 = vadd.f32 0.0, %v413
  %v415 = vpop.f32.mrf.mxu0
  %v416 = vpop.f32.mrf.mxu0
  %v417 = vadd.f32 0.0, %v416
  %v418 = vpop.f32.mrf.mxu0
  %419 = vmatprep.mubr.bf16.mxu0 %v185
  %420 = vmatmul.mubr.bf16.gmra.mxu0 %v184
  %v421 = vpop.f32.mrf.mxu0
  %v422 = vadd.f32 0.0, %v421
  %v423 = vpop.f32.mrf.mxu0
  %v424 = vpop.f32.mrf.mxu0
  %v425 = vadd.f32 0.0, %v424
  %v426 = vpop.f32.mrf.mxu0
  %427 = vmatprep.mubr.bf16.mxu0 %v188
  %428 = vmatmul.mubr.bf16.gmra.mxu0 %v187
  %v429 = vpop.f32.mrf.mxu0
  %v430 = vadd.f32 0.0, %v429
  %v431 = vpop.f32.mrf.mxu0
  %v432 = vpop.f32.mrf.mxu0
  %v433 = vadd.f32 0.0, %v432
  %v434 = vpop.f32.mrf.mxu0
  %435 = vdwg.mxu0
  %436 = vmatprep.subr.bf16.mxu0 0
  %437 = vmatpush1.bf16.msra.mxu0 0
  %438 = vmatprep.subr.bf16.mxu0 0
  %439 = vmatpush1.bf16.msra.mxu0 0
  %440 = vmatprep.subr.bf16.mxu0 0
  %441 = vmatpush1.bf16.msra.mxu0 0
  %442 = vmatprep.subr.bf16.mxu0 0
  %443 = vmatpush1.bf16.msra.mxu0 0
  %444 = vmatprep.subr.bf16.mxu0 0
  %445 = vmatpush1.bf16.msra.mxu0 0
  %446 = vmatprep.subr.bf16.mxu0 0
  %447 = vmatpush1.bf16.msra.mxu0 0
  %448 = vmatprep.subr.bf16.mxu0 0
  %449 = vmatpush1.bf16.msra.mxu0 %v295
  %450 = vmatprep.subr.bf16.mxu0 0
  %451 = vmatpush1.bf16.msra.mxu0 %v294
  %452 = vmatprep.subr.bf16.mxu0 0
  %453 = vmatpush2.bf16.msra.mxu0 0
  %454 = vmatprep.subr.bf16.mxu0 0
  %455 = vmatpush2.bf16.msra.mxu0 0
  %456 = vmatprep.subr.bf16.mxu0 0
  %457 = vmatpush2.bf16.msra.mxu0 0
  %458 = vmatprep.subr.bf16.mxu0 0
  %459 = vmatpush2.bf16.msra.mxu0 0
  %460 = vmatprep.subr.bf16.mxu0 0
  %461 = vmatpush2.bf16.msra.mxu0 0
  %462 = vmatprep.subr.bf16.mxu0 0
  %463 = vmatpush2.bf16.msra.mxu0 0
  %464 = vmatprep.subr.bf16.mxu0 0
  %465 = vmatpush2.bf16.msra.mxu0 0
  %466 = vmatprep.subr.bf16.mxu0 0
  %467 = vmatpush2.bf16.msra.mxu0 0
  %468 = vmatprep.mubr.bf16.mxu0 0
  %469 = vmatmul.mubr.bf16.gmra.mxu0 %v316
  %v470 = vpop.f32.mrf.mxu0
  %v471 = vadd.f32 %v374, %v470
  %v472 = vpop.f32.mrf.mxu0
  %v473 = vpop.f32.mrf.mxu0
  %v474 = vadd.f32 %v377, %v473
  %v475 = vpop.f32.mrf.mxu0
  %476 = vmatprep.mubr.bf16.mxu0 0
  %477 = vmatmul.mubr.bf16.gmra.mxu0 %v319
  %v478 = vpop.f32.mrf.mxu0
  %v479 = vadd.f32 %v382, %v478
  %v480 = vpop.f32.mrf.mxu0
  %v481 = vpop.f32.mrf.mxu0
  %v482 = vadd.f32 %v385, %v481
  %v483 = vpop.f32.mrf.mxu0
  %484 = vmatprep.mubr.bf16.mxu0 0
  %485 = vmatmul.mubr.bf16.gmra.mxu0 %v322
  %v486 = vpop.f32.mrf.mxu0
  %v487 = vadd.f32 %v390, %v486
  %v488 = vpop.f32.mrf.mxu0
  %v489 = vpop.f32.mrf.mxu0
  %v490 = vadd.f32 %v393, %v489
  %v491 = vpop.f32.mrf.mxu0
  %492 = vmatprep.mubr.bf16.mxu0 0
  %493 = vmatmul.mubr.bf16.gmra.mxu0 %v325
  %v494 = vpop.f32.mrf.mxu0
  %v495 = vadd.f32 %v398, %v494
  %v496 = vpop.f32.mrf.mxu0
  %v497 = vpop.f32.mrf.mxu0
  %v498 = vadd.f32 %v401, %v497
  %v499 = vpop.f32.mrf.mxu0
  %500 = vmatprep.mubr.bf16.mxu0 0
  %501 = vmatmul.mubr.bf16.gmra.mxu0 %v328
  %v502 = vpop.f32.mrf.mxu0
  %v503 = vadd.f32 %v406, %v502
  %v504 = vpop.f32.mrf.mxu0
  %v505 = vpop.f32.mrf.mxu0
  %v506 = vadd.f32 %v409, %v505
  %v507 = vpop.f32.mrf.mxu0
  %508 = vmatprep.mubr.bf16.mxu0 0
  %509 = vmatmul.mubr.bf16.gmra.mxu0 %v331
  %v510 = vpop.f32.mrf.mxu0
  %v511 = vadd.f32 %v414, %v510
  %v512 = vpop.f32.mrf.mxu0
  %v513 = vpop.f32.mrf.mxu0
  %v514 = vadd.f32 %v417, %v513
  %v515 = vpop.f32.mrf.mxu0
  %516 = vmatprep.mubr.bf16.mxu0 0
  %517 = vmatmul.mubr.bf16.gmra.mxu0 %v334
  %v518 = vpop.f32.mrf.mxu0
  %v519 = vadd.f32 %v422, %v518
  %v520 = vpop.f32.mrf.mxu0
  %v521 = vpop.f32.mrf.mxu0
  %v522 = vadd.f32 %v425, %v521
  %v523 = vpop.f32.mrf.mxu0
  %524 = vmatprep.mubr.bf16.mxu0 0
  %525 = vmatmul.mubr.bf16.gmra.mxu0 %v337
  %v526 = vpop.f32.mrf.mxu0
  %v527 = vadd.f32 %v430, %v526
  %v528 = vpop.f32.mrf.mxu0
  %v529 = vpop.f32.mrf.mxu0
  %v530 = vadd.f32 %v433, %v529
  %v531 = vpop.f32.mrf.mxu0
  %532 = vdwg.mxu0
  %v533 = vld [vmem:[%s2] sm:$0x1]
  %v535 = vlaneseq
  %v536 = vshrl.u32 %v535, 7
  %v537 = vsub.s32 0, %v536
  %v538 = vrot.slane %v533, %v537
  %v540 = vmul.f32 %v471, %v538
  %v541 = vmul.f32 %v474, %v538
  %v542 = vmul.f32 %v479, %v538
  %v543 = vmul.f32 %v482, %v538
  %v544 = vmul.f32 %v487, %v538
  %v545 = vmul.f32 %v490, %v538
  %v546 = vmul.f32 %v495, %v538
  %v547 = vmul.f32 %v498, %v538
  %v548 = vmul.f32 %v503, %v538
  %v549 = vmul.f32 %v506, %v538
  %v550 = vmul.f32 %v511, %v538
  %v551 = vmul.f32 %v514, %v538
  %v552 = vmul.f32 %v519, %v538
  %v553 = vmul.f32 %v522, %v538
  %v554 = vmul.f32 %v527, %v538
  %v555 = vmul.f32 %v530, %v538
  %v556 = vld [vmem:[%s3] sm:$0x1]
  %v558 = vlaneseq
  %v559 = vshrl.u32 %v558, 7
  %v560 = vsub.s32 0, %v559
  %v561 = vrot.slane %v556, %v560
  %v563 = vadd.f32 %v540, %v561
  %v564 = vadd.f32 %v541, %v561
  %v565 = vadd.f32 %v542, %v561
  %v566 = vadd.f32 %v543, %v561
  %v567 = vadd.f32 %v544, %v561
  %v568 = vadd.f32 %v545, %v561
  %v569 = vadd.f32 %v546, %v561
  %v570 = vadd.f32 %v547, %v561
  %v571 = vadd.f32 %v548, %v561
  %v572 = vadd.f32 %v549, %v561
  %v573 = vadd.f32 %v550, %v561
  %v574 = vadd.f32 %v551, %v561
  %v575 = vadd.f32 %v552, %v561
  %v576 = vadd.f32 %v553, %v561
  %v577 = vadd.f32 %v554, %v561
  %v578 = vadd.f32 %v555, %v561
  %579 = vst [vmem:[%s4] sm:$0xff] %v563
  %580 = vst [vmem:[%s4 + $0x8] sm:$0xff] %v564
  %581 = vst [vmem:[%s4 + $0x10] sm:$0xff] %v565
  %582 = vst [vmem:[%s4 + $0x18] sm:$0xff] %v566
  %583 = vst [vmem:[%s4 + $0x20] sm:$0xff] %v567
  %584 = vst [vmem:[%s4 + $0x28] sm:$0xff] %v568
  %585 = vst [vmem:[%s4 + $0x30] sm:$0xff] %v569
  %586 = vst [vmem:[%s4 + $0x38] sm:$0xff] %v570
  %587 = vst [vmem:[%s4 + $0x40] sm:$0xff] %v571
  %588 = vst [vmem:[%s4 + $0x48] sm:$0xff] %v572
  %589 = vst [vmem:[%s4 + $0x50] sm:$0xff] %v573
  %590 = vst [vmem:[%s4 + $0x58] sm:$0xff] %v574
  %591 = vst [vmem:[%s4 + $0x60] sm:$0xff] %v575
  %592 = vst [vmem:[%s4 + $0x68] sm:$0xff] %v576
  %593 = vst [vmem:[%s4 + $0x70] sm:$0xff] %v577
  %594 = vst [vmem:[%s4 + $0x78] sm:$0xff] %v578
  // Predicated region
  $region18: #{one_model_forward.59} parent=0 // pred_check
    _
  $region19: #{one_model_forward.59} parent=0 // pred_check_branch
    %596 = sbr.rel (0) target = $region21
  $region20: #{one_model_forward.59} parent=0 // pred_region
    _
  $region21: #{one_model_forward.59} parent=0 // pred_fallthru
    _
  // Predicated region
  $region22: #{one_model_forward.59} parent=0 // pred_check
    _
  $region23: #{one_model_forward.59} parent=0 // pred_check_branch
    %598 = sbr.rel (0) target = $region25
  $region24: #{one_model_forward.59} parent=0 // pred_region
    _
  $region25: #{one_model_forward.59} parent=0 // pred_fallthru
    _

// kernel: one_model_forward.60
$region0: #{one_model_forward.60}
  #allocation0 [shape = 'u32[]', space=smem, size = 0x4, offset = 0x4, fixed_abs, tag = 'smem constant byte address 0x4 - core index']
  #allocation1 [shape = 'u32[144,128]{1,0:T(1,128)}', space=vmem, size = 0x12000, scoped, tag = 'internal scratch']
  %s0 = inlined_call_operand.vmem [shape: f32[2,64,32], index: 0, kind: input, shape index: {}]
  %s1 = inlined_call_operand.vmem [shape: f32[2,8,64], index: 1, kind: input, shape index: {}]
  %s2 = inlined_call_operand.vmem [shape: f32[2,64,32], index: 2, kind: input, shape index: {}]
  %s3 = inlined_call_operand.vmem [shape: f32[2,8,32], index: 3, kind: output, shape index: {0}]
  %s4 = inlined_call_operand.vmem [shape: f32[8,128], index: 4, kind: output, shape index: {1}]
  %5 = xla_tuple %s3, %s4
  %s6 = sld [smem:[#allocation0]]
  $region30: #{one_model_forward.60} parent=0
    _
  %s8 = ssub.s32 1, %s6
  %s9 = scalar_select 0, %s8, %s6
  // Predicated region
  $region2: #{one_model_forward.60} parent=0 // pred_check
    _
  $region3: #{one_model_forward.60} parent=0 // pred_check_branch
    %11 = sbr.rel (0) target = $region5
  $region4: #{one_model_forward.60} parent=0 // pred_region
    _
  $region5: #{one_model_forward.60} parent=0 // pred_fallthru
    _
  // Predicated region
  $region6: #{one_model_forward.60} parent=0 // pred_check
    _
  $region7: #{one_model_forward.60} parent=0 // pred_check_branch
    %13 = sbr.rel (0) target = $region9
  $region8: #{one_model_forward.60} parent=0 // pred_region
    _
  $region9: #{one_model_forward.60} parent=0 // pred_fallthru
    _
  // Predicated region
  $region10: #{one_model_forward.60} parent=0 // pred_check
    _
  $region11: #{one_model_forward.60} parent=0 // pred_check_branch
    %15 = sbr.rel (0) target = $region13
  $region12: #{one_model_forward.60} parent=0 // pred_region
    _
  $region13: #{one_model_forward.60} parent=0 // pred_fallthru
    _
  %v16 = vld [vmem:[%s0] sm:$0xff]
  %v17 = vld [vmem:[%s0 + $0x8] sm:$0xff]
  %v18 = vld [vmem:[%s0 + $0x10] sm:$0xff]
  %v19 = vld [vmem:[%s0 + $0x18] sm:$0xff]
  %v20 = vld [vmem:[%s0 + $0x20] sm:$0xff]
  %v21 = vld [vmem:[%s0 + $0x28] sm:$0xff]
  %v22 = vld [vmem:[%s0 + $0x30] sm:$0xff]
  %v23 = vld [vmem:[%s0 + $0x38] sm:$0xff]
  %v24 = vld [vmem:[%s1] sm:$0xff]
  %v25 = vld [vmem:[%s2] sm:$0xff]
  %v26 = vld [vmem:[%s2 + $0x8] sm:$0xff]
  %v27 = vld [vmem:[%s2 + $0x10] sm:$0xff]
  %v28 = vld [vmem:[%s2 + $0x18] sm:$0xff]
  %v29 = vld [vmem:[%s2 + $0x20] sm:$0xff]
  %v30 = vld [vmem:[%s2 + $0x28] sm:$0xff]
  %v31 = vld [vmem:[%s2 + $0x30] sm:$0xff]
  %v32 = vld [vmem:[%s2 + $0x38] sm:$0xff]
  %vm33 = vcmask 523264
  %v35 = vsel %vm33, %v24, 0
  %37 = vmatprep.subr.mxu0 0.0
  %38 = vmatpush1.msra.mxu0 0.0
  %39 = vmatprep.subr.mxu0 0.0
  %40 = vmatpush1.msra.mxu0 0.0
  %41 = vmatprep.subr.mxu0 0.0
  %42 = vmatpush1.msra.mxu0 0.0
  %43 = vmatprep.subr.mxu0 0.0
  %44 = vmatpush1.msra.mxu0 0.0
  %45 = vmatprep.subr.mxu0 0.0
  %46 = vmatpush1.msra.mxu0 0.0
  %47 = vmatprep.subr.mxu0 0.0
  %48 = vmatpush1.msra.mxu0 0.0
  %49 = vmatprep.subr.mxu0 0.0
  %50 = vmatpush1.msra.mxu0 0.0
  %51 = vmatprep.subr.mxu0 0.0
  %52 = vmatpush1.msra.mxu0 0.0
  %53 = vmatprep.subr.mxu0 0.0
  %54 = vmatpush1.msra.mxu0 %v23
  %55 = vmatprep.subr.mxu0 0.0
  %56 = vmatpush1.msra.mxu0 %v22
  %57 = vmatprep.subr.mxu0 0.0
  %58 = vmatpush1.msra.mxu0 %v21
  %59 = vmatprep.subr.mxu0 0.0
  %60 = vmatpush1.msra.mxu0 %v20
  %61 = vmatprep.subr.mxu0 0.0
  %62 = vmatpush1.msra.mxu0 %v19
  %63 = vmatprep.subr.mxu0 0.0
  %64 = vmatpush1.msra.mxu0 %v18
  %65 = vmatprep.subr.mxu0 0.0
  %66 = vmatpush1.msra.mxu0 %v17
  %67 = vmatprep.subr.mxu0 0.0
  %68 = vmatpush1.msra.mxu0 %v16
  %69 = vmatprep.subr.mxu0 0.0
  %70 = vmatpush2.msra.mxu0 0.0
  %71 = vmatprep.subr.mxu0 0.0
  %72 = vmatpush2.msra.mxu0 0.0
  %73 = vmatprep.subr.mxu0 0.0
  %74 = vmatpush2.msra.mxu0 0.0
  %75 = vmatprep.subr.mxu0 0.0
  %76 = vmatpush2.msra.mxu0 0.0
  %77 = vmatprep.subr.mxu0 0.0
  %78 = vmatpush2.msra.mxu0 0.0
  %79 = vmatprep.subr.mxu0 0.0
  %80 = vmatpush2.msra.mxu0 0.0
  %81 = vmatprep.subr.mxu0 0.0
  %82 = vmatpush2.msra.mxu0 0.0
  %83 = vmatprep.subr.mxu0 0.0
  %84 = vmatpush2.msra.mxu0 0.0
  %85 = vmatprep.subr.mxu0 0.0
  %86 = vmatpush2.msra.mxu0 0.0
  %87 = vmatprep.subr.mxu0 0.0
  %88 = vmatpush2.msra.mxu0 0.0
  %89 = vmatprep.subr.mxu0 0.0
  %90 = vmatpush2.msra.mxu0 0.0
  %91 = vmatprep.subr.mxu0 0.0
  %92 = vmatpush2.msra.mxu0 0.0
  %93 = vmatprep.subr.mxu0 0.0
  %94 = vmatpush2.msra.mxu0 0.0
  %95 = vmatprep.subr.mxu0 0.0
  %96 = vmatpush2.msra.mxu0 0.0
  %97 = vmatprep.subr.mxu0 0.0
  %98 = vmatpush2.msra.mxu0 0.0
  %99 = vmatprep.subr.mxu0 0.0
  %100 = vmatpush2.msra.mxu0 0.0
  %101 = vmatprep.mubr.f32.mxu0 0.0
  %102 = vmatmul.mubr.f32.gmra.mxu0 %v35
  %v103 = vpop.f32.mrf.mxu0
  %v104 = vadd.f32 0.0, %v103
  %v105 = vpop.f32.mrf.mxu0
  %106 = vdwg.mxu0
  %v107 = vsel %vm33, %v24, 0.0
  %108 = vadd.xlane.f32.xlu0 %v107
  %v109 = vpop.xlane.xlu0 %108
  %v110 = vadd.f32 %v109, 1e-06
  %v111 = vrcp.pop %v110
  %v112 = vmul.f32 %v104, %v111
  %vm113 = vcmask 261120
  %114 = vst.msk [vmem:[%s3] sm:$0xff] %vm113, %v112
  %v115 = vmul.f32 %v112, %v112
  %v116 = vsel %vm113, %v115, 0.0
  %117 = vadd.xlane.f32.xlu0 %v116
  %v118 = vpop.xlane.xlu0 %117
  %v119 = vadd.f32 %v118, 1e-06
  %v120 = vrsqrt.pop %v119
  %v121 = vmul.f32 %v112, %v120
  %v122 = vmul.f32 %v25, %v25
  %v123 = vmul.f32 %v26, %v26
  %v124 = vmul.f32 %v27, %v27
  %v125 = vmul.f32 %v28, %v28
  %v126 = vmul.f32 %v29, %v29
  %v127 = vmul.f32 %v30, %v30
  %v128 = vmul.f32 %v31, %v31
  %v129 = vmul.f32 %v32, %v32
  %v130 = vsel %vm113, %v122, 0.0
  %131 = vadd.xlane.f32.xlu0 %v130
  %v132 = vpop.xlane.xlu0 %131
  %v133 = vsel %vm113, %v123, 0.0
  %134 = vadd.xlane.f32.xlu0 %v133
  %v135 = vpop.xlane.xlu0 %134
  %v136 = vsel %vm113, %v124, 0.0
  %137 = vadd.xlane.f32.xlu0 %v136
  %v138 = vpop.xlane.xlu0 %137
  %v139 = vsel %vm113, %v125, 0.0
  %140 = vadd.xlane.f32.xlu0 %v139
  %v141 = vpop.xlane.xlu0 %140
  %v142 = vsel %vm113, %v126, 0.0
  %143 = vadd.xlane.f32.xlu0 %v142
  %v144 = vpop.xlane.xlu0 %143
  %v145 = vsel %vm113, %v127, 0.0
  %146 = vadd.xlane.f32.xlu0 %v145
  %v147 = vpop.xlane.xlu0 %146
  %v148 = vsel %vm113, %v128, 0.0
  %149 = vadd.xlane.f32.xlu0 %v148
  %v150 = vpop.xlane.xlu0 %149
  %v151 = vsel %vm113, %v129, 0.0
  %152 = vadd.xlane.f32.xlu0 %v151
  %v153 = vpop.xlane.xlu0 %152
  %v154 = vadd.f32 %v132, 1e-06
  %v155 = vadd.f32 %v135, 1e-06
  %v156 = vadd.f32 %v138, 1e-06
  %v157 = vadd.f32 %v141, 1e-06
  %v158 = vadd.f32 %v144, 1e-06
  %v159 = vadd.f32 %v147, 1e-06
  %v160 = vadd.f32 %v150, 1e-06
  %v161 = vadd.f32 %v153, 1e-06
  %v162 = vrsqrt.pop %v154
  %v163 = vrsqrt.pop %v155
  %v164 = vrsqrt.pop %v156
  %v165 = vrsqrt.pop %v157
  %v166 = vrsqrt.pop %v158
  %v167 = vrsqrt.pop %v159
  %v168 = vrsqrt.pop %v160
  %v169 = vrsqrt.pop %v161
  %v170 = vmul.f32 %v25, %v162
  %v171 = vmul.f32 %v26, %v163
  %v172 = vmul.f32 %v27, %v164
  %v173 = vmul.f32 %v28, %v165
  %v174 = vmul.f32 %v29, %v166
  %v175 = vmul.f32 %v30, %v167
  %v176 = vmul.f32 %v31, %v168
  %v177 = vmul.f32 %v32, %v169
  %v179 = vsel %vm113, %v121, 0
  %v182 = vsel %vm113, %v170, 0
  %v185 = vsel %vm113, %v171, 0
  %v188 = vsel %vm113, %v172, 0
  %v191 = vsel %vm113, %v173, 0
  %v194 = vsel %vm113, %v174, 0
  %v197 = vsel %vm113, %v175, 0
  %v200 = vsel %vm113, %v176, 0
  %v203 = vsel %vm113, %v177, 0
  %205 = vmatprep.subr.mxu0 0.0
  %206 = vmatpush1.xpose.msra.mxu0 0.0
  %207 = vmatprep.subr.mxu0 0.0
  %208 = vmatpush1.xpose.msra.mxu0 0.0
  %209 = vmatprep.subr.mxu0 0.0
  %210 = vmatpush1.xpose.msra.mxu0 0.0
  %211 = vmatprep.subr.mxu0 0.0
  %212 = vmatpush1.xpose.msra.mxu0 0.0
  %213 = vmatprep.subr.mxu0 0.0
  %214 = vmatpush1.xpose.msra.mxu0 0.0
  %215 = vmatprep.subr.mxu0 0.0
  %216 = vmatpush1.xpose.msra.mxu0 0.0
  %217 = vmatprep.subr.mxu0 0.0
  %218 = vmatpush1.xpose.msra.mxu0 0.0
  %219 = vmatprep.subr.mxu0 0.0
  %220 = vmatpush1.xpose.msra.mxu0 0.0
  %221 = vmatprep.subr.mxu0 0.0
  %222 = vmatpush1.xpose.msra.mxu0 %v203
  %223 = vmatprep.subr.mxu0 0.0
  %224 = vmatpush1.xpose.msra.mxu0 %v200
  %225 = vmatprep.subr.mxu0 0.0
  %226 = vmatpush1.xpose.msra.mxu0 %v197
  %227 = vmatprep.subr.mxu0 0.0
  %228 = vmatpush1.xpose.msra.mxu0 %v194
  %229 = vmatprep.subr.mxu0 0.0
  %230 = vmatpush1.xpose.msra.mxu0 %v191
  %231 = vmatprep.subr.mxu0 0.0
  %232 = vmatpush1.xpose.msra.mxu0 %v188
  %233 = vmatprep.subr.mxu0 0.0
  %234 = vmatpush1.xpose.msra.mxu0 %v185
  %235 = vmatprep.subr.mxu0 0.0
  %236 = vmatpush1.xpose.msra.mxu0 %v182
  %237 = vmatprep.subr.mxu0 0.0
  %238 = vmatpush2.xpose.msra.mxu0 0.0
  %239 = vmatprep.subr.mxu0 0.0
  %240 = vmatpush2.xpose.msra.mxu0 0.0
  %241 = vmatprep.subr.mxu0 0.0
  %242 = vmatpush2.xpose.msra.mxu0 0.0
  %243 = vmatprep.subr.mxu0 0.0
  %244 = vmatpush2.xpose.msra.mxu0 0.0
  %245 = vmatprep.subr.mxu0 0.0
  %246 = vmatpush2.xpose.msra.mxu0 0.0
  %247 = vmatprep.subr.mxu0 0.0
  %248 = vmatpush2.xpose.msra.mxu0 0.0
  %249 = vmatprep.subr.mxu0 0.0
  %250 = vmatpush2.xpose.msra.mxu0 0.0
  %251 = vmatprep.subr.mxu0 0.0
  %252 = vmatpush2.xpose.msra.mxu0 0.0
  %253 = vmatprep.subr.mxu0 0.0
  %254 = vmatpush2.xpose.msra.mxu0 0.0
  %255 = vmatprep.subr.mxu0 0.0
  %256 = vmatpush2.xpose.msra.mxu0 0.0
  %257 = vmatprep.subr.mxu0 0.0
  %258 = vmatpush2.xpose.msra.mxu0 0.0
  %259 = vmatprep.subr.mxu0 0.0
  %260 = vmatpush2.xpose.msra.mxu0 0.0
  %261 = vmatprep.subr.mxu0 0.0
  %262 = vmatpush2.xpose.msra.mxu0 0.0
  %263 = vmatprep.subr.mxu0 0.0
  %264 = vmatpush2.xpose.msra.mxu0 0.0
  %265 = vmatprep.subr.mxu0 0.0
  %266 = vmatpush2.xpose.msra.mxu0 0.0
  %267 = vmatprep.subr.mxu0 0.0
  %268 = vmatpush2.xpose.msra.mxu0 0.0
  %269 = vmatprep.mubr.f32.mxu0 0.0
  %270 = vmatmul.mubr.f32.gmra.mxu0 %v179
  %v271 = vpop.f32.mrf.mxu0
  %v272 = vadd.f32 0.0, %v271
  %v273 = vpop.f32.mrf.mxu0
  %274 = vdwg.mxu0
  %275 = vst.msk [vmem:[%s4] sm:$0xff] %vm33, %v272
  %s276 = scalar_lea.vmem %s0, 64
  %v277 = vld [vmem:[%s276] sm:$0xff]
  %v278 = vld [vmem:[%s276 + $0x8] sm:$0xff]
  %v279 = vld [vmem:[%s276 + $0x10] sm:$0xff]
  %v280 = vld [vmem:[%s276 + $0x18] sm:$0xff]
  %v281 = vld [vmem:[%s276 + $0x20] sm:$0xff]
  %v282 = vld [vmem:[%s276 + $0x28] sm:$0xff]
  %v283 = vld [vmem:[%s276 + $0x30] sm:$0xff]
  %v284 = vld [vmem:[%s276 + $0x38] sm:$0xff]
  %s285 = scalar_lea.vmem %s1, 8
  %v286 = vld [vmem:[%s285] sm:$0xff]
  %s287 = scalar_lea.vmem %s2, 64
  %v288 = vld [vmem:[%s287] sm:$0xff]
  %v289 = vld [vmem:[%s287 + $0x8] sm:$0xff]
  %v290 = vld [vmem:[%s287 + $0x10] sm:$0xff]
  %v291 = vld [vmem:[%s287 + $0x18] sm:$0xff]
  %v292 = vld [vmem:[%s287 + $0x20] sm:$0xff]
  %v293 = vld [vmem:[%s287 + $0x28] sm:$0xff]
  %v294 = vld [vmem:[%s287 + $0x30] sm:$0xff]
  %v295 = vld [vmem:[%s287 + $0x38] sm:$0xff]
  %v297 = vsel %vm33, %v286, 0
  %299 = vmatprep.subr.mxu0 0.0
  %300 = vmatpush1.msra.mxu0 0.0
  %301 = vmatprep.subr.mxu0 0.0
  %302 = vmatpush1.msra.mxu0 0.0
  %303 = vmatprep.subr.mxu0 0.0
  %304 = vmatpush1.msra.mxu0 0.0
  %305 = vmatprep.subr.mxu0 0.0
  %306 = vmatpush1.msra.mxu0 0.0
  %307 = vmatprep.subr.mxu0 0.0
  %308 = vmatpush1.msra.mxu0 0.0
  %309 = vmatprep.subr.mxu0 0.0
  %310 = vmatpush1.msra.mxu0 0.0
  %311 = vmatprep.subr.mxu0 0.0
  %312 = vmatpush1.msra.mxu0 0.0
  %313 = vmatprep.subr.mxu0 0.0
  %314 = vmatpush1.msra.mxu0 0.0
  %315 = vmatprep.subr.mxu0 0.0
  %316 = vmatpush1.msra.mxu0 %v284
  %317 = vmatprep.subr.mxu0 0.0
  %318 = vmatpush1.msra.mxu0 %v283
  %319 = vmatprep.subr.mxu0 0.0
  %320 = vmatpush1.msra.mxu0 %v282
  %321 = vmatprep.subr.mxu0 0.0
  %322 = vmatpush1.msra.mxu0 %v281
  %323 = vmatprep.subr.mxu0 0.0
  %324 = vmatpush1.msra.mxu0 %v280
  %325 = vmatprep.subr.mxu0 0.0
  %326 = vmatpush1.msra.mxu0 %v279
  %327 = vmatprep.subr.mxu0 0.0
  %328 = vmatpush1.msra.mxu0 %v278
  %329 = vmatprep.subr.mxu0 0.0
  %330 = vmatpush1.msra.mxu0 %v277
  %331 = vmatprep.subr.mxu0 0.0
  %332 = vmatpush2.msra.mxu0 0.0
  %333 = vmatprep.subr.mxu0 0.0
  %334 = vmatpush2.msra.mxu0 0.0
  %335 = vmatprep.subr.mxu0 0.0
  %336 = vmatpush2.msra.mxu0 0.0
  %337 = vmatprep.subr.mxu0 0.0
  %338 = vmatpush2.msra.mxu0 0.0
  %339 = vmatprep.subr.mxu0 0.0
  %340 = vmatpush2.msra.mxu0 0.0
  %341 = vmatprep.subr.mxu0 0.0
  %342 = vmatpush2.msra.mxu0 0.0
  %343 = vmatprep.subr.mxu0 0.0
  %344 = vmatpush2.msra.mxu0 0.0
  %345 = vmatprep.subr.mxu0 0.0
  %346 = vmatpush2.msra.mxu0 0.0
  %347 = vmatprep.subr.mxu0 0.0
  %348 = vmatpush2.msra.mxu0 0.0
  %349 = vmatprep.subr.mxu0 0.0
  %350 = vmatpush2.msra.mxu0 0.0
  %351 = vmatprep.subr.mxu0 0.0
  %352 = vmatpush2.msra.mxu0 0.0
  %353 = vmatprep.subr.mxu0 0.0
  %354 = vmatpush2.msra.mxu0 0.0
  %355 = vmatprep.subr.mxu0 0.0
  %356 = vmatpush2.msra.mxu0 0.0
  %357 = vmatprep.subr.mxu0 0.0
  %358 = vmatpush2.msra.mxu0 0.0
  %359 = vmatprep.subr.mxu0 0.0
  %360 = vmatpush2.msra.mxu0 0.0
  %361 = vmatprep.subr.mxu0 0.0
  %362 = vmatpush2.msra.mxu0 0.0
  %363 = vmatprep.mubr.f32.mxu0 0.0
  %364 = vmatmul.mubr.f32.gmra.mxu0 %v297
  %v365 = vpop.f32.mrf.mxu0
  %v366 = vadd.f32 0.0, %v365
  %v367 = vpop.f32.mrf.mxu0
  %368 = vdwg.mxu0
  %v369 = vsel %vm33, %v286, 0.0
  %370 = vadd.xlane.f32.xlu0 %v369
  %v371 = vpop.xlane.xlu0 %370
  %v372 = vadd.f32 %v371, 1e-06
  %v373 = vrcp.pop %v372
  %v374 = vmul.f32 %v366, %v373
  %s375 = scalar_lea.vmem %s3, 8
  %376 = vst.msk [vmem:[%s375] sm:$0xff] %vm113, %v374
  %v377 = vmul.f32 %v374, %v374
  %v378 = vsel %vm113, %v377, 0.0
  %379 = vadd.xlane.f32.xlu0 %v378
  %v380 = vpop.xlane.xlu0 %379
  %v381 = vadd.f32 %v380, 1e-06
  %v382 = vrsqrt.pop %v381
  %v383 = vmul.f32 %v374, %v382
  %v384 = vmul.f32 %v288, %v288
  %v385 = vmul.f32 %v289, %v289
  %v386 = vmul.f32 %v290, %v290
  %v387 = vmul.f32 %v291, %v291
  %v388 = vmul.f32 %v292, %v292
  %v389 = vmul.f32 %v293, %v293
  %v390 = vmul.f32 %v294, %v294
  %v391 = vmul.f32 %v295, %v295
  %v392 = vsel %vm113, %v384, 0.0
  %393 = vadd.xlane.f32.xlu0 %v392
  %v394 = vpop.xlane.xlu0 %393
  %v395 = vsel %vm113, %v385, 0.0
  %396 = vadd.xlane.f32.xlu0 %v395
  %v397 = vpop.xlane.xlu0 %396
  %v398 = vsel %vm113, %v386, 0.0
  %399 = vadd.xlane.f32.xlu0 %v398
  %v400 = vpop.xlane.xlu0 %399
  %v401 = vsel %vm113, %v387, 0.0
  %402 = vadd.xlane.f32.xlu0 %v401
  %v403 = vpop.xlane.xlu0 %402
  %v404 = vsel %vm113, %v388, 0.0
  %405 = vadd.xlane.f32.xlu0 %v404
  %v406 = vpop.xlane.xlu0 %405
  %v407 = vsel %vm113, %v389, 0.0
  %408 = vadd.xlane.f32.xlu0 %v407
  %v409 = vpop.xlane.xlu0 %408
  %v410 = vsel %vm113, %v390, 0.0
  %411 = vadd.xlane.f32.xlu0 %v410
  %v412 = vpop.xlane.xlu0 %411
  %v413 = vsel %vm113, %v391, 0.0
  %414 = vadd.xlane.f32.xlu0 %v413
  %v415 = vpop.xlane.xlu0 %414
  %v416 = vadd.f32 %v394, 1e-06
  %v417 = vadd.f32 %v397, 1e-06
  %v418 = vadd.f32 %v400, 1e-06
  %v419 = vadd.f32 %v403, 1e-06
  %v420 = vadd.f32 %v406, 1e-06
  %v421 = vadd.f32 %v409, 1e-06
  %v422 = vadd.f32 %v412, 1e-06
  %v423 = vadd.f32 %v415, 1e-06
  %v424 = vrsqrt.pop %v416
  %v425 = vrsqrt.pop %v417
  %v426 = vrsqrt.pop %v418
  %v427 = vrsqrt.pop %v419
  %v428 = vrsqrt.pop %v420
  %v429 = vrsqrt.pop %v421
  %v430 = vrsqrt.pop %v422
  %v431 = vrsqrt.pop %v423
  %v432 = vmul.f32 %v288, %v424
  %v433 = vmul.f32 %v289, %v425
  %v434 = vmul.f32 %v290, %v426
  %v435 = vmul.f32 %v291, %v427
  %v436 = vmul.f32 %v292, %v428
  %v437 = vmul.f32 %v293, %v429
  %v438 = vmul.f32 %v294, %v430
  %v439 = vmul.f32 %v295, %v431
  %v441 = vsel %vm113, %v383, 0
  %v444 = vsel %vm113, %v432, 0
  %v447 = vsel %vm113, %v433, 0
  %v450 = vsel %vm113, %v434, 0
  %v453 = vsel %vm113, %v435, 0
  %v456 = vsel %vm113, %v436, 0
  %v459 = vsel %vm113, %v437, 0
  %v462 = vsel %vm113, %v438, 0
  %v465 = vsel %vm113, %v439, 0
  %467 = vmatprep.subr.mxu0 0.0
  %468 = vmatpush1.xpose.msra.mxu0 0.0
  %469 = vmatprep.subr.mxu0 0.0
  %470 = vmatpush1.xpose.msra.mxu0 0.0
  %471 = vmatprep.subr.mxu0 0.0
  %472 = vmatpush1.xpose.msra.mxu0 0.0
  %473 = vmatprep.subr.mxu0 0.0
  %474 = vmatpush1.xpose.msra.mxu0 0.0
  %475 = vmatprep.subr.mxu0 0.0
  %476 = vmatpush1.xpose.msra.mxu0 0.0
  %477 = vmatprep.subr.mxu0 0.0
  %478 = vmatpush1.xpose.msra.mxu0 0.0
  %479 = vmatprep.subr.mxu0 0.0
  %480 = vmatpush1.xpose.msra.mxu0 0.0
  %481 = vmatprep.subr.mxu0 0.0
  %482 = vmatpush1.xpose.msra.mxu0 0.0
  %483 = vmatprep.subr.mxu0 0.0
  %484 = vmatpush1.xpose.msra.mxu0 %v465
  %485 = vmatprep.subr.mxu0 0.0
  %486 = vmatpush1.xpose.msra.mxu0 %v462
  %487 = vmatprep.subr.mxu0 0.0
  %488 = vmatpush1.xpose.msra.mxu0 %v459
  %489 = vmatprep.subr.mxu0 0.0
  %490 = vmatpush1.xpose.msra.mxu0 %v456
  %491 = vmatprep.subr.mxu0 0.0
  %492 = vmatpush1.xpose.msra.mxu0 %v453
  %493 = vmatprep.subr.mxu0 0.0
  %494 = vmatpush1.xpose.msra.mxu0 %v450
  %495 = vmatprep.subr.mxu0 0.0
  %496 = vmatpush1.xpose.msra.mxu0 %v447
  %497 = vmatprep.subr.mxu0 0.0
  %498 = vmatpush1.xpose.msra.mxu0 %v444
  %499 = vmatprep.subr.mxu0 0.0
  %500 = vmatpush2.xpose.msra.mxu0 0.0
  %501 = vmatprep.subr.mxu0 0.0
  %502 = vmatpush2.xpose.msra.mxu0 0.0
  %503 = vmatprep.subr.mxu0 0.0
  %504 = vmatpush2.xpose.msra.mxu0 0.0
  %505 = vmatprep.subr.mxu0 0.0
  %506 = vmatpush2.xpose.msra.mxu0 0.0
  %507 = vmatprep.subr.mxu0 0.0
  %508 = vmatpush2.xpose.msra.mxu0 0.0
  %509 = vmatprep.subr.mxu0 0.0
  %510 = vmatpush2.xpose.msra.mxu0 0.0
  %511 = vmatprep.subr.mxu0 0.0
  %512 = vmatpush2.xpose.msra.mxu0 0.0
  %513 = vmatprep.subr.mxu0 0.0
  %514 = vmatpush2.xpose.msra.mxu0 0.0
  %515 = vmatprep.subr.mxu0 0.0
  %516 = vmatpush2.xpose.msra.mxu0 0.0
  %517 = vmatprep.subr.mxu0 0.0
  %518 = vmatpush2.xpose.msra.mxu0 0.0
  %519 = vmatprep.subr.mxu0 0.0
  %520 = vmatpush2.xpose.msra.mxu0 0.0
  %521 = vmatprep.subr.mxu0 0.0
  %522 = vmatpush2.xpose.msra.mxu0 0.0
  %523 = vmatprep.subr.mxu0 0.0
  %524 = vmatpush2.xpose.msra.mxu0 0.0
  %525 = vmatprep.subr.mxu0 0.0
  %526 = vmatpush2.xpose.msra.mxu0 0.0
  %527 = vmatprep.subr.mxu0 0.0
  %528 = vmatpush2.xpose.msra.mxu0 0.0
  %529 = vmatprep.subr.mxu0 0.0
  %530 = vmatpush2.xpose.msra.mxu0 0.0
  %531 = vmatprep.mubr.f32.mxu0 0.0
  %532 = vmatmul.mubr.f32.gmra.mxu0 %v441
  %v533 = vpop.f32.mrf.mxu0
  %v534 = vadd.f32 0.0, %v533
  %v535 = vpop.f32.mrf.mxu0
  %536 = vdwg.mxu0
  %538 = vrot.lane.b32.xlu0 %v534, 64
  %v539 = vpop.permute.xlu0 %538
  %vm541 = vcmask 1048064
  %542 = vst.msk [vmem:[%s4] sm:$0xff] %vm541, %v539
  // Predicated region
  $region14: #{one_model_forward.60} parent=0 // pred_check
    _
  $region15: #{one_model_forward.60} parent=0 // pred_check_branch
    %544 = sbr.rel (0) target = $region17
  $region16: #{one_model_forward.60} parent=0 // pred_region
    _
  $region17: #{one_model_forward.60} parent=0 // pred_fallthru
    _
  // Predicated region
  $region18: #{one_model_forward.60} parent=0 // pred_check
    _
  $region19: #{one_model_forward.60} parent=0 // pred_check_branch
    %546 = sbr.rel (0) target = $region21
  $region20: #{one_model_forward.60} parent=0 // pred_region
    _
  $region21: #{one_model_forward.60} parent=0 // pred_fallthru
    _
  // Predicated region
  $region22: #{one_model_forward.60} parent=0 // pred_check
    _
  $region23: #{one_model_forward.60} parent=0 // pred_check_branch
    %548 = sbr.rel (0) target = $region25
  $region24: #{one_model_forward.60} parent=0 // pred_region
    _
  $region25: #{one_model_forward.60} parent=0 // pred_fallthru
    _
  // Predicated region
  $region26: #{one_model_forward.60} parent=0 // pred_check
    _
  $region27: #{one_model_forward.60} parent=0 // pred_check_branch
    %550 = sbr.rel (0) target = $region29
  $region28: #{one_model_forward.60} parent=0 // pred_region
    _
  $region29: #{one_model_forward.60} parent=0 // pred_fallthru
    _

// kernel: one_model_forward.61
$region0: #{one_model_forward.61}
  #allocation0 [shape = 'u32[]', space=smem, size = 0x4, offset = 0x4, fixed_abs, tag = 'smem constant byte address 0x4 - core index']
  #allocation1 [shape = 'u32[144,128]{1,0:T(1,128)}', space=vmem, size = 0x12000, scoped, tag = 'internal scratch']
  %s0 = inlined_call_operand.vmem [shape: f32[2,64,128], index: 0, kind: input, shape index: {}]
  %s1 = inlined_call_operand.vmem [shape: f32[2,2,9,128], index: 1, kind: input, shape index: {}]
  %s2 = inlined_call_operand.vmem [shape: f32[64,9], index: 2, kind: input, shape index: {}]
  %s3 = inlined_call_operand.vmem [shape: f32[1,128], index: 3, kind: input, shape index: {}]
  %s4 = inlined_call_operand.vmem [shape: f32[1,128], index: 4, kind: input, shape index: {}]
  %s5 = inlined_call_operand.vmem [shape: bf16[2,64,128], index: 5, kind: output, shape index: {}]
  %s6 = sld [smem:[#allocation0]]
  $region91: #{one_model_forward.61} parent=0
    _
  %s8 = ssub.s32 1, %s6
  %s9 = scalar_select 0, %s8, %s6
  $region1: #{one_model_forward.61} parent=0
    #allocation2 [shape = 'u8[32768]{0}', space=vmem, size = 0x8000, scoped, tag = 'input window, operand 1']
    loop: start=0, step=1, limit=4
    $region2: #{one_model_forward.61} parent=1 // loop_pre_header
      _
    $region3: #{one_model_forward.61} parent=1 // loop_header
      %s11 = sphi 0, %s15
      %p12 = scmp.ge.s32.totalorder %s11, 4
      %s21 = sphi 0, %s23
      %s24 = sphi 0, %s21
      %s25 = sphi 0, %s24
      %s41 = sphi 0, %s25
      %s47 = sphi 0, %s49
      %s50 = sphi 0, %s47
      %s51 = sphi 0, %s50
      %s67 = sphi 0, %s51
      %s71 = sphi 0, %s71
      %s73 = sphi 0, %s71
      %s74 = sphi 0, %s73
      %s88 = sphi 0, %s74
      %s92 = sphi 0, %s92
      %s94 = sphi 0, %s92
      %s95 = sphi 0, %s94
      %s109 = sphi 0, %s95
      %s113 = sphi 0, %s113
      %s115 = sphi 0, %s113
      %s116 = sphi 0, %s115
      %s130 = sphi 0, %s116
      %s136 = sphi 0, %s138
      %s139 = sphi 0, %s136
      %s140 = sphi 0, %s139
      %s156 = sphi 0, %s140
    $region4: #{one_model_forward.61} parent=1 // loop_header_branch
      %14 = sbr.rel (%p12) target = $region8
    $region5: #{one_model_forward.61} parent=1 // loop_body
      %s16 = ssub.s32 %s11, 1
      %s17 = ssub.s32 %s11, 2
      %s18 = sadd.s32 %s11, 1
      %s19 = ssub.s32 %s11, %s18
      %p20 = scmp.eq.s32.totalorder %s19, 0
      %s22 = sadd.s32 %s21, 1
      %s23 = scalar_select %p20, %s21, %s22
      %p26 = pneg %p20
      %p27 = scmp.eq.s32.totalorder %s11, 1
      %p28 = por %p26, %p27
      %p29 = scmp.ne.s32.totalorder %s21, %s24
      %p30 = scmp.eq.s32.totalorder %s11, 0
      %p31 = por %p29, %p30
      %p32 = scmp.ne.s32.totalorder %s21, %s24
      %p33 = scmp.eq.s32.totalorder %s16, 1
      %p34 = por %p32, %p33
      %p35 = scmp.ne.s32.totalorder %s24, %s25
      %p36 = scmp.eq.s32.totalorder %s16, 0
      %p37 = por %p35, %p36
      %p38 = scmp.ne.s32.totalorder %s24, %s25
      %p39 = scmp.eq.s32.totalorder %s17, 1
      %p40 = por %p38, %p39
      %p42 = scmp.ne.s32.totalorder %s25, %s41
      %p43 = scmp.eq.s32.totalorder %s17, 0
      %p44 = por %p42, %p43
      %s45 = ssub.s32 %s11, %s18
      %p46 = scmp.eq.s32.totalorder %s45, 0
      %s48 = sadd.s32 %s47, 1
      %s49 = scalar_select %p46, %s47, %s48
      %p52 = pneg %p46
      %p53 = scmp.eq.s32.totalorder %s11, 1
      %p54 = por %p52, %p53
      %p55 = scmp.ne.s32.totalorder %s47, %s50
      %p56 = scmp.eq.s32.totalorder %s11, 0
      %p57 = por %p55, %p56
      %p58 = scmp.ne.s32.totalorder %s47, %s50
      %p59 = scmp.eq.s32.totalorder %s16, 1
      %p60 = por %p58, %p59
      %p61 = scmp.ne.s32.totalorder %s50, %s51
      %p62 = scmp.eq.s32.totalorder %s16, 0
      %p63 = por %p61, %p62
      %p64 = scmp.ne.s32.totalorder %s50, %s51
      %p65 = scmp.eq.s32.totalorder %s17, 1
      %p66 = por %p64, %p65
      %p68 = scmp.ne.s32.totalorder %s51, %s67
      %p69 = scmp.eq.s32.totalorder %s17, 0
      %p70 = por %p68, %p69
      %s72 = sadd.s32 %s71, 1
      %p75 = scmp.eq.s32.totalorder %s11, 1
      %p76 = scmp.ne.s32.totalorder %s71, %s73
      %p77 = scmp.eq.s32.totalorder %s11, 0
      %p78 = por %p76, %p77
      %p79 = scmp.ne.s32.totalorder %s71, %s73
      %p80 = scmp.eq.s32.totalorder %s16, 1
      %p81 = por %p79, %p80
      %p82 = scmp.ne.s32.totalorder %s73, %s74
      %p83 = scmp.eq.s32.totalorder %s16, 0
      %p84 = por %p82, %p83
      %p85 = scmp.ne.s32.totalorder %s73, %s74
      %p86 = scmp.eq.s32.totalorder %s17, 1
      %p87 = por %p85, %p86
      %p89 = scmp.ne.s32.totalorder %s74, %s88
      %p90 = scmp.eq.s32.totalorder %s17, 0
      %p91 = por %p89, %p90
      %s93 = sadd.s32 %s92, 1
      %p96 = scmp.eq.s32.totalorder %s11, 1
      %p97 = scmp.ne.s32.totalorder %s92, %s94
      %p98 = scmp.eq.s32.totalorder %s11, 0
      %p99 = por %p97, %p98
      %p100 = scmp.ne.s32.totalorder %s92, %s94
      %p101 = scmp.eq.s32.totalorder %s16, 1
      %p102 = por %p100, %p101
      %p103 = scmp.ne.s32.totalorder %s94, %s95
      %p104 = scmp.eq.s32.totalorder %s16, 0
      %p105 = por %p103, %p104
      %p106 = scmp.ne.s32.totalorder %s94, %s95
      %p107 = scmp.eq.s32.totalorder %s17, 1
      %p108 = por %p106, %p107
      %p110 = scmp.ne.s32.totalorder %s95, %s109
      %p111 = scmp.eq.s32.totalorder %s17, 0
      %p112 = por %p110, %p111
      %s114 = sadd.s32 %s113, 1
      %p117 = scmp.eq.s32.totalorder %s11, 1
      %p118 = scmp.ne.s32.totalorder %s113, %s115
      %p119 = scmp.eq.s32.totalorder %s11, 0
      %p120 = por %p118, %p119
      %p121 = scmp.ne.s32.totalorder %s113, %s115
      %p122 = scmp.eq.s32.totalorder %s16, 1
      %p123 = por %p121, %p122
      %p124 = scmp.ne.s32.totalorder %s115, %s116
      %p125 = scmp.eq.s32.totalorder %s16, 0
      %p126 = por %p124, %p125
      %p127 = scmp.ne.s32.totalorder %s115, %s116
      %p128 = scmp.eq.s32.totalorder %s17, 1
      %p129 = por %p127, %p128
      %p131 = scmp.ne.s32.totalorder %s116, %s130
      %p132 = scmp.eq.s32.totalorder %s17, 0
      %p133 = por %p131, %p132
      %s134 = ssub.s32 %s11, %s18
      %p135 = scmp.eq.s32.totalorder %s134, 0
      %s137 = sadd.s32 %s136, 1
      %s138 = scalar_select %p135, %s136, %s137
      %p141 = pneg %p135
      %p142 = scmp.eq.s32.totalorder %s11, 1
      %p143 = por %p141, %p142
      %p144 = scmp.ne.s32.totalorder %s136, %s139
      %p145 = scmp.eq.s32.totalorder %s11, 0
      %p146 = por %p144, %p145
      %p147 = scmp.ne.s32.totalorder %s136, %s139
      %p148 = scmp.eq.s32.totalorder %s16, 1
      %p149 = por %p147, %p148
      %p150 = scmp.ne.s32.totalorder %s139, %s140
      %p151 = scmp.eq.s32.totalorder %s16, 0
      %p152 = por %p150, %p151
      %p153 = scmp.ne.s32.totalorder %s139, %s140
      %p154 = scmp.eq.s32.totalorder %s17, 1
      %p155 = por %p153, %p154
      %p157 = scmp.ne.s32.totalorder %s140, %s156
      %p158 = scmp.eq.s32.totalorder %s17, 0
      %p159 = por %p157, %p158
      %p160 = scmp.le.s32.totalorder 1, %s11
      %p161 = scmp.lt.s32.totalorder %s11, 3
      %p162 = pnand %p160, %p161
      %p163 = pneg %p162
      // Predicated region
      $region9: #{one_model_forward.61} parent=5 // pred_check
        _
      $region10: #{one_model_forward.61} parent=5 // pred_check_branch
        %165 = sbr.rel (%p162) target = $region12
      $region11: #{one_model_forward.61} parent=5 // pred_region
        %s166 = ssub.s32 %s11, 1
        // Predicated region
        $region13: #{one_model_forward.61} parent=11 // pred_check
          %p167 = pneg %p84
        $region14: #{one_model_forward.61} parent=11 // pred_check_branch
          %169 = sbr.rel (%p167) target = $region16
        $region15: #{one_model_forward.61} parent=11 // pred_region
          _
        $region16: #{one_model_forward.61} parent=11 // pred_fallthru
          _
        // Predicated region
        $region17: #{one_model_forward.61} parent=11 // pred_check
          %p170 = pneg %p105
        $region18: #{one_model_forward.61} parent=11 // pred_check_branch
          %172 = sbr.rel (%p170) target = $region20
        $region19: #{one_model_forward.61} parent=11 // pred_region
          _
        $region20: #{one_model_forward.61} parent=11 // pred_fallthru
          _
        // Predicated region
        $region21: #{one_model_forward.61} parent=11 // pred_check
          %p173 = pneg %p126
        $region22: #{one_model_forward.61} parent=11 // pred_check_branch
          %175 = sbr.rel (%p173) target = $region24
        $region23: #{one_model_forward.61} parent=11 // pred_region
          _
        $region24: #{one_model_forward.61} parent=11 // pred_fallthru
          _
      $region12: #{one_model_forward.61} parent=5 // pred_fallthru
        _
      %p176 = scmp.lt.s32.totalorder %s11, 2
      // Predicated region
      $region25: #{one_model_forward.61} parent=5 // pred_check
        %p177 = pneg %p176
      $region26: #{one_model_forward.61} parent=5 // pred_check_branch
        %179 = sbr.rel (%p177) target = $region28
      $region27: #{one_model_forward.61} parent=5 // pred_region
        // Predicated region
        $region29: #{one_model_forward.61} parent=27 // pred_check
          %p180 = pneg %p31
        $region30: #{one_model_forward.61} parent=27 // pred_check_branch
          %182 = sbr.rel (%p180) target = $region32
        $region31: #{one_model_forward.61} parent=27 // pred_region
          %p183 = scmp.lt.s32.totalorder %s11, 1
          %s184 = scalar_select %p183, %s11, 1
          %s185 = smul.addr %s184, 8
          %s186 = smul.addr %s185, 8
          %s187 = scalar_lea.vmem %s0, %s186
        $region32: #{one_model_forward.61} parent=27 // pred_fallthru
          _
        // Predicated region
        $region33: #{one_model_forward.61} parent=27 // pred_check
          %p188 = pneg %p57
        $region34: #{one_model_forward.61} parent=27 // pred_check_branch
          %190 = sbr.rel (%p188) target = $region36
        $region35: #{one_model_forward.61} parent=27 // pred_region
          %s191 = sand.u32 %s47, 1
          %s192 = sand.u32 %s47, 1
          %s193 = smul.addr %s192, 32
          %s194 = scalar_lea.vmem [#allocation2], %s193
          %s195 = smul.addr %s11, 2
          %s196 = smul.addr %s195, 8
          %s197 = scalar_lea.vmem %s1, %s196
          // Predicated region
          $region37: #{one_model_forward.61} parent=35 // pred_check
            _
          $region38: #{one_model_forward.61} parent=35 // pred_check_branch
            %199 = sbr.rel (0) target = $region40
          $region39: #{one_model_forward.61} parent=35 // pred_region
            // Predicated region
            $region41: #{one_model_forward.61} parent=39 // pred_check
              _
            $region42: #{one_model_forward.61} parent=39 // pred_check_branch
              %201 = sbr.rel (0) target = $region44
            $region43: #{one_model_forward.61} parent=39 // pred_region
              // Predicated region
              $region56: #{one_model_forward.61} parent=43 // pred_check
                _
              $region57: #{one_model_forward.61} parent=43 // pred_check_branch
                %223 = sbr.rel (0) target = $region59
              $region58: #{one_model_forward.61} parent=43 // pred_region
                loop: start=0, step=1, limit=1
                $region60: #{one_model_forward.61} parent=58 // loop_pre_header
                  _
                $region61: #{one_model_forward.61} parent=58 // loop_header
                  %s225 = sphi 0, %s229
                  %p226 = scmp.ge.s32.totalorder %s225, 1
                  %s230 = sphi %s197, %s197
                  %s231 = sphi %s194, %s194
                $region62: #{one_model_forward.61} parent=58 // loop_header_branch
                  %228 = sbr.rel (%p226) target = $region66
                $region63: #{one_model_forward.61} parent=58 // loop_body
                  %v232 = vld [vmem:[%s230] sm:$0xff]
                  %233 = vst [vmem:[%s231] sm:$0xff] %v232
                  %v234 = vld [vmem:[%s230 + $0x8] sm:$0xff]
                  %235 = vst [vmem:[%s231 + $0x8] sm:$0xff] %v234
                  %v236 = vld [vmem:[%s230 + $0x20] sm:$0xff]
                  %237 = vst [vmem:[%s231 + $0x10] sm:$0xff] %v236
                  %v238 = vld [vmem:[%s230 + $0x28] sm:$0xff]
                  %239 = vst [vmem:[%s231 + $0x18] sm:$0xff] %v238
                $region64: #{one_model_forward.61} parent=58 // loop_footer
                  %s229 = sadd.s32 1, %s225
                $region65: #{one_model_forward.61} parent=58 // loop_footer_branch
                  %224 = sbr.rel target = $region61
                $region66: #{one_model_forward.61} parent=58 // loop_exit
                  _
              $region59: #{one_model_forward.61} parent=43 // pred_fallthru
                _
              // Predicated region
              $region67: #{one_model_forward.61} parent=43 // pred_check
                _
              $region68: #{one_model_forward.61} parent=43 // pred_check_branch
                %241 = sbr.rel target = $region70
              $region69: #{one_model_forward.61} parent=43 // pred_region
                _
              $region70: #{one_model_forward.61} parent=43 // pred_fallthru
                _
            $region44: #{one_model_forward.61} parent=39 // pred_fallthru
              _
            // Predicated region
            $region45: #{one_model_forward.61} parent=39 // pred_check
              _
            $region46: #{one_model_forward.61} parent=39 // pred_check_branch
              %203 = sbr.rel target = $region48
            $region47: #{one_model_forward.61} parent=39 // pred_region
              %s205 = ssub.s32 256, 1
              loop: start=0, step=1, limit=1
              $region49: #{one_model_forward.61} parent=47 // loop_pre_header
                _
              $region50: #{one_model_forward.61} parent=47 // loop_header
                %s207 = sphi 0, %s211
                %p208 = scmp.ge.s32.totalorder %s207, 1
                %s212 = sphi %s197, %s197
                %s213 = sphi %s194, %s194
              $region51: #{one_model_forward.61} parent=47 // loop_header_branch
                %210 = sbr.rel (%p208) target = $region55
              $region52: #{one_model_forward.61} parent=47 // loop_body
                %v214 = vld [vmem:[%s212] sm:%s205]
                %215 = vst [vmem:[%s213] sm:%s205] %v214
                %v216 = vld [vmem:[%s212 + $0x8] sm:%s205]
                %217 = vst [vmem:[%s213 + $0x8] sm:%s205] %v216
                %v218 = vld [vmem:[%s212 + $0x20] sm:%s205]
                %219 = vst [vmem:[%s213 + $0x10] sm:%s205] %v218
                %v220 = vld [vmem:[%s212 + $0x28] sm:%s205]
                %221 = vst [vmem:[%s213 + $0x18] sm:%s205] %v220
              $region53: #{one_model_forward.61} parent=47 // loop_footer
                %s211 = sadd.s32 1, %s207
              $region54: #{one_model_forward.61} parent=47 // loop_footer_branch
                %206 = sbr.rel target = $region50
              $region55: #{one_model_forward.61} parent=47 // loop_exit
                _
            $region48: #{one_model_forward.61} parent=39 // pred_fallthru
              _
          $region40: #{one_model_forward.61} parent=35 // pred_fallthru
            _
          %242 = vnop
        $region36: #{one_model_forward.61} parent=27 // pred_fallthru
          _
      $region28: #{one_model_forward.61} parent=5 // pred_fallthru
        _
      %p243 = scmp.le.s32.totalorder 1, %s11
      %p244 = scmp.lt.s32.totalorder %s11, 3
      %p245 = pnand %p243, %p244
      %p246 = pneg %p245
      // Predicated region
      $region71: #{one_model_forward.61} parent=5 // pred_check
        _
      $region72: #{one_model_forward.61} parent=5 // pred_check_branch
        %248 = sbr.rel (%p245) target = $region74
      $region73: #{one_model_forward.61} parent=5 // pred_region
        %s249 = ssub.s32 %s11, 1
        %s250 = sand.u32 %s50, 1
        %s251 = sand.u32 %s50, 1
        %s252 = smul.addr %s251, 32
        %s253 = scalar_lea.vmem [#allocation2], %s252
        // Predicated region
        $region75: #{one_model_forward.61} parent=73 // pred_check
          %p254 = pneg %p63
        $region76: #{one_model_forward.61} parent=73 // pred_check_branch
          %256 = sbr.rel (%p254) target = $region78
        $region77: #{one_model_forward.61} parent=73 // pred_region
          _
        $region78: #{one_model_forward.61} parent=73 // pred_fallthru
          _
        %p257 = scmp.lt.s32.totalorder %s16, 1
        %s258 = scalar_select %p257, %s16, 1
        %s259 = smul.addr %s258, 8
        %s260 = smul.addr %s259, 8
        %s261 = scalar_lea.vmem %s0, %s260
        %p262 = pneg %p37
        %p263 = pneg %p34
        %s264 = sand.u32 %s50, 1
        %s265 = sand.u32 %s50, 1
        %s266 = smul.addr %s265, 32
        %s267 = scalar_lea.vmem [#allocation2], %s266
        %p268 = pneg %p63
        %p269 = pneg %p60
        %p270 = pneg %p84
        %p271 = pneg %p81
        %p272 = pneg %p105
        %p273 = pneg %p102
        %p274 = pneg %p126
        %p275 = pneg %p123
        %p276 = pneg %p152
        %p277 = pneg %p149
        %p278 = scmp.lt.s32.totalorder %s16, 1
        %s279 = scalar_select %p278, %s16, 1
        %s280 = smul.addr %s279, 8
        %s281 = smul.addr %s280, 4
        %s282 = scalar_lea.vmem %s5, %s281
        %p283 = scmp.lt.s32.totalorder %s16, 1
        %s284 = scalar_select %p283, %s16, 1
        %s285 = smul.addr %s284, 8
        %s286 = smul.addr %s285, 8
        %s287 = scalar_lea.vmem %s0, %s286
        %p288 = scmp.lt.s32.totalorder %s16, 1
        %s289 = scalar_select %p288, %s16, 1
        %s290 = smul.addr %s289, 8
        %s291 = smul.addr %s290, 4
        %s292 = scalar_lea.vmem %s5, %s291
        %v293 = vld [vmem:[%s287] sm:$0xff]
        %v294 = vld [vmem:[%s287 + $0x8] sm:$0xff]
        %v295 = vld [vmem:[%s287 + $0x10] sm:$0xff]
        %v296 = vld [vmem:[%s287 + $0x18] sm:$0xff]
        %v297 = vld [vmem:[%s287 + $0x20] sm:$0xff]
        %v298 = vld [vmem:[%s287 + $0x28] sm:$0xff]
        %v299 = vld [vmem:[%s287 + $0x30] sm:$0xff]
        %v300 = vld [vmem:[%s287 + $0x38] sm:$0xff]
        %v301 = vld [vmem:[%s3] sm:$0x1]
        %v302 = vld [vmem:[%s4] sm:$0x1]
        %v303 = vld [vmem:[%s2] sm:$0xff]
        %v304 = vld [vmem:[%s2 + $0x8] sm:$0xff]
        %v305 = vld [vmem:[%s2 + $0x10] sm:$0xff]
        %v306 = vld [vmem:[%s2 + $0x18] sm:$0xff]
        %v307 = vld [vmem:[%s2 + $0x20] sm:$0xff]
        %v308 = vld [vmem:[%s2 + $0x28] sm:$0xff]
        %v309 = vld [vmem:[%s2 + $0x30] sm:$0xff]
        %v310 = vld [vmem:[%s2 + $0x38] sm:$0xff]
        %v311 = vld [vmem:[%s253] sm:$0xff]
        %v312 = vld [vmem:[%s253 + $0x8] sm:$0x1]
        %vm313 = vcmask 72704
        %v315 = vsel %vm313, %v303, 0
        %v318 = vsel %vm313, %v304, 0
        %v321 = vsel %vm313, %v305, 0
        %v324 = vsel %vm313, %v306, 0
        %v327 = vsel %vm313, %v307, 0
        %v330 = vsel %vm313, %v308, 0
        %v333 = vsel %vm313, %v309, 0
        %v336 = vsel %vm313, %v310, 0
        %vm338 = vcmask 1040384
        %v340 = vsel %vm338, %v312, 0
        %342 = vmatprep.subr.mxu0 0.0
        %343 = vmatpush1.msra.mxu0 0.0
        %344 = vmatprep.subr.mxu0 0.0
        %345 = vmatpush1.msra.mxu0 0.0
        %346 = vmatprep.subr.mxu0 0.0
        %347 = vmatpush1.msra.mxu0 0.0
        %348 = vmatprep.subr.mxu0 0.0
        %349 = vmatpush1.msra.mxu0 0.0
        %350 = vmatprep.subr.mxu0 0.0
        %351 = vmatpush1.msra.mxu0 0.0
        %352 = vmatprep.subr.mxu0 0.0
        %353 = vmatpush1.msra.mxu0 0.0
        %354 = vmatprep.subr.mxu0 0.0
        %355 = vmatpush1.msra.mxu0 0.0
        %356 = vmatprep.subr.mxu0 0.0
        %357 = vmatpush1.msra.mxu0 0.0
        %358 = vmatprep.subr.mxu0 0.0
        %359 = vmatpush1.msra.mxu0 0.0
        %360 = vmatprep.subr.mxu0 0.0
        %361 = vmatpush1.msra.mxu0 0.0
        %362 = vmatprep.subr.mxu0 0.0
        %363 = vmatpush1.msra.mxu0 0.0
        %364 = vmatprep.subr.mxu0 0.0
        %365 = vmatpush1.msra.mxu0 0.0
        %366 = vmatprep.subr.mxu0 0.0
        %367 = vmatpush1.msra.mxu0 0.0
        %368 = vmatprep.subr.mxu0 0.0
        %369 = vmatpush1.msra.mxu0 0.0
        %370 = vmatprep.subr.mxu0 0.0
        %371 = vmatpush1.msra.mxu0 %v340
        %372 = vmatprep.subr.mxu0 0.0
        %373 = vmatpush1.msra.mxu0 %v311
        %374 = vmatprep.subr.mxu0 0.0
        %375 = vmatpush2.msra.mxu0 0.0
        %376 = vmatprep.subr.mxu0 0.0
        %377 = vmatpush2.msra.mxu0 0.0
        %378 = vmatprep.subr.mxu0 0.0
        %379 = vmatpush2.msra.mxu0 0.0
        %380 = vmatprep.subr.mxu0 0.0
        %381 = vmatpush2.msra.mxu0 0.0
        %382 = vmatprep.subr.mxu0 0.0
        %383 = vmatpush2.msra.mxu0 0.0
        %384 = vmatprep.subr.mxu0 0.0
        %385 = vmatpush2.msra.mxu0 0.0
        %386 = vmatprep.subr.mxu0 0.0
        %387 = vmatpush2.msra.mxu0 0.0
        %388 = vmatprep.subr.mxu0 0.0
        %389 = vmatpush2.msra.mxu0 0.0
        %390 = vmatprep.subr.mxu0 0.0
        %391 = vmatpush2.msra.mxu0 0.0
        %392 = vmatprep.subr.mxu0 0.0
        %393 = vmatpush2.msra.mxu0 0.0
        %394 = vmatprep.subr.mxu0 0.0
        %395 = vmatpush2.msra.mxu0 0.0
        %396 = vmatprep.subr.mxu0 0.0
        %397 = vmatpush2.msra.mxu0 0.0
        %398 = vmatprep.subr.mxu0 0.0
        %399 = vmatpush2.msra.mxu0 0.0
        %400 = vmatprep.subr.mxu0 0.0
        %401 = vmatpush2.msra.mxu0 0.0
        %402 = vmatprep.subr.mxu0 0.0
        %403 = vmatpush2.msra.mxu0 0.0
        %404 = vmatprep.subr.mxu0 0.0
        %405 = vmatpush2.msra.mxu0 0.0
        %406 = vmatprep.mubr.f32.mxu0 0.0
        %407 = vmatmul.mubr.f32.gmra.mxu0 %v315
        %v408 = vpop.f32.mrf.mxu0
        %v409 = vadd.f32 0.0, %v408
        %v410 = vpop.f32.mrf.mxu0
        %411 = vmatprep.mubr.f32.mxu0 0.0
        %412 = vmatmul.mubr.f32.gmra.mxu0 %v318
        %v413 = vpop.f32.mrf.mxu0
        %v414 = vadd.f32 0.0, %v413
        %v415 = vpop.f32.mrf.mxu0
        %416 = vmatprep.mubr.f32.mxu0 0.0
        %417 = vmatmul.mubr.f32.gmra.mxu0 %v321
        %v418 = vpop.f32.mrf.mxu0
        %v419 = vadd.f32 0.0, %v418
        %v420 = vpop.f32.mrf.mxu0
        %421 = vmatprep.mubr.f32.mxu0 0.0
        %422 = vmatmul.mubr.f32.gmra.mxu0 %v324
        %v423 = vpop.f32.mrf.mxu0
        %v424 = vadd.f32 0.0, %v423
        %v425 = vpop.f32.mrf.mxu0
        %426 = vmatprep.mubr.f32.mxu0 0.0
        %427 = vmatmul.mubr.f32.gmra.mxu0 %v327
        %v428 = vpop.f32.mrf.mxu0
        %v429 = vadd.f32 0.0, %v428
        %v430 = vpop.f32.mrf.mxu0
        %431 = vmatprep.mubr.f32.mxu0 0.0
        %432 = vmatmul.mubr.f32.gmra.mxu0 %v330
        %v433 = vpop.f32.mrf.mxu0
        %v434 = vadd.f32 0.0, %v433
        %v435 = vpop.f32.mrf.mxu0
        %436 = vmatprep.mubr.f32.mxu0 0.0
        %437 = vmatmul.mubr.f32.gmra.mxu0 %v333
        %v438 = vpop.f32.mrf.mxu0
        %v439 = vadd.f32 0.0, %v438
        %v440 = vpop.f32.mrf.mxu0
        %441 = vmatprep.mubr.f32.mxu0 0.0
        %442 = vmatmul.mubr.f32.gmra.mxu0 %v336
        %v443 = vpop.f32.mrf.mxu0
        %v444 = vadd.f32 0.0, %v443
        %v445 = vpop.f32.mrf.mxu0
        %446 = vdwg.mxu0
        %v447 = vadd.f32 %v293, %v409
        %v448 = vadd.f32 %v294, %v414
        %v449 = vadd.f32 %v295, %v419
        %v450 = vadd.f32 %v296, %v424
        %v451 = vadd.f32 %v297, %v429
        %v452 = vadd.f32 %v298, %v434
        %v453 = vadd.f32 %v299, %v439
        %v454 = vadd.f32 %v300, %v444
        %v456 = vlaneseq
        %v457 = vshrl.u32 %v456, 7
        %v458 = vsub.s32 0, %v457
        %v459 = vrot.slane %v301, %v458
        %v461 = vmul.f32 %v447, %v459
        %v462 = vmul.f32 %v448, %v459
        %v463 = vmul.f32 %v449, %v459
        %v464 = vmul.f32 %v450, %v459
        %v465 = vmul.f32 %v451, %v459
        %v466 = vmul.f32 %v452, %v459
        %v467 = vmul.f32 %v453, %v459
        %v468 = vmul.f32 %v454, %v459
        %v470 = vlaneseq
        %v471 = vshrl.u32 %v470, 7
        %v472 = vsub.s32 0, %v471
        %v473 = vrot.slane %v302, %v472
        %v475 = vadd.f32 %v461, %v473
        %v476 = vadd.f32 %v462, %v473
        %v477 = vadd.f32 %v463, %v473
        %v478 = vadd.f32 %v464, %v473
        %v479 = vadd.f32 %v465, %v473
        %v480 = vadd.f32 %v466, %v473
        %v481 = vadd.f32 %v467, %v473
        %v482 = vadd.f32 %v468, %v473
        %v483 = vmax.f32 %v475, 0.0
        %v484 = vmax.f32 %v476, 0.0
        %v485 = vmax.f32 %v477, 0.0
        %v486 = vmax.f32 %v478, 0.0
        %v487 = vmax.f32 %v479, 0.0
        %v488 = vmax.f32 %v480, 0.0
        %v489 = vmax.f32 %v481, 0.0
        %v490 = vmax.f32 %v482, 0.0
        %v491 = vadd.f32 %v483, 0.0
        %v492 = vadd.f32 %v484, 0.0
        %v493 = vadd.f32 %v485, 0.0
        %v494 = vadd.f32 %v486, 0.0
        %v495 = vadd.f32 %v487, 0.0
        %v496 = vadd.f32 %v488, 0.0
        %v497 = vadd.f32 %v489, 0.0
        %v498 = vadd.f32 %v490, 0.0
        %s499 = scalar_lea.vmem %s253, 16 [#allocation2]
        %v500 = vld [vmem:[%s499] sm:$0xff]
        %v501 = vld [vmem:[%s499 + $0x8] sm:$0x1]
        %v503 = vsel %vm338, %v501, 0
        %505 = vmatprep.subr.mxu0 0.0
        %506 = vmatpush1.msra.mxu0 0.0
        %507 = vmatprep.subr.mxu0 0.0
        %508 = vmatpush1.msra.mxu0 0.0
        %509 = vmatprep.subr.mxu0 0.0
        %510 = vmatpush1.msra.mxu0 0.0
        %511 = vmatprep.subr.mxu0 0.0
        %512 = vmatpush1.msra.mxu0 0.0
        %513 = vmatprep.subr.mxu0 0.0
        %514 = vmatpush1.msra.mxu0 0.0
        %515 = vmatprep.subr.mxu0 0.0
        %516 = vmatpush1.msra.mxu0 0.0
        %517 = vmatprep.subr.mxu0 0.0
        %518 = vmatpush1.msra.mxu0 0.0
        %519 = vmatprep.subr.mxu0 0.0
        %520 = vmatpush1.msra.mxu0 0.0
        %521 = vmatprep.subr.mxu0 0.0
        %522 = vmatpush1.msra.mxu0 0.0
        %523 = vmatprep.subr.mxu0 0.0
        %524 = vmatpush1.msra.mxu0 0.0
        %525 = vmatprep.subr.mxu0 0.0
        %526 = vmatpush1.msra.mxu0 0.0
        %527 = vmatprep.subr.mxu0 0.0
        %528 = vmatpush1.msra.mxu0 0.0
        %529 = vmatprep.subr.mxu0 0.0
        %530 = vmatpush1.msra.mxu0 0.0
        %531 = vmatprep.subr.mxu0 0.0
        %532 = vmatpush1.msra.mxu0 0.0
        %533 = vmatprep.subr.mxu0 0.0
        %534 = vmatpush1.msra.mxu0 %v503
        %535 = vmatprep.subr.mxu0 0.0
        %536 = vmatpush1.msra.mxu0 %v500
        %537 = vmatprep.subr.mxu0 0.0
        %538 = vmatpush2.msra.mxu0 0.0
        %539 = vmatprep.subr.mxu0 0.0
        %540 = vmatpush2.msra.mxu0 0.0
        %541 = vmatprep.subr.mxu0 0.0
        %542 = vmatpush2.msra.mxu0 0.0
        %543 = vmatprep.subr.mxu0 0.0
        %544 = vmatpush2.msra.mxu0 0.0
        %545 = vmatprep.subr.mxu0 0.0
        %546 = vmatpush2.msra.mxu0 0.0
        %547 = vmatprep.subr.mxu0 0.0
        %548 = vmatpush2.msra.mxu0 0.0
        %549 = vmatprep.subr.mxu0 0.0
        %550 = vmatpush2.msra.mxu0 0.0
        %551 = vmatprep.subr.mxu0 0.0
        %552 = vmatpush2.msra.mxu0 0.0
        %553 = vmatprep.subr.mxu0 0.0
        %554 = vmatpush2.msra.mxu0 0.0
        %555 = vmatprep.subr.mxu0 0.0
        %556 = vmatpush2.msra.mxu0 0.0
        %557 = vmatprep.subr.mxu0 0.0
        %558 = vmatpush2.msra.mxu0 0.0
        %559 = vmatprep.subr.mxu0 0.0
        %560 = vmatpush2.msra.mxu0 0.0
        %561 = vmatprep.subr.mxu0 0.0
        %562 = vmatpush2.msra.mxu0 0.0
        %563 = vmatprep.subr.mxu0 0.0
        %564 = vmatpush2.msra.mxu0 0.0
        %565 = vmatprep.subr.mxu0 0.0
        %566 = vmatpush2.msra.mxu0 0.0
        %567 = vmatprep.subr.mxu0 0.0
        %568 = vmatpush2.msra.mxu0 0.0
        %569 = vmatprep.mubr.f32.mxu0 0.0
        %570 = vmatmul.mubr.f32.gmra.mxu0 %v315
        %v571 = vpop.f32.mrf.mxu0
        %v572 = vadd.f32 0.0, %v571
        %v573 = vpop.f32.mrf.mxu0
        %574 = vmatprep.mubr.f32.mxu0 0.0
        %575 = vmatmul.mubr.f32.gmra.mxu0 %v318
        %v576 = vpop.f32.mrf.mxu0
        %v577 = vadd.f32 0.0, %v576
        %v578 = vpop.f32.mrf.mxu0
        %579 = vmatprep.mubr.f32.mxu0 0.0
        %580 = vmatmul.mubr.f32.gmra.mxu0 %v321
        %v581 = vpop.f32.mrf.mxu0
        %v582 = vadd.f32 0.0, %v581
        %v583 = vpop.f32.mrf.mxu0
        %584 = vmatprep.mubr.f32.mxu0 0.0
        %585 = vmatmul.mubr.f32.gmra.mxu0 %v324
        %v586 = vpop.f32.mrf.mxu0
        %v587 = vadd.f32 0.0, %v586
        %v588 = vpop.f32.mrf.mxu0
        %589 = vmatprep.mubr.f32.mxu0 0.0
        %590 = vmatmul.mubr.f32.gmra.mxu0 %v327
        %v591 = vpop.f32.mrf.mxu0
        %v592 = vadd.f32 0.0, %v591
        %v593 = vpop.f32.mrf.mxu0
        %594 = vmatprep.mubr.f32.mxu0 0.0
        %595 = vmatmul.mubr.f32.gmra.mxu0 %v330
        %v596 = vpop.f32.mrf.mxu0
        %v597 = vadd.f32 0.0, %v596
        %v598 = vpop.f32.mrf.mxu0
        %599 = vmatprep.mubr.f32.mxu0 0.0
        %600 = vmatmul.mubr.f32.gmra.mxu0 %v333
        %v601 = vpop.f32.mrf.mxu0
        %v602 = vadd.f32 0.0, %v601
        %v603 = vpop.f32.mrf.mxu0
        %604 = vmatprep.mubr.f32.mxu0 0.0
        %605 = vmatmul.mubr.f32.gmra.mxu0 %v336
        %v606 = vpop.f32.mrf.mxu0
        %v607 = vadd.f32 0.0, %v606
        %v608 = vpop.f32.mrf.mxu0
        %609 = vdwg.mxu0
        %v610 = vadd.f32 %v293, %v572
        %v611 = vadd.f32 %v294, %v577
        %v612 = vadd.f32 %v295, %v582
        %v613 = vadd.f32 %v296, %v587
        %v614 = vadd.f32 %v297, %v592
        %v615 = vadd.f32 %v298, %v597
        %v616 = vadd.f32 %v299, %v602
        %v617 = vadd.f32 %v300, %v607
        %v618 = vmul.f32 %v610, %v459
        %v619 = vmul.f32 %v611, %v459
        %v620 = vmul.f32 %v612, %v459
        %v621 = vmul.f32 %v613, %v459
        %v622 = vmul.f32 %v614, %v459
        %v623 = vmul.f32 %v615, %v459
        %v624 = vmul.f32 %v616, %v459
        %v625 = vmul.f32 %v617, %v459
        %v626 = vadd.f32 %v618, %v473
        %v627 = vadd.f32 %v619, %v473
        %v628 = vadd.f32 %v620, %v473
        %v629 = vadd.f32 %v621, %v473
        %v630 = vadd.f32 %v622, %v473
        %v631 = vadd.f32 %v623, %v473
        %v632 = vadd.f32 %v624, %v473
        %v633 = vadd.f32 %v625, %v473
        %v634 = vmax.f32 %v626, 0.0
        %v635 = vmax.f32 %v627, 0.0
        %v636 = vmax.f32 %v628, 0.0
        %v637 = vmax.f32 %v629, 0.0
        %v638 = vmax.f32 %v630, 0.0
        %v639 = vmax.f32 %v631, 0.0
        %v640 = vmax.f32 %v632, 0.0
        %v641 = vmax.f32 %v633, 0.0
        %v642 = vadd.f32 %v491, %v634
        %v643 = vadd.f32 %v492, %v635
        %v644 = vadd.f32 %v493, %v636
        %v645 = vadd.f32 %v494, %v637
        %v646 = vadd.f32 %v495, %v638
        %v647 = vadd.f32 %v496, %v639
        %v648 = vadd.f32 %v497, %v640
        %v649 = vadd.f32 %v498, %v641
        %v650 = vpack.c.bf16 %v643, %v642
        %v651 = vpack.c.bf16 %v645, %v644
        %v652 = vpack.c.bf16 %v647, %v646
        %v653 = vpack.c.bf16 %v649, %v648
        %v658 = vunpack.c.l.b16 %v650
        %v659 = vunpack.c.h.b16 %v650
        %v660 = vunpack.c.l.b16 %v651
        %v661 = vunpack.c.h.b16 %v651
        %v662 = vunpack.c.l.b16 %v652
        %v663 = vunpack.c.h.b16 %v652
        %v664 = vunpack.c.l.b16 %v653
        %v665 = vunpack.c.h.b16 %v653
        %v666 = vpack.c.b16 %v658, %v658
        %v667 = vpack.c.b16 %v659, %v659
        %v668 = vpack.c.b16 %v660, %v660
        %v669 = vpack.c.b16 %v661, %v661
        %v670 = vpack.c.b16 %v662, %v662
        %v671 = vpack.c.b16 %v663, %v663
        %v672 = vpack.c.b16 %v664, %v664
        %v673 = vpack.c.b16 %v665, %v665
        %682 = vst [vmem:[%s292] sm:$0xf] %v666
        %683 = vst [vmem:[%s292 + $0x4] sm:$0xf] %v667
        %684 = vst [vmem:[%s292 + $0x8] sm:$0xf] %v668
        %685 = vst [vmem:[%s292 + $0xc] sm:$0xf] %v669
        %686 = vst [vmem:[%s292 + $0x10] sm:$0xf] %v670
        %687 = vst [vmem:[%s292 + $0x14] sm:$0xf] %v671
        %688 = vst [vmem:[%s292 + $0x18] sm:$0xf] %v672
        %689 = vst [vmem:[%s292 + $0x1c] sm:$0xf] %v673
        %p690 = scmp.lt.s32.totalorder %s16, 1
        %s691 = scalar_select %p690, %s16, 1
        %s692 = smul.addr %s691, 8
        %s693 = smul.addr %s692, 4
        %s694 = scalar_lea.vmem %s5, %s693
        // Predicated region
        $region79: #{one_model_forward.61} parent=73 // pred_check
          %p695 = pneg %p149
        $region80: #{one_model_forward.61} parent=73 // pred_check_branch
          %697 = sbr.rel (%p695) target = $region82
        $region81: #{one_model_forward.61} parent=73 // pred_region
          _
        $region82: #{one_model_forward.61} parent=73 // pred_fallthru
          _
      $region74: #{one_model_forward.61} parent=5 // pred_fallthru
        _
      %p698 = scmp.le.s32.totalorder 2, %s11
      // Predicated region
      $region83: #{one_model_forward.61} parent=5 // pred_check
        %p699 = pneg %p698
      $region84: #{one_model_forward.61} parent=5 // pred_check_branch
        %701 = sbr.rel (%p699) target = $region86
      $region85: #{one_model_forward.61} parent=5 // pred_region
        %s702 = ssub.s32 %s11, 2
        // Predicated region
        $region87: #{one_model_forward.61} parent=85 // pred_check
          %p703 = pneg %p155
        $region88: #{one_model_forward.61} parent=85 // pred_check_branch
          %705 = sbr.rel (%p703) target = $region90
        $region89: #{one_model_forward.61} parent=85 // pred_region
          %p706 = scmp.lt.s32.totalorder %s17, 1
          %s707 = scalar_select %p706, %s17, 1
          %s708 = smul.addr %s707, 8
          %s709 = smul.addr %s708, 4
          %s710 = scalar_lea.vmem %s5, %s709
        $region90: #{one_model_forward.61} parent=85 // pred_fallthru
          _
      $region86: #{one_model_forward.61} parent=5 // pred_fallthru
        _
    $region6: #{one_model_forward.61} parent=1 // loop_footer
      %s15 = sadd.s32 1, %s11
    $region7: #{one_model_forward.61} parent=1 // loop_footer_branch
      %10 = sbr.rel target = $region3
    $region8: #{one_model_forward.61} parent=1 // loop_exit
      _

// kernel: one_model_forward.62
$region0: #{one_model_forward.62}
  #allocation0 [shape = 'u32[]', space=smem, size = 0x4, offset = 0x4, fixed_abs, tag = 'smem constant byte address 0x4 - core index']
  #allocation1 [shape = 'u32[144,128]{1,0:T(1,128)}', space=vmem, size = 0x12000, scoped, tag = 'internal scratch']
  %s0 = inlined_call_operand.vmem [shape: bf16[128,306], index: 0, kind: input, shape index: {}]
  %s1 = inlined_call_operand.vmem [shape: bf16[306,128], index: 1, kind: input, shape index: {}]
  %s2 = inlined_call_operand.vmem [shape: f32[1,128], index: 2, kind: input, shape index: {}]
  %s3 = inlined_call_operand.vmem [shape: f32[1,128], index: 3, kind: input, shape index: {}]
  %s4 = inlined_call_operand.vmem [shape: f32[128,128], index: 4, kind: output, shape index: {}]
  %s5 = sld [smem:[#allocation0]]
  $region26: #{one_model_forward.62} parent=0
    _
  %s7 = ssub.s32 1, %s5
  %s8 = scalar_select 0, %s7, %s5
  // Predicated region
  $region2: #{one_model_forward.62} parent=0 // pred_check
    _
  $region3: #{one_model_forward.62} parent=0 // pred_check_branch
    %10 = sbr.rel (0) target = $region5
  $region4: #{one_model_forward.62} parent=0 // pred_region
    _
  $region5: #{one_model_forward.62} parent=0 // pred_fallthru
    _
  // Predicated region
  $region6: #{one_model_forward.62} parent=0 // pred_check
    _
  $region7: #{one_model_forward.62} parent=0 // pred_check_branch
    %12 = sbr.rel (0) target = $region9
  $region8: #{one_model_forward.62} parent=0 // pred_region
    _
  $region9: #{one_model_forward.62} parent=0 // pred_fallthru
    _
  // Predicated region
  $region10: #{one_model_forward.62} parent=0 // pred_check
    _
  $region11: #{one_model_forward.62} parent=0 // pred_check_branch
    %14 = sbr.rel (0) target = $region13
  $region12: #{one_model_forward.62} parent=0 // pred_region
    _
  $region13: #{one_model_forward.62} parent=0 // pred_fallthru
    _
  // Predicated region
  $region14: #{one_model_forward.62} parent=0 // pred_check
    _
  $region15: #{one_model_forward.62} parent=0 // pred_check_branch
    %16 = sbr.rel (0) target = $region17
  $region16: #{one_model_forward.62} parent=0 // pred_region
    _
  $region17: #{one_model_forward.62} parent=0 // pred_fallthru
    _
  %v18 = vld [vmem:[%s0] sm:$0xff]
  %v19 = vld [vmem:[%s0 + $0x8] sm:$0xf]
  %v20 = vld [vmem:[%s0 + $0xc] sm:$0xff]
  %v21 = vld [vmem:[%s0 + $0x14] sm:$0xf]
  %v22 = vld [vmem:[%s0 + $0x18] sm:$0xff]
  %v23 = vld [vmem:[%s0 + $0x20] sm:$0xf]
  %v24 = vld [vmem:[%s0 + $0x24] sm:$0xff]
  %v25 = vld [vmem:[%s0 + $0x2c] sm:$0xf]
  %v26 = vld [vmem:[%s0 + $0x30] sm:$0xff]
  %v27 = vld [vmem:[%s0 + $0x38] sm:$0xf]
  %v28 = vld [vmem:[%s0 + $0x3c] sm:$0xff]
  %v29 = vld [vmem:[%s0 + $0x44] sm:$0xf]
  %v30 = vld [vmem:[%s0 + $0x48] sm:$0xff]
  %v31 = vld [vmem:[%s0 + $0x50] sm:$0xf]
  %v32 = vld [vmem:[%s0 + $0x54] sm:$0xff]
  %v33 = vld [vmem:[%s0 + $0x5c] sm:$0xf]
  %v34 = vld [vmem:[%s0 + $0x60] sm:$0xff]
  %v35 = vld [vmem:[%s0 + $0x68] sm:$0xf]
  %v36 = vld [vmem:[%s0 + $0x6c] sm:$0xff]
  %v37 = vld [vmem:[%s0 + $0x74] sm:$0xf]
  %v38 = vld [vmem:[%s0 + $0x78] sm:$0xff]
  %v39 = vld [vmem:[%s0 + $0x80] sm:$0xf]
  %v40 = vld [vmem:[%s0 + $0x84] sm:$0xff]
  %v41 = vld [vmem:[%s0 + $0x8c] sm:$0xf]
  %v42 = vld [vmem:[%s0 + $0x90] sm:$0xff]
  %v43 = vld [vmem:[%s0 + $0x98] sm:$0xf]
  %v44 = vld [vmem:[%s0 + $0x9c] sm:$0xff]
  %v45 = vld [vmem:[%s0 + $0xa4] sm:$0xf]
  %v46 = vld [vmem:[%s0 + $0xa8] sm:$0xff]
  %v47 = vld [vmem:[%s0 + $0xb0] sm:$0xf]
  %v48 = vld [vmem:[%s0 + $0xb4] sm:$0xff]
  %v49 = vld [vmem:[%s0 + $0xbc] sm:$0xf]
  %v50 = vld [vmem:[%s1] sm:$0xf]
  %v51 = vld [vmem:[%s1 + $0x4] sm:$0xf]
  %v52 = vld [vmem:[%s1 + $0x8] sm:$0xf]
  %v53 = vld [vmem:[%s1 + $0xc] sm:$0xf]
  %v54 = vld [vmem:[%s1 + $0x10] sm:$0xf]
  %v55 = vld [vmem:[%s1 + $0x14] sm:$0xf]
  %v56 = vld [vmem:[%s1 + $0x18] sm:$0xf]
  %v57 = vld [vmem:[%s1 + $0x1c] sm:$0xf]
  %v58 = vld [vmem:[%s1 + $0x20] sm:$0xf]
  %v59 = vld [vmem:[%s1 + $0x24] sm:$0xf]
  %v60 = vld [vmem:[%s1 + $0x28] sm:$0xf]
  %v61 = vld [vmem:[%s1 + $0x2c] sm:$0xf]
  %v62 = vld [vmem:[%s1 + $0x30] sm:$0xf]
  %v63 = vld [vmem:[%s1 + $0x34] sm:$0xf]
  %v64 = vld [vmem:[%s1 + $0x38] sm:$0xf]
  %v65 = vld [vmem:[%s1 + $0x3c] sm:$0xf]
  %v66 = vld [vmem:[%s1 + $0x40] sm:$0xf]
  %v67 = vld [vmem:[%s1 + $0x44] sm:$0xf]
  %v68 = vld [vmem:[%s1 + $0x48] sm:$0xf]
  %v69 = vld [vmem:[%s1 + $0x4c] sm:$0xf]
  %v70 = vld [vmem:[%s1 + $0x50] sm:$0xf]
  %v71 = vld [vmem:[%s1 + $0x54] sm:$0xf]
  %v72 = vld [vmem:[%s1 + $0x58] sm:$0xf]
  %v73 = vld [vmem:[%s1 + $0x5c] sm:$0xf]
  %v74 = vld [vmem:[%s1 + $0x60] sm:$0xf]
  %v75 = vld [vmem:[%s1 + $0x64] sm:$0xf]
  %v76 = vld [vmem:[%s1 + $0x68] sm:$0xf]
  %v77 = vld [vmem:[%s1 + $0x6c] sm:$0xf]
  %v78 = vld [vmem:[%s1 + $0x70] sm:$0xf]
  %v79 = vld [vmem:[%s1 + $0x74] sm:$0xf]
  %v80 = vld [vmem:[%s1 + $0x78] sm:$0xf]
  %v81 = vld [vmem:[%s1 + $0x7c] sm:$0xf]
  %v82 = vld [vmem:[%s1 + $0x80] sm:$0xf]
  %v83 = vld [vmem:[%s1 + $0x84] sm:$0xf]
  %v84 = vld [vmem:[%s1 + $0x88] sm:$0xf]
  %v85 = vld [vmem:[%s1 + $0x8c] sm:$0xf]
  %v86 = vld [vmem:[%s1 + $0x90] sm:$0xf]
  %v87 = vld [vmem:[%s1 + $0x94] sm:$0xf]
  %v88 = vld [vmem:[%s1 + $0x98] sm:$0x1]
  %v121 = vunpack.c.l.b16 %v18
  %v122 = vunpack.c.h.b16 %v18
  %v123 = vunpack.c.l.b16 %v19
  %v124 = vunpack.c.l.b16 %v20
  %v125 = vunpack.c.h.b16 %v20
  %v126 = vunpack.c.l.b16 %v21
  %v127 = vunpack.c.l.b16 %v22
  %v128 = vunpack.c.h.b16 %v22
  %v129 = vunpack.c.l.b16 %v23
  %v130 = vunpack.c.l.b16 %v24
  %v131 = vunpack.c.h.b16 %v24
  %v132 = vunpack.c.l.b16 %v25
  %v133 = vunpack.c.l.b16 %v26
  %v134 = vunpack.c.h.b16 %v26
  %v135 = vunpack.c.l.b16 %v27
  %v136 = vunpack.c.l.b16 %v28
  %v137 = vunpack.c.h.b16 %v28
  %v138 = vunpack.c.l.b16 %v29
  %v139 = vunpack.c.l.b16 %v30
  %v140 = vunpack.c.h.b16 %v30
  %v141 = vunpack.c.l.b16 %v31
  %v142 = vunpack.c.l.b16 %v32
  %v143 = vunpack.c.h.b16 %v32
  %v144 = vunpack.c.l.b16 %v33
  %v145 = vunpack.c.l.b16 %v34
  %v146 = vunpack.c.h.b16 %v34
  %v147 = vunpack.c.l.b16 %v35
  %v148 = vunpack.c.l.b16 %v36
  %v149 = vunpack.c.h.b16 %v36
  %v150 = vunpack.c.l.b16 %v37
  %v151 = vunpack.c.l.b16 %v38
  %v152 = vunpack.c.h.b16 %v38
  %v153 = vunpack.c.l.b16 %v39
  %v154 = vunpack.c.l.b16 %v40
  %v155 = vunpack.c.h.b16 %v40
  %v156 = vunpack.c.l.b16 %v41
  %v157 = vunpack.c.l.b16 %v42
  %v158 = vunpack.c.h.b16 %v42
  %v159 = vunpack.c.l.b16 %v43
  %v160 = vunpack.c.l.b16 %v44
  %v161 = vunpack.c.h.b16 %v44
  %v162 = vunpack.c.l.b16 %v45
  %v163 = vunpack.c.l.b16 %v46
  %v164 = vunpack.c.h.b16 %v46
  %v165 = vunpack.c.l.b16 %v47
  %v166 = vunpack.c.l.b16 %v48
  %v167 = vunpack.c.h.b16 %v48
  %v168 = vunpack.c.l.b16 %v49
  %v169 = vpack.c.b16 %v124, %v121
  %v170 = vpack.c.b16 %v125, %v122
  %v171 = vpack.c.b16 %v126, %v123
  %v172 = vpack.c.b16 %v130, %v127
  %v173 = vpack.c.b16 %v131, %v128
  %v174 = vpack.c.b16 %v132, %v129
  %v175 = vpack.c.b16 %v136, %v133
  %v176 = vpack.c.b16 %v137, %v134
  %v177 = vpack.c.b16 %v138, %v135
  %v178 = vpack.c.b16 %v142, %v139
  %v179 = vpack.c.b16 %v143, %v140
  %v180 = vpack.c.b16 %v144, %v141
  %v181 = vpack.c.b16 %v148, %v145
  %v182 = vpack.c.b16 %v149, %v146
  %v183 = vpack.c.b16 %v150, %v147
  %v184 = vpack.c.b16 %v154, %v151
  %v185 = vpack.c.b16 %v155, %v152
  %v186 = vpack.c.b16 %v156, %v153
  %v187 = vpack.c.b16 %v160, %v157
  %v188 = vpack.c.b16 %v161, %v158
  %v189 = vpack.c.b16 %v162, %v159
  %v190 = vpack.c.b16 %v166, %v163
  %v191 = vpack.c.b16 %v167, %v164
  %v192 = vpack.c.b16 %v168, %v165
  %v248 = vunpack.c.l.b16 %v50
  %v249 = vunpack.c.l.b16 %v51
  %v250 = vunpack.c.l.b16 %v52
  %v251 = vunpack.c.l.b16 %v53
  %v252 = vunpack.c.l.b16 %v54
  %v253 = vunpack.c.l.b16 %v55
  %v254 = vunpack.c.l.b16 %v56
  %v255 = vunpack.c.l.b16 %v57
  %v256 = vunpack.c.l.b16 %v58
  %v257 = vunpack.c.l.b16 %v59
  %v258 = vunpack.c.l.b16 %v60
  %v259 = vunpack.c.l.b16 %v61
  %v260 = vunpack.c.l.b16 %v62
  %v261 = vunpack.c.l.b16 %v63
  %v262 = vunpack.c.l.b16 %v64
  %v263 = vunpack.c.l.b16 %v65
  %v264 = vunpack.c.l.b16 %v66
  %v265 = vunpack.c.l.b16 %v67
  %v266 = vunpack.c.l.b16 %v68
  %v267 = vunpack.c.l.b16 %v69
  %v268 = vunpack.c.l.b16 %v70
  %v269 = vunpack.c.l.b16 %v71
  %v270 = vunpack.c.l.b16 %v72
  %v271 = vunpack.c.l.b16 %v73
  %v272 = vunpack.c.l.b16 %v74
  %v273 = vunpack.c.l.b16 %v75
  %v274 = vunpack.c.l.b16 %v76
  %v275 = vunpack.c.l.b16 %v77
  %v276 = vunpack.c.l.b16 %v78
  %v277 = vunpack.c.l.b16 %v79
  %v278 = vunpack.c.l.b16 %v80
  %v279 = vunpack.c.l.b16 %v81
  %v280 = vunpack.c.l.b16 %v82
  %v281 = vunpack.c.l.b16 %v83
  %v282 = vunpack.c.l.b16 %v84
  %v283 = vunpack.c.l.b16 %v85
  %v284 = vunpack.c.l.b16 %v86
  %v285 = vunpack.c.l.b16 %v87
  %v286 = vunpack.c.l.b16 %v88
  %v287 = vpack.c.b16 %v249, %v248
  %v288 = vpack.c.b16 %v251, %v250
  %v289 = vpack.c.b16 %v253, %v252
  %v290 = vpack.c.b16 %v255, %v254
  %v291 = vpack.c.b16 %v257, %v256
  %v292 = vpack.c.b16 %v259, %v258
  %v293 = vpack.c.b16 %v261, %v260
  %v294 = vpack.c.b16 %v263, %v262
  %v295 = vpack.c.b16 %v265, %v264
  %v296 = vpack.c.b16 %v267, %v266
  %v297 = vpack.c.b16 %v269, %v268
  %v298 = vpack.c.b16 %v271, %v270
  %v299 = vpack.c.b16 %v273, %v272
  %v300 = vpack.c.b16 %v275, %v274
  %v301 = vpack.c.b16 %v277, %v276
  %v302 = vpack.c.b16 %v279, %v278
  %v303 = vpack.c.b16 %v281, %v280
  %v304 = vpack.c.b16 %v283, %v282
  %v305 = vpack.c.b16 %v285, %v284
  %v306 = vpack.c.b16 %v286, %v286
  %vm326 = vcmask 408576
  %v328 = vsel %vm326, %v171, 0
  %v331 = vsel %vm326, %v174, 0
  %v334 = vsel %vm326, %v177, 0
  %v337 = vsel %vm326, %v180, 0
  %v340 = vsel %vm326, %v183, 0
  %v343 = vsel %vm326, %v186, 0
  %v346 = vsel %vm326, %v189, 0
  %v349 = vsel %vm326, %v192, 0
  %vm351 = vcmask 1040384
  %v353 = vsel %vm351, %v306, 0
  %355 = vmatprep.subr.bf16.mxu0 0
  %356 = vmatpush1.bf16.msra.mxu0 %v294
  %357 = vmatprep.subr.bf16.mxu0 0
  %358 = vmatpush1.bf16.msra.mxu0 %v293
  %359 = vmatprep.subr.bf16.mxu0 0
  %360 = vmatpush1.bf16.msra.mxu0 %v292
  %361 = vmatprep.subr.bf16.mxu0 0
  %362 = vmatpush1.bf16.msra.mxu0 %v291
  %363 = vmatprep.subr.bf16.mxu0 0
  %364 = vmatpush1.bf16.msra.mxu0 %v290
  %365 = vmatprep.subr.bf16.mxu0 0
  %366 = vmatpush1.bf16.msra.mxu0 %v289
  %367 = vmatprep.subr.bf16.mxu0 0
  %368 = vmatpush1.bf16.msra.mxu0 %v288
  %369 = vmatprep.subr.bf16.mxu0 0
  %370 = vmatpush1.bf16.msra.mxu0 %v287
  %371 = vmatprep.subr.bf16.mxu0 0
  %372 = vmatpush2.bf16.msra.mxu0 %v302
  %373 = vmatprep.subr.bf16.mxu0 0
  %374 = vmatpush2.bf16.msra.mxu0 %v301
  %375 = vmatprep.subr.bf16.mxu0 0
  %376 = vmatpush2.bf16.msra.mxu0 %v300
  %377 = vmatprep.subr.bf16.mxu0 0
  %378 = vmatpush2.bf16.msra.mxu0 %v299
  %379 = vmatprep.subr.bf16.mxu0 0
  %380 = vmatpush2.bf16.msra.mxu0 %v298
  %381 = vmatprep.subr.bf16.mxu0 0
  %382 = vmatpush2.bf16.msra.mxu0 %v297
  %383 = vmatprep.subr.bf16.mxu0 0
  %384 = vmatpush2.bf16.msra.mxu0 %v296
  %385 = vmatprep.subr.bf16.mxu0 0
  %386 = vmatpush2.bf16.msra.mxu0 %v295
  %387 = vmatprep.mubr.bf16.mxu0 %v170
  %388 = vmatmul.mubr.bf16.gmra.mxu0 %v169
  %v389 = vpop.f32.mrf.mxu0
  %v390 = vadd.f32 0.0, %v389
  %v391 = vpop.f32.mrf.mxu0
  %v392 = vpop.f32.mrf.mxu0
  %v393 = vadd.f32 0.0, %v392
  %v394 = vpop.f32.mrf.mxu0
  %395 = vmatprep.mubr.bf16.mxu0 %v173
  %396 = vmatmul.mubr.bf16.gmra.mxu0 %v172
  %v397 = vpop.f32.mrf.mxu0
  %v398 = vadd.f32 0.0, %v397
  %v399 = vpop.f32.mrf.mxu0
  %v400 = vpop.f32.mrf.mxu0
  %v401 = vadd.f32 0.0, %v400
  %v402 = vpop.f32.mrf.mxu0
  %403 = vmatprep.mubr.bf16.mxu0 %v176
  %404 = vmatmul.mubr.bf16.gmra.mxu0 %v175
  %v405 = vpop.f32.mrf.mxu0
  %v406 = vadd.f32 0.0, %v405
  %v407 = vpop.f32.mrf.mxu0
  %v408 = vpop.f32.mrf.mxu0
  %v409 = vadd.f32 0.0, %v408
  %v410 = vpop.f32.mrf.mxu0
  %411 = vmatprep.mubr.bf16.mxu0 %v179
  %412 = vmatmul.mubr.bf16.gmra.mxu0 %v178
  %v413 = vpop.f32.mrf.mxu0
  %v414 = vadd.f32 0.0, %v413
  %v415 = vpop.f32.mrf.mxu0
  %v416 = vpop.f32.mrf.mxu0
  %v417 = vadd.f32 0.0, %v416
  %v418 = vpop.f32.mrf.mxu0
  %419 = vmatprep.mubr.bf16.mxu0 %v182
  %420 = vmatmul.mubr.bf16.gmra.mxu0 %v181
  %v421 = vpop.f32.mrf.mxu0
  %v422 = vadd.f32 0.0, %v421
  %v423 = vpop.f32.mrf.mxu0
  %v424 = vpop.f32.mrf.mxu0
  %v425 = vadd.f32 0.0, %v424
  %v426 = vpop.f32.mrf.mxu0
  %427 = vmatprep.mubr.bf16.mxu0 %v185
  %428 = vmatmul.mubr.bf16.gmra.mxu0 %v184
  %v429 = vpop.f32.mrf.mxu0
  %v430 = vadd.f32 0.0, %v429
  %v431 = vpop.f32.mrf.mxu0
  %v432 = vpop.f32.mrf.mxu0
  %v433 = vadd.f32 0.0, %v432
  %v434 = vpop.f32.mrf.mxu0
  %435 = vmatprep.mubr.bf16.mxu0 %v188
  %436 = vmatmul.mubr.bf16.gmra.mxu0 %v187
  %v437 = vpop.f32.mrf.mxu0
  %v438 = vadd.f32 0.0, %v437
  %v439 = vpop.f32.mrf.mxu0
  %v440 = vpop.f32.mrf.mxu0
  %v441 = vadd.f32 0.0, %v440
  %v442 = vpop.f32.mrf.mxu0
  %443 = vmatprep.mubr.bf16.mxu0 %v191
  %444 = vmatmul.mubr.bf16.gmra.mxu0 %v190
  %v445 = vpop.f32.mrf.mxu0
  %v446 = vadd.f32 0.0, %v445
  %v447 = vpop.f32.mrf.mxu0
  %v448 = vpop.f32.mrf.mxu0
  %v449 = vadd.f32 0.0, %v448
  %v450 = vpop.f32.mrf.mxu0
  %451 = vdwg.mxu0
  %452 = vmatprep.subr.bf16.mxu0 0
  %453 = vmatpush1.bf16.msra.mxu0 0
  %454 = vmatprep.subr.bf16.mxu0 0
  %455 = vmatpush1.bf16.msra.mxu0 0
  %456 = vmatprep.subr.bf16.mxu0 0
  %457 = vmatpush1.bf16.msra.mxu0 0
  %458 = vmatprep.subr.bf16.mxu0 0
  %459 = vmatpush1.bf16.msra.mxu0 0
  %460 = vmatprep.subr.bf16.mxu0 0
  %461 = vmatpush1.bf16.msra.mxu0 %v353
  %462 = vmatprep.subr.bf16.mxu0 0
  %463 = vmatpush1.bf16.msra.mxu0 %v305
  %464 = vmatprep.subr.bf16.mxu0 0
  %465 = vmatpush1.bf16.msra.mxu0 %v304
  %466 = vmatprep.subr.bf16.mxu0 0
  %467 = vmatpush1.bf16.msra.mxu0 %v303
  %468 = vmatprep.subr.bf16.mxu0 0
  %469 = vmatpush2.bf16.msra.mxu0 0
  %470 = vmatprep.subr.bf16.mxu0 0
  %471 = vmatpush2.bf16.msra.mxu0 0
  %472 = vmatprep.subr.bf16.mxu0 0
  %473 = vmatpush2.bf16.msra.mxu0 0
  %474 = vmatprep.subr.bf16.mxu0 0
  %475 = vmatpush2.bf16.msra.mxu0 0
  %476 = vmatprep.subr.bf16.mxu0 0
  %477 = vmatpush2.bf16.msra.mxu0 0
  %478 = vmatprep.subr.bf16.mxu0 0
  %479 = vmatpush2.bf16.msra.mxu0 0
  %480 = vmatprep.subr.bf16.mxu0 0
  %481 = vmatpush2.bf16.msra.mxu0 0
  %482 = vmatprep.subr.bf16.mxu0 0
  %483 = vmatpush2.bf16.msra.mxu0 0
  %484 = vmatprep.mubr.bf16.mxu0 0
  %485 = vmatmul.mubr.bf16.gmra.mxu0 %v328
  %v486 = vpop.f32.mrf.mxu0
  %v487 = vadd.f32 %v390, %v486
  %v488 = vpop.f32.mrf.mxu0
  %v489 = vpop.f32.mrf.mxu0
  %v490 = vadd.f32 %v393, %v489
  %v491 = vpop.f32.mrf.mxu0
  %492 = vmatprep.mubr.bf16.mxu0 0
  %493 = vmatmul.mubr.bf16.gmra.mxu0 %v331
  %v494 = vpop.f32.mrf.mxu0
  %v495 = vadd.f32 %v398, %v494
  %v496 = vpop.f32.mrf.mxu0
  %v497 = vpop.f32.mrf.mxu0
  %v498 = vadd.f32 %v401, %v497
  %v499 = vpop.f32.mrf.mxu0
  %500 = vmatprep.mubr.bf16.mxu0 0
  %501 = vmatmul.mubr.bf16.gmra.mxu0 %v334
  %v502 = vpop.f32.mrf.mxu0
  %v503 = vadd.f32 %v406, %v502
  %v504 = vpop.f32.mrf.mxu0
  %v505 = vpop.f32.mrf.mxu0
  %v506 = vadd.f32 %v409, %v505
  %v507 = vpop.f32.mrf.mxu0
  %508 = vmatprep.mubr.bf16.mxu0 0
  %509 = vmatmul.mubr.bf16.gmra.mxu0 %v337
  %v510 = vpop.f32.mrf.mxu0
  %v511 = vadd.f32 %v414, %v510
  %v512 = vpop.f32.mrf.mxu0
  %v513 = vpop.f32.mrf.mxu0
  %v514 = vadd.f32 %v417, %v513
  %v515 = vpop.f32.mrf.mxu0
  %516 = vmatprep.mubr.bf16.mxu0 0
  %517 = vmatmul.mubr.bf16.gmra.mxu0 %v340
  %v518 = vpop.f32.mrf.mxu0
  %v519 = vadd.f32 %v422, %v518
  %v520 = vpop.f32.mrf.mxu0
  %v521 = vpop.f32.mrf.mxu0
  %v522 = vadd.f32 %v425, %v521
  %v523 = vpop.f32.mrf.mxu0
  %524 = vmatprep.mubr.bf16.mxu0 0
  %525 = vmatmul.mubr.bf16.gmra.mxu0 %v343
  %v526 = vpop.f32.mrf.mxu0
  %v527 = vadd.f32 %v430, %v526
  %v528 = vpop.f32.mrf.mxu0
  %v529 = vpop.f32.mrf.mxu0
  %v530 = vadd.f32 %v433, %v529
  %v531 = vpop.f32.mrf.mxu0
  %532 = vmatprep.mubr.bf16.mxu0 0
  %533 = vmatmul.mubr.bf16.gmra.mxu0 %v346
  %v534 = vpop.f32.mrf.mxu0
  %v535 = vadd.f32 %v438, %v534
  %v536 = vpop.f32.mrf.mxu0
  %v537 = vpop.f32.mrf.mxu0
  %v538 = vadd.f32 %v441, %v537
  %v539 = vpop.f32.mrf.mxu0
  %540 = vmatprep.mubr.bf16.mxu0 0
  %541 = vmatmul.mubr.bf16.gmra.mxu0 %v349
  %v542 = vpop.f32.mrf.mxu0
  %v543 = vadd.f32 %v446, %v542
  %v544 = vpop.f32.mrf.mxu0
  %v545 = vpop.f32.mrf.mxu0
  %v546 = vadd.f32 %v449, %v545
  %v547 = vpop.f32.mrf.mxu0
  %548 = vdwg.mxu0
  %v549 = vld [vmem:[%s2] sm:$0x1]
  %v551 = vlaneseq
  %v552 = vshrl.u32 %v551, 7
  %v553 = vsub.s32 0, %v552
  %v554 = vrot.slane %v549, %v553
  %v556 = vmul.f32 %v487, %v554
  %v557 = vmul.f32 %v490, %v554
  %v558 = vmul.f32 %v495, %v554
  %v559 = vmul.f32 %v498, %v554
  %v560 = vmul.f32 %v503, %v554
  %v561 = vmul.f32 %v506, %v554
  %v562 = vmul.f32 %v511, %v554
  %v563 = vmul.f32 %v514, %v554
  %v564 = vmul.f32 %v519, %v554
  %v565 = vmul.f32 %v522, %v554
  %v566 = vmul.f32 %v527, %v554
  %v567 = vmul.f32 %v530, %v554
  %v568 = vmul.f32 %v535, %v554
  %v569 = vmul.f32 %v538, %v554
  %v570 = vmul.f32 %v543, %v554
  %v571 = vmul.f32 %v546, %v554
  %v572 = vld [vmem:[%s3] sm:$0x1]
  %v574 = vlaneseq
  %v575 = vshrl.u32 %v574, 7
  %v576 = vsub.s32 0, %v575
  %v577 = vrot.slane %v572, %v576
  %v579 = vadd.f32 %v556, %v577
  %v580 = vadd.f32 %v557, %v577
  %v581 = vadd.f32 %v558, %v577
  %v582 = vadd.f32 %v559, %v577
  %v583 = vadd.f32 %v560, %v577
  %v584 = vadd.f32 %v561, %v577
  %v585 = vadd.f32 %v562, %v577
  %v586 = vadd.f32 %v563, %v577
  %v587 = vadd.f32 %v564, %v577
  %v588 = vadd.f32 %v565, %v577
  %v589 = vadd.f32 %v566, %v577
  %v590 = vadd.f32 %v567, %v577
  %v591 = vadd.f32 %v568, %v577
  %v592 = vadd.f32 %v569, %v577
  %v593 = vadd.f32 %v570, %v577
  %v594 = vadd.f32 %v571, %v577
  %v595 = vmax.f32 %v579, 0.0
  %v596 = vmax.f32 %v580, 0.0
  %v597 = vmax.f32 %v581, 0.0
  %v598 = vmax.f32 %v582, 0.0
  %v599 = vmax.f32 %v583, 0.0
  %v600 = vmax.f32 %v584, 0.0
  %v601 = vmax.f32 %v585, 0.0
  %v602 = vmax.f32 %v586, 0.0
  %v603 = vmax.f32 %v587, 0.0
  %v604 = vmax.f32 %v588, 0.0
  %v605 = vmax.f32 %v589, 0.0
  %v606 = vmax.f32 %v590, 0.0
  %v607 = vmax.f32 %v591, 0.0
  %v608 = vmax.f32 %v592, 0.0
  %v609 = vmax.f32 %v593, 0.0
  %v610 = vmax.f32 %v594, 0.0
  %611 = vst [vmem:[%s4] sm:$0xff] %v595
  %612 = vst [vmem:[%s4 + $0x8] sm:$0xff] %v596
  %613 = vst [vmem:[%s4 + $0x10] sm:$0xff] %v597
  %614 = vst [vmem:[%s4 + $0x18] sm:$0xff] %v598
  %615 = vst [vmem:[%s4 + $0x20] sm:$0xff] %v599
  %616 = vst [vmem:[%s4 + $0x28] sm:$0xff] %v600
  %617 = vst [vmem:[%s4 + $0x30] sm:$0xff] %v601
  %618 = vst [vmem:[%s4 + $0x38] sm:$0xff] %v602
  %619 = vst [vmem:[%s4 + $0x40] sm:$0xff] %v603
  %620 = vst [vmem:[%s4 + $0x48] sm:$0xff] %v604
  %621 = vst [vmem:[%s4 + $0x50] sm:$0xff] %v605
  %622 = vst [vmem:[%s4 + $0x58] sm:$0xff] %v606
  %623 = vst [vmem:[%s4 + $0x60] sm:$0xff] %v607
  %624 = vst [vmem:[%s4 + $0x68] sm:$0xff] %v608
  %625 = vst [vmem:[%s4 + $0x70] sm:$0xff] %v609
  %626 = vst [vmem:[%s4 + $0x78] sm:$0xff] %v610
  // Predicated region
  $region18: #{one_model_forward.62} parent=0 // pred_check
    _
  $region19: #{one_model_forward.62} parent=0 // pred_check_branch
    %628 = sbr.rel (0) target = $region21
  $region20: #{one_model_forward.62} parent=0 // pred_region
    _
  $region21: #{one_model_forward.62} parent=0 // pred_fallthru
    _
  // Predicated region
  $region22: #{one_model_forward.62} parent=0 // pred_check
    _
  $region23: #{one_model_forward.62} parent=0 // pred_check_branch
    %630 = sbr.rel (0) target = $region25
  $region24: #{one_model_forward.62} parent=0 // pred_region
    _
  $region25: #{one_model_forward.62} parent=0 // pred_fallthru
    _

// kernel: one_model_forward.63
$region0: #{one_model_forward.63}
  #allocation0 [shape = 'u32[]', space=smem, size = 0x4, offset = 0x4, fixed_abs, tag = 'smem constant byte address 0x4 - core index']
  #allocation1 [shape = 'u32[144,128]{1,0:T(1,128)}', space=vmem, size = 0x12000, scoped, tag = 'internal scratch']
  %s0 = inlined_call_operand.vmem [shape: bf16[128,297], index: 0, kind: input, shape index: {}]
  %s1 = inlined_call_operand.vmem [shape: bf16[297,128], index: 1, kind: input, shape index: {}]
  %s2 = inlined_call_operand.vmem [shape: f32[1,128], index: 2, kind: input, shape index: {}]
  %s3 = inlined_call_operand.vmem [shape: f32[1,128], index: 3, kind: input, shape index: {}]
  %s4 = inlined_call_operand.vmem [shape: bf16[128,128], index: 4, kind: output, shape index: {}]
  %s5 = sld [smem:[#allocation0]]
  $region26: #{one_model_forward.63} parent=0
    _
  %s7 = ssub.s32 1, %s5
  %s8 = scalar_select 0, %s7, %s5
  // Predicated region
  $region2: #{one_model_forward.63} parent=0 // pred_check
    _
  $region3: #{one_model_forward.63} parent=0 // pred_check_branch
    %10 = sbr.rel (0) target = $region5
  $region4: #{one_model_forward.63} parent=0 // pred_region
    _
  $region5: #{one_model_forward.63} parent=0 // pred_fallthru
    _
  // Predicated region
  $region6: #{one_model_forward.63} parent=0 // pred_check
    _
  $region7: #{one_model_forward.63} parent=0 // pred_check_branch
    %12 = sbr.rel (0) target = $region9
  $region8: #{one_model_forward.63} parent=0 // pred_region
    _
  $region9: #{one_model_forward.63} parent=0 // pred_fallthru
    _
  // Predicated region
  $region10: #{one_model_forward.63} parent=0 // pred_check
    _
  $region11: #{one_model_forward.63} parent=0 // pred_check_branch
    %14 = sbr.rel (0) target = $region13
  $region12: #{one_model_forward.63} parent=0 // pred_region
    _
  $region13: #{one_model_forward.63} parent=0 // pred_fallthru
    _
  // Predicated region
  $region14: #{one_model_forward.63} parent=0 // pred_check
    _
  $region15: #{one_model_forward.63} parent=0 // pred_check_branch
    %16 = sbr.rel (0) target = $region17
  $region16: #{one_model_forward.63} parent=0 // pred_region
    _
  $region17: #{one_model_forward.63} parent=0 // pred_fallthru
    _
  %v18 = vld [vmem:[%s0] sm:$0xff]
  %v19 = vld [vmem:[%s0 + $0x8] sm:$0xf]
  %v20 = vld [vmem:[%s0 + $0xc] sm:$0xff]
  %v21 = vld [vmem:[%s0 + $0x14] sm:$0xf]
  %v22 = vld [vmem:[%s0 + $0x18] sm:$0xff]
  %v23 = vld [vmem:[%s0 + $0x20] sm:$0xf]
  %v24 = vld [vmem:[%s0 + $0x24] sm:$0xff]
  %v25 = vld [vmem:[%s0 + $0x2c] sm:$0xf]
  %v26 = vld [vmem:[%s0 + $0x30] sm:$0xff]
  %v27 = vld [vmem:[%s0 + $0x38] sm:$0xf]
  %v28 = vld [vmem:[%s0 + $0x3c] sm:$0xff]
  %v29 = vld [vmem:[%s0 + $0x44] sm:$0xf]
  %v30 = vld [vmem:[%s0 + $0x48] sm:$0xff]
  %v31 = vld [vmem:[%s0 + $0x50] sm:$0xf]
  %v32 = vld [vmem:[%s0 + $0x54] sm:$0xff]
  %v33 = vld [vmem:[%s0 + $0x5c] sm:$0xf]
  %v34 = vld [vmem:[%s0 + $0x60] sm:$0xff]
  %v35 = vld [vmem:[%s0 + $0x68] sm:$0xf]
  %v36 = vld [vmem:[%s0 + $0x6c] sm:$0xff]
  %v37 = vld [vmem:[%s0 + $0x74] sm:$0xf]
  %v38 = vld [vmem:[%s0 + $0x78] sm:$0xff]
  %v39 = vld [vmem:[%s0 + $0x80] sm:$0xf]
  %v40 = vld [vmem:[%s0 + $0x84] sm:$0xff]
  %v41 = vld [vmem:[%s0 + $0x8c] sm:$0xf]
  %v42 = vld [vmem:[%s0 + $0x90] sm:$0xff]
  %v43 = vld [vmem:[%s0 + $0x98] sm:$0xf]
  %v44 = vld [vmem:[%s0 + $0x9c] sm:$0xff]
  %v45 = vld [vmem:[%s0 + $0xa4] sm:$0xf]
  %v46 = vld [vmem:[%s0 + $0xa8] sm:$0xff]
  %v47 = vld [vmem:[%s0 + $0xb0] sm:$0xf]
  %v48 = vld [vmem:[%s0 + $0xb4] sm:$0xff]
  %v49 = vld [vmem:[%s0 + $0xbc] sm:$0xf]
  %v50 = vld [vmem:[%s1] sm:$0xf]
  %v51 = vld [vmem:[%s1 + $0x4] sm:$0xf]
  %v52 = vld [vmem:[%s1 + $0x8] sm:$0xf]
  %v53 = vld [vmem:[%s1 + $0xc] sm:$0xf]
  %v54 = vld [vmem:[%s1 + $0x10] sm:$0xf]
  %v55 = vld [vmem:[%s1 + $0x14] sm:$0xf]
  %v56 = vld [vmem:[%s1 + $0x18] sm:$0xf]
  %v57 = vld [vmem:[%s1 + $0x1c] sm:$0xf]
  %v58 = vld [vmem:[%s1 + $0x20] sm:$0xf]
  %v59 = vld [vmem:[%s1 + $0x24] sm:$0xf]
  %v60 = vld [vmem:[%s1 + $0x28] sm:$0xf]
  %v61 = vld [vmem:[%s1 + $0x2c] sm:$0xf]
  %v62 = vld [vmem:[%s1 + $0x30] sm:$0xf]
  %v63 = vld [vmem:[%s1 + $0x34] sm:$0xf]
  %v64 = vld [vmem:[%s1 + $0x38] sm:$0xf]
  %v65 = vld [vmem:[%s1 + $0x3c] sm:$0xf]
  %v66 = vld [vmem:[%s1 + $0x40] sm:$0xf]
  %v67 = vld [vmem:[%s1 + $0x44] sm:$0xf]
  %v68 = vld [vmem:[%s1 + $0x48] sm:$0xf]
  %v69 = vld [vmem:[%s1 + $0x4c] sm:$0xf]
  %v70 = vld [vmem:[%s1 + $0x50] sm:$0xf]
  %v71 = vld [vmem:[%s1 + $0x54] sm:$0xf]
  %v72 = vld [vmem:[%s1 + $0x58] sm:$0xf]
  %v73 = vld [vmem:[%s1 + $0x5c] sm:$0xf]
  %v74 = vld [vmem:[%s1 + $0x60] sm:$0xf]
  %v75 = vld [vmem:[%s1 + $0x64] sm:$0xf]
  %v76 = vld [vmem:[%s1 + $0x68] sm:$0xf]
  %v77 = vld [vmem:[%s1 + $0x6c] sm:$0xf]
  %v78 = vld [vmem:[%s1 + $0x70] sm:$0xf]
  %v79 = vld [vmem:[%s1 + $0x74] sm:$0xf]
  %v80 = vld [vmem:[%s1 + $0x78] sm:$0xf]
  %v81 = vld [vmem:[%s1 + $0x7c] sm:$0xf]
  %v82 = vld [vmem:[%s1 + $0x80] sm:$0xf]
  %v83 = vld [vmem:[%s1 + $0x84] sm:$0xf]
  %v84 = vld [vmem:[%s1 + $0x88] sm:$0xf]
  %v85 = vld [vmem:[%s1 + $0x8c] sm:$0xf]
  %v86 = vld [vmem:[%s1 + $0x90] sm:$0xf]
  %v87 = vld [vmem:[%s1 + $0x94] sm:$0x1]
  %v120 = vunpack.c.l.b16 %v18
  %v121 = vunpack.c.h.b16 %v18
  %v122 = vunpack.c.l.b16 %v19
  %v123 = vunpack.c.l.b16 %v20
  %v124 = vunpack.c.h.b16 %v20
  %v125 = vunpack.c.l.b16 %v21
  %v126 = vunpack.c.l.b16 %v22
  %v127 = vunpack.c.h.b16 %v22
  %v128 = vunpack.c.l.b16 %v23
  %v129 = vunpack.c.l.b16 %v24
  %v130 = vunpack.c.h.b16 %v24
  %v131 = vunpack.c.l.b16 %v25
  %v132 = vunpack.c.l.b16 %v26
  %v133 = vunpack.c.h.b16 %v26
  %v134 = vunpack.c.l.b16 %v27
  %v135 = vunpack.c.l.b16 %v28
  %v136 = vunpack.c.h.b16 %v28
  %v137 = vunpack.c.l.b16 %v29
  %v138 = vunpack.c.l.b16 %v30
  %v139 = vunpack.c.h.b16 %v30
  %v140 = vunpack.c.l.b16 %v31
  %v141 = vunpack.c.l.b16 %v32
  %v142 = vunpack.c.h.b16 %v32
  %v143 = vunpack.c.l.b16 %v33
  %v144 = vunpack.c.l.b16 %v34
  %v145 = vunpack.c.h.b16 %v34
  %v146 = vunpack.c.l.b16 %v35
  %v147 = vunpack.c.l.b16 %v36
  %v148 = vunpack.c.h.b16 %v36
  %v149 = vunpack.c.l.b16 %v37
  %v150 = vunpack.c.l.b16 %v38
  %v151 = vunpack.c.h.b16 %v38
  %v152 = vunpack.c.l.b16 %v39
  %v153 = vunpack.c.l.b16 %v40
  %v154 = vunpack.c.h.b16 %v40
  %v155 = vunpack.c.l.b16 %v41
  %v156 = vunpack.c.l.b16 %v42
  %v157 = vunpack.c.h.b16 %v42
  %v158 = vunpack.c.l.b16 %v43
  %v159 = vunpack.c.l.b16 %v44
  %v160 = vunpack.c.h.b16 %v44
  %v161 = vunpack.c.l.b16 %v45
  %v162 = vunpack.c.l.b16 %v46
  %v163 = vunpack.c.h.b16 %v46
  %v164 = vunpack.c.l.b16 %v47
  %v165 = vunpack.c.l.b16 %v48
  %v166 = vunpack.c.h.b16 %v48
  %v167 = vunpack.c.l.b16 %v49
  %v168 = vpack.c.b16 %v123, %v120
  %v169 = vpack.c.b16 %v124, %v121
  %v170 = vpack.c.b16 %v125, %v122
  %v171 = vpack.c.b16 %v129, %v126
  %v172 = vpack.c.b16 %v130, %v127
  %v173 = vpack.c.b16 %v131, %v128
  %v174 = vpack.c.b16 %v135, %v132
  %v175 = vpack.c.b16 %v136, %v133
  %v176 = vpack.c.b16 %v137, %v134
  %v177 = vpack.c.b16 %v141, %v138
  %v178 = vpack.c.b16 %v142, %v139
  %v179 = vpack.c.b16 %v143, %v140
  %v180 = vpack.c.b16 %v147, %v144
  %v181 = vpack.c.b16 %v148, %v145
  %v182 = vpack.c.b16 %v149, %v146
  %v183 = vpack.c.b16 %v153, %v150
  %v184 = vpack.c.b16 %v154, %v151
  %v185 = vpack.c.b16 %v155, %v152
  %v186 = vpack.c.b16 %v159, %v156
  %v187 = vpack.c.b16 %v160, %v157
  %v188 = vpack.c.b16 %v161, %v158
  %v189 = vpack.c.b16 %v165, %v162
  %v190 = vpack.c.b16 %v166, %v163
  %v191 = vpack.c.b16 %v167, %v164
  %v246 = vunpack.c.l.b16 %v50
  %v247 = vunpack.c.l.b16 %v51
  %v248 = vunpack.c.l.b16 %v52
  %v249 = vunpack.c.l.b16 %v53
  %v250 = vunpack.c.l.b16 %v54
  %v251 = vunpack.c.l.b16 %v55
  %v252 = vunpack.c.l.b16 %v56
  %v253 = vunpack.c.l.b16 %v57
  %v254 = vunpack.c.l.b16 %v58
  %v255 = vunpack.c.l.b16 %v59
  %v256 = vunpack.c.l.b16 %v60
  %v257 = vunpack.c.l.b16 %v61
  %v258 = vunpack.c.l.b16 %v62
  %v259 = vunpack.c.l.b16 %v63
  %v260 = vunpack.c.l.b16 %v64
  %v261 = vunpack.c.l.b16 %v65
  %v262 = vunpack.c.l.b16 %v66
  %v263 = vunpack.c.l.b16 %v67
  %v264 = vunpack.c.l.b16 %v68
  %v265 = vunpack.c.l.b16 %v69
  %v266 = vunpack.c.l.b16 %v70
  %v267 = vunpack.c.l.b16 %v71
  %v268 = vunpack.c.l.b16 %v72
  %v269 = vunpack.c.l.b16 %v73
  %v270 = vunpack.c.l.b16 %v74
  %v271 = vunpack.c.l.b16 %v75
  %v272 = vunpack.c.l.b16 %v76
  %v273 = vunpack.c.l.b16 %v77
  %v274 = vunpack.c.l.b16 %v78
  %v275 = vunpack.c.l.b16 %v79
  %v276 = vunpack.c.l.b16 %v80
  %v277 = vunpack.c.l.b16 %v81
  %v278 = vunpack.c.l.b16 %v82
  %v279 = vunpack.c.l.b16 %v83
  %v280 = vunpack.c.l.b16 %v84
  %v281 = vunpack.c.l.b16 %v85
  %v282 = vunpack.c.l.b16 %v86
  %v283 = vunpack.c.l.b16 %v87
  %v284 = vpack.c.b16 %v247, %v246
  %v285 = vpack.c.b16 %v249, %v248
  %v286 = vpack.c.b16 %v251, %v250
  %v287 = vpack.c.b16 %v253, %v252
  %v288 = vpack.c.b16 %v255, %v254
  %v289 = vpack.c.b16 %v257, %v256
  %v290 = vpack.c.b16 %v259, %v258
  %v291 = vpack.c.b16 %v261, %v260
  %v292 = vpack.c.b16 %v263, %v262
  %v293 = vpack.c.b16 %v265, %v264
  %v294 = vpack.c.b16 %v267, %v266
  %v295 = vpack.c.b16 %v269, %v268
  %v296 = vpack.c.b16 %v271, %v270
  %v297 = vpack.c.b16 %v273, %v272
  %v298 = vpack.c.b16 %v275, %v274
  %v299 = vpack.c.b16 %v277, %v276
  %v300 = vpack.c.b16 %v279, %v278
  %v301 = vpack.c.b16 %v281, %v280
  %v302 = vpack.c.b16 %v283, %v282
  %vm321 = vcmask 334848
  %v323 = vsel %vm321, %v170, 0
  %v326 = vsel %vm321, %v173, 0
  %v329 = vsel %vm321, %v176, 0
  %v332 = vsel %vm321, %v179, 0
  %v335 = vsel %vm321, %v182, 0
  %v338 = vsel %vm321, %v185, 0
  %v341 = vsel %vm321, %v188, 0
  %v344 = vsel %vm321, %v191, 0
  %vm346 = vcmask 1043456
  %vm347 = vcmask 1044480
  %v348 = vsel %vm346, 4294967295, 65535
  %v349 = vsel %vm347, %v348, 0
  %v351 = vand.u32 %v302, %v349
  %353 = vmatprep.subr.bf16.mxu0 0
  %354 = vmatpush1.bf16.msra.mxu0 %v291
  %355 = vmatprep.subr.bf16.mxu0 0
  %356 = vmatpush1.bf16.msra.mxu0 %v290
  %357 = vmatprep.subr.bf16.mxu0 0
  %358 = vmatpush1.bf16.msra.mxu0 %v289
  %359 = vmatprep.subr.bf16.mxu0 0
  %360 = vmatpush1.bf16.msra.mxu0 %v288
  %361 = vmatprep.subr.bf16.mxu0 0
  %362 = vmatpush1.bf16.msra.mxu0 %v287
  %363 = vmatprep.subr.bf16.mxu0 0
  %364 = vmatpush1.bf16.msra.mxu0 %v286
  %365 = vmatprep.subr.bf16.mxu0 0
  %366 = vmatpush1.bf16.msra.mxu0 %v285
  %367 = vmatprep.subr.bf16.mxu0 0
  %368 = vmatpush1.bf16.msra.mxu0 %v284
  %369 = vmatprep.subr.bf16.mxu0 0
  %370 = vmatpush2.bf16.msra.mxu0 %v299
  %371 = vmatprep.subr.bf16.mxu0 0
  %372 = vmatpush2.bf16.msra.mxu0 %v298
  %373 = vmatprep.subr.bf16.mxu0 0
  %374 = vmatpush2.bf16.msra.mxu0 %v297
  %375 = vmatprep.subr.bf16.mxu0 0
  %376 = vmatpush2.bf16.msra.mxu0 %v296
  %377 = vmatprep.subr.bf16.mxu0 0
  %378 = vmatpush2.bf16.msra.mxu0 %v295
  %379 = vmatprep.subr.bf16.mxu0 0
  %380 = vmatpush2.bf16.msra.mxu0 %v294
  %381 = vmatprep.subr.bf16.mxu0 0
  %382 = vmatpush2.bf16.msra.mxu0 %v293
  %383 = vmatprep.subr.bf16.mxu0 0
  %384 = vmatpush2.bf16.msra.mxu0 %v292
  %385 = vmatprep.mubr.bf16.mxu0 %v169
  %386 = vmatmul.mubr.bf16.gmra.mxu0 %v168
  %v387 = vpop.f32.mrf.mxu0
  %v388 = vadd.f32 0.0, %v387
  %v389 = vpop.f32.mrf.mxu0
  %v390 = vpop.f32.mrf.mxu0
  %v391 = vadd.f32 0.0, %v390
  %v392 = vpop.f32.mrf.mxu0
  %393 = vmatprep.mubr.bf16.mxu0 %v172
  %394 = vmatmul.mubr.bf16.gmra.mxu0 %v171
  %v395 = vpop.f32.mrf.mxu0
  %v396 = vadd.f32 0.0, %v395
  %v397 = vpop.f32.mrf.mxu0
  %v398 = vpop.f32.mrf.mxu0
  %v399 = vadd.f32 0.0, %v398
  %v400 = vpop.f32.mrf.mxu0
  %401 = vmatprep.mubr.bf16.mxu0 %v175
  %402 = vmatmul.mubr.bf16.gmra.mxu0 %v174
  %v403 = vpop.f32.mrf.mxu0
  %v404 = vadd.f32 0.0, %v403
  %v405 = vpop.f32.mrf.mxu0
  %v406 = vpop.f32.mrf.mxu0
  %v407 = vadd.f32 0.0, %v406
  %v408 = vpop.f32.mrf.mxu0
  %409 = vmatprep.mubr.bf16.mxu0 %v178
  %410 = vmatmul.mubr.bf16.gmra.mxu0 %v177
  %v411 = vpop.f32.mrf.mxu0
  %v412 = vadd.f32 0.0, %v411
  %v413 = vpop.f32.mrf.mxu0
  %v414 = vpop.f32.mrf.mxu0
  %v415 = vadd.f32 0.0, %v414
  %v416 = vpop.f32.mrf.mxu0
  %417 = vmatprep.mubr.bf16.mxu0 %v181
  %418 = vmatmul.mubr.bf16.gmra.mxu0 %v180
  %v419 = vpop.f32.mrf.mxu0
  %v420 = vadd.f32 0.0, %v419
  %v421 = vpop.f32.mrf.mxu0
  %v422 = vpop.f32.mrf.mxu0
  %v423 = vadd.f32 0.0, %v422
  %v424 = vpop.f32.mrf.mxu0
  %425 = vmatprep.mubr.bf16.mxu0 %v184
  %426 = vmatmul.mubr.bf16.gmra.mxu0 %v183
  %v427 = vpop.f32.mrf.mxu0
  %v428 = vadd.f32 0.0, %v427
  %v429 = vpop.f32.mrf.mxu0
  %v430 = vpop.f32.mrf.mxu0
  %v431 = vadd.f32 0.0, %v430
  %v432 = vpop.f32.mrf.mxu0
  %433 = vmatprep.mubr.bf16.mxu0 %v187
  %434 = vmatmul.mubr.bf16.gmra.mxu0 %v186
  %v435 = vpop.f32.mrf.mxu0
  %v436 = vadd.f32 0.0, %v435
  %v437 = vpop.f32.mrf.mxu0
  %v438 = vpop.f32.mrf.mxu0
  %v439 = vadd.f32 0.0, %v438
  %v440 = vpop.f32.mrf.mxu0
  %441 = vmatprep.mubr.bf16.mxu0 %v190
  %442 = vmatmul.mubr.bf16.gmra.mxu0 %v189
  %v443 = vpop.f32.mrf.mxu0
  %v444 = vadd.f32 0.0, %v443
  %v445 = vpop.f32.mrf.mxu0
  %v446 = vpop.f32.mrf.mxu0
  %v447 = vadd.f32 0.0, %v446
  %v448 = vpop.f32.mrf.mxu0
  %449 = vdwg.mxu0
  %450 = vmatprep.subr.bf16.mxu0 0
  %451 = vmatpush1.bf16.msra.mxu0 0
  %452 = vmatprep.subr.bf16.mxu0 0
  %453 = vmatpush1.bf16.msra.mxu0 0
  %454 = vmatprep.subr.bf16.mxu0 0
  %455 = vmatpush1.bf16.msra.mxu0 0
  %456 = vmatprep.subr.bf16.mxu0 0
  %457 = vmatpush1.bf16.msra.mxu0 0
  %458 = vmatprep.subr.bf16.mxu0 0
  %459 = vmatpush1.bf16.msra.mxu0 0
  %460 = vmatprep.subr.bf16.mxu0 0
  %461 = vmatpush1.bf16.msra.mxu0 %v351
  %462 = vmatprep.subr.bf16.mxu0 0
  %463 = vmatpush1.bf16.msra.mxu0 %v301
  %464 = vmatprep.subr.bf16.mxu0 0
  %465 = vmatpush1.bf16.msra.mxu0 %v300
  %466 = vmatprep.subr.bf16.mxu0 0
  %467 = vmatpush2.bf16.msra.mxu0 0
  %468 = vmatprep.subr.bf16.mxu0 0
  %469 = vmatpush2.bf16.msra.mxu0 0
  %470 = vmatprep.subr.bf16.mxu0 0
  %471 = vmatpush2.bf16.msra.mxu0 0
  %472 = vmatprep.subr.bf16.mxu0 0
  %473 = vmatpush2.bf16.msra.mxu0 0
  %474 = vmatprep.subr.bf16.mxu0 0
  %475 = vmatpush2.bf16.msra.mxu0 0
  %476 = vmatprep.subr.bf16.mxu0 0
  %477 = vmatpush2.bf16.msra.mxu0 0
  %478 = vmatprep.subr.bf16.mxu0 0
  %479 = vmatpush2.bf16.msra.mxu0 0
  %480 = vmatprep.subr.bf16.mxu0 0
  %481 = vmatpush2.bf16.msra.mxu0 0
  %482 = vmatprep.mubr.bf16.mxu0 0
  %483 = vmatmul.mubr.bf16.gmra.mxu0 %v323
  %v484 = vpop.f32.mrf.mxu0
  %v485 = vadd.f32 %v388, %v484
  %v486 = vpop.f32.mrf.mxu0
  %v487 = vpop.f32.mrf.mxu0
  %v488 = vadd.f32 %v391, %v487
  %v489 = vpop.f32.mrf.mxu0
  %490 = vmatprep.mubr.bf16.mxu0 0
  %491 = vmatmul.mubr.bf16.gmra.mxu0 %v326
  %v492 = vpop.f32.mrf.mxu0
  %v493 = vadd.f32 %v396, %v492
  %v494 = vpop.f32.mrf.mxu0
  %v495 = vpop.f32.mrf.mxu0
  %v496 = vadd.f32 %v399, %v495
  %v497 = vpop.f32.mrf.mxu0
  %498 = vmatprep.mubr.bf16.mxu0 0
  %499 = vmatmul.mubr.bf16.gmra.mxu0 %v329
  %v500 = vpop.f32.mrf.mxu0
  %v501 = vadd.f32 %v404, %v500
  %v502 = vpop.f32.mrf.mxu0
  %v503 = vpop.f32.mrf.mxu0
  %v504 = vadd.f32 %v407, %v503
  %v505 = vpop.f32.mrf.mxu0
  %506 = vmatprep.mubr.bf16.mxu0 0
  %507 = vmatmul.mubr.bf16.gmra.mxu0 %v332
  %v508 = vpop.f32.mrf.mxu0
  %v509 = vadd.f32 %v412, %v508
  %v510 = vpop.f32.mrf.mxu0
  %v511 = vpop.f32.mrf.mxu0
  %v512 = vadd.f32 %v415, %v511
  %v513 = vpop.f32.mrf.mxu0
  %514 = vmatprep.mubr.bf16.mxu0 0
  %515 = vmatmul.mubr.bf16.gmra.mxu0 %v335
  %v516 = vpop.f32.mrf.mxu0
  %v517 = vadd.f32 %v420, %v516
  %v518 = vpop.f32.mrf.mxu0
  %v519 = vpop.f32.mrf.mxu0
  %v520 = vadd.f32 %v423, %v519
  %v521 = vpop.f32.mrf.mxu0
  %522 = vmatprep.mubr.bf16.mxu0 0
  %523 = vmatmul.mubr.bf16.gmra.mxu0 %v338
  %v524 = vpop.f32.mrf.mxu0
  %v525 = vadd.f32 %v428, %v524
  %v526 = vpop.f32.mrf.mxu0
  %v527 = vpop.f32.mrf.mxu0
  %v528 = vadd.f32 %v431, %v527
  %v529 = vpop.f32.mrf.mxu0
  %530 = vmatprep.mubr.bf16.mxu0 0
  %531 = vmatmul.mubr.bf16.gmra.mxu0 %v341
  %v532 = vpop.f32.mrf.mxu0
  %v533 = vadd.f32 %v436, %v532
  %v534 = vpop.f32.mrf.mxu0
  %v535 = vpop.f32.mrf.mxu0
  %v536 = vadd.f32 %v439, %v535
  %v537 = vpop.f32.mrf.mxu0
  %538 = vmatprep.mubr.bf16.mxu0 0
  %539 = vmatmul.mubr.bf16.gmra.mxu0 %v344
  %v540 = vpop.f32.mrf.mxu0
  %v541 = vadd.f32 %v444, %v540
  %v542 = vpop.f32.mrf.mxu0
  %v543 = vpop.f32.mrf.mxu0
  %v544 = vadd.f32 %v447, %v543
  %v545 = vpop.f32.mrf.mxu0
  %546 = vdwg.mxu0
  %v547 = vld [vmem:[%s2] sm:$0x1]
  %v549 = vlaneseq
  %v550 = vshrl.u32 %v549, 7
  %v551 = vsub.s32 0, %v550
  %v552 = vrot.slane %v547, %v551
  %v554 = vmul.f32 %v485, %v552
  %v555 = vmul.f32 %v488, %v552
  %v556 = vmul.f32 %v493, %v552
  %v557 = vmul.f32 %v496, %v552
  %v558 = vmul.f32 %v501, %v552
  %v559 = vmul.f32 %v504, %v552
  %v560 = vmul.f32 %v509, %v552
  %v561 = vmul.f32 %v512, %v552
  %v562 = vmul.f32 %v517, %v552
  %v563 = vmul.f32 %v520, %v552
  %v564 = vmul.f32 %v525, %v552
  %v565 = vmul.f32 %v528, %v552
  %v566 = vmul.f32 %v533, %v552
  %v567 = vmul.f32 %v536, %v552
  %v568 = vmul.f32 %v541, %v552
  %v569 = vmul.f32 %v544, %v552
  %v570 = vld [vmem:[%s3] sm:$0x1]
  %v572 = vlaneseq
  %v573 = vshrl.u32 %v572, 7
  %v574 = vsub.s32 0, %v573
  %v575 = vrot.slane %v570, %v574
  %v577 = vadd.f32 %v554, %v575
  %v578 = vadd.f32 %v555, %v575
  %v579 = vadd.f32 %v556, %v575
  %v580 = vadd.f32 %v557, %v575
  %v581 = vadd.f32 %v558, %v575
  %v582 = vadd.f32 %v559, %v575
  %v583 = vadd.f32 %v560, %v575
  %v584 = vadd.f32 %v561, %v575
  %v585 = vadd.f32 %v562, %v575
  %v586 = vadd.f32 %v563, %v575
  %v587 = vadd.f32 %v564, %v575
  %v588 = vadd.f32 %v565, %v575
  %v589 = vadd.f32 %v566, %v575
  %v590 = vadd.f32 %v567, %v575
  %v591 = vadd.f32 %v568, %v575
  %v592 = vadd.f32 %v569, %v575
  %v593 = vmax.f32 %v577, 0.0
  %v594 = vmax.f32 %v578, 0.0
  %v595 = vmax.f32 %v579, 0.0
  %v596 = vmax.f32 %v580, 0.0
  %v597 = vmax.f32 %v581, 0.0
  %v598 = vmax.f32 %v582, 0.0
  %v599 = vmax.f32 %v583, 0.0
  %v600 = vmax.f32 %v584, 0.0
  %v601 = vmax.f32 %v585, 0.0
  %v602 = vmax.f32 %v586, 0.0
  %v603 = vmax.f32 %v587, 0.0
  %v604 = vmax.f32 %v588, 0.0
  %v605 = vmax.f32 %v589, 0.0
  %v606 = vmax.f32 %v590, 0.0
  %v607 = vmax.f32 %v591, 0.0
  %v608 = vmax.f32 %v592, 0.0
  %v609 = vpack.c.bf16 %v594, %v593
  %v610 = vpack.c.bf16 %v596, %v595
  %v611 = vpack.c.bf16 %v598, %v597
  %v612 = vpack.c.bf16 %v600, %v599
  %v613 = vpack.c.bf16 %v602, %v601
  %v614 = vpack.c.bf16 %v604, %v603
  %v615 = vpack.c.bf16 %v606, %v605
  %v616 = vpack.c.bf16 %v608, %v607
  %v625 = vunpack.c.l.b16 %v609
  %v626 = vunpack.c.h.b16 %v609
  %v627 = vunpack.c.l.b16 %v610
  %v628 = vunpack.c.h.b16 %v610
  %v629 = vunpack.c.l.b16 %v611
  %v630 = vunpack.c.h.b16 %v611
  %v631 = vunpack.c.l.b16 %v612
  %v632 = vunpack.c.h.b16 %v612
  %v633 = vunpack.c.l.b16 %v613
  %v634 = vunpack.c.h.b16 %v613
  %v635 = vunpack.c.l.b16 %v614
  %v636 = vunpack.c.h.b16 %v614
  %v637 = vunpack.c.l.b16 %v615
  %v638 = vunpack.c.h.b16 %v615
  %v639 = vunpack.c.l.b16 %v616
  %v640 = vunpack.c.h.b16 %v616
  %v641 = vpack.c.b16 %v625, %v625
  %v642 = vpack.c.b16 %v626, %v626
  %v643 = vpack.c.b16 %v627, %v627
  %v644 = vpack.c.b16 %v628, %v628
  %v645 = vpack.c.b16 %v629, %v629
  %v646 = vpack.c.b16 %v630, %v630
  %v647 = vpack.c.b16 %v631, %v631
  %v648 = vpack.c.b16 %v632, %v632
  %v649 = vpack.c.b16 %v633, %v633
  %v650 = vpack.c.b16 %v634, %v634
  %v651 = vpack.c.b16 %v635, %v635
  %v652 = vpack.c.b16 %v636, %v636
  %v653 = vpack.c.b16 %v637, %v637
  %v654 = vpack.c.b16 %v638, %v638
  %v655 = vpack.c.b16 %v639, %v639
  %v656 = vpack.c.b16 %v640, %v640
  %673 = vst [vmem:[%s4] sm:$0xf] %v641
  %674 = vst [vmem:[%s4 + $0x4] sm:$0xf] %v642
  %675 = vst [vmem:[%s4 + $0x8] sm:$0xf] %v643
  %676 = vst [vmem:[%s4 + $0xc] sm:$0xf] %v644
  %677 = vst [vmem:[%s4 + $0x10] sm:$0xf] %v645
  %678 = vst [vmem:[%s4 + $0x14] sm:$0xf] %v646
  %679 = vst [vmem:[%s4 + $0x18] sm:$0xf] %v647
  %680 = vst [vmem:[%s4 + $0x1c] sm:$0xf] %v648
  %681 = vst [vmem:[%s4 + $0x20] sm:$0xf] %v649
  %682 = vst [vmem:[%s4 + $0x24] sm:$0xf] %v650
  %683 = vst [vmem:[%s4 + $0x28] sm:$0xf] %v651
  %684 = vst [vmem:[%s4 + $0x2c] sm:$0xf] %v652
  %685 = vst [vmem:[%s4 + $0x30] sm:$0xf] %v653
  %686 = vst [vmem:[%s4 + $0x34] sm:$0xf] %v654
  %687 = vst [vmem:[%s4 + $0x38] sm:$0xf] %v655
  %688 = vst [vmem:[%s4 + $0x3c] sm:$0xf] %v656
  // Predicated region
  $region18: #{one_model_forward.63} parent=0 // pred_check
    _
  $region19: #{one_model_forward.63} parent=0 // pred_check_branch
    %690 = sbr.rel (0) target = $region21
  $region20: #{one_model_forward.63} parent=0 // pred_region
    _
  $region21: #{one_model_forward.63} parent=0 // pred_fallthru
    _
  // Predicated region
  $region22: #{one_model_forward.63} parent=0 // pred_check
    _
  $region23: #{one_model_forward.63} parent=0 // pred_check_branch
    %692 = sbr.rel (0) target = $region25
  $region24: #{one_model_forward.63} parent=0 // pred_region
    _
  $region25: #{one_model_forward.63} parent=0 // pred_fallthru
    _

// kernel: one_model_forward.69
$region0: #{one_model_forward.69}
  #allocation0 [shape = 'u32[]', space=smem, size = 0x4, offset = 0x4, fixed_abs, tag = 'smem constant byte address 0x4 - core index']
  #allocation1 [shape = 'u32[144,128]{1,0:T(1,128)}', space=vmem, size = 0x12000, scoped, tag = 'internal scratch']
  %s0 = inlined_call_operand.vmem [shape: bf16[8,32], index: 0, kind: input, shape index: {}]
  %s1 = inlined_call_operand.vmem [shape: bf16[32,128], index: 1, kind: input, shape index: {}]
  %s2 = inlined_call_operand.vmem [shape: f32[1,128], index: 2, kind: input, shape index: {}]
  %s3 = inlined_call_operand.vmem [shape: f32[1,128], index: 3, kind: input, shape index: {}]
  %s4 = inlined_call_operand.vmem [shape: f32[8,128], index: 4, kind: output, shape index: {}]
  %s5 = sld [smem:[#allocation0]]
  $region26: #{one_model_forward.69} parent=0
    _
  %s7 = ssub.s32 1, %s5
  %s8 = scalar_select 0, %s7, %s5
  // Predicated region
  $region2: #{one_model_forward.69} parent=0 // pred_check
    _
  $region3: #{one_model_forward.69} parent=0 // pred_check_branch
    %10 = sbr.rel (0) target = $region5
  $region4: #{one_model_forward.69} parent=0 // pred_region
    _
  $region5: #{one_model_forward.69} parent=0 // pred_fallthru
    _
  // Predicated region
  $region6: #{one_model_forward.69} parent=0 // pred_check
    _
  $region7: #{one_model_forward.69} parent=0 // pred_check_branch
    %12 = sbr.rel (0) target = $region9
  $region8: #{one_model_forward.69} parent=0 // pred_region
    _
  $region9: #{one_model_forward.69} parent=0 // pred_fallthru
    _
  // Predicated region
  $region10: #{one_model_forward.69} parent=0 // pred_check
    _
  $region11: #{one_model_forward.69} parent=0 // pred_check_branch
    %14 = sbr.rel (0) target = $region13
  $region12: #{one_model_forward.69} parent=0 // pred_region
    _
  $region13: #{one_model_forward.69} parent=0 // pred_fallthru
    _
  // Predicated region
  $region14: #{one_model_forward.69} parent=0 // pred_check
    _
  $region15: #{one_model_forward.69} parent=0 // pred_check_branch
    %16 = sbr.rel (0) target = $region17
  $region16: #{one_model_forward.69} parent=0 // pred_region
    _
  $region17: #{one_model_forward.69} parent=0 // pred_fallthru
    _
  %v18 = vld [vmem:[%s0] sm:$0xf]
  %v19 = vld [vmem:[%s1] sm:$0xf]
  %v20 = vld [vmem:[%s1 + $0x4] sm:$0xf]
  %v21 = vld [vmem:[%s1 + $0x8] sm:$0xf]
  %v22 = vld [vmem:[%s1 + $0xc] sm:$0xf]
  %v27 = vunpack.c.l.b16 %v19
  %v28 = vunpack.c.l.b16 %v20
  %v29 = vunpack.c.l.b16 %v21
  %v30 = vunpack.c.l.b16 %v22
  %v31 = vpack.c.b16 %v28, %v27
  %v32 = vpack.c.b16 %v30, %v29
  %vm35 = vcmask 261120
  %v37 = vsel %vm35, %v18, 0
  %39 = vmatprep.subr.bf16.mxu0 0
  %40 = vmatpush1.bf16.msra.mxu0 0
  %41 = vmatprep.subr.bf16.mxu0 0
  %42 = vmatpush1.bf16.msra.mxu0 0
  %43 = vmatprep.subr.bf16.mxu0 0
  %44 = vmatpush1.bf16.msra.mxu0 0
  %45 = vmatprep.subr.bf16.mxu0 0
  %46 = vmatpush1.bf16.msra.mxu0 0
  %47 = vmatprep.subr.bf16.mxu0 0
  %48 = vmatpush1.bf16.msra.mxu0 0
  %49 = vmatprep.subr.bf16.mxu0 0
  %50 = vmatpush1.bf16.msra.mxu0 0
  %51 = vmatprep.subr.bf16.mxu0 0
  %52 = vmatpush1.bf16.msra.mxu0 %v32
  %53 = vmatprep.subr.bf16.mxu0 0
  %54 = vmatpush1.bf16.msra.mxu0 %v31
  %55 = vmatprep.subr.bf16.mxu0 0
  %56 = vmatpush2.bf16.msra.mxu0 0
  %57 = vmatprep.subr.bf16.mxu0 0
  %58 = vmatpush2.bf16.msra.mxu0 0
  %59 = vmatprep.subr.bf16.mxu0 0
  %60 = vmatpush2.bf16.msra.mxu0 0
  %61 = vmatprep.subr.bf16.mxu0 0
  %62 = vmatpush2.bf16.msra.mxu0 0
  %63 = vmatprep.subr.bf16.mxu0 0
  %64 = vmatpush2.bf16.msra.mxu0 0
  %65 = vmatprep.subr.bf16.mxu0 0
  %66 = vmatpush2.bf16.msra.mxu0 0
  %67 = vmatprep.subr.bf16.mxu0 0
  %68 = vmatpush2.bf16.msra.mxu0 0
  %69 = vmatprep.subr.bf16.mxu0 0
  %70 = vmatpush2.bf16.msra.mxu0 0
  %71 = vmatprep.mubr.bf16.mxu0 0
  %72 = vmatmul.mubr.bf16.gmra.mxu0 %v37
  %v73 = vpop.f32.mrf.mxu0
  %v74 = vadd.f32 0.0, %v73
  %v75 = vpop.f32.mrf.mxu0
  %v76 = vpop.f32.mrf.mxu0
  %v77 = vpop.f32.mrf.mxu0
  %78 = vdwg.mxu0
  %v79 = vld [vmem:[%s2] sm:$0x1]
  %v81 = vlaneseq
  %v82 = vshrl.u32 %v81, 7
  %v83 = vsub.s32 0, %v82
  %v84 = vrot.slane %v79, %v83
  %v86 = vmul.f32 %v74, %v84
  %v87 = vld [vmem:[%s3] sm:$0x1]
  %v89 = vlaneseq
  %v90 = vshrl.u32 %v89, 7
  %v91 = vsub.s32 0, %v90
  %v92 = vrot.slane %v87, %v91
  %v94 = vadd.f32 %v86, %v92
  %v95 = vmax.f32 %v94, 0.0
  %96 = vst [vmem:[%s4] sm:$0xff] %v95
  // Predicated region
  $region18: #{one_model_forward.69} parent=0 // pred_check
    _
  $region19: #{one_model_forward.69} parent=0 // pred_check_branch
    %98 = sbr.rel (0) target = $region21
  $region20: #{one_model_forward.69} parent=0 // pred_region
    _
  $region21: #{one_model_forward.69} parent=0 // pred_fallthru
    _
  // Predicated region
  $region22: #{one_model_forward.69} parent=0 // pred_check
    _
  $region23: #{one_model_forward.69} parent=0 // pred_check_branch
    %100 = sbr.rel (0) target = $region25
  $region24: #{one_model_forward.69} parent=0 // pred_region
    _
  $region25: #{one_model_forward.69} parent=0 // pred_fallthru
    _

// kernel: one_model_forward.65
$region0: #{one_model_forward.65}
  #allocation0 [shape = 'u32[]', space=smem, size = 0x4, offset = 0x4, fixed_abs, tag = 'smem constant byte address 0x4 - core index']
  #allocation1 [shape = 'u32[144,128]{1,0:T(1,128)}', space=vmem, size = 0x12000, scoped, tag = 'internal scratch']
  %s0 = inlined_call_operand.vmem [shape: bf16[128,288], index: 0, kind: input, shape index: {}]
  %s1 = inlined_call_operand.vmem [shape: bf16[288,128], index: 1, kind: input, shape index: {}]
  %s2 = inlined_call_operand.vmem [shape: f32[1,128], index: 2, kind: input, shape index: {}]
  %s3 = inlined_call_operand.vmem [shape: f32[1,128], index: 3, kind: input, shape index: {}]
  %s4 = inlined_call_operand.vmem [shape: bf16[128,128], index: 4, kind: output, shape index: {}]
  %s5 = sld [smem:[#allocation0]]
  $region26: #{one_model_forward.65} parent=0
    _
  %s7 = ssub.s32 1, %s5
  %s8 = scalar_select 0, %s7, %s5
  // Predicated region
  $region2: #{one_model_forward.65} parent=0 // pred_check
    _
  $region3: #{one_model_forward.65} parent=0 // pred_check_branch
    %10 = sbr.rel (0) target = $region5
  $region4: #{one_model_forward.65} parent=0 // pred_region
    _
  $region5: #{one_model_forward.65} parent=0 // pred_fallthru
    _
  // Predicated region
  $region6: #{one_model_forward.65} parent=0 // pred_check
    _
  $region7: #{one_model_forward.65} parent=0 // pred_check_branch
    %12 = sbr.rel (0) target = $region9
  $region8: #{one_model_forward.65} parent=0 // pred_region
    _
  $region9: #{one_model_forward.65} parent=0 // pred_fallthru
    _
  // Predicated region
  $region10: #{one_model_forward.65} parent=0 // pred_check
    _
  $region11: #{one_model_forward.65} parent=0 // pred_check_branch
    %14 = sbr.rel (0) target = $region13
  $region12: #{one_model_forward.65} parent=0 // pred_region
    _
  $region13: #{one_model_forward.65} parent=0 // pred_fallthru
    _
  // Predicated region
  $region14: #{one_model_forward.65} parent=0 // pred_check
    _
  $region15: #{one_model_forward.65} parent=0 // pred_check_branch
    %16 = sbr.rel (0) target = $region17
  $region16: #{one_model_forward.65} parent=0 // pred_region
    _
  $region17: #{one_model_forward.65} parent=0 // pred_fallthru
    _
  %v18 = vld [vmem:[%s0] sm:$0xff]
  %v19 = vld [vmem:[%s0 + $0x8] sm:$0xf]
  %v20 = vld [vmem:[%s0 + $0xc] sm:$0xff]
  %v21 = vld [vmem:[%s0 + $0x14] sm:$0xf]
  %v22 = vld [vmem:[%s0 + $0x18] sm:$0xff]
  %v23 = vld [vmem:[%s0 + $0x20] sm:$0xf]
  %v24 = vld [vmem:[%s0 + $0x24] sm:$0xff]
  %v25 = vld [vmem:[%s0 + $0x2c] sm:$0xf]
  %v26 = vld [vmem:[%s0 + $0x30] sm:$0xff]
  %v27 = vld [vmem:[%s0 + $0x38] sm:$0xf]
  %v28 = vld [vmem:[%s0 + $0x3c] sm:$0xff]
  %v29 = vld [vmem:[%s0 + $0x44] sm:$0xf]
  %v30 = vld [vmem:[%s0 + $0x48] sm:$0xff]
  %v31 = vld [vmem:[%s0 + $0x50] sm:$0xf]
  %v32 = vld [vmem:[%s0 + $0x54] sm:$0xff]
  %v33 = vld [vmem:[%s0 + $0x5c] sm:$0xf]
  %v34 = vld [vmem:[%s0 + $0x60] sm:$0xff]
  %v35 = vld [vmem:[%s0 + $0x68] sm:$0xf]
  %v36 = vld [vmem:[%s0 + $0x6c] sm:$0xff]
  %v37 = vld [vmem:[%s0 + $0x74] sm:$0xf]
  %v38 = vld [vmem:[%s0 + $0x78] sm:$0xff]
  %v39 = vld [vmem:[%s0 + $0x80] sm:$0xf]
  %v40 = vld [vmem:[%s0 + $0x84] sm:$0xff]
  %v41 = vld [vmem:[%s0 + $0x8c] sm:$0xf]
  %v42 = vld [vmem:[%s0 + $0x90] sm:$0xff]
  %v43 = vld [vmem:[%s0 + $0x98] sm:$0xf]
  %v44 = vld [vmem:[%s0 + $0x9c] sm:$0xff]
  %v45 = vld [vmem:[%s0 + $0xa4] sm:$0xf]
  %v46 = vld [vmem:[%s0 + $0xa8] sm:$0xff]
  %v47 = vld [vmem:[%s0 + $0xb0] sm:$0xf]
  %v48 = vld [vmem:[%s0 + $0xb4] sm:$0xff]
  %v49 = vld [vmem:[%s0 + $0xbc] sm:$0xf]
  %v50 = vld [vmem:[%s1] sm:$0xf]
  %v51 = vld [vmem:[%s1 + $0x4] sm:$0xf]
  %v52 = vld [vmem:[%s1 + $0x8] sm:$0xf]
  %v53 = vld [vmem:[%s1 + $0xc] sm:$0xf]
  %v54 = vld [vmem:[%s1 + $0x10] sm:$0xf]
  %v55 = vld [vmem:[%s1 + $0x14] sm:$0xf]
  %v56 = vld [vmem:[%s1 + $0x18] sm:$0xf]
  %v57 = vld [vmem:[%s1 + $0x1c] sm:$0xf]
  %v58 = vld [vmem:[%s1 + $0x20] sm:$0xf]
  %v59 = vld [vmem:[%s1 + $0x24] sm:$0xf]
  %v60 = vld [vmem:[%s1 + $0x28] sm:$0xf]
  %v61 = vld [vmem:[%s1 + $0x2c] sm:$0xf]
  %v62 = vld [vmem:[%s1 + $0x30] sm:$0xf]
  %v63 = vld [vmem:[%s1 + $0x34] sm:$0xf]
  %v64 = vld [vmem:[%s1 + $0x38] sm:$0xf]
  %v65 = vld [vmem:[%s1 + $0x3c] sm:$0xf]
  %v66 = vld [vmem:[%s1 + $0x40] sm:$0xf]
  %v67 = vld [vmem:[%s1 + $0x44] sm:$0xf]
  %v68 = vld [vmem:[%s1 + $0x48] sm:$0xf]
  %v69 = vld [vmem:[%s1 + $0x4c] sm:$0xf]
  %v70 = vld [vmem:[%s1 + $0x50] sm:$0xf]
  %v71 = vld [vmem:[%s1 + $0x54] sm:$0xf]
  %v72 = vld [vmem:[%s1 + $0x58] sm:$0xf]
  %v73 = vld [vmem:[%s1 + $0x5c] sm:$0xf]
  %v74 = vld [vmem:[%s1 + $0x60] sm:$0xf]
  %v75 = vld [vmem:[%s1 + $0x64] sm:$0xf]
  %v76 = vld [vmem:[%s1 + $0x68] sm:$0xf]
  %v77 = vld [vmem:[%s1 + $0x6c] sm:$0xf]
  %v78 = vld [vmem:[%s1 + $0x70] sm:$0xf]
  %v79 = vld [vmem:[%s1 + $0x74] sm:$0xf]
  %v80 = vld [vmem:[%s1 + $0x78] sm:$0xf]
  %v81 = vld [vmem:[%s1 + $0x7c] sm:$0xf]
  %v82 = vld [vmem:[%s1 + $0x80] sm:$0xf]
  %v83 = vld [vmem:[%s1 + $0x84] sm:$0xf]
  %v84 = vld [vmem:[%s1 + $0x88] sm:$0xf]
  %v85 = vld [vmem:[%s1 + $0x8c] sm:$0xf]
  %v118 = vunpack.c.l.b16 %v18
  %v119 = vunpack.c.h.b16 %v18
  %v120 = vunpack.c.l.b16 %v19
  %v121 = vunpack.c.l.b16 %v20
  %v122 = vunpack.c.h.b16 %v20
  %v123 = vunpack.c.l.b16 %v21
  %v124 = vunpack.c.l.b16 %v22
  %v125 = vunpack.c.h.b16 %v22
  %v126 = vunpack.c.l.b16 %v23
  %v127 = vunpack.c.l.b16 %v24
  %v128 = vunpack.c.h.b16 %v24
  %v129 = vunpack.c.l.b16 %v25
  %v130 = vunpack.c.l.b16 %v26
  %v131 = vunpack.c.h.b16 %v26
  %v132 = vunpack.c.l.b16 %v27
  %v133 = vunpack.c.l.b16 %v28
  %v134 = vunpack.c.h.b16 %v28
  %v135 = vunpack.c.l.b16 %v29
  %v136 = vunpack.c.l.b16 %v30
  %v137 = vunpack.c.h.b16 %v30
  %v138 = vunpack.c.l.b16 %v31
  %v139 = vunpack.c.l.b16 %v32
  %v140 = vunpack.c.h.b16 %v32
  %v141 = vunpack.c.l.b16 %v33
  %v142 = vunpack.c.l.b16 %v34
  %v143 = vunpack.c.h.b16 %v34
  %v144 = vunpack.c.l.b16 %v35
  %v145 = vunpack.c.l.b16 %v36
  %v146 = vunpack.c.h.b16 %v36
  %v147 = vunpack.c.l.b16 %v37
  %v148 = vunpack.c.l.b16 %v38
  %v149 = vunpack.c.h.b16 %v38
  %v150 = vunpack.c.l.b16 %v39
  %v151 = vunpack.c.l.b16 %v40
  %v152 = vunpack.c.h.b16 %v40
  %v153 = vunpack.c.l.b16 %v41
  %v154 = vunpack.c.l.b16 %v42
  %v155 = vunpack.c.h.b16 %v42
  %v156 = vunpack.c.l.b16 %v43
  %v157 = vunpack.c.l.b16 %v44
  %v158 = vunpack.c.h.b16 %v44
  %v159 = vunpack.c.l.b16 %v45
  %v160 = vunpack.c.l.b16 %v46
  %v161 = vunpack.c.h.b16 %v46
  %v162 = vunpack.c.l.b16 %v47
  %v163 = vunpack.c.l.b16 %v48
  %v164 = vunpack.c.h.b16 %v48
  %v165 = vunpack.c.l.b16 %v49
  %v166 = vpack.c.b16 %v121, %v118
  %v167 = vpack.c.b16 %v122, %v119
  %v168 = vpack.c.b16 %v123, %v120
  %v169 = vpack.c.b16 %v127, %v124
  %v170 = vpack.c.b16 %v128, %v125
  %v171 = vpack.c.b16 %v129, %v126
  %v172 = vpack.c.b16 %v133, %v130
  %v173 = vpack.c.b16 %v134, %v131
  %v174 = vpack.c.b16 %v135, %v132
  %v175 = vpack.c.b16 %v139, %v136
  %v176 = vpack.c.b16 %v140, %v137
  %v177 = vpack.c.b16 %v141, %v138
  %v178 = vpack.c.b16 %v145, %v142
  %v179 = vpack.c.b16 %v146, %v143
  %v180 = vpack.c.b16 %v147, %v144
  %v181 = vpack.c.b16 %v151, %v148
  %v182 = vpack.c.b16 %v152, %v149
  %v183 = vpack.c.b16 %v153, %v150
  %v184 = vpack.c.b16 %v157, %v154
  %v185 = vpack.c.b16 %v158, %v155
  %v186 = vpack.c.b16 %v159, %v156
  %v187 = vpack.c.b16 %v163, %v160
  %v188 = vpack.c.b16 %v164, %v161
  %v189 = vpack.c.b16 %v165, %v162
  %v242 = vunpack.c.l.b16 %v50
  %v243 = vunpack.c.l.b16 %v51
  %v244 = vunpack.c.l.b16 %v52
  %v245 = vunpack.c.l.b16 %v53
  %v246 = vunpack.c.l.b16 %v54
  %v247 = vunpack.c.l.b16 %v55
  %v248 = vunpack.c.l.b16 %v56
  %v249 = vunpack.c.l.b16 %v57
  %v250 = vunpack.c.l.b16 %v58
  %v251 = vunpack.c.l.b16 %v59
  %v252 = vunpack.c.l.b16 %v60
  %v253 = vunpack.c.l.b16 %v61
  %v254 = vunpack.c.l.b16 %v62
  %v255 = vunpack.c.l.b16 %v63
  %v256 = vunpack.c.l.b16 %v64
  %v257 = vunpack.c.l.b16 %v65
  %v258 = vunpack.c.l.b16 %v66
  %v259 = vunpack.c.l.b16 %v67
  %v260 = vunpack.c.l.b16 %v68
  %v261 = vunpack.c.l.b16 %v69
  %v262 = vunpack.c.l.b16 %v70
  %v263 = vunpack.c.l.b16 %v71
  %v264 = vunpack.c.l.b16 %v72
  %v265 = vunpack.c.l.b16 %v73
  %v266 = vunpack.c.l.b16 %v74
  %v267 = vunpack.c.l.b16 %v75
  %v268 = vunpack.c.l.b16 %v76
  %v269 = vunpack.c.l.b16 %v77
  %v270 = vunpack.c.l.b16 %v78
  %v271 = vunpack.c.l.b16 %v79
  %v272 = vunpack.c.l.b16 %v80
  %v273 = vunpack.c.l.b16 %v81
  %v274 = vunpack.c.l.b16 %v82
  %v275 = vunpack.c.l.b16 %v83
  %v276 = vunpack.c.l.b16 %v84
  %v277 = vunpack.c.l.b16 %v85
  %v278 = vpack.c.b16 %v243, %v242
  %v279 = vpack.c.b16 %v245, %v244
  %v280 = vpack.c.b16 %v247, %v246
  %v281 = vpack.c.b16 %v249, %v248
  %v282 = vpack.c.b16 %v251, %v250
  %v283 = vpack.c.b16 %v253, %v252
  %v284 = vpack.c.b16 %v255, %v254
  %v285 = vpack.c.b16 %v257, %v256
  %v286 = vpack.c.b16 %v259, %v258
  %v287 = vpack.c.b16 %v261, %v260
  %v288 = vpack.c.b16 %v263, %v262
  %v289 = vpack.c.b16 %v265, %v264
  %v290 = vpack.c.b16 %v267, %v266
  %v291 = vpack.c.b16 %v269, %v268
  %v292 = vpack.c.b16 %v271, %v270
  %v293 = vpack.c.b16 %v273, %v272
  %v294 = vpack.c.b16 %v275, %v274
  %v295 = vpack.c.b16 %v277, %v276
  %vm314 = vcmask 261120
  %v316 = vsel %vm314, %v168, 0
  %v319 = vsel %vm314, %v171, 0
  %v322 = vsel %vm314, %v174, 0
  %v325 = vsel %vm314, %v177, 0
  %v328 = vsel %vm314, %v180, 0
  %v331 = vsel %vm314, %v183, 0
  %v334 = vsel %vm314, %v186, 0
  %v337 = vsel %vm314, %v189, 0
  %339 = vmatprep.subr.bf16.mxu0 0
  %340 = vmatpush1.bf16.msra.mxu0 %v285
  %341 = vmatprep.subr.bf16.mxu0 0
  %342 = vmatpush1.bf16.msra.mxu0 %v284
  %343 = vmatprep.subr.bf16.mxu0 0
  %344 = vmatpush1.bf16.msra.mxu0 %v283
  %345 = vmatprep.subr.bf16.mxu0 0
  %346 = vmatpush1.bf16.msra.mxu0 %v282
  %347 = vmatprep.subr.bf16.mxu0 0
  %348 = vmatpush1.bf16.msra.mxu0 %v281
  %349 = vmatprep.subr.bf16.mxu0 0
  %350 = vmatpush1.bf16.msra.mxu0 %v280
  %351 = vmatprep.subr.bf16.mxu0 0
  %352 = vmatpush1.bf16.msra.mxu0 %v279
  %353 = vmatprep.subr.bf16.mxu0 0
  %354 = vmatpush1.bf16.msra.mxu0 %v278
  %355 = vmatprep.subr.bf16.mxu0 0
  %356 = vmatpush2.bf16.msra.mxu0 %v293
  %357 = vmatprep.subr.bf16.mxu0 0
  %358 = vmatpush2.bf16.msra.mxu0 %v292
  %359 = vmatprep.subr.bf16.mxu0 0
  %360 = vmatpush2.bf16.msra.mxu0 %v291
  %361 = vmatprep.subr.bf16.mxu0 0
  %362 = vmatpush2.bf16.msra.mxu0 %v290
  %363 = vmatprep.subr.bf16.mxu0 0
  %364 = vmatpush2.bf16.msra.mxu0 %v289
  %365 = vmatprep.subr.bf16.mxu0 0
  %366 = vmatpush2.bf16.msra.mxu0 %v288
  %367 = vmatprep.subr.bf16.mxu0 0
  %368 = vmatpush2.bf16.msra.mxu0 %v287
  %369 = vmatprep.subr.bf16.mxu0 0
  %370 = vmatpush2.bf16.msra.mxu0 %v286
  %371 = vmatprep.mubr.bf16.mxu0 %v167
  %372 = vmatmul.mubr.bf16.gmra.mxu0 %v166
  %v373 = vpop.f32.mrf.mxu0
  %v374 = vadd.f32 0.0, %v373
  %v375 = vpop.f32.mrf.mxu0
  %v376 = vpop.f32.mrf.mxu0
  %v377 = vadd.f32 0.0, %v376
  %v378 = vpop.f32.mrf.mxu0
  %379 = vmatprep.mubr.bf16.mxu0 %v170
  %380 = vmatmul.mubr.bf16.gmra.mxu0 %v169
  %v381 = vpop.f32.mrf.mxu0
  %v382 = vadd.f32 0.0, %v381
  %v383 = vpop.f32.mrf.mxu0
  %v384 = vpop.f32.mrf.mxu0
  %v385 = vadd.f32 0.0, %v384
  %v386 = vpop.f32.mrf.mxu0
  %387 = vmatprep.mubr.bf16.mxu0 %v173
  %388 = vmatmul.mubr.bf16.gmra.mxu0 %v172
  %v389 = vpop.f32.mrf.mxu0
  %v390 = vadd.f32 0.0, %v389
  %v391 = vpop.f32.mrf.mxu0
  %v392 = vpop.f32.mrf.mxu0
  %v393 = vadd.f32 0.0, %v392
  %v394 = vpop.f32.mrf.mxu0
  %395 = vmatprep.mubr.bf16.mxu0 %v176
  %396 = vmatmul.mubr.bf16.gmra.mxu0 %v175
  %v397 = vpop.f32.mrf.mxu0
  %v398 = vadd.f32 0.0, %v397
  %v399 = vpop.f32.mrf.mxu0
  %v400 = vpop.f32.mrf.mxu0
  %v401 = vadd.f32 0.0, %v400
  %v402 = vpop.f32.mrf.mxu0
  %403 = vmatprep.mubr.bf16.mxu0 %v179
  %404 = vmatmul.mubr.bf16.gmra.mxu0 %v178
  %v405 = vpop.f32.mrf.mxu0
  %v406 = vadd.f32 0.0, %v405
  %v407 = vpop.f32.mrf.mxu0
  %v408 = vpop.f32.mrf.mxu0
  %v409 = vadd.f32 0.0, %v408
  %v410 = vpop.f32.mrf.mxu0
  %411 = vmatprep.mubr.bf16.mxu0 %v182
  %412 = vmatmul.mubr.bf16.gmra.mxu0 %v181
  %v413 = vpop.f32.mrf.mxu0
  %v414 = vadd.f32 0.0, %v413
  %v415 = vpop.f32.mrf.mxu0
  %v416 = vpop.f32.mrf.mxu0
  %v417 = vadd.f32 0.0, %v416
  %v418 = vpop.f32.mrf.mxu0
  %419 = vmatprep.mubr.bf16.mxu0 %v185
  %420 = vmatmul.mubr.bf16.gmra.mxu0 %v184
  %v421 = vpop.f32.mrf.mxu0
  %v422 = vadd.f32 0.0, %v421
  %v423 = vpop.f32.mrf.mxu0
  %v424 = vpop.f32.mrf.mxu0
  %v425 = vadd.f32 0.0, %v424
  %v426 = vpop.f32.mrf.mxu0
  %427 = vmatprep.mubr.bf16.mxu0 %v188
  %428 = vmatmul.mubr.bf16.gmra.mxu0 %v187
  %v429 = vpop.f32.mrf.mxu0
  %v430 = vadd.f32 0.0, %v429
  %v431 = vpop.f32.mrf.mxu0
  %v432 = vpop.f32.mrf.mxu0
  %v433 = vadd.f32 0.0, %v432
  %v434 = vpop.f32.mrf.mxu0
  %435 = vdwg.mxu0
  %436 = vmatprep.subr.bf16.mxu0 0
  %437 = vmatpush1.bf16.msra.mxu0 0
  %438 = vmatprep.subr.bf16.mxu0 0
  %439 = vmatpush1.bf16.msra.mxu0 0
  %440 = vmatprep.subr.bf16.mxu0 0
  %441 = vmatpush1.bf16.msra.mxu0 0
  %442 = vmatprep.subr.bf16.mxu0 0
  %443 = vmatpush1.bf16.msra.mxu0 0
  %444 = vmatprep.subr.bf16.mxu0 0
  %445 = vmatpush1.bf16.msra.mxu0 0
  %446 = vmatprep.subr.bf16.mxu0 0
  %447 = vmatpush1.bf16.msra.mxu0 0
  %448 = vmatprep.subr.bf16.mxu0 0
  %449 = vmatpush1.bf16.msra.mxu0 %v295
  %450 = vmatprep.subr.bf16.mxu0 0
  %451 = vmatpush1.bf16.msra.mxu0 %v294
  %452 = vmatprep.subr.bf16.mxu0 0
  %453 = vmatpush2.bf16.msra.mxu0 0
  %454 = vmatprep.subr.bf16.mxu0 0
  %455 = vmatpush2.bf16.msra.mxu0 0
  %456 = vmatprep.subr.bf16.mxu0 0
  %457 = vmatpush2.bf16.msra.mxu0 0
  %458 = vmatprep.subr.bf16.mxu0 0
  %459 = vmatpush2.bf16.msra.mxu0 0
  %460 = vmatprep.subr.bf16.mxu0 0
  %461 = vmatpush2.bf16.msra.mxu0 0
  %462 = vmatprep.subr.bf16.mxu0 0
  %463 = vmatpush2.bf16.msra.mxu0 0
  %464 = vmatprep.subr.bf16.mxu0 0
  %465 = vmatpush2.bf16.msra.mxu0 0
  %466 = vmatprep.subr.bf16.mxu0 0
  %467 = vmatpush2.bf16.msra.mxu0 0
  %468 = vmatprep.mubr.bf16.mxu0 0
  %469 = vmatmul.mubr.bf16.gmra.mxu0 %v316
  %v470 = vpop.f32.mrf.mxu0
  %v471 = vadd.f32 %v374, %v470
  %v472 = vpop.f32.mrf.mxu0
  %v473 = vpop.f32.mrf.mxu0
  %v474 = vadd.f32 %v377, %v473
  %v475 = vpop.f32.mrf.mxu0
  %476 = vmatprep.mubr.bf16.mxu0 0
  %477 = vmatmul.mubr.bf16.gmra.mxu0 %v319
  %v478 = vpop.f32.mrf.mxu0
  %v479 = vadd.f32 %v382, %v478
  %v480 = vpop.f32.mrf.mxu0
  %v481 = vpop.f32.mrf.mxu0
  %v482 = vadd.f32 %v385, %v481
  %v483 = vpop.f32.mrf.mxu0
  %484 = vmatprep.mubr.bf16.mxu0 0
  %485 = vmatmul.mubr.bf16.gmra.mxu0 %v322
  %v486 = vpop.f32.mrf.mxu0
  %v487 = vadd.f32 %v390, %v486
  %v488 = vpop.f32.mrf.mxu0
  %v489 = vpop.f32.mrf.mxu0
  %v490 = vadd.f32 %v393, %v489
  %v491 = vpop.f32.mrf.mxu0
  %492 = vmatprep.mubr.bf16.mxu0 0
  %493 = vmatmul.mubr.bf16.gmra.mxu0 %v325
  %v494 = vpop.f32.mrf.mxu0
  %v495 = vadd.f32 %v398, %v494
  %v496 = vpop.f32.mrf.mxu0
  %v497 = vpop.f32.mrf.mxu0
  %v498 = vadd.f32 %v401, %v497
  %v499 = vpop.f32.mrf.mxu0
  %500 = vmatprep.mubr.bf16.mxu0 0
  %501 = vmatmul.mubr.bf16.gmra.mxu0 %v328
  %v502 = vpop.f32.mrf.mxu0
  %v503 = vadd.f32 %v406, %v502
  %v504 = vpop.f32.mrf.mxu0
  %v505 = vpop.f32.mrf.mxu0
  %v506 = vadd.f32 %v409, %v505
  %v507 = vpop.f32.mrf.mxu0
  %508 = vmatprep.mubr.bf16.mxu0 0
  %509 = vmatmul.mubr.bf16.gmra.mxu0 %v331
  %v510 = vpop.f32.mrf.mxu0
  %v511 = vadd.f32 %v414, %v510
  %v512 = vpop.f32.mrf.mxu0
  %v513 = vpop.f32.mrf.mxu0
  %v514 = vadd.f32 %v417, %v513
  %v515 = vpop.f32.mrf.mxu0
  %516 = vmatprep.mubr.bf16.mxu0 0
  %517 = vmatmul.mubr.bf16.gmra.mxu0 %v334
  %v518 = vpop.f32.mrf.mxu0
  %v519 = vadd.f32 %v422, %v518
  %v520 = vpop.f32.mrf.mxu0
  %v521 = vpop.f32.mrf.mxu0
  %v522 = vadd.f32 %v425, %v521
  %v523 = vpop.f32.mrf.mxu0
  %524 = vmatprep.mubr.bf16.mxu0 0
  %525 = vmatmul.mubr.bf16.gmra.mxu0 %v337
  %v526 = vpop.f32.mrf.mxu0
  %v527 = vadd.f32 %v430, %v526
  %v528 = vpop.f32.mrf.mxu0
  %v529 = vpop.f32.mrf.mxu0
  %v530 = vadd.f32 %v433, %v529
  %v531 = vpop.f32.mrf.mxu0
  %532 = vdwg.mxu0
  %v533 = vld [vmem:[%s2] sm:$0x1]
  %v535 = vlaneseq
  %v536 = vshrl.u32 %v535, 7
  %v537 = vsub.s32 0, %v536
  %v538 = vrot.slane %v533, %v537
  %v540 = vmul.f32 %v471, %v538
  %v541 = vmul.f32 %v474, %v538
  %v542 = vmul.f32 %v479, %v538
  %v543 = vmul.f32 %v482, %v538
  %v544 = vmul.f32 %v487, %v538
  %v545 = vmul.f32 %v490, %v538
  %v546 = vmul.f32 %v495, %v538
  %v547 = vmul.f32 %v498, %v538
  %v548 = vmul.f32 %v503, %v538
  %v549 = vmul.f32 %v506, %v538
  %v550 = vmul.f32 %v511, %v538
  %v551 = vmul.f32 %v514, %v538
  %v552 = vmul.f32 %v519, %v538
  %v553 = vmul.f32 %v522, %v538
  %v554 = vmul.f32 %v527, %v538
  %v555 = vmul.f32 %v530, %v538
  %v556 = vld [vmem:[%s3] sm:$0x1]
  %v558 = vlaneseq
  %v559 = vshrl.u32 %v558, 7
  %v560 = vsub.s32 0, %v559
  %v561 = vrot.slane %v556, %v560
  %v563 = vadd.f32 %v540, %v561
  %v564 = vadd.f32 %v541, %v561
  %v565 = vadd.f32 %v542, %v561
  %v566 = vadd.f32 %v543, %v561
  %v567 = vadd.f32 %v544, %v561
  %v568 = vadd.f32 %v545, %v561
  %v569 = vadd.f32 %v546, %v561
  %v570 = vadd.f32 %v547, %v561
  %v571 = vadd.f32 %v548, %v561
  %v572 = vadd.f32 %v549, %v561
  %v573 = vadd.f32 %v550, %v561
  %v574 = vadd.f32 %v551, %v561
  %v575 = vadd.f32 %v552, %v561
  %v576 = vadd.f32 %v553, %v561
  %v577 = vadd.f32 %v554, %v561
  %v578 = vadd.f32 %v555, %v561
  %v579 = vmax.f32 %v563, 0.0
  %v580 = vmax.f32 %v564, 0.0
  %v581 = vmax.f32 %v565, 0.0
  %v582 = vmax.f32 %v566, 0.0
  %v583 = vmax.f32 %v567, 0.0
  %v584 = vmax.f32 %v568, 0.0
  %v585 = vmax.f32 %v569, 0.0
  %v586 = vmax.f32 %v570, 0.0
  %v587 = vmax.f32 %v571, 0.0
  %v588 = vmax.f32 %v572, 0.0
  %v589 = vmax.f32 %v573, 0.0
  %v590 = vmax.f32 %v574, 0.0
  %v591 = vmax.f32 %v575, 0.0
  %v592 = vmax.f32 %v576, 0.0
  %v593 = vmax.f32 %v577, 0.0
  %v594 = vmax.f32 %v578, 0.0
  %v595 = vpack.c.bf16 %v580, %v579
  %v596 = vpack.c.bf16 %v582, %v581
  %v597 = vpack.c.bf16 %v584, %v583
  %v598 = vpack.c.bf16 %v586, %v585
  %v599 = vpack.c.bf16 %v588, %v587
  %v600 = vpack.c.bf16 %v590, %v589
  %v601 = vpack.c.bf16 %v592, %v591
  %v602 = vpack.c.bf16 %v594, %v593
  %v611 = vunpack.c.l.b16 %v595
  %v612 = vunpack.c.h.b16 %v595
  %v613 = vunpack.c.l.b16 %v596
  %v614 = vunpack.c.h.b16 %v596
  %v615 = vunpack.c.l.b16 %v597
  %v616 = vunpack.c.h.b16 %v597
  %v617 = vunpack.c.l.b16 %v598
  %v618 = vunpack.c.h.b16 %v598
  %v619 = vunpack.c.l.b16 %v599
  %v620 = vunpack.c.h.b16 %v599
  %v621 = vunpack.c.l.b16 %v600
  %v622 = vunpack.c.h.b16 %v600
  %v623 = vunpack.c.l.b16 %v601
  %v624 = vunpack.c.h.b16 %v601
  %v625 = vunpack.c.l.b16 %v602
  %v626 = vunpack.c.h.b16 %v602
  %v627 = vpack.c.b16 %v611, %v611
  %v628 = vpack.c.b16 %v612, %v612
  %v629 = vpack.c.b16 %v613, %v613
  %v630 = vpack.c.b16 %v614, %v614
  %v631 = vpack.c.b16 %v615, %v615
  %v632 = vpack.c.b16 %v616, %v616
  %v633 = vpack.c.b16 %v617, %v617
  %v634 = vpack.c.b16 %v618, %v618
  %v635 = vpack.c.b16 %v619, %v619
  %v636 = vpack.c.b16 %v620, %v620
  %v637 = vpack.c.b16 %v621, %v621
  %v638 = vpack.c.b16 %v622, %v622
  %v639 = vpack.c.b16 %v623, %v623
  %v640 = vpack.c.b16 %v624, %v624
  %v641 = vpack.c.b16 %v625, %v625
  %v642 = vpack.c.b16 %v626, %v626
  %659 = vst [vmem:[%s4] sm:$0xf] %v627
  %660 = vst [vmem:[%s4 + $0x4] sm:$0xf] %v628
  %661 = vst [vmem:[%s4 + $0x8] sm:$0xf] %v629
  %662 = vst [vmem:[%s4 + $0xc] sm:$0xf] %v630
  %663 = vst [vmem:[%s4 + $0x10] sm:$0xf] %v631
  %664 = vst [vmem:[%s4 + $0x14] sm:$0xf] %v632
  %665 = vst [vmem:[%s4 + $0x18] sm:$0xf] %v633
  %666 = vst [vmem:[%s4 + $0x1c] sm:$0xf] %v634
  %667 = vst [vmem:[%s4 + $0x20] sm:$0xf] %v635
  %668 = vst [vmem:[%s4 + $0x24] sm:$0xf] %v636
  %669 = vst [vmem:[%s4 + $0x28] sm:$0xf] %v637
  %670 = vst [vmem:[%s4 + $0x2c] sm:$0xf] %v638
  %671 = vst [vmem:[%s4 + $0x30] sm:$0xf] %v639
  %672 = vst [vmem:[%s4 + $0x34] sm:$0xf] %v640
  %673 = vst [vmem:[%s4 + $0x38] sm:$0xf] %v641
  %674 = vst [vmem:[%s4 + $0x3c] sm:$0xf] %v642
  // Predicated region
  $region18: #{one_model_forward.65} parent=0 // pred_check
    _
  $region19: #{one_model_forward.65} parent=0 // pred_check_branch
    %676 = sbr.rel (0) target = $region21
  $region20: #{one_model_forward.65} parent=0 // pred_region
    _
  $region21: #{one_model_forward.65} parent=0 // pred_fallthru
    _
  // Predicated region
  $region22: #{one_model_forward.65} parent=0 // pred_check
    _
  $region23: #{one_model_forward.65} parent=0 // pred_check_branch
    %678 = sbr.rel (0) target = $region25
  $region24: #{one_model_forward.65} parent=0 // pred_region
    _
  $region25: #{one_model_forward.65} parent=0 // pred_fallthru
    _

// kernel: one_model_forward.71
$region0: #{one_model_forward.71}
  #allocation0 [shape = 'u32[]', space=smem, size = 0x4, offset = 0x4, fixed_abs, tag = 'smem constant byte address 0x4 - core index']
  #allocation1 [shape = 'u32[144,128]{1,0:T(1,128)}', space=vmem, size = 0x12000, scoped, tag = 'internal scratch']
  %s0 = inlined_call_operand.vmem [shape: bf16[24,32], index: 0, kind: input, shape index: {}]
  %s1 = inlined_call_operand.vmem [shape: bf16[32,128], index: 1, kind: input, shape index: {}]
  %s2 = inlined_call_operand.vmem [shape: f32[1,128], index: 2, kind: input, shape index: {}]
  %s3 = inlined_call_operand.vmem [shape: f32[1,128], index: 3, kind: input, shape index: {}]
  %s4 = inlined_call_operand.vmem [shape: f32[24,128], index: 4, kind: output, shape index: {}]
  %s5 = sld [smem:[#allocation0]]
  $region26: #{one_model_forward.71} parent=0
    _
  %s7 = ssub.s32 1, %s5
  %s8 = scalar_select 0, %s7, %s5
  // Predicated region
  $region2: #{one_model_forward.71} parent=0 // pred_check
    _
  $region3: #{one_model_forward.71} parent=0 // pred_check_branch
    %10 = sbr.rel (0) target = $region5
  $region4: #{one_model_forward.71} parent=0 // pred_region
    _
  $region5: #{one_model_forward.71} parent=0 // pred_fallthru
    _
  // Predicated region
  $region6: #{one_model_forward.71} parent=0 // pred_check
    _
  $region7: #{one_model_forward.71} parent=0 // pred_check_branch
    %12 = sbr.rel (0) target = $region9
  $region8: #{one_model_forward.71} parent=0 // pred_region
    _
  $region9: #{one_model_forward.71} parent=0 // pred_fallthru
    _
  // Predicated region
  $region10: #{one_model_forward.71} parent=0 // pred_check
    _
  $region11: #{one_model_forward.71} parent=0 // pred_check_branch
    %14 = sbr.rel (0) target = $region13
  $region12: #{one_model_forward.71} parent=0 // pred_region
    _
  $region13: #{one_model_forward.71} parent=0 // pred_fallthru
    _
  // Predicated region
  $region14: #{one_model_forward.71} parent=0 // pred_check
    _
  $region15: #{one_model_forward.71} parent=0 // pred_check_branch
    %16 = sbr.rel (0) target = $region17
  $region16: #{one_model_forward.71} parent=0 // pred_region
    _
  $region17: #{one_model_forward.71} parent=0 // pred_fallthru
    _
  %v18 = vld [vmem:[%s0] sm:$0xf]
  %v19 = vld [vmem:[%s0 + $0x4] sm:$0xf]
  %v20 = vld [vmem:[%s0 + $0x8] sm:$0xf]
  %v21 = vld [vmem:[%s1] sm:$0xf]
  %v22 = vld [vmem:[%s1 + $0x4] sm:$0xf]
  %v23 = vld [vmem:[%s1 + $0x8] sm:$0xf]
  %v24 = vld [vmem:[%s1 + $0xc] sm:$0xf]
  %v28 = vunpack.c.l.b16 %v18
  %v29 = vunpack.c.l.b16 %v19
  %v30 = vunpack.c.l.b16 %v20
  %v31 = vpack.c.b16 %v29, %v28
  %v32 = vpack.c.b16 %v30, %v30
  %v37 = vunpack.c.l.b16 %v21
  %v38 = vunpack.c.l.b16 %v22
  %v39 = vunpack.c.l.b16 %v23
  %v40 = vunpack.c.l.b16 %v24
  %v41 = vpack.c.b16 %v38, %v37
  %v42 = vpack.c.b16 %v40, %v39
  %vm45 = vcmask 261120
  %v47 = vsel %vm45, %v31, 0
  %v50 = vsel %vm45, %v32, 0
  %52 = vmatprep.subr.bf16.mxu0 0
  %53 = vmatpush1.bf16.msra.mxu0 0
  %54 = vmatprep.subr.bf16.mxu0 0
  %55 = vmatpush1.bf16.msra.mxu0 0
  %56 = vmatprep.subr.bf16.mxu0 0
  %57 = vmatpush1.bf16.msra.mxu0 0
  %58 = vmatprep.subr.bf16.mxu0 0
  %59 = vmatpush1.bf16.msra.mxu0 0
  %60 = vmatprep.subr.bf16.mxu0 0
  %61 = vmatpush1.bf16.msra.mxu0 0
  %62 = vmatprep.subr.bf16.mxu0 0
  %63 = vmatpush1.bf16.msra.mxu0 0
  %64 = vmatprep.subr.bf16.mxu0 0
  %65 = vmatpush1.bf16.msra.mxu0 %v42
  %66 = vmatprep.subr.bf16.mxu0 0
  %67 = vmatpush1.bf16.msra.mxu0 %v41
  %68 = vmatprep.subr.bf16.mxu0 0
  %69 = vmatpush2.bf16.msra.mxu0 0
  %70 = vmatprep.subr.bf16.mxu0 0
  %71 = vmatpush2.bf16.msra.mxu0 0
  %72 = vmatprep.subr.bf16.mxu0 0
  %73 = vmatpush2.bf16.msra.mxu0 0
  %74 = vmatprep.subr.bf16.mxu0 0
  %75 = vmatpush2.bf16.msra.mxu0 0
  %76 = vmatprep.subr.bf16.mxu0 0
  %77 = vmatpush2.bf16.msra.mxu0 0
  %78 = vmatprep.subr.bf16.mxu0 0
  %79 = vmatpush2.bf16.msra.mxu0 0
  %80 = vmatprep.subr.bf16.mxu0 0
  %81 = vmatpush2.bf16.msra.mxu0 0
  %82 = vmatprep.subr.bf16.mxu0 0
  %83 = vmatpush2.bf16.msra.mxu0 0
  %84 = vmatprep.mubr.bf16.mxu0 0
  %85 = vmatmul.mubr.bf16.gmra.mxu0 %v47
  %v86 = vpop.f32.mrf.mxu0
  %v87 = vadd.f32 0.0, %v86
  %v88 = vpop.f32.mrf.mxu0
  %v89 = vpop.f32.mrf.mxu0
  %v90 = vadd.f32 0.0, %v89
  %v91 = vpop.f32.mrf.mxu0
  %92 = vmatprep.mubr.bf16.mxu0 0
  %93 = vmatmul.mubr.bf16.gmra.mxu0 %v50
  %v94 = vpop.f32.mrf.mxu0
  %v95 = vadd.f32 0.0, %v94
  %v96 = vpop.f32.mrf.mxu0
  %v97 = vpop.f32.mrf.mxu0
  %v98 = vpop.f32.mrf.mxu0
  %99 = vdwg.mxu0
  %v100 = vld [vmem:[%s2] sm:$0x1]
  %v102 = vlaneseq
  %v103 = vshrl.u32 %v102, 7
  %v104 = vsub.s32 0, %v103
  %v105 = vrot.slane %v100, %v104
  %v107 = vmul.f32 %v87, %v105
  %v108 = vmul.f32 %v90, %v105
  %v109 = vmul.f32 %v95, %v105
  %v110 = vld [vmem:[%s3] sm:$0x1]
  %v112 = vlaneseq
  %v113 = vshrl.u32 %v112, 7
  %v114 = vsub.s32 0, %v113
  %v115 = vrot.slane %v110, %v114
  %v117 = vadd.f32 %v107, %v115
  %v118 = vadd.f32 %v108, %v115
  %v119 = vadd.f32 %v109, %v115
  %v120 = vmax.f32 %v117, 0.0
  %v121 = vmax.f32 %v118, 0.0
  %v122 = vmax.f32 %v119, 0.0
  %123 = vst [vmem:[%s4] sm:$0xff] %v120
  %124 = vst [vmem:[%s4 + $0x8] sm:$0xff] %v121
  %125 = vst [vmem:[%s4 + $0x10] sm:$0xff] %v122
  // Predicated region
  $region18: #{one_model_forward.71} parent=0 // pred_check
    _
  $region19: #{one_model_forward.71} parent=0 // pred_check_branch
    %127 = sbr.rel (0) target = $region21
  $region20: #{one_model_forward.71} parent=0 // pred_region
    _
  $region21: #{one_model_forward.71} parent=0 // pred_fallthru
    _
  // Predicated region
  $region22: #{one_model_forward.71} parent=0 // pred_check
    _
  $region23: #{one_model_forward.71} parent=0 // pred_check_branch
    %129 = sbr.rel (0) target = $region25
  $region24: #{one_model_forward.71} parent=0 // pred_region
    _
  $region25: #{one_model_forward.71} parent=0 // pred_fallthru
    _

// kernel: one_model_forward.72
$region0: #{one_model_forward.72}
  #allocation0 [shape = 'u32[]', space=smem, size = 0x4, offset = 0x4, fixed_abs, tag = 'smem constant byte address 0x4 - core index']
  #allocation1 [shape = 'u32[144,128]{1,0:T(1,128)}', space=vmem, size = 0x12000, scoped, tag = 'internal scratch']
  %s0 = inlined_call_operand.vmem [shape: bf16[72,32], index: 0, kind: input, shape index: {}]
  %s1 = inlined_call_operand.vmem [shape: bf16[32,128], index: 1, kind: input, shape index: {}]
  %s2 = inlined_call_operand.vmem [shape: f32[1,128], index: 2, kind: input, shape index: {}]
  %s3 = inlined_call_operand.vmem [shape: f32[1,128], index: 3, kind: input, shape index: {}]
  %s4 = inlined_call_operand.vmem [shape: f32[72,128], index: 4, kind: output, shape index: {}]
  %s5 = sld [smem:[#allocation0]]
  $region26: #{one_model_forward.72} parent=0
    _
  %s7 = ssub.s32 1, %s5
  %s8 = scalar_select 0, %s7, %s5
  // Predicated region
  $region2: #{one_model_forward.72} parent=0 // pred_check
    _
  $region3: #{one_model_forward.72} parent=0 // pred_check_branch
    %10 = sbr.rel (0) target = $region5
  $region4: #{one_model_forward.72} parent=0 // pred_region
    _
  $region5: #{one_model_forward.72} parent=0 // pred_fallthru
    _
  // Predicated region
  $region6: #{one_model_forward.72} parent=0 // pred_check
    _
  $region7: #{one_model_forward.72} parent=0 // pred_check_branch
    %12 = sbr.rel (0) target = $region9
  $region8: #{one_model_forward.72} parent=0 // pred_region
    _
  $region9: #{one_model_forward.72} parent=0 // pred_fallthru
    _
  // Predicated region
  $region10: #{one_model_forward.72} parent=0 // pred_check
    _
  $region11: #{one_model_forward.72} parent=0 // pred_check_branch
    %14 = sbr.rel (0) target = $region13
  $region12: #{one_model_forward.72} parent=0 // pred_region
    _
  $region13: #{one_model_forward.72} parent=0 // pred_fallthru
    _
  // Predicated region
  $region14: #{one_model_forward.72} parent=0 // pred_check
    _
  $region15: #{one_model_forward.72} parent=0 // pred_check_branch
    %16 = sbr.rel (0) target = $region17
  $region16: #{one_model_forward.72} parent=0 // pred_region
    _
  $region17: #{one_model_forward.72} parent=0 // pred_fallthru
    _
  %v18 = vld [vmem:[%s0] sm:$0xf]
  %v19 = vld [vmem:[%s0 + $0x4] sm:$0xf]
  %v20 = vld [vmem:[%s0 + $0x8] sm:$0xf]
  %v21 = vld [vmem:[%s0 + $0xc] sm:$0xf]
  %v22 = vld [vmem:[%s0 + $0x10] sm:$0xf]
  %v23 = vld [vmem:[%s0 + $0x14] sm:$0xf]
  %v24 = vld [vmem:[%s0 + $0x18] sm:$0xf]
  %v25 = vld [vmem:[%s0 + $0x1c] sm:$0xf]
  %v26 = vld [vmem:[%s0 + $0x20] sm:$0xf]
  %v27 = vld [vmem:[%s1] sm:$0xf]
  %v28 = vld [vmem:[%s1 + $0x4] sm:$0xf]
  %v29 = vld [vmem:[%s1 + $0x8] sm:$0xf]
  %v30 = vld [vmem:[%s1 + $0xc] sm:$0xf]
  %v40 = vunpack.c.l.b16 %v18
  %v41 = vunpack.c.l.b16 %v19
  %v42 = vunpack.c.l.b16 %v20
  %v43 = vunpack.c.l.b16 %v21
  %v44 = vunpack.c.l.b16 %v22
  %v45 = vunpack.c.l.b16 %v23
  %v46 = vunpack.c.l.b16 %v24
  %v47 = vunpack.c.l.b16 %v25
  %v48 = vunpack.c.l.b16 %v26
  %v49 = vpack.c.b16 %v41, %v40
  %v50 = vpack.c.b16 %v43, %v42
  %v51 = vpack.c.b16 %v45, %v44
  %v52 = vpack.c.b16 %v47, %v46
  %v53 = vpack.c.b16 %v48, %v48
  %v58 = vunpack.c.l.b16 %v27
  %v59 = vunpack.c.l.b16 %v28
  %v60 = vunpack.c.l.b16 %v29
  %v61 = vunpack.c.l.b16 %v30
  %v62 = vpack.c.b16 %v59, %v58
  %v63 = vpack.c.b16 %v61, %v60
  %vm66 = vcmask 261120
  %v68 = vsel %vm66, %v49, 0
  %v71 = vsel %vm66, %v50, 0
  %v74 = vsel %vm66, %v51, 0
  %v77 = vsel %vm66, %v52, 0
  %v80 = vsel %vm66, %v53, 0
  %82 = vmatprep.subr.bf16.mxu0 0
  %83 = vmatpush1.bf16.msra.mxu0 0
  %84 = vmatprep.subr.bf16.mxu0 0
  %85 = vmatpush1.bf16.msra.mxu0 0
  %86 = vmatprep.subr.bf16.mxu0 0
  %87 = vmatpush1.bf16.msra.mxu0 0
  %88 = vmatprep.subr.bf16.mxu0 0
  %89 = vmatpush1.bf16.msra.mxu0 0
  %90 = vmatprep.subr.bf16.mxu0 0
  %91 = vmatpush1.bf16.msra.mxu0 0
  %92 = vmatprep.subr.bf16.mxu0 0
  %93 = vmatpush1.bf16.msra.mxu0 0
  %94 = vmatprep.subr.bf16.mxu0 0
  %95 = vmatpush1.bf16.msra.mxu0 %v63
  %96 = vmatprep.subr.bf16.mxu0 0
  %97 = vmatpush1.bf16.msra.mxu0 %v62
  %98 = vmatprep.subr.bf16.mxu0 0
  %99 = vmatpush2.bf16.msra.mxu0 0
  %100 = vmatprep.subr.bf16.mxu0 0
  %101 = vmatpush2.bf16.msra.mxu0 0
  %102 = vmatprep.subr.bf16.mxu0 0
  %103 = vmatpush2.bf16.msra.mxu0 0
  %104 = vmatprep.subr.bf16.mxu0 0
  %105 = vmatpush2.bf16.msra.mxu0 0
  %106 = vmatprep.subr.bf16.mxu0 0
  %107 = vmatpush2.bf16.msra.mxu0 0
  %108 = vmatprep.subr.bf16.mxu0 0
  %109 = vmatpush2.bf16.msra.mxu0 0
  %110 = vmatprep.subr.bf16.mxu0 0
  %111 = vmatpush2.bf16.msra.mxu0 0
  %112 = vmatprep.subr.bf16.mxu0 0
  %113 = vmatpush2.bf16.msra.mxu0 0
  %114 = vmatprep.mubr.bf16.mxu0 0
  %115 = vmatmul.mubr.bf16.gmra.mxu0 %v68
  %v116 = vpop.f32.mrf.mxu0
  %v117 = vadd.f32 0.0, %v116
  %v118 = vpop.f32.mrf.mxu0
  %v119 = vpop.f32.mrf.mxu0
  %v120 = vadd.f32 0.0, %v119
  %v121 = vpop.f32.mrf.mxu0
  %122 = vmatprep.mubr.bf16.mxu0 0
  %123 = vmatmul.mubr.bf16.gmra.mxu0 %v71
  %v124 = vpop.f32.mrf.mxu0
  %v125 = vadd.f32 0.0, %v124
  %v126 = vpop.f32.mrf.mxu0
  %v127 = vpop.f32.mrf.mxu0
  %v128 = vadd.f32 0.0, %v127
  %v129 = vpop.f32.mrf.mxu0
  %130 = vmatprep.mubr.bf16.mxu0 0
  %131 = vmatmul.mubr.bf16.gmra.mxu0 %v74
  %v132 = vpop.f32.mrf.mxu0
  %v133 = vadd.f32 0.0, %v132
  %v134 = vpop.f32.mrf.mxu0
  %v135 = vpop.f32.mrf.mxu0
  %v136 = vadd.f32 0.0, %v135
  %v137 = vpop.f32.mrf.mxu0
  %138 = vmatprep.mubr.bf16.mxu0 0
  %139 = vmatmul.mubr.bf16.gmra.mxu0 %v77
  %v140 = vpop.f32.mrf.mxu0
  %v141 = vadd.f32 0.0, %v140
  %v142 = vpop.f32.mrf.mxu0
  %v143 = vpop.f32.mrf.mxu0
  %v144 = vadd.f32 0.0, %v143
  %v145 = vpop.f32.mrf.mxu0
  %146 = vmatprep.mubr.bf16.mxu0 0
  %147 = vmatmul.mubr.bf16.gmra.mxu0 %v80
  %v148 = vpop.f32.mrf.mxu0
  %v149 = vadd.f32 0.0, %v148
  %v150 = vpop.f32.mrf.mxu0
  %v151 = vpop.f32.mrf.mxu0
  %v152 = vpop.f32.mrf.mxu0
  %153 = vdwg.mxu0
  %v154 = vld [vmem:[%s2] sm:$0x1]
  %v156 = vlaneseq
  %v157 = vshrl.u32 %v156, 7
  %v158 = vsub.s32 0, %v157
  %v159 = vrot.slane %v154, %v158
  %v161 = vmul.f32 %v117, %v159
  %v162 = vmul.f32 %v120, %v159
  %v163 = vmul.f32 %v125, %v159
  %v164 = vmul.f32 %v128, %v159
  %v165 = vmul.f32 %v133, %v159
  %v166 = vmul.f32 %v136, %v159
  %v167 = vmul.f32 %v141, %v159
  %v168 = vmul.f32 %v144, %v159
  %v169 = vmul.f32 %v149, %v159
  %v170 = vld [vmem:[%s3] sm:$0x1]
  %v172 = vlaneseq
  %v173 = vshrl.u32 %v172, 7
  %v174 = vsub.s32 0, %v173
  %v175 = vrot.slane %v170, %v174
  %v177 = vadd.f32 %v161, %v175
  %v178 = vadd.f32 %v162, %v175
  %v179 = vadd.f32 %v163, %v175
  %v180 = vadd.f32 %v164, %v175
  %v181 = vadd.f32 %v165, %v175
  %v182 = vadd.f32 %v166, %v175
  %v183 = vadd.f32 %v167, %v175
  %v184 = vadd.f32 %v168, %v175
  %v185 = vadd.f32 %v169, %v175
  %v186 = vmax.f32 %v177, 0.0
  %v187 = vmax.f32 %v178, 0.0
  %v188 = vmax.f32 %v179, 0.0
  %v189 = vmax.f32 %v180, 0.0
  %v190 = vmax.f32 %v181, 0.0
  %v191 = vmax.f32 %v182, 0.0
  %v192 = vmax.f32 %v183, 0.0
  %v193 = vmax.f32 %v184, 0.0
  %v194 = vmax.f32 %v185, 0.0
  %195 = vst [vmem:[%s4] sm:$0xff] %v186
  %196 = vst [vmem:[%s4 + $0x8] sm:$0xff] %v187
  %197 = vst [vmem:[%s4 + $0x10] sm:$0xff] %v188
  %198 = vst [vmem:[%s4 + $0x18] sm:$0xff] %v189
  %199 = vst [vmem:[%s4 + $0x20] sm:$0xff] %v190
  %200 = vst [vmem:[%s4 + $0x28] sm:$0xff] %v191
  %201 = vst [vmem:[%s4 + $0x30] sm:$0xff] %v192
  %202 = vst [vmem:[%s4 + $0x38] sm:$0xff] %v193
  %203 = vst [vmem:[%s4 + $0x40] sm:$0xff] %v194
  // Predicated region
  $region18: #{one_model_forward.72} parent=0 // pred_check
    _
  $region19: #{one_model_forward.72} parent=0 // pred_check_branch
    %205 = sbr.rel (0) target = $region21
  $region20: #{one_model_forward.72} parent=0 // pred_region
    _
  $region21: #{one_model_forward.72} parent=0 // pred_fallthru
    _
  // Predicated region
  $region22: #{one_model_forward.72} parent=0 // pred_check
    _
  $region23: #{one_model_forward.72} parent=0 // pred_check_branch
    %207 = sbr.rel (0) target = $region25
  $region24: #{one_model_forward.72} parent=0 // pred_region
    _
  $region25: #{one_model_forward.72} parent=0 // pred_fallthru
    _

// kernel: one_model_forward.73
$region0: #{one_model_forward.73}
  #allocation0 [shape = 'u32[]', space=smem, size = 0x4, offset = 0x4, fixed_abs, tag = 'smem constant byte address 0x4 - core index']
  #allocation1 [shape = 'u32[144,128]{1,0:T(1,128)}', space=vmem, size = 0x12000, scoped, tag = 'internal scratch']
  #allocation2 [shape = 'f32[1,1]{1,0:T(1,128)S(1)}', space=vmem, size = 0x200, scoped, tag = 'scoped memory for one_model_forward.73']
  %s0 = inlined_call_operand.vmem [shape: bf16[128,160], index: 0, kind: input, shape index: {}]
  %s1 = inlined_call_operand.vmem [shape: bf16[160,128], index: 1, kind: input, shape index: {}]
  %s2 = inlined_call_operand.vmem [shape: f32[1,128], index: 2, kind: input, shape index: {}]
  %s3 = inlined_call_operand.vmem [shape: f32[1,128], index: 3, kind: input, shape index: {}]
  %s4 = inlined_call_operand.vmem [shape: f32[1,128], index: 4, kind: input, shape index: {}]
  %s5 = inlined_call_operand.<no memory space> [shape: f32[1,1], index: 5, kind: input, shape index: {}]
  %s6 = inlined_call_operand.vmem [shape: f32[128,1], index: 6, kind: output, shape index: {}]
  %s7 = sld [smem:[#allocation0]]
  $region34: #{one_model_forward.73} parent=0
    _
  %s9 = ssub.s32 1, %s7
  %s10 = scalar_select 0, %s9, %s7
  %v11 = vstv %s5
  %12 = vst [vmem:[#allocation2] sm:$0x1] %v11
  // Predicated region
  $region2: #{one_model_forward.73} parent=0 // pred_check
    _
  $region3: #{one_model_forward.73} parent=0 // pred_check_branch
    %14 = sbr.rel (0) target = $region5
  $region4: #{one_model_forward.73} parent=0 // pred_region
    _
  $region5: #{one_model_forward.73} parent=0 // pred_fallthru
    _
  // Predicated region
  $region6: #{one_model_forward.73} parent=0 // pred_check
    _
  $region7: #{one_model_forward.73} parent=0 // pred_check_branch
    %16 = sbr.rel (0) target = $region9
  $region8: #{one_model_forward.73} parent=0 // pred_region
    _
  $region9: #{one_model_forward.73} parent=0 // pred_fallthru
    _
  // Predicated region
  $region10: #{one_model_forward.73} parent=0 // pred_check
    _
  $region11: #{one_model_forward.73} parent=0 // pred_check_branch
    %18 = sbr.rel (0) target = $region13
  $region12: #{one_model_forward.73} parent=0 // pred_region
    _
  $region13: #{one_model_forward.73} parent=0 // pred_fallthru
    _
  // Predicated region
  $region14: #{one_model_forward.73} parent=0 // pred_check
    _
  $region15: #{one_model_forward.73} parent=0 // pred_check_branch
    %20 = sbr.rel (0) target = $region17
  $region16: #{one_model_forward.73} parent=0 // pred_region
    _
  $region17: #{one_model_forward.73} parent=0 // pred_fallthru
    _
  // Predicated region
  $region18: #{one_model_forward.73} parent=0 // pred_check
    _
  $region19: #{one_model_forward.73} parent=0 // pred_check_branch
    %22 = sbr.rel (0) target = $region21
  $region20: #{one_model_forward.73} parent=0 // pred_region
    _
  $region21: #{one_model_forward.73} parent=0 // pred_fallthru
    _
  // Predicated region
  $region22: #{one_model_forward.73} parent=0 // pred_check
    _
  $region23: #{one_model_forward.73} parent=0 // pred_check_branch
    %24 = sbr.rel (0) target = $region25
  $region24: #{one_model_forward.73} parent=0 // pred_region
    _
  $region25: #{one_model_forward.73} parent=0 // pred_fallthru
    _
  %v26 = vld [vmem:[%s0] sm:$0xff]
  %v27 = vld [vmem:[%s0 + $0x8] sm:$0xff]
  %v28 = vld [vmem:[%s0 + $0x10] sm:$0xff]
  %v29 = vld [vmem:[%s0 + $0x18] sm:$0xff]
  %v30 = vld [vmem:[%s0 + $0x20] sm:$0xff]
  %v31 = vld [vmem:[%s0 + $0x28] sm:$0xff]
  %v32 = vld [vmem:[%s0 + $0x30] sm:$0xff]
  %v33 = vld [vmem:[%s0 + $0x38] sm:$0xff]
  %v34 = vld [vmem:[%s0 + $0x40] sm:$0xff]
  %v35 = vld [vmem:[%s0 + $0x48] sm:$0xff]
  %v36 = vld [vmem:[%s0 + $0x50] sm:$0xff]
  %v37 = vld [vmem:[%s0 + $0x58] sm:$0xff]
  %v38 = vld [vmem:[%s0 + $0x60] sm:$0xff]
  %v39 = vld [vmem:[%s0 + $0x68] sm:$0xff]
  %v40 = vld [vmem:[%s0 + $0x70] sm:$0xff]
  %v41 = vld [vmem:[%s0 + $0x78] sm:$0xff]
  %v42 = vld [vmem:[%s1] sm:$0xf]
  %v43 = vld [vmem:[%s1 + $0x4] sm:$0xf]
  %v44 = vld [vmem:[%s1 + $0x8] sm:$0xf]
  %v45 = vld [vmem:[%s1 + $0xc] sm:$0xf]
  %v46 = vld [vmem:[%s1 + $0x10] sm:$0xf]
  %v47 = vld [vmem:[%s1 + $0x14] sm:$0xf]
  %v48 = vld [vmem:[%s1 + $0x18] sm:$0xf]
  %v49 = vld [vmem:[%s1 + $0x1c] sm:$0xf]
  %v50 = vld [vmem:[%s1 + $0x20] sm:$0xf]
  %v51 = vld [vmem:[%s1 + $0x24] sm:$0xf]
  %v52 = vld [vmem:[%s1 + $0x28] sm:$0xf]
  %v53 = vld [vmem:[%s1 + $0x2c] sm:$0xf]
  %v54 = vld [vmem:[%s1 + $0x30] sm:$0xf]
  %v55 = vld [vmem:[%s1 + $0x34] sm:$0xf]
  %v56 = vld [vmem:[%s1 + $0x38] sm:$0xf]
  %v57 = vld [vmem:[%s1 + $0x3c] sm:$0xf]
  %v58 = vld [vmem:[%s1 + $0x40] sm:$0xf]
  %v59 = vld [vmem:[%s1 + $0x44] sm:$0xf]
  %v60 = vld [vmem:[%s1 + $0x48] sm:$0xf]
  %v61 = vld [vmem:[%s1 + $0x4c] sm:$0xf]
  %v78 = vunpack.c.l.b16 %v26
  %v79 = vunpack.c.h.b16 %v26
  %v80 = vunpack.c.l.b16 %v27
  %v81 = vunpack.c.h.b16 %v27
  %v82 = vunpack.c.l.b16 %v28
  %v83 = vunpack.c.h.b16 %v28
  %v84 = vunpack.c.l.b16 %v29
  %v85 = vunpack.c.h.b16 %v29
  %v86 = vunpack.c.l.b16 %v30
  %v87 = vunpack.c.h.b16 %v30
  %v88 = vunpack.c.l.b16 %v31
  %v89 = vunpack.c.h.b16 %v31
  %v90 = vunpack.c.l.b16 %v32
  %v91 = vunpack.c.h.b16 %v32
  %v92 = vunpack.c.l.b16 %v33
  %v93 = vunpack.c.h.b16 %v33
  %v94 = vunpack.c.l.b16 %v34
  %v95 = vunpack.c.h.b16 %v34
  %v96 = vunpack.c.l.b16 %v35
  %v97 = vunpack.c.h.b16 %v35
  %v98 = vunpack.c.l.b16 %v36
  %v99 = vunpack.c.h.b16 %v36
  %v100 = vunpack.c.l.b16 %v37
  %v101 = vunpack.c.h.b16 %v37
  %v102 = vunpack.c.l.b16 %v38
  %v103 = vunpack.c.h.b16 %v38
  %v104 = vunpack.c.l.b16 %v39
  %v105 = vunpack.c.h.b16 %v39
  %v106 = vunpack.c.l.b16 %v40
  %v107 = vunpack.c.h.b16 %v40
  %v108 = vunpack.c.l.b16 %v41
  %v109 = vunpack.c.h.b16 %v41
  %v110 = vpack.c.b16 %v80, %v78
  %v111 = vpack.c.b16 %v81, %v79
  %v112 = vpack.c.b16 %v84, %v82
  %v113 = vpack.c.b16 %v85, %v83
  %v114 = vpack.c.b16 %v88, %v86
  %v115 = vpack.c.b16 %v89, %v87
  %v116 = vpack.c.b16 %v92, %v90
  %v117 = vpack.c.b16 %v93, %v91
  %v118 = vpack.c.b16 %v96, %v94
  %v119 = vpack.c.b16 %v97, %v95
  %v120 = vpack.c.b16 %v100, %v98
  %v121 = vpack.c.b16 %v101, %v99
  %v122 = vpack.c.b16 %v104, %v102
  %v123 = vpack.c.b16 %v105, %v103
  %v124 = vpack.c.b16 %v108, %v106
  %v125 = vpack.c.b16 %v109, %v107
  %v154 = vunpack.c.l.b16 %v42
  %v155 = vunpack.c.l.b16 %v43
  %v156 = vunpack.c.l.b16 %v44
  %v157 = vunpack.c.l.b16 %v45
  %v158 = vunpack.c.l.b16 %v46
  %v159 = vunpack.c.l.b16 %v47
  %v160 = vunpack.c.l.b16 %v48
  %v161 = vunpack.c.l.b16 %v49
  %v162 = vunpack.c.l.b16 %v50
  %v163 = vunpack.c.l.b16 %v51
  %v164 = vunpack.c.l.b16 %v52
  %v165 = vunpack.c.l.b16 %v53
  %v166 = vunpack.c.l.b16 %v54
  %v167 = vunpack.c.l.b16 %v55
  %v168 = vunpack.c.l.b16 %v56
  %v169 = vunpack.c.l.b16 %v57
  %v170 = vunpack.c.l.b16 %v58
  %v171 = vunpack.c.l.b16 %v59
  %v172 = vunpack.c.l.b16 %v60
  %v173 = vunpack.c.l.b16 %v61
  %v174 = vpack.c.b16 %v155, %v154
  %v175 = vpack.c.b16 %v157, %v156
  %v176 = vpack.c.b16 %v159, %v158
  %v177 = vpack.c.b16 %v161, %v160
  %v178 = vpack.c.b16 %v163, %v162
  %v179 = vpack.c.b16 %v165, %v164
  %v180 = vpack.c.b16 %v167, %v166
  %v181 = vpack.c.b16 %v169, %v168
  %v182 = vpack.c.b16 %v171, %v170
  %v183 = vpack.c.b16 %v173, %v172
  %vm194 = vcmask 261120
  %v196 = vsel %vm194, %v111, 0
  %v199 = vsel %vm194, %v113, 0
  %v202 = vsel %vm194, %v115, 0
  %v205 = vsel %vm194, %v117, 0
  %v208 = vsel %vm194, %v119, 0
  %v211 = vsel %vm194, %v121, 0
  %v214 = vsel %vm194, %v123, 0
  %v217 = vsel %vm194, %v125, 0
  %219 = vmatprep.subr.bf16.mxu0 0
  %220 = vmatpush1.bf16.msra.mxu0 %v181
  %221 = vmatprep.subr.bf16.mxu0 0
  %222 = vmatpush1.bf16.msra.mxu0 %v180
  %223 = vmatprep.subr.bf16.mxu0 0
  %224 = vmatpush1.bf16.msra.mxu0 %v179
  %225 = vmatprep.subr.bf16.mxu0 0
  %226 = vmatpush1.bf16.msra.mxu0 %v178
  %227 = vmatprep.subr.bf16.mxu0 0
  %228 = vmatpush1.bf16.msra.mxu0 %v177
  %229 = vmatprep.subr.bf16.mxu0 0
  %230 = vmatpush1.bf16.msra.mxu0 %v176
  %231 = vmatprep.subr.bf16.mxu0 0
  %232 = vmatpush1.bf16.msra.mxu0 %v175
  %233 = vmatprep.subr.bf16.mxu0 0
  %234 = vmatpush1.bf16.msra.mxu0 %v174
  %235 = vmatprep.subr.bf16.mxu0 0
  %236 = vmatpush2.bf16.msra.mxu0 0
  %237 = vmatprep.subr.bf16.mxu0 0
  %238 = vmatpush2.bf16.msra.mxu0 0
  %239 = vmatprep.subr.bf16.mxu0 0
  %240 = vmatpush2.bf16.msra.mxu0 0
  %241 = vmatprep.subr.bf16.mxu0 0
  %242 = vmatpush2.bf16.msra.mxu0 0
  %243 = vmatprep.subr.bf16.mxu0 0
  %244 = vmatpush2.bf16.msra.mxu0 0
  %245 = vmatprep.subr.bf16.mxu0 0
  %246 = vmatpush2.bf16.msra.mxu0 0
  %247 = vmatprep.subr.bf16.mxu0 0
  %248 = vmatpush2.bf16.msra.mxu0 %v183
  %249 = vmatprep.subr.bf16.mxu0 0
  %250 = vmatpush2.bf16.msra.mxu0 %v182
  %251 = vmatprep.mubr.bf16.mxu0 %v196
  %252 = vmatmul.mubr.bf16.gmra.mxu0 %v110
  %v253 = vpop.f32.mrf.mxu0
  %v254 = vadd.f32 0.0, %v253
  %v255 = vpop.f32.mrf.mxu0
  %v256 = vpop.f32.mrf.mxu0
  %v257 = vadd.f32 0.0, %v256
  %v258 = vpop.f32.mrf.mxu0
  %259 = vmatprep.mubr.bf16.mxu0 %v199
  %260 = vmatmul.mubr.bf16.gmra.mxu0 %v112
  %v261 = vpop.f32.mrf.mxu0
  %v262 = vadd.f32 0.0, %v261
  %v263 = vpop.f32.mrf.mxu0
  %v264 = vpop.f32.mrf.mxu0
  %v265 = vadd.f32 0.0, %v264
  %v266 = vpop.f32.mrf.mxu0
  %267 = vmatprep.mubr.bf16.mxu0 %v202
  %268 = vmatmul.mubr.bf16.gmra.mxu0 %v114
  %v269 = vpop.f32.mrf.mxu0
  %v270 = vadd.f32 0.0, %v269
  %v271 = vpop.f32.mrf.mxu0
  %v272 = vpop.f32.mrf.mxu0
  %v273 = vadd.f32 0.0, %v272
  %v274 = vpop.f32.mrf.mxu0
  %275 = vmatprep.mubr.bf16.mxu0 %v205
  %276 = vmatmul.mubr.bf16.gmra.mxu0 %v116
  %v277 = vpop.f32.mrf.mxu0
  %v278 = vadd.f32 0.0, %v277
  %v279 = vpop.f32.mrf.mxu0
  %v280 = vpop.f32.mrf.mxu0
  %v281 = vadd.f32 0.0, %v280
  %v282 = vpop.f32.mrf.mxu0
  %283 = vmatprep.mubr.bf16.mxu0 %v208
  %284 = vmatmul.mubr.bf16.gmra.mxu0 %v118
  %v285 = vpop.f32.mrf.mxu0
  %v286 = vadd.f32 0.0, %v285
  %v287 = vpop.f32.mrf.mxu0
  %v288 = vpop.f32.mrf.mxu0
  %v289 = vadd.f32 0.0, %v288
  %v290 = vpop.f32.mrf.mxu0
  %291 = vmatprep.mubr.bf16.mxu0 %v211
  %292 = vmatmul.mubr.bf16.gmra.mxu0 %v120
  %v293 = vpop.f32.mrf.mxu0
  %v294 = vadd.f32 0.0, %v293
  %v295 = vpop.f32.mrf.mxu0
  %v296 = vpop.f32.mrf.mxu0
  %v297 = vadd.f32 0.0, %v296
  %v298 = vpop.f32.mrf.mxu0
  %299 = vmatprep.mubr.bf16.mxu0 %v214
  %300 = vmatmul.mubr.bf16.gmra.mxu0 %v122
  %v301 = vpop.f32.mrf.mxu0
  %v302 = vadd.f32 0.0, %v301
  %v303 = vpop.f32.mrf.mxu0
  %v304 = vpop.f32.mrf.mxu0
  %v305 = vadd.f32 0.0, %v304
  %v306 = vpop.f32.mrf.mxu0
  %307 = vmatprep.mubr.bf16.mxu0 %v217
  %308 = vmatmul.mubr.bf16.gmra.mxu0 %v124
  %v309 = vpop.f32.mrf.mxu0
  %v310 = vadd.f32 0.0, %v309
  %v311 = vpop.f32.mrf.mxu0
  %v312 = vpop.f32.mrf.mxu0
  %v313 = vadd.f32 0.0, %v312
  %v314 = vpop.f32.mrf.mxu0
  %315 = vdwg.mxu0
  %v316 = vld [vmem:[%s2] sm:$0x1]
  %v318 = vlaneseq
  %v319 = vshrl.u32 %v318, 7
  %v320 = vsub.s32 0, %v319
  %v321 = vrot.slane %v316, %v320
  %v323 = vmul.f32 %v254, %v321
  %v324 = vmul.f32 %v257, %v321
  %v325 = vmul.f32 %v262, %v321
  %v326 = vmul.f32 %v265, %v321
  %v327 = vmul.f32 %v270, %v321
  %v328 = vmul.f32 %v273, %v321
  %v329 = vmul.f32 %v278, %v321
  %v330 = vmul.f32 %v281, %v321
  %v331 = vmul.f32 %v286, %v321
  %v332 = vmul.f32 %v289, %v321
  %v333 = vmul.f32 %v294, %v321
  %v334 = vmul.f32 %v297, %v321
  %v335 = vmul.f32 %v302, %v321
  %v336 = vmul.f32 %v305, %v321
  %v337 = vmul.f32 %v310, %v321
  %v338 = vmul.f32 %v313, %v321
  %v339 = vld [vmem:[%s3] sm:$0x1]
  %v341 = vlaneseq
  %v342 = vshrl.u32 %v341, 7
  %v343 = vsub.s32 0, %v342
  %v344 = vrot.slane %v339, %v343
  %v346 = vadd.f32 %v323, %v344
  %v347 = vadd.f32 %v324, %v344
  %v348 = vadd.f32 %v325, %v344
  %v349 = vadd.f32 %v326, %v344
  %v350 = vadd.f32 %v327, %v344
  %v351 = vadd.f32 %v328, %v344
  %v352 = vadd.f32 %v329, %v344
  %v353 = vadd.f32 %v330, %v344
  %v354 = vadd.f32 %v331, %v344
  %v355 = vadd.f32 %v332, %v344
  %v356 = vadd.f32 %v333, %v344
  %v357 = vadd.f32 %v334, %v344
  %v358 = vadd.f32 %v335, %v344
  %v359 = vadd.f32 %v336, %v344
  %v360 = vadd.f32 %v337, %v344
  %v361 = vadd.f32 %v338, %v344
  %v362 = vmax.f32 %v346, 0.0
  %v363 = vmax.f32 %v347, 0.0
  %v364 = vmax.f32 %v348, 0.0
  %v365 = vmax.f32 %v349, 0.0
  %v366 = vmax.f32 %v350, 0.0
  %v367 = vmax.f32 %v351, 0.0
  %v368 = vmax.f32 %v352, 0.0
  %v369 = vmax.f32 %v353, 0.0
  %v370 = vmax.f32 %v354, 0.0
  %v371 = vmax.f32 %v355, 0.0
  %v372 = vmax.f32 %v356, 0.0
  %v373 = vmax.f32 %v357, 0.0
  %v374 = vmax.f32 %v358, 0.0
  %v375 = vmax.f32 %v359, 0.0
  %v376 = vmax.f32 %v360, 0.0
  %v377 = vmax.f32 %v361, 0.0
  %v378 = vld [vmem:[%s4] sm:$0x1]
  %v380 = vlaneseq
  %v381 = vshrl.u32 %v380, 7
  %v382 = vsub.s32 0, %v381
  %v383 = vrot.slane %v378, %v382
  %v385 = vmul.f32 %v362, %v383
  %v386 = vmul.f32 %v363, %v383
  %v387 = vmul.f32 %v364, %v383
  %v388 = vmul.f32 %v365, %v383
  %v389 = vmul.f32 %v366, %v383
  %v390 = vmul.f32 %v367, %v383
  %v391 = vmul.f32 %v368, %v383
  %v392 = vmul.f32 %v369, %v383
  %v393 = vmul.f32 %v370, %v383
  %v394 = vmul.f32 %v371, %v383
  %v395 = vmul.f32 %v372, %v383
  %v396 = vmul.f32 %v373, %v383
  %v397 = vmul.f32 %v374, %v383
  %v398 = vmul.f32 %v375, %v383
  %v399 = vmul.f32 %v376, %v383
  %v400 = vmul.f32 %v377, %v383
  %401 = vadd.xlane.f32.xlu0 %v385
  %v402 = vpop.xlane.xlu0 %401
  %403 = vadd.xlane.f32.xlu0 %v386
  %v404 = vpop.xlane.xlu0 %403
  %405 = vadd.xlane.f32.xlu0 %v387
  %v406 = vpop.xlane.xlu0 %405
  %407 = vadd.xlane.f32.xlu0 %v388
  %v408 = vpop.xlane.xlu0 %407
  %409 = vadd.xlane.f32.xlu0 %v389
  %v410 = vpop.xlane.xlu0 %409
  %411 = vadd.xlane.f32.xlu0 %v390
  %v412 = vpop.xlane.xlu0 %411
  %413 = vadd.xlane.f32.xlu0 %v391
  %v414 = vpop.xlane.xlu0 %413
  %415 = vadd.xlane.f32.xlu0 %v392
  %v416 = vpop.xlane.xlu0 %415
  %417 = vadd.xlane.f32.xlu0 %v393
  %v418 = vpop.xlane.xlu0 %417
  %419 = vadd.xlane.f32.xlu0 %v394
  %v420 = vpop.xlane.xlu0 %419
  %421 = vadd.xlane.f32.xlu0 %v395
  %v422 = vpop.xlane.xlu0 %421
  %423 = vadd.xlane.f32.xlu0 %v396
  %v424 = vpop.xlane.xlu0 %423
  %425 = vadd.xlane.f32.xlu0 %v397
  %v426 = vpop.xlane.xlu0 %425
  %427 = vadd.xlane.f32.xlu0 %v398
  %v428 = vpop.xlane.xlu0 %427
  %429 = vadd.xlane.f32.xlu0 %v399
  %v430 = vpop.xlane.xlu0 %429
  %431 = vadd.xlane.f32.xlu0 %v400
  %v432 = vpop.xlane.xlu0 %431
  %v433 = vld [vmem:[#allocation2] sm:$0x1]
  %v435 = vlaneseq
  %v436 = vshrl.u32 %v435, 7
  %v437 = vsub.s32 0, %v436
  %v438 = vrot.slane %v433, %v437
  %v440 = vadd.f32 %v402, %v438
  %v441 = vadd.f32 %v404, %v438
  %v442 = vadd.f32 %v406, %v438
  %v443 = vadd.f32 %v408, %v438
  %v444 = vadd.f32 %v410, %v438
  %v445 = vadd.f32 %v412, %v438
  %v446 = vadd.f32 %v414, %v438
  %v447 = vadd.f32 %v416, %v438
  %v448 = vadd.f32 %v418, %v438
  %v449 = vadd.f32 %v420, %v438
  %v450 = vadd.f32 %v422, %v438
  %v451 = vadd.f32 %v424, %v438
  %v452 = vadd.f32 %v426, %v438
  %v453 = vadd.f32 %v428, %v438
  %v454 = vadd.f32 %v430, %v438
  %v455 = vadd.f32 %v432, %v438
  %vm456 = vcmask 7168
  %457 = vst.msk [vmem:[%s6] sm:$0xff] %vm456, %v440
  %458 = vst.msk [vmem:[%s6 + $0x8] sm:$0xff] %vm456, %v441
  %459 = vst.msk [vmem:[%s6 + $0x10] sm:$0xff] %vm456, %v442
  %460 = vst.msk [vmem:[%s6 + $0x18] sm:$0xff] %vm456, %v443
  %461 = vst.msk [vmem:[%s6 + $0x20] sm:$0xff] %vm456, %v444
  %462 = vst.msk [vmem:[%s6 + $0x28] sm:$0xff] %vm456, %v445
  %463 = vst.msk [vmem:[%s6 + $0x30] sm:$0xff] %vm456, %v446
  %464 = vst.msk [vmem:[%s6 + $0x38] sm:$0xff] %vm456, %v447
  %465 = vst.msk [vmem:[%s6 + $0x40] sm:$0xff] %vm456, %v448
  %466 = vst.msk [vmem:[%s6 + $0x48] sm:$0xff] %vm456, %v449
  %467 = vst.msk [vmem:[%s6 + $0x50] sm:$0xff] %vm456, %v450
  %468 = vst.msk [vmem:[%s6 + $0x58] sm:$0xff] %vm456, %v451
  %469 = vst.msk [vmem:[%s6 + $0x60] sm:$0xff] %vm456, %v452
  %470 = vst.msk [vmem:[%s6 + $0x68] sm:$0xff] %vm456, %v453
  %471 = vst.msk [vmem:[%s6 + $0x70] sm:$0xff] %vm456, %v454
  %472 = vst.msk [vmem:[%s6 + $0x78] sm:$0xff] %vm456, %v455
  // Predicated region
  $region26: #{one_model_forward.73} parent=0 // pred_check
    _
  $region27: #{one_model_forward.73} parent=0 // pred_check_branch
    %474 = sbr.rel (0) target = $region29
  $region28: #{one_model_forward.73} parent=0 // pred_region
    _
  $region29: #{one_model_forward.73} parent=0 // pred_fallthru
    _
  // Predicated region
  $region30: #{one_model_forward.73} parent=0 // pred_check
    _
  $region31: #{one_model_forward.73} parent=0 // pred_check_branch
    %476 = sbr.rel (0) target = $region33
  $region32: #{one_model_forward.73} parent=0 // pred_region
    _
  $region33: #{one_model_forward.73} parent=0 // pred_fallthru
    _

// kernel: one_model_forward.75
$region0: #{one_model_forward.75}
  #allocation0 [shape = 'u32[]', space=smem, size = 0x4, offset = 0x4, fixed_abs, tag = 'smem constant byte address 0x4 - core index']
  #allocation1 [shape = 'u32[144,128]{1,0:T(1,128)}', space=vmem, size = 0x12000, scoped, tag = 'internal scratch']
  %s0 = inlined_call_operand.vmem [shape: f32[2,64,128], index: 0, kind: input, shape index: {}]
  %s1 = inlined_call_operand.vmem [shape: f32[4,2,9,128], index: 1, kind: input, shape index: {}]
  %s2 = inlined_call_operand.vmem [shape: f32[64,9], index: 2, kind: input, shape index: {}]
  %s3 = inlined_call_operand.vmem [shape: f32[1,128], index: 3, kind: input, shape index: {}]
  %s4 = inlined_call_operand.vmem [shape: f32[1,128], index: 4, kind: input, shape index: {}]
  %s5 = inlined_call_operand.vmem [shape: bf16[2,64,128], index: 5, kind: output, shape index: {}]
  %s6 = sld [smem:[#allocation0]]
  $region91: #{one_model_forward.75} parent=0
    _
  %s8 = ssub.s32 1, %s6
  %s9 = scalar_select 0, %s8, %s6
  $region1: #{one_model_forward.75} parent=0
    #allocation2 [shape = 'u8[65536]{0}', space=vmem, size = 0x10000, scoped, tag = 'input window, operand 1']
    loop: start=0, step=1, limit=4
    $region2: #{one_model_forward.75} parent=1 // loop_pre_header
      _
    $region3: #{one_model_forward.75} parent=1 // loop_header
      %s11 = sphi 0, %s15
      %p12 = scmp.ge.s32.totalorder %s11, 4
      %s21 = sphi 0, %s23
      %s24 = sphi 0, %s21
      %s25 = sphi 0, %s24
      %s41 = sphi 0, %s25
      %s47 = sphi 0, %s49
      %s50 = sphi 0, %s47
      %s51 = sphi 0, %s50
      %s67 = sphi 0, %s51
      %s71 = sphi 0, %s71
      %s73 = sphi 0, %s71
      %s74 = sphi 0, %s73
      %s88 = sphi 0, %s74
      %s92 = sphi 0, %s92
      %s94 = sphi 0, %s92
      %s95 = sphi 0, %s94
      %s109 = sphi 0, %s95
      %s113 = sphi 0, %s113
      %s115 = sphi 0, %s113
      %s116 = sphi 0, %s115
      %s130 = sphi 0, %s116
      %s136 = sphi 0, %s138
      %s139 = sphi 0, %s136
      %s140 = sphi 0, %s139
      %s156 = sphi 0, %s140
    $region4: #{one_model_forward.75} parent=1 // loop_header_branch
      %14 = sbr.rel (%p12) target = $region8
    $region5: #{one_model_forward.75} parent=1 // loop_body
      %s16 = ssub.s32 %s11, 1
      %s17 = ssub.s32 %s11, 2
      %s18 = sadd.s32 %s11, 1
      %s19 = ssub.s32 %s11, %s18
      %p20 = scmp.eq.s32.totalorder %s19, 0
      %s22 = sadd.s32 %s21, 1
      %s23 = scalar_select %p20, %s21, %s22
      %p26 = pneg %p20
      %p27 = scmp.eq.s32.totalorder %s11, 1
      %p28 = por %p26, %p27
      %p29 = scmp.ne.s32.totalorder %s21, %s24
      %p30 = scmp.eq.s32.totalorder %s11, 0
      %p31 = por %p29, %p30
      %p32 = scmp.ne.s32.totalorder %s21, %s24
      %p33 = scmp.eq.s32.totalorder %s16, 1
      %p34 = por %p32, %p33
      %p35 = scmp.ne.s32.totalorder %s24, %s25
      %p36 = scmp.eq.s32.totalorder %s16, 0
      %p37 = por %p35, %p36
      %p38 = scmp.ne.s32.totalorder %s24, %s25
      %p39 = scmp.eq.s32.totalorder %s17, 1
      %p40 = por %p38, %p39
      %p42 = scmp.ne.s32.totalorder %s25, %s41
      %p43 = scmp.eq.s32.totalorder %s17, 0
      %p44 = por %p42, %p43
      %s45 = ssub.s32 %s11, %s18
      %p46 = scmp.eq.s32.totalorder %s45, 0
      %s48 = sadd.s32 %s47, 1
      %s49 = scalar_select %p46, %s47, %s48
      %p52 = pneg %p46
      %p53 = scmp.eq.s32.totalorder %s11, 1
      %p54 = por %p52, %p53
      %p55 = scmp.ne.s32.totalorder %s47, %s50
      %p56 = scmp.eq.s32.totalorder %s11, 0
      %p57 = por %p55, %p56
      %p58 = scmp.ne.s32.totalorder %s47, %s50
      %p59 = scmp.eq.s32.totalorder %s16, 1
      %p60 = por %p58, %p59
      %p61 = scmp.ne.s32.totalorder %s50, %s51
      %p62 = scmp.eq.s32.totalorder %s16, 0
      %p63 = por %p61, %p62
      %p64 = scmp.ne.s32.totalorder %s50, %s51
      %p65 = scmp.eq.s32.totalorder %s17, 1
      %p66 = por %p64, %p65
      %p68 = scmp.ne.s32.totalorder %s51, %s67
      %p69 = scmp.eq.s32.totalorder %s17, 0
      %p70 = por %p68, %p69
      %s72 = sadd.s32 %s71, 1
      %p75 = scmp.eq.s32.totalorder %s11, 1
      %p76 = scmp.ne.s32.totalorder %s71, %s73
      %p77 = scmp.eq.s32.totalorder %s11, 0
      %p78 = por %p76, %p77
      %p79 = scmp.ne.s32.totalorder %s71, %s73
      %p80 = scmp.eq.s32.totalorder %s16, 1
      %p81 = por %p79, %p80
      %p82 = scmp.ne.s32.totalorder %s73, %s74
      %p83 = scmp.eq.s32.totalorder %s16, 0
      %p84 = por %p82, %p83
      %p85 = scmp.ne.s32.totalorder %s73, %s74
      %p86 = scmp.eq.s32.totalorder %s17, 1
      %p87 = por %p85, %p86
      %p89 = scmp.ne.s32.totalorder %s74, %s88
      %p90 = scmp.eq.s32.totalorder %s17, 0
      %p91 = por %p89, %p90
      %s93 = sadd.s32 %s92, 1
      %p96 = scmp.eq.s32.totalorder %s11, 1
      %p97 = scmp.ne.s32.totalorder %s92, %s94
      %p98 = scmp.eq.s32.totalorder %s11, 0
      %p99 = por %p97, %p98
      %p100 = scmp.ne.s32.totalorder %s92, %s94
      %p101 = scmp.eq.s32.totalorder %s16, 1
      %p102 = por %p100, %p101
      %p103 = scmp.ne.s32.totalorder %s94, %s95
      %p104 = scmp.eq.s32.totalorder %s16, 0
      %p105 = por %p103, %p104
      %p106 = scmp.ne.s32.totalorder %s94, %s95
      %p107 = scmp.eq.s32.totalorder %s17, 1
      %p108 = por %p106, %p107
      %p110 = scmp.ne.s32.totalorder %s95, %s109
      %p111 = scmp.eq.s32.totalorder %s17, 0
      %p112 = por %p110, %p111
      %s114 = sadd.s32 %s113, 1
      %p117 = scmp.eq.s32.totalorder %s11, 1
      %p118 = scmp.ne.s32.totalorder %s113, %s115
      %p119 = scmp.eq.s32.totalorder %s11, 0
      %p120 = por %p118, %p119
      %p121 = scmp.ne.s32.totalorder %s113, %s115
      %p122 = scmp.eq.s32.totalorder %s16, 1
      %p123 = por %p121, %p122
      %p124 = scmp.ne.s32.totalorder %s115, %s116
      %p125 = scmp.eq.s32.totalorder %s16, 0
      %p126 = por %p124, %p125
      %p127 = scmp.ne.s32.totalorder %s115, %s116
      %p128 = scmp.eq.s32.totalorder %s17, 1
      %p129 = por %p127, %p128
      %p131 = scmp.ne.s32.totalorder %s116, %s130
      %p132 = scmp.eq.s32.totalorder %s17, 0
      %p133 = por %p131, %p132
      %s134 = ssub.s32 %s11, %s18
      %p135 = scmp.eq.s32.totalorder %s134, 0
      %s137 = sadd.s32 %s136, 1
      %s138 = scalar_select %p135, %s136, %s137
      %p141 = pneg %p135
      %p142 = scmp.eq.s32.totalorder %s11, 1
      %p143 = por %p141, %p142
      %p144 = scmp.ne.s32.totalorder %s136, %s139
      %p145 = scmp.eq.s32.totalorder %s11, 0
      %p146 = por %p144, %p145
      %p147 = scmp.ne.s32.totalorder %s136, %s139
      %p148 = scmp.eq.s32.totalorder %s16, 1
      %p149 = por %p147, %p148
      %p150 = scmp.ne.s32.totalorder %s139, %s140
      %p151 = scmp.eq.s32.totalorder %s16, 0
      %p152 = por %p150, %p151
      %p153 = scmp.ne.s32.totalorder %s139, %s140
      %p154 = scmp.eq.s32.totalorder %s17, 1
      %p155 = por %p153, %p154
      %p157 = scmp.ne.s32.totalorder %s140, %s156
      %p158 = scmp.eq.s32.totalorder %s17, 0
      %p159 = por %p157, %p158
      %p160 = scmp.le.s32.totalorder 1, %s11
      %p161 = scmp.lt.s32.totalorder %s11, 3
      %p162 = pnand %p160, %p161
      %p163 = pneg %p162
      // Predicated region
      $region9: #{one_model_forward.75} parent=5 // pred_check
        _
      $region10: #{one_model_forward.75} parent=5 // pred_check_branch
        %165 = sbr.rel (%p162) target = $region12
      $region11: #{one_model_forward.75} parent=5 // pred_region
        %s166 = ssub.s32 %s11, 1
        // Predicated region
        $region13: #{one_model_forward.75} parent=11 // pred_check
          %p167 = pneg %p84
        $region14: #{one_model_forward.75} parent=11 // pred_check_branch
          %169 = sbr.rel (%p167) target = $region16
        $region15: #{one_model_forward.75} parent=11 // pred_region
          _
        $region16: #{one_model_forward.75} parent=11 // pred_fallthru
          _
        // Predicated region
        $region17: #{one_model_forward.75} parent=11 // pred_check
          %p170 = pneg %p105
        $region18: #{one_model_forward.75} parent=11 // pred_check_branch
          %172 = sbr.rel (%p170) target = $region20
        $region19: #{one_model_forward.75} parent=11 // pred_region
          _
        $region20: #{one_model_forward.75} parent=11 // pred_fallthru
          _
        // Predicated region
        $region21: #{one_model_forward.75} parent=11 // pred_check
          %p173 = pneg %p126
        $region22: #{one_model_forward.75} parent=11 // pred_check_branch
          %175 = sbr.rel (%p173) target = $region24
        $region23: #{one_model_forward.75} parent=11 // pred_region
          _
        $region24: #{one_model_forward.75} parent=11 // pred_fallthru
          _
      $region12: #{one_model_forward.75} parent=5 // pred_fallthru
        _
      %p176 = scmp.lt.s32.totalorder %s11, 2
      // Predicated region
      $region25: #{one_model_forward.75} parent=5 // pred_check
        %p177 = pneg %p176
      $region26: #{one_model_forward.75} parent=5 // pred_check_branch
        %179 = sbr.rel (%p177) target = $region28
      $region27: #{one_model_forward.75} parent=5 // pred_region
        // Predicated region
        $region29: #{one_model_forward.75} parent=27 // pred_check
          %p180 = pneg %p31
        $region30: #{one_model_forward.75} parent=27 // pred_check_branch
          %182 = sbr.rel (%p180) target = $region32
        $region31: #{one_model_forward.75} parent=27 // pred_region
          %p183 = scmp.lt.s32.totalorder %s11, 1
          %s184 = scalar_select %p183, %s11, 1
          %s185 = smul.addr %s184, 8
          %s186 = smul.addr %s185, 8
          %s187 = scalar_lea.vmem %s0, %s186
        $region32: #{one_model_forward.75} parent=27 // pred_fallthru
          _
        // Predicated region
        $region33: #{one_model_forward.75} parent=27 // pred_check
          %p188 = pneg %p57
        $region34: #{one_model_forward.75} parent=27 // pred_check_branch
          %190 = sbr.rel (%p188) target = $region36
        $region35: #{one_model_forward.75} parent=27 // pred_region
          %s191 = sand.u32 %s47, 1
          %s192 = sand.u32 %s47, 1
          %s193 = smul.addr %s192, 64
          %s194 = scalar_lea.vmem [#allocation2], %s193
          %s195 = smul.addr %s11, 2
          %s196 = smul.addr %s195, 8
          %s197 = scalar_lea.vmem %s1, %s196
          // Predicated region
          $region37: #{one_model_forward.75} parent=35 // pred_check
            _
          $region38: #{one_model_forward.75} parent=35 // pred_check_branch
            %199 = sbr.rel (0) target = $region40
          $region39: #{one_model_forward.75} parent=35 // pred_region
            // Predicated region
            $region41: #{one_model_forward.75} parent=39 // pred_check
              _
            $region42: #{one_model_forward.75} parent=39 // pred_check_branch
              %201 = sbr.rel (0) target = $region44
            $region43: #{one_model_forward.75} parent=39 // pred_region
              // Predicated region
              $region56: #{one_model_forward.75} parent=43 // pred_check
                _
              $region57: #{one_model_forward.75} parent=43 // pred_check_branch
                %231 = sbr.rel (0) target = $region59
              $region58: #{one_model_forward.75} parent=43 // pred_region
                loop: start=0, step=1, limit=1
                $region60: #{one_model_forward.75} parent=58 // loop_pre_header
                  _
                $region61: #{one_model_forward.75} parent=58 // loop_header
                  %s233 = sphi 0, %s237
                  %p234 = scmp.ge.s32.totalorder %s233, 1
                  %s238 = sphi %s197, %s197
                  %s239 = sphi %s194, %s194
                $region62: #{one_model_forward.75} parent=58 // loop_header_branch
                  %236 = sbr.rel (%p234) target = $region66
                $region63: #{one_model_forward.75} parent=58 // loop_body
                  %v240 = vld [vmem:[%s238] sm:$0xff]
                  %241 = vst [vmem:[%s239] sm:$0xff] %v240
                  %v242 = vld [vmem:[%s238 + $0x8] sm:$0xff]
                  %243 = vst [vmem:[%s239 + $0x8] sm:$0xff] %v242
                  %v244 = vld [vmem:[%s238 + $0x20] sm:$0xff]
                  %245 = vst [vmem:[%s239 + $0x10] sm:$0xff] %v244
                  %v246 = vld [vmem:[%s238 + $0x28] sm:$0xff]
                  %247 = vst [vmem:[%s239 + $0x18] sm:$0xff] %v246
                  %v248 = vld [vmem:[%s238 + $0x40] sm:$0xff]
                  %249 = vst [vmem:[%s239 + $0x20] sm:$0xff] %v248
                  %v250 = vld [vmem:[%s238 + $0x48] sm:$0xff]
                  %251 = vst [vmem:[%s239 + $0x28] sm:$0xff] %v250
                  %v252 = vld [vmem:[%s238 + $0x60] sm:$0xff]
                  %253 = vst [vmem:[%s239 + $0x30] sm:$0xff] %v252
                  %v254 = vld [vmem:[%s238 + $0x68] sm:$0xff]
                  %255 = vst [vmem:[%s239 + $0x38] sm:$0xff] %v254
                $region64: #{one_model_forward.75} parent=58 // loop_footer
                  %s237 = sadd.s32 1, %s233
                $region65: #{one_model_forward.75} parent=58 // loop_footer_branch
                  %232 = sbr.rel target = $region61
                $region66: #{one_model_forward.75} parent=58 // loop_exit
                  _
              $region59: #{one_model_forward.75} parent=43 // pred_fallthru
                _
              // Predicated region
              $region67: #{one_model_forward.75} parent=43 // pred_check
                _
              $region68: #{one_model_forward.75} parent=43 // pred_check_branch
                %257 = sbr.rel target = $region70
              $region69: #{one_model_forward.75} parent=43 // pred_region
                _
              $region70: #{one_model_forward.75} parent=43 // pred_fallthru
                _
            $region44: #{one_model_forward.75} parent=39 // pred_fallthru
              _
            // Predicated region
            $region45: #{one_model_forward.75} parent=39 // pred_check
              _
            $region46: #{one_model_forward.75} parent=39 // pred_check_branch
              %203 = sbr.rel target = $region48
            $region47: #{one_model_forward.75} parent=39 // pred_region
              %s205 = ssub.s32 256, 1
              loop: start=0, step=1, limit=1
              $region49: #{one_model_forward.75} parent=47 // loop_pre_header
                _
              $region50: #{one_model_forward.75} parent=47 // loop_header
                %s207 = sphi 0, %s211
                %p208 = scmp.ge.s32.totalorder %s207, 1
                %s212 = sphi %s197, %s197
                %s213 = sphi %s194, %s194
              $region51: #{one_model_forward.75} parent=47 // loop_header_branch
                %210 = sbr.rel (%p208) target = $region55
              $region52: #{one_model_forward.75} parent=47 // loop_body
                %v214 = vld [vmem:[%s212] sm:%s205]
                %215 = vst [vmem:[%s213] sm:%s205] %v214
                %v216 = vld [vmem:[%s212 + $0x8] sm:%s205]
                %217 = vst [vmem:[%s213 + $0x8] sm:%s205] %v216
                %v218 = vld [vmem:[%s212 + $0x20] sm:%s205]
                %219 = vst [vmem:[%s213 + $0x10] sm:%s205] %v218
                %v220 = vld [vmem:[%s212 + $0x28] sm:%s205]
                %221 = vst [vmem:[%s213 + $0x18] sm:%s205] %v220
                %v222 = vld [vmem:[%s212 + $0x40] sm:%s205]
                %223 = vst [vmem:[%s213 + $0x20] sm:%s205] %v222
                %v224 = vld [vmem:[%s212 + $0x48] sm:%s205]
                %225 = vst [vmem:[%s213 + $0x28] sm:%s205] %v224
                %v226 = vld [vmem:[%s212 + $0x60] sm:%s205]
                %227 = vst [vmem:[%s213 + $0x30] sm:%s205] %v226
                %v228 = vld [vmem:[%s212 + $0x68] sm:%s205]
                %229 = vst [vmem:[%s213 + $0x38] sm:%s205] %v228
              $region53: #{one_model_forward.75} parent=47 // loop_footer
                %s211 = sadd.s32 1, %s207
              $region54: #{one_model_forward.75} parent=47 // loop_footer_branch
                %206 = sbr.rel target = $region50
              $region55: #{one_model_forward.75} parent=47 // loop_exit
                _
            $region48: #{one_model_forward.75} parent=39 // pred_fallthru
              _
          $region40: #{one_model_forward.75} parent=35 // pred_fallthru
            _
          %258 = vnop
        $region36: #{one_model_forward.75} parent=27 // pred_fallthru
          _
      $region28: #{one_model_forward.75} parent=5 // pred_fallthru
        _
      %p259 = scmp.le.s32.totalorder 1, %s11
      %p260 = scmp.lt.s32.totalorder %s11, 3
      %p261 = pnand %p259, %p260
      %p262 = pneg %p261
      // Predicated region
      $region71: #{one_model_forward.75} parent=5 // pred_check
        _
      $region72: #{one_model_forward.75} parent=5 // pred_check_branch
        %264 = sbr.rel (%p261) target = $region74
      $region73: #{one_model_forward.75} parent=5 // pred_region
        %s265 = ssub.s32 %s11, 1
        %s266 = sand.u32 %s50, 1
        %s267 = sand.u32 %s50, 1
        %s268 = smul.addr %s267, 64
        %s269 = scalar_lea.vmem [#allocation2], %s268
        // Predicated region
        $region75: #{one_model_forward.75} parent=73 // pred_check
          %p270 = pneg %p63
        $region76: #{one_model_forward.75} parent=73 // pred_check_branch
          %272 = sbr.rel (%p270) target = $region78
        $region77: #{one_model_forward.75} parent=73 // pred_region
          _
        $region78: #{one_model_forward.75} parent=73 // pred_fallthru
          _
        %p273 = scmp.lt.s32.totalorder %s16, 1
        %s274 = scalar_select %p273, %s16, 1
        %s275 = smul.addr %s274, 8
        %s276 = smul.addr %s275, 8
        %s277 = scalar_lea.vmem %s0, %s276
        %p278 = pneg %p37
        %p279 = pneg %p34
        %s280 = sand.u32 %s50, 1
        %s281 = sand.u32 %s50, 1
        %s282 = smul.addr %s281, 64
        %s283 = scalar_lea.vmem [#allocation2], %s282
        %p284 = pneg %p63
        %p285 = pneg %p60
        %p286 = pneg %p84
        %p287 = pneg %p81
        %p288 = pneg %p105
        %p289 = pneg %p102
        %p290 = pneg %p126
        %p291 = pneg %p123
        %p292 = pneg %p152
        %p293 = pneg %p149
        %p294 = scmp.lt.s32.totalorder %s16, 1
        %s295 = scalar_select %p294, %s16, 1
        %s296 = smul.addr %s295, 8
        %s297 = smul.addr %s296, 4
        %s298 = scalar_lea.vmem %s5, %s297
        %p299 = scmp.lt.s32.totalorder %s16, 1
        %s300 = scalar_select %p299, %s16, 1
        %s301 = smul.addr %s300, 8
        %s302 = smul.addr %s301, 8
        %s303 = scalar_lea.vmem %s0, %s302
        %p304 = scmp.lt.s32.totalorder %s16, 1
        %s305 = scalar_select %p304, %s16, 1
        %s306 = smul.addr %s305, 8
        %s307 = smul.addr %s306, 4
        %s308 = scalar_lea.vmem %s5, %s307
        %v309 = vld [vmem:[%s303] sm:$0xff]
        %v310 = vld [vmem:[%s303 + $0x8] sm:$0xff]
        %v311 = vld [vmem:[%s303 + $0x10] sm:$0xff]
        %v312 = vld [vmem:[%s303 + $0x18] sm:$0xff]
        %v313 = vld [vmem:[%s303 + $0x20] sm:$0xff]
        %v314 = vld [vmem:[%s303 + $0x28] sm:$0xff]
        %v315 = vld [vmem:[%s303 + $0x30] sm:$0xff]
        %v316 = vld [vmem:[%s303 + $0x38] sm:$0xff]
        %v317 = vld [vmem:[%s3] sm:$0x1]
        %v318 = vld [vmem:[%s4] sm:$0x1]
        %v319 = vld [vmem:[%s2] sm:$0xff]
        %v320 = vld [vmem:[%s2 + $0x8] sm:$0xff]
        %v321 = vld [vmem:[%s2 + $0x10] sm:$0xff]
        %v322 = vld [vmem:[%s2 + $0x18] sm:$0xff]
        %v323 = vld [vmem:[%s2 + $0x20] sm:$0xff]
        %v324 = vld [vmem:[%s2 + $0x28] sm:$0xff]
        %v325 = vld [vmem:[%s2 + $0x30] sm:$0xff]
        %v326 = vld [vmem:[%s2 + $0x38] sm:$0xff]
        %v327 = vld [vmem:[%s269] sm:$0xff]
        %v328 = vld [vmem:[%s269 + $0x8] sm:$0x1]
        %vm329 = vcmask 72704
        %v331 = vsel %vm329, %v319, 0
        %v334 = vsel %vm329, %v320, 0
        %v337 = vsel %vm329, %v321, 0
        %v340 = vsel %vm329, %v322, 0
        %v343 = vsel %vm329, %v323, 0
        %v346 = vsel %vm329, %v324, 0
        %v349 = vsel %vm329, %v325, 0
        %v352 = vsel %vm329, %v326, 0
        %vm354 = vcmask 1040384
        %v356 = vsel %vm354, %v328, 0
        %358 = vmatprep.subr.mxu0 0.0
        %359 = vmatpush1.msra.mxu0 0.0
        %360 = vmatprep.subr.mxu0 0.0
        %361 = vmatpush1.msra.mxu0 0.0
        %362 = vmatprep.subr.mxu0 0.0
        %363 = vmatpush1.msra.mxu0 0.0
        %364 = vmatprep.subr.mxu0 0.0
        %365 = vmatpush1.msra.mxu0 0.0
        %366 = vmatprep.subr.mxu0 0.0
        %367 = vmatpush1.msra.mxu0 0.0
        %368 = vmatprep.subr.mxu0 0.0
        %369 = vmatpush1.msra.mxu0 0.0
        %370 = vmatprep.subr.mxu0 0.0
        %371 = vmatpush1.msra.mxu0 0.0
        %372 = vmatprep.subr.mxu0 0.0
        %373 = vmatpush1.msra.mxu0 0.0
        %374 = vmatprep.subr.mxu0 0.0
        %375 = vmatpush1.msra.mxu0 0.0
        %376 = vmatprep.subr.mxu0 0.0
        %377 = vmatpush1.msra.mxu0 0.0
        %378 = vmatprep.subr.mxu0 0.0
        %379 = vmatpush1.msra.mxu0 0.0
        %380 = vmatprep.subr.mxu0 0.0
        %381 = vmatpush1.msra.mxu0 0.0
        %382 = vmatprep.subr.mxu0 0.0
        %383 = vmatpush1.msra.mxu0 0.0
        %384 = vmatprep.subr.mxu0 0.0
        %385 = vmatpush1.msra.mxu0 0.0
        %386 = vmatprep.subr.mxu0 0.0
        %387 = vmatpush1.msra.mxu0 %v356
        %388 = vmatprep.subr.mxu0 0.0
        %389 = vmatpush1.msra.mxu0 %v327
        %390 = vmatprep.subr.mxu0 0.0
        %391 = vmatpush2.msra.mxu0 0.0
        %392 = vmatprep.subr.mxu0 0.0
        %393 = vmatpush2.msra.mxu0 0.0
        %394 = vmatprep.subr.mxu0 0.0
        %395 = vmatpush2.msra.mxu0 0.0
        %396 = vmatprep.subr.mxu0 0.0
        %397 = vmatpush2.msra.mxu0 0.0
        %398 = vmatprep.subr.mxu0 0.0
        %399 = vmatpush2.msra.mxu0 0.0
        %400 = vmatprep.subr.mxu0 0.0
        %401 = vmatpush2.msra.mxu0 0.0
        %402 = vmatprep.subr.mxu0 0.0
        %403 = vmatpush2.msra.mxu0 0.0
        %404 = vmatprep.subr.mxu0 0.0
        %405 = vmatpush2.msra.mxu0 0.0
        %406 = vmatprep.subr.mxu0 0.0
        %407 = vmatpush2.msra.mxu0 0.0
        %408 = vmatprep.subr.mxu0 0.0
        %409 = vmatpush2.msra.mxu0 0.0
        %410 = vmatprep.subr.mxu0 0.0
        %411 = vmatpush2.msra.mxu0 0.0
        %412 = vmatprep.subr.mxu0 0.0
        %413 = vmatpush2.msra.mxu0 0.0
        %414 = vmatprep.subr.mxu0 0.0
        %415 = vmatpush2.msra.mxu0 0.0
        %416 = vmatprep.subr.mxu0 0.0
        %417 = vmatpush2.msra.mxu0 0.0
        %418 = vmatprep.subr.mxu0 0.0
        %419 = vmatpush2.msra.mxu0 0.0
        %420 = vmatprep.subr.mxu0 0.0
        %421 = vmatpush2.msra.mxu0 0.0
        %422 = vmatprep.mubr.f32.mxu0 0.0
        %423 = vmatmul.mubr.f32.gmra.mxu0 %v331
        %v424 = vpop.f32.mrf.mxu0
        %v425 = vadd.f32 0.0, %v424
        %v426 = vpop.f32.mrf.mxu0
        %427 = vmatprep.mubr.f32.mxu0 0.0
        %428 = vmatmul.mubr.f32.gmra.mxu0 %v334
        %v429 = vpop.f32.mrf.mxu0
        %v430 = vadd.f32 0.0, %v429
        %v431 = vpop.f32.mrf.mxu0
        %432 = vmatprep.mubr.f32.mxu0 0.0
        %433 = vmatmul.mubr.f32.gmra.mxu0 %v337
        %v434 = vpop.f32.mrf.mxu0
        %v435 = vadd.f32 0.0, %v434
        %v436 = vpop.f32.mrf.mxu0
        %437 = vmatprep.mubr.f32.mxu0 0.0
        %438 = vmatmul.mubr.f32.gmra.mxu0 %v340
        %v439 = vpop.f32.mrf.mxu0
        %v440 = vadd.f32 0.0, %v439
        %v441 = vpop.f32.mrf.mxu0
        %442 = vmatprep.mubr.f32.mxu0 0.0
        %443 = vmatmul.mubr.f32.gmra.mxu0 %v343
        %v444 = vpop.f32.mrf.mxu0
        %v445 = vadd.f32 0.0, %v444
        %v446 = vpop.f32.mrf.mxu0
        %447 = vmatprep.mubr.f32.mxu0 0.0
        %448 = vmatmul.mubr.f32.gmra.mxu0 %v346
        %v449 = vpop.f32.mrf.mxu0
        %v450 = vadd.f32 0.0, %v449
        %v451 = vpop.f32.mrf.mxu0
        %452 = vmatprep.mubr.f32.mxu0 0.0
        %453 = vmatmul.mubr.f32.gmra.mxu0 %v349
        %v454 = vpop.f32.mrf.mxu0
        %v455 = vadd.f32 0.0, %v454
        %v456 = vpop.f32.mrf.mxu0
        %457 = vmatprep.mubr.f32.mxu0 0.0
        %458 = vmatmul.mubr.f32.gmra.mxu0 %v352
        %v459 = vpop.f32.mrf.mxu0
        %v460 = vadd.f32 0.0, %v459
        %v461 = vpop.f32.mrf.mxu0
        %462 = vdwg.mxu0
        %v463 = vadd.f32 %v309, %v425
        %v464 = vadd.f32 %v310, %v430
        %v465 = vadd.f32 %v311, %v435
        %v466 = vadd.f32 %v312, %v440
        %v467 = vadd.f32 %v313, %v445
        %v468 = vadd.f32 %v314, %v450
        %v469 = vadd.f32 %v315, %v455
        %v470 = vadd.f32 %v316, %v460
        %v472 = vlaneseq
        %v473 = vshrl.u32 %v472, 7
        %v474 = vsub.s32 0, %v473
        %v475 = vrot.slane %v317, %v474
        %v477 = vmul.f32 %v463, %v475
        %v478 = vmul.f32 %v464, %v475
        %v479 = vmul.f32 %v465, %v475
        %v480 = vmul.f32 %v466, %v475
        %v481 = vmul.f32 %v467, %v475
        %v482 = vmul.f32 %v468, %v475
        %v483 = vmul.f32 %v469, %v475
        %v484 = vmul.f32 %v470, %v475
        %v486 = vlaneseq
        %v487 = vshrl.u32 %v486, 7
        %v488 = vsub.s32 0, %v487
        %v489 = vrot.slane %v318, %v488
        %v491 = vadd.f32 %v477, %v489
        %v492 = vadd.f32 %v478, %v489
        %v493 = vadd.f32 %v479, %v489
        %v494 = vadd.f32 %v480, %v489
        %v495 = vadd.f32 %v481, %v489
        %v496 = vadd.f32 %v482, %v489
        %v497 = vadd.f32 %v483, %v489
        %v498 = vadd.f32 %v484, %v489
        %v499 = vmax.f32 %v491, 0.0
        %v500 = vmax.f32 %v492, 0.0
        %v501 = vmax.f32 %v493, 0.0
        %v502 = vmax.f32 %v494, 0.0
        %v503 = vmax.f32 %v495, 0.0
        %v504 = vmax.f32 %v496, 0.0
        %v505 = vmax.f32 %v497, 0.0
        %v506 = vmax.f32 %v498, 0.0
        %v507 = vadd.f32 %v499, 0.0
        %v508 = vadd.f32 %v500, 0.0
        %v509 = vadd.f32 %v501, 0.0
        %v510 = vadd.f32 %v502, 0.0
        %v511 = vadd.f32 %v503, 0.0
        %v512 = vadd.f32 %v504, 0.0
        %v513 = vadd.f32 %v505, 0.0
        %v514 = vadd.f32 %v506, 0.0
        %s515 = scalar_lea.vmem %s269, 16 [#allocation2]
        %v516 = vld [vmem:[%s515] sm:$0xff]
        %v517 = vld [vmem:[%s515 + $0x8] sm:$0x1]
        %v519 = vsel %vm354, %v517, 0
        %521 = vmatprep.subr.mxu0 0.0
        %522 = vmatpush1.msra.mxu0 0.0
        %523 = vmatprep.subr.mxu0 0.0
        %524 = vmatpush1.msra.mxu0 0.0
        %525 = vmatprep.subr.mxu0 0.0
        %526 = vmatpush1.msra.mxu0 0.0
        %527 = vmatprep.subr.mxu0 0.0
        %528 = vmatpush1.msra.mxu0 0.0
        %529 = vmatprep.subr.mxu0 0.0
        %530 = vmatpush1.msra.mxu0 0.0
        %531 = vmatprep.subr.mxu0 0.0
        %532 = vmatpush1.msra.mxu0 0.0
        %533 = vmatprep.subr.mxu0 0.0
        %534 = vmatpush1.msra.mxu0 0.0
        %535 = vmatprep.subr.mxu0 0.0
        %536 = vmatpush1.msra.mxu0 0.0
        %537 = vmatprep.subr.mxu0 0.0
        %538 = vmatpush1.msra.mxu0 0.0
        %539 = vmatprep.subr.mxu0 0.0
        %540 = vmatpush1.msra.mxu0 0.0
        %541 = vmatprep.subr.mxu0 0.0
        %542 = vmatpush1.msra.mxu0 0.0
        %543 = vmatprep.subr.mxu0 0.0
        %544 = vmatpush1.msra.mxu0 0.0
        %545 = vmatprep.subr.mxu0 0.0
        %546 = vmatpush1.msra.mxu0 0.0
        %547 = vmatprep.subr.mxu0 0.0
        %548 = vmatpush1.msra.mxu0 0.0
        %549 = vmatprep.subr.mxu0 0.0
        %550 = vmatpush1.msra.mxu0 %v519
        %551 = vmatprep.subr.mxu0 0.0
        %552 = vmatpush1.msra.mxu0 %v516
        %553 = vmatprep.subr.mxu0 0.0
        %554 = vmatpush2.msra.mxu0 0.0
        %555 = vmatprep.subr.mxu0 0.0
        %556 = vmatpush2.msra.mxu0 0.0
        %557 = vmatprep.subr.mxu0 0.0
        %558 = vmatpush2.msra.mxu0 0.0
        %559 = vmatprep.subr.mxu0 0.0
        %560 = vmatpush2.msra.mxu0 0.0
        %561 = vmatprep.subr.mxu0 0.0
        %562 = vmatpush2.msra.mxu0 0.0
        %563 = vmatprep.subr.mxu0 0.0
        %564 = vmatpush2.msra.mxu0 0.0
        %565 = vmatprep.subr.mxu0 0.0
        %566 = vmatpush2.msra.mxu0 0.0
        %567 = vmatprep.subr.mxu0 0.0
        %568 = vmatpush2.msra.mxu0 0.0
        %569 = vmatprep.subr.mxu0 0.0
        %570 = vmatpush2.msra.mxu0 0.0
        %571 = vmatprep.subr.mxu0 0.0
        %572 = vmatpush2.msra.mxu0 0.0
        %573 = vmatprep.subr.mxu0 0.0
        %574 = vmatpush2.msra.mxu0 0.0
        %575 = vmatprep.subr.mxu0 0.0
        %576 = vmatpush2.msra.mxu0 0.0
        %577 = vmatprep.subr.mxu0 0.0
        %578 = vmatpush2.msra.mxu0 0.0
        %579 = vmatprep.subr.mxu0 0.0
        %580 = vmatpush2.msra.mxu0 0.0
        %581 = vmatprep.subr.mxu0 0.0
        %582 = vmatpush2.msra.mxu0 0.0
        %583 = vmatprep.subr.mxu0 0.0
        %584 = vmatpush2.msra.mxu0 0.0
        %585 = vmatprep.mubr.f32.mxu0 0.0
        %586 = vmatmul.mubr.f32.gmra.mxu0 %v331
        %v587 = vpop.f32.mrf.mxu0
        %v588 = vadd.f32 0.0, %v587
        %v589 = vpop.f32.mrf.mxu0
        %590 = vmatprep.mubr.f32.mxu0 0.0
        %591 = vmatmul.mubr.f32.gmra.mxu0 %v334
        %v592 = vpop.f32.mrf.mxu0
        %v593 = vadd.f32 0.0, %v592
        %v594 = vpop.f32.mrf.mxu0
        %595 = vmatprep.mubr.f32.mxu0 0.0
        %596 = vmatmul.mubr.f32.gmra.mxu0 %v337
        %v597 = vpop.f32.mrf.mxu0
        %v598 = vadd.f32 0.0, %v597
        %v599 = vpop.f32.mrf.mxu0
        %600 = vmatprep.mubr.f32.mxu0 0.0
        %601 = vmatmul.mubr.f32.gmra.mxu0 %v340
        %v602 = vpop.f32.mrf.mxu0
        %v603 = vadd.f32 0.0, %v602
        %v604 = vpop.f32.mrf.mxu0
        %605 = vmatprep.mubr.f32.mxu0 0.0
        %606 = vmatmul.mubr.f32.gmra.mxu0 %v343
        %v607 = vpop.f32.mrf.mxu0
        %v608 = vadd.f32 0.0, %v607
        %v609 = vpop.f32.mrf.mxu0
        %610 = vmatprep.mubr.f32.mxu0 0.0
        %611 = vmatmul.mubr.f32.gmra.mxu0 %v346
        %v612 = vpop.f32.mrf.mxu0
        %v613 = vadd.f32 0.0, %v612
        %v614 = vpop.f32.mrf.mxu0
        %615 = vmatprep.mubr.f32.mxu0 0.0
        %616 = vmatmul.mubr.f32.gmra.mxu0 %v349
        %v617 = vpop.f32.mrf.mxu0
        %v618 = vadd.f32 0.0, %v617
        %v619 = vpop.f32.mrf.mxu0
        %620 = vmatprep.mubr.f32.mxu0 0.0
        %621 = vmatmul.mubr.f32.gmra.mxu0 %v352
        %v622 = vpop.f32.mrf.mxu0
        %v623 = vadd.f32 0.0, %v622
        %v624 = vpop.f32.mrf.mxu0
        %625 = vdwg.mxu0
        %v626 = vadd.f32 %v309, %v588
        %v627 = vadd.f32 %v310, %v593
        %v628 = vadd.f32 %v311, %v598
        %v629 = vadd.f32 %v312, %v603
        %v630 = vadd.f32 %v313, %v608
        %v631 = vadd.f32 %v314, %v613
        %v632 = vadd.f32 %v315, %v618
        %v633 = vadd.f32 %v316, %v623
        %v634 = vmul.f32 %v626, %v475
        %v635 = vmul.f32 %v627, %v475
        %v636 = vmul.f32 %v628, %v475
        %v637 = vmul.f32 %v629, %v475
        %v638 = vmul.f32 %v630, %v475
        %v639 = vmul.f32 %v631, %v475
        %v640 = vmul.f32 %v632, %v475
        %v641 = vmul.f32 %v633, %v475
        %v642 = vadd.f32 %v634, %v489
        %v643 = vadd.f32 %v635, %v489
        %v644 = vadd.f32 %v636, %v489
        %v645 = vadd.f32 %v637, %v489
        %v646 = vadd.f32 %v638, %v489
        %v647 = vadd.f32 %v639, %v489
        %v648 = vadd.f32 %v640, %v489
        %v649 = vadd.f32 %v641, %v489
        %v650 = vmax.f32 %v642, 0.0
        %v651 = vmax.f32 %v643, 0.0
        %v652 = vmax.f32 %v644, 0.0
        %v653 = vmax.f32 %v645, 0.0
        %v654 = vmax.f32 %v646, 0.0
        %v655 = vmax.f32 %v647, 0.0
        %v656 = vmax.f32 %v648, 0.0
        %v657 = vmax.f32 %v649, 0.0
        %v658 = vadd.f32 %v507, %v650
        %v659 = vadd.f32 %v508, %v651
        %v660 = vadd.f32 %v509, %v652
        %v661 = vadd.f32 %v510, %v653
        %v662 = vadd.f32 %v511, %v654
        %v663 = vadd.f32 %v512, %v655
        %v664 = vadd.f32 %v513, %v656
        %v665 = vadd.f32 %v514, %v657
        %s666 = scalar_lea.vmem %s269, 32 [#allocation2]
        %v667 = vld [vmem:[%s666] sm:$0xff]
        %v668 = vld [vmem:[%s666 + $0x8] sm:$0x1]
        %v670 = vsel %vm354, %v668, 0
        %672 = vmatprep.subr.mxu0 0.0
        %673 = vmatpush1.msra.mxu0 0.0
        %674 = vmatprep.subr.mxu0 0.0
        %675 = vmatpush1.msra.mxu0 0.0
        %676 = vmatprep.subr.mxu0 0.0
        %677 = vmatpush1.msra.mxu0 0.0
        %678 = vmatprep.subr.mxu0 0.0
        %679 = vmatpush1.msra.mxu0 0.0
        %680 = vmatprep.subr.mxu0 0.0
        %681 = vmatpush1.msra.mxu0 0.0
        %682 = vmatprep.subr.mxu0 0.0
        %683 = vmatpush1.msra.mxu0 0.0
        %684 = vmatprep.subr.mxu0 0.0
        %685 = vmatpush1.msra.mxu0 0.0
        %686 = vmatprep.subr.mxu0 0.0
        %687 = vmatpush1.msra.mxu0 0.0
        %688 = vmatprep.subr.mxu0 0.0
        %689 = vmatpush1.msra.mxu0 0.0
        %690 = vmatprep.subr.mxu0 0.0
        %691 = vmatpush1.msra.mxu0 0.0
        %692 = vmatprep.subr.mxu0 0.0
        %693 = vmatpush1.msra.mxu0 0.0
        %694 = vmatprep.subr.mxu0 0.0
        %695 = vmatpush1.msra.mxu0 0.0
        %696 = vmatprep.subr.mxu0 0.0
        %697 = vmatpush1.msra.mxu0 0.0
        %698 = vmatprep.subr.mxu0 0.0
        %699 = vmatpush1.msra.mxu0 0.0
        %700 = vmatprep.subr.mxu0 0.0
        %701 = vmatpush1.msra.mxu0 %v670
        %702 = vmatprep.subr.mxu0 0.0
        %703 = vmatpush1.msra.mxu0 %v667
        %704 = vmatprep.subr.mxu0 0.0
        %705 = vmatpush2.msra.mxu0 0.0
        %706 = vmatprep.subr.mxu0 0.0
        %707 = vmatpush2.msra.mxu0 0.0
        %708 = vmatprep.subr.mxu0 0.0
        %709 = vmatpush2.msra.mxu0 0.0
        %710 = vmatprep.subr.mxu0 0.0
        %711 = vmatpush2.msra.mxu0 0.0
        %712 = vmatprep.subr.mxu0 0.0
        %713 = vmatpush2.msra.mxu0 0.0
        %714 = vmatprep.subr.mxu0 0.0
        %715 = vmatpush2.msra.mxu0 0.0
        %716 = vmatprep.subr.mxu0 0.0
        %717 = vmatpush2.msra.mxu0 0.0
        %718 = vmatprep.subr.mxu0 0.0
        %719 = vmatpush2.msra.mxu0 0.0
        %720 = vmatprep.subr.mxu0 0.0
        %721 = vmatpush2.msra.mxu0 0.0
        %722 = vmatprep.subr.mxu0 0.0
        %723 = vmatpush2.msra.mxu0 0.0
        %724 = vmatprep.subr.mxu0 0.0
        %725 = vmatpush2.msra.mxu0 0.0
        %726 = vmatprep.subr.mxu0 0.0
        %727 = vmatpush2.msra.mxu0 0.0
        %728 = vmatprep.subr.mxu0 0.0
        %729 = vmatpush2.msra.mxu0 0.0
        %730 = vmatprep.subr.mxu0 0.0
        %731 = vmatpush2.msra.mxu0 0.0
        %732 = vmatprep.subr.mxu0 0.0
        %733 = vmatpush2.msra.mxu0 0.0
        %734 = vmatprep.subr.mxu0 0.0
        %735 = vmatpush2.msra.mxu0 0.0
        %736 = vmatprep.mubr.f32.mxu0 0.0
        %737 = vmatmul.mubr.f32.gmra.mxu0 %v331
        %v738 = vpop.f32.mrf.mxu0
        %v739 = vadd.f32 0.0, %v738
        %v740 = vpop.f32.mrf.mxu0
        %741 = vmatprep.mubr.f32.mxu0 0.0
        %742 = vmatmul.mubr.f32.gmra.mxu0 %v334
        %v743 = vpop.f32.mrf.mxu0
        %v744 = vadd.f32 0.0, %v743
        %v745 = vpop.f32.mrf.mxu0
        %746 = vmatprep.mubr.f32.mxu0 0.0
        %747 = vmatmul.mubr.f32.gmra.mxu0 %v337
        %v748 = vpop.f32.mrf.mxu0
        %v749 = vadd.f32 0.0, %v748
        %v750 = vpop.f32.mrf.mxu0
        %751 = vmatprep.mubr.f32.mxu0 0.0
        %752 = vmatmul.mubr.f32.gmra.mxu0 %v340
        %v753 = vpop.f32.mrf.mxu0
        %v754 = vadd.f32 0.0, %v753
        %v755 = vpop.f32.mrf.mxu0
        %756 = vmatprep.mubr.f32.mxu0 0.0
        %757 = vmatmul.mubr.f32.gmra.mxu0 %v343
        %v758 = vpop.f32.mrf.mxu0
        %v759 = vadd.f32 0.0, %v758
        %v760 = vpop.f32.mrf.mxu0
        %761 = vmatprep.mubr.f32.mxu0 0.0
        %762 = vmatmul.mubr.f32.gmra.mxu0 %v346
        %v763 = vpop.f32.mrf.mxu0
        %v764 = vadd.f32 0.0, %v763
        %v765 = vpop.f32.mrf.mxu0
        %766 = vmatprep.mubr.f32.mxu0 0.0
        %767 = vmatmul.mubr.f32.gmra.mxu0 %v349
        %v768 = vpop.f32.mrf.mxu0
        %v769 = vadd.f32 0.0, %v768
        %v770 = vpop.f32.mrf.mxu0
        %771 = vmatprep.mubr.f32.mxu0 0.0
        %772 = vmatmul.mubr.f32.gmra.mxu0 %v352
        %v773 = vpop.f32.mrf.mxu0
        %v774 = vadd.f32 0.0, %v773
        %v775 = vpop.f32.mrf.mxu0
        %776 = vdwg.mxu0
        %v777 = vadd.f32 %v309, %v739
        %v778 = vadd.f32 %v310, %v744
        %v779 = vadd.f32 %v311, %v749
        %v780 = vadd.f32 %v312, %v754
        %v781 = vadd.f32 %v313, %v759
        %v782 = vadd.f32 %v314, %v764
        %v783 = vadd.f32 %v315, %v769
        %v784 = vadd.f32 %v316, %v774
        %v785 = vmul.f32 %v777, %v475
        %v786 = vmul.f32 %v778, %v475
        %v787 = vmul.f32 %v779, %v475
        %v788 = vmul.f32 %v780, %v475
        %v789 = vmul.f32 %v781, %v475
        %v790 = vmul.f32 %v782, %v475
        %v791 = vmul.f32 %v783, %v475
        %v792 = vmul.f32 %v784, %v475
        %v793 = vadd.f32 %v785, %v489
        %v794 = vadd.f32 %v786, %v489
        %v795 = vadd.f32 %v787, %v489
        %v796 = vadd.f32 %v788, %v489
        %v797 = vadd.f32 %v789, %v489
        %v798 = vadd.f32 %v790, %v489
        %v799 = vadd.f32 %v791, %v489
        %v800 = vadd.f32 %v792, %v489
        %v801 = vmax.f32 %v793, 0.0
        %v802 = vmax.f32 %v794, 0.0
        %v803 = vmax.f32 %v795, 0.0
        %v804 = vmax.f32 %v796, 0.0
        %v805 = vmax.f32 %v797, 0.0
        %v806 = vmax.f32 %v798, 0.0
        %v807 = vmax.f32 %v799, 0.0
        %v808 = vmax.f32 %v800, 0.0
        %v809 = vadd.f32 %v658, %v801
        %v810 = vadd.f32 %v659, %v802
        %v811 = vadd.f32 %v660, %v803
        %v812 = vadd.f32 %v661, %v804
        %v813 = vadd.f32 %v662, %v805
        %v814 = vadd.f32 %v663, %v806
        %v815 = vadd.f32 %v664, %v807
        %v816 = vadd.f32 %v665, %v808
        %s817 = scalar_lea.vmem %s269, 48 [#allocation2]
        %v818 = vld [vmem:[%s817] sm:$0xff]
        %v819 = vld [vmem:[%s817 + $0x8] sm:$0x1]
        %v821 = vsel %vm354, %v819, 0
        %823 = vmatprep.subr.mxu0 0.0
        %824 = vmatpush1.msra.mxu0 0.0
        %825 = vmatprep.subr.mxu0 0.0
        %826 = vmatpush1.msra.mxu0 0.0
        %827 = vmatprep.subr.mxu0 0.0
        %828 = vmatpush1.msra.mxu0 0.0
        %829 = vmatprep.subr.mxu0 0.0
        %830 = vmatpush1.msra.mxu0 0.0
        %831 = vmatprep.subr.mxu0 0.0
        %832 = vmatpush1.msra.mxu0 0.0
        %833 = vmatprep.subr.mxu0 0.0
        %834 = vmatpush1.msra.mxu0 0.0
        %835 = vmatprep.subr.mxu0 0.0
        %836 = vmatpush1.msra.mxu0 0.0
        %837 = vmatprep.subr.mxu0 0.0
        %838 = vmatpush1.msra.mxu0 0.0
        %839 = vmatprep.subr.mxu0 0.0
        %840 = vmatpush1.msra.mxu0 0.0
        %841 = vmatprep.subr.mxu0 0.0
        %842 = vmatpush1.msra.mxu0 0.0
        %843 = vmatprep.subr.mxu0 0.0
        %844 = vmatpush1.msra.mxu0 0.0
        %845 = vmatprep.subr.mxu0 0.0
        %846 = vmatpush1.msra.mxu0 0.0
        %847 = vmatprep.subr.mxu0 0.0
        %848 = vmatpush1.msra.mxu0 0.0
        %849 = vmatprep.subr.mxu0 0.0
        %850 = vmatpush1.msra.mxu0 0.0
        %851 = vmatprep.subr.mxu0 0.0
        %852 = vmatpush1.msra.mxu0 %v821
        %853 = vmatprep.subr.mxu0 0.0
        %854 = vmatpush1.msra.mxu0 %v818
        %855 = vmatprep.subr.mxu0 0.0
        %856 = vmatpush2.msra.mxu0 0.0
        %857 = vmatprep.subr.mxu0 0.0
        %858 = vmatpush2.msra.mxu0 0.0
        %859 = vmatprep.subr.mxu0 0.0
        %860 = vmatpush2.msra.mxu0 0.0
        %861 = vmatprep.subr.mxu0 0.0
        %862 = vmatpush2.msra.mxu0 0.0
        %863 = vmatprep.subr.mxu0 0.0
        %864 = vmatpush2.msra.mxu0 0.0
        %865 = vmatprep.subr.mxu0 0.0
        %866 = vmatpush2.msra.mxu0 0.0
        %867 = vmatprep.subr.mxu0 0.0
        %868 = vmatpush2.msra.mxu0 0.0
        %869 = vmatprep.subr.mxu0 0.0
        %870 = vmatpush2.msra.mxu0 0.0
        %871 = vmatprep.subr.mxu0 0.0
        %872 = vmatpush2.msra.mxu0 0.0
        %873 = vmatprep.subr.mxu0 0.0
        %874 = vmatpush2.msra.mxu0 0.0
        %875 = vmatprep.subr.mxu0 0.0
        %876 = vmatpush2.msra.mxu0 0.0
        %877 = vmatprep.subr.mxu0 0.0
        %878 = vmatpush2.msra.mxu0 0.0
        %879 = vmatprep.subr.mxu0 0.0
        %880 = vmatpush2.msra.mxu0 0.0
        %881 = vmatprep.subr.mxu0 0.0
        %882 = vmatpush2.msra.mxu0 0.0
        %883 = vmatprep.subr.mxu0 0.0
        %884 = vmatpush2.msra.mxu0 0.0
        %885 = vmatprep.subr.mxu0 0.0
        %886 = vmatpush2.msra.mxu0 0.0
        %887 = vmatprep.mubr.f32.mxu0 0.0
        %888 = vmatmul.mubr.f32.gmra.mxu0 %v331
        %v889 = vpop.f32.mrf.mxu0
        %v890 = vadd.f32 0.0, %v889
        %v891 = vpop.f32.mrf.mxu0
        %892 = vmatprep.mubr.f32.mxu0 0.0
        %893 = vmatmul.mubr.f32.gmra.mxu0 %v334
        %v894 = vpop.f32.mrf.mxu0
        %v895 = vadd.f32 0.0, %v894
        %v896 = vpop.f32.mrf.mxu0
        %897 = vmatprep.mubr.f32.mxu0 0.0
        %898 = vmatmul.mubr.f32.gmra.mxu0 %v337
        %v899 = vpop.f32.mrf.mxu0
        %v900 = vadd.f32 0.0, %v899
        %v901 = vpop.f32.mrf.mxu0
        %902 = vmatprep.mubr.f32.mxu0 0.0
        %903 = vmatmul.mubr.f32.gmra.mxu0 %v340
        %v904 = vpop.f32.mrf.mxu0
        %v905 = vadd.f32 0.0, %v904
        %v906 = vpop.f32.mrf.mxu0
        %907 = vmatprep.mubr.f32.mxu0 0.0
        %908 = vmatmul.mubr.f32.gmra.mxu0 %v343
        %v909 = vpop.f32.mrf.mxu0
        %v910 = vadd.f32 0.0, %v909
        %v911 = vpop.f32.mrf.mxu0
        %912 = vmatprep.mubr.f32.mxu0 0.0
        %913 = vmatmul.mubr.f32.gmra.mxu0 %v346
        %v914 = vpop.f32.mrf.mxu0
        %v915 = vadd.f32 0.0, %v914
        %v916 = vpop.f32.mrf.mxu0
        %917 = vmatprep.mubr.f32.mxu0 0.0
        %918 = vmatmul.mubr.f32.gmra.mxu0 %v349
        %v919 = vpop.f32.mrf.mxu0
        %v920 = vadd.f32 0.0, %v919
        %v921 = vpop.f32.mrf.mxu0
        %922 = vmatprep.mubr.f32.mxu0 0.0
        %923 = vmatmul.mubr.f32.gmra.mxu0 %v352
        %v924 = vpop.f32.mrf.mxu0
        %v925 = vadd.f32 0.0, %v924
        %v926 = vpop.f32.mrf.mxu0
        %927 = vdwg.mxu0
        %v928 = vadd.f32 %v309, %v890
        %v929 = vadd.f32 %v310, %v895
        %v930 = vadd.f32 %v311, %v900
        %v931 = vadd.f32 %v312, %v905
        %v932 = vadd.f32 %v313, %v910
        %v933 = vadd.f32 %v314, %v915
        %v934 = vadd.f32 %v315, %v920
        %v935 = vadd.f32 %v316, %v925
        %v936 = vmul.f32 %v928, %v475
        %v937 = vmul.f32 %v929, %v475
        %v938 = vmul.f32 %v930, %v475
        %v939 = vmul.f32 %v931, %v475
        %v940 = vmul.f32 %v932, %v475
        %v941 = vmul.f32 %v933, %v475
        %v942 = vmul.f32 %v934, %v475
        %v943 = vmul.f32 %v935, %v475
        %v944 = vadd.f32 %v936, %v489
        %v945 = vadd.f32 %v937, %v489
        %v946 = vadd.f32 %v938, %v489
        %v947 = vadd.f32 %v939, %v489
        %v948 = vadd.f32 %v940, %v489
        %v949 = vadd.f32 %v941, %v489
        %v950 = vadd.f32 %v942, %v489
        %v951 = vadd.f32 %v943, %v489
        %v952 = vmax.f32 %v944, 0.0
        %v953 = vmax.f32 %v945, 0.0
        %v954 = vmax.f32 %v946, 0.0
        %v955 = vmax.f32 %v947, 0.0
        %v956 = vmax.f32 %v948, 0.0
        %v957 = vmax.f32 %v949, 0.0
        %v958 = vmax.f32 %v950, 0.0
        %v959 = vmax.f32 %v951, 0.0
        %v960 = vadd.f32 %v809, %v952
        %v961 = vadd.f32 %v810, %v953
        %v962 = vadd.f32 %v811, %v954
        %v963 = vadd.f32 %v812, %v955
        %v964 = vadd.f32 %v813, %v956
        %v965 = vadd.f32 %v814, %v957
        %v966 = vadd.f32 %v815, %v958
        %v967 = vadd.f32 %v816, %v959
        %v968 = vpack.c.bf16 %v961, %v960
        %v969 = vpack.c.bf16 %v963, %v962
        %v970 = vpack.c.bf16 %v965, %v964
        %v971 = vpack.c.bf16 %v967, %v966
        %v976 = vunpack.c.l.b16 %v968
        %v977 = vunpack.c.h.b16 %v968
        %v978 = vunpack.c.l.b16 %v969
        %v979 = vunpack.c.h.b16 %v969
        %v980 = vunpack.c.l.b16 %v970
        %v981 = vunpack.c.h.b16 %v970
        %v982 = vunpack.c.l.b16 %v971
        %v983 = vunpack.c.h.b16 %v971
        %v984 = vpack.c.b16 %v976, %v976
        %v985 = vpack.c.b16 %v977, %v977
        %v986 = vpack.c.b16 %v978, %v978
        %v987 = vpack.c.b16 %v979, %v979
        %v988 = vpack.c.b16 %v980, %v980
        %v989 = vpack.c.b16 %v981, %v981
        %v990 = vpack.c.b16 %v982, %v982
        %v991 = vpack.c.b16 %v983, %v983
        %1000 = vst [vmem:[%s308] sm:$0xf] %v984
        %1001 = vst [vmem:[%s308 + $0x4] sm:$0xf] %v985
        %1002 = vst [vmem:[%s308 + $0x8] sm:$0xf] %v986
        %1003 = vst [vmem:[%s308 + $0xc] sm:$0xf] %v987
        %1004 = vst [vmem:[%s308 + $0x10] sm:$0xf] %v988
        %1005 = vst [vmem:[%s308 + $0x14] sm:$0xf] %v989
        %1006 = vst [vmem:[%s308 + $0x18] sm:$0xf] %v990
        %1007 = vst [vmem:[%s308 + $0x1c] sm:$0xf] %v991
        %p1008 = scmp.lt.s32.totalorder %s16, 1
        %s1009 = scalar_select %p1008, %s16, 1
        %s1010 = smul.addr %s1009, 8
        %s1011 = smul.addr %s1010, 4
        %s1012 = scalar_lea.vmem %s5, %s1011
        // Predicated region
        $region79: #{one_model_forward.75} parent=73 // pred_check
          %p1013 = pneg %p149
        $region80: #{one_model_forward.75} parent=73 // pred_check_branch
          %1015 = sbr.rel (%p1013) target = $region82
        $region81: #{one_model_forward.75} parent=73 // pred_region
          _
        $region82: #{one_model_forward.75} parent=73 // pred_fallthru
          _
      $region74: #{one_model_forward.75} parent=5 // pred_fallthru
        _
      %p1016 = scmp.le.s32.totalorder 2, %s11
      // Predicated region
      $region83: #{one_model_forward.75} parent=5 // pred_check
        %p1017 = pneg %p1016
      $region84: #{one_model_forward.75} parent=5 // pred_check_branch
        %1019 = sbr.rel (%p1017) target = $region86
      $region85: #{one_model_forward.75} parent=5 // pred_region
        %s1020 = ssub.s32 %s11, 2
        // Predicated region
        $region87: #{one_model_forward.75} parent=85 // pred_check
          %p1021 = pneg %p155
        $region88: #{one_model_forward.75} parent=85 // pred_check_branch
          %1023 = sbr.rel (%p1021) target = $region90
        $region89: #{one_model_forward.75} parent=85 // pred_region
          %p1024 = scmp.lt.s32.totalorder %s17, 1
          %s1025 = scalar_select %p1024, %s17, 1
          %s1026 = smul.addr %s1025, 8
          %s1027 = smul.addr %s1026, 4
          %s1028 = scalar_lea.vmem %s5, %s1027
        $region90: #{one_model_forward.75} parent=85 // pred_fallthru
          _
      $region86: #{one_model_forward.75} parent=5 // pred_fallthru
        _
    $region6: #{one_model_forward.75} parent=1 // loop_footer
      %s15 = sadd.s32 1, %s11
    $region7: #{one_model_forward.75} parent=1 // loop_footer_branch
      %10 = sbr.rel target = $region3
    $region8: #{one_model_forward.75} parent=1 // loop_exit
      _

// kernel: one_model_forward.89
$region0: #{one_model_forward.89}
  #allocation0 [shape = 'u32[]', space=smem, size = 0x4, offset = 0x4, fixed_abs, tag = 'smem constant byte address 0x4 - core index']
  #allocation1 [shape = 'u32[144,128]{1,0:T(1,128)}', space=vmem, size = 0x12000, scoped, tag = 'internal scratch']
  %s0 = inlined_call_operand.vmem [shape: f32[2,64,128], index: 0, kind: input, shape index: {}]
  %s1 = inlined_call_operand.vmem [shape: f32[6,2,9,128], index: 1, kind: input, shape index: {}]
  %s2 = inlined_call_operand.vmem [shape: f32[64,9], index: 2, kind: input, shape index: {}]
  %s3 = inlined_call_operand.vmem [shape: f32[1,128], index: 3, kind: input, shape index: {}]
  %s4 = inlined_call_operand.vmem [shape: f32[1,128], index: 4, kind: input, shape index: {}]
  %s5 = inlined_call_operand.vmem [shape: bf16[2,64,128], index: 5, kind: output, shape index: {}]
  %s6 = sld [smem:[#allocation0]]
  $region91: #{one_model_forward.89} parent=0
    _
  %s8 = ssub.s32 1, %s6
  %s9 = scalar_select 0, %s8, %s6
  $region1: #{one_model_forward.89} parent=0
    #allocation2 [shape = 'u8[98304]{0}', space=vmem, size = 0x18000, scoped, tag = 'input window, operand 1']
    loop: start=0, step=1, limit=4
    $region2: #{one_model_forward.89} parent=1 // loop_pre_header
      _
    $region3: #{one_model_forward.89} parent=1 // loop_header
      %s11 = sphi 0, %s15
      %p12 = scmp.ge.s32.totalorder %s11, 4
      %s21 = sphi 0, %s23
      %s24 = sphi 0, %s21
      %s25 = sphi 0, %s24
      %s41 = sphi 0, %s25
      %s47 = sphi 0, %s49
      %s50 = sphi 0, %s47
      %s51 = sphi 0, %s50
      %s67 = sphi 0, %s51
      %s71 = sphi 0, %s71
      %s73 = sphi 0, %s71
      %s74 = sphi 0, %s73
      %s88 = sphi 0, %s74
      %s92 = sphi 0, %s92
      %s94 = sphi 0, %s92
      %s95 = sphi 0, %s94
      %s109 = sphi 0, %s95
      %s113 = sphi 0, %s113
      %s115 = sphi 0, %s113
      %s116 = sphi 0, %s115
      %s130 = sphi 0, %s116
      %s136 = sphi 0, %s138
      %s139 = sphi 0, %s136
      %s140 = sphi 0, %s139
      %s156 = sphi 0, %s140
    $region4: #{one_model_forward.89} parent=1 // loop_header_branch
      %14 = sbr.rel (%p12) target = $region8
    $region5: #{one_model_forward.89} parent=1 // loop_body
      %s16 = ssub.s32 %s11, 1
      %s17 = ssub.s32 %s11, 2
      %s18 = sadd.s32 %s11, 1
      %s19 = ssub.s32 %s11, %s18
      %p20 = scmp.eq.s32.totalorder %s19, 0
      %s22 = sadd.s32 %s21, 1
      %s23 = scalar_select %p20, %s21, %s22
      %p26 = pneg %p20
      %p27 = scmp.eq.s32.totalorder %s11, 1
      %p28 = por %p26, %p27
      %p29 = scmp.ne.s32.totalorder %s21, %s24
      %p30 = scmp.eq.s32.totalorder %s11, 0
      %p31 = por %p29, %p30
      %p32 = scmp.ne.s32.totalorder %s21, %s24
      %p33 = scmp.eq.s32.totalorder %s16, 1
      %p34 = por %p32, %p33
      %p35 = scmp.ne.s32.totalorder %s24, %s25
      %p36 = scmp.eq.s32.totalorder %s16, 0
      %p37 = por %p35, %p36
      %p38 = scmp.ne.s32.totalorder %s24, %s25
      %p39 = scmp.eq.s32.totalorder %s17, 1
      %p40 = por %p38, %p39
      %p42 = scmp.ne.s32.totalorder %s25, %s41
      %p43 = scmp.eq.s32.totalorder %s17, 0
      %p44 = por %p42, %p43
      %s45 = ssub.s32 %s11, %s18
      %p46 = scmp.eq.s32.totalorder %s45, 0
      %s48 = sadd.s32 %s47, 1
      %s49 = scalar_select %p46, %s47, %s48
      %p52 = pneg %p46
      %p53 = scmp.eq.s32.totalorder %s11, 1
      %p54 = por %p52, %p53
      %p55 = scmp.ne.s32.totalorder %s47, %s50
      %p56 = scmp.eq.s32.totalorder %s11, 0
      %p57 = por %p55, %p56
      %p58 = scmp.ne.s32.totalorder %s47, %s50
      %p59 = scmp.eq.s32.totalorder %s16, 1
      %p60 = por %p58, %p59
      %p61 = scmp.ne.s32.totalorder %s50, %s51
      %p62 = scmp.eq.s32.totalorder %s16, 0
      %p63 = por %p61, %p62
      %p64 = scmp.ne.s32.totalorder %s50, %s51
      %p65 = scmp.eq.s32.totalorder %s17, 1
      %p66 = por %p64, %p65
      %p68 = scmp.ne.s32.totalorder %s51, %s67
      %p69 = scmp.eq.s32.totalorder %s17, 0
      %p70 = por %p68, %p69
      %s72 = sadd.s32 %s71, 1
      %p75 = scmp.eq.s32.totalorder %s11, 1
      %p76 = scmp.ne.s32.totalorder %s71, %s73
      %p77 = scmp.eq.s32.totalorder %s11, 0
      %p78 = por %p76, %p77
      %p79 = scmp.ne.s32.totalorder %s71, %s73
      %p80 = scmp.eq.s32.totalorder %s16, 1
      %p81 = por %p79, %p80
      %p82 = scmp.ne.s32.totalorder %s73, %s74
      %p83 = scmp.eq.s32.totalorder %s16, 0
      %p84 = por %p82, %p83
      %p85 = scmp.ne.s32.totalorder %s73, %s74
      %p86 = scmp.eq.s32.totalorder %s17, 1
      %p87 = por %p85, %p86
      %p89 = scmp.ne.s32.totalorder %s74, %s88
      %p90 = scmp.eq.s32.totalorder %s17, 0
      %p91 = por %p89, %p90
      %s93 = sadd.s32 %s92, 1
      %p96 = scmp.eq.s32.totalorder %s11, 1
      %p97 = scmp.ne.s32.totalorder %s92, %s94
      %p98 = scmp.eq.s32.totalorder %s11, 0
      %p99 = por %p97, %p98
      %p100 = scmp.ne.s32.totalorder %s92, %s94
      %p101 = scmp.eq.s32.totalorder %s16, 1
      %p102 = por %p100, %p101
      %p103 = scmp.ne.s32.totalorder %s94, %s95
      %p104 = scmp.eq.s32.totalorder %s16, 0
      %p105 = por %p103, %p104
      %p106 = scmp.ne.s32.totalorder %s94, %s95
      %p107 = scmp.eq.s32.totalorder %s17, 1
      %p108 = por %p106, %p107
      %p110 = scmp.ne.s32.totalorder %s95, %s109
      %p111 = scmp.eq.s32.totalorder %s17, 0
      %p112 = por %p110, %p111
      %s114 = sadd.s32 %s113, 1
      %p117 = scmp.eq.s32.totalorder %s11, 1
      %p118 = scmp.ne.s32.totalorder %s113, %s115
      %p119 = scmp.eq.s32.totalorder %s11, 0
      %p120 = por %p118, %p119
      %p121 = scmp.ne.s32.totalorder %s113, %s115
      %p122 = scmp.eq.s32.totalorder %s16, 1
      %p123 = por %p121, %p122
      %p124 = scmp.ne.s32.totalorder %s115, %s116
      %p125 = scmp.eq.s32.totalorder %s16, 0
      %p126 = por %p124, %p125
      %p127 = scmp.ne.s32.totalorder %s115, %s116
      %p128 = scmp.eq.s32.totalorder %s17, 1
      %p129 = por %p127, %p128
      %p131 = scmp.ne.s32.totalorder %s116, %s130
      %p132 = scmp.eq.s32.totalorder %s17, 0
      %p133 = por %p131, %p132
      %s134 = ssub.s32 %s11, %s18
      %p135 = scmp.eq.s32.totalorder %s134, 0
      %s137 = sadd.s32 %s136, 1
      %s138 = scalar_select %p135, %s136, %s137
      %p141 = pneg %p135
      %p142 = scmp.eq.s32.totalorder %s11, 1
      %p143 = por %p141, %p142
      %p144 = scmp.ne.s32.totalorder %s136, %s139
      %p145 = scmp.eq.s32.totalorder %s11, 0
      %p146 = por %p144, %p145
      %p147 = scmp.ne.s32.totalorder %s136, %s139
      %p148 = scmp.eq.s32.totalorder %s16, 1
      %p149 = por %p147, %p148
      %p150 = scmp.ne.s32.totalorder %s139, %s140
      %p151 = scmp.eq.s32.totalorder %s16, 0
      %p152 = por %p150, %p151
      %p153 = scmp.ne.s32.totalorder %s139, %s140
      %p154 = scmp.eq.s32.totalorder %s17, 1
      %p155 = por %p153, %p154
      %p157 = scmp.ne.s32.totalorder %s140, %s156
      %p158 = scmp.eq.s32.totalorder %s17, 0
      %p159 = por %p157, %p158
      %p160 = scmp.le.s32.totalorder 1, %s11
      %p161 = scmp.lt.s32.totalorder %s11, 3
      %p162 = pnand %p160, %p161
      %p163 = pneg %p162
      // Predicated region
      $region9: #{one_model_forward.89} parent=5 // pred_check
        _
      $region10: #{one_model_forward.89} parent=5 // pred_check_branch
        %165 = sbr.rel (%p162) target = $region12
      $region11: #{one_model_forward.89} parent=5 // pred_region
        %s166 = ssub.s32 %s11, 1
        // Predicated region
        $region13: #{one_model_forward.89} parent=11 // pred_check
          %p167 = pneg %p84
        $region14: #{one_model_forward.89} parent=11 // pred_check_branch
          %169 = sbr.rel (%p167) target = $region16
        $region15: #{one_model_forward.89} parent=11 // pred_region
          _
        $region16: #{one_model_forward.89} parent=11 // pred_fallthru
          _
        // Predicated region
        $region17: #{one_model_forward.89} parent=11 // pred_check
          %p170 = pneg %p105
        $region18: #{one_model_forward.89} parent=11 // pred_check_branch
          %172 = sbr.rel (%p170) target = $region20
        $region19: #{one_model_forward.89} parent=11 // pred_region
          _
        $region20: #{one_model_forward.89} parent=11 // pred_fallthru
          _
        // Predicated region
        $region21: #{one_model_forward.89} parent=11 // pred_check
          %p173 = pneg %p126
        $region22: #{one_model_forward.89} parent=11 // pred_check_branch
          %175 = sbr.rel (%p173) target = $region24
        $region23: #{one_model_forward.89} parent=11 // pred_region
          _
        $region24: #{one_model_forward.89} parent=11 // pred_fallthru
          _
      $region12: #{one_model_forward.89} parent=5 // pred_fallthru
        _
      %p176 = scmp.lt.s32.totalorder %s11, 2
      // Predicated region
      $region25: #{one_model_forward.89} parent=5 // pred_check
        %p177 = pneg %p176
      $region26: #{one_model_forward.89} parent=5 // pred_check_branch
        %179 = sbr.rel (%p177) target = $region28
      $region27: #{one_model_forward.89} parent=5 // pred_region
        // Predicated region
        $region29: #{one_model_forward.89} parent=27 // pred_check
          %p180 = pneg %p31
        $region30: #{one_model_forward.89} parent=27 // pred_check_branch
          %182 = sbr.rel (%p180) target = $region32
        $region31: #{one_model_forward.89} parent=27 // pred_region
          %p183 = scmp.lt.s32.totalorder %s11, 1
          %s184 = scalar_select %p183, %s11, 1
          %s185 = smul.addr %s184, 8
          %s186 = smul.addr %s185, 8
          %s187 = scalar_lea.vmem %s0, %s186
        $region32: #{one_model_forward.89} parent=27 // pred_fallthru
          _
        // Predicated region
        $region33: #{one_model_forward.89} parent=27 // pred_check
          %p188 = pneg %p57
        $region34: #{one_model_forward.89} parent=27 // pred_check_branch
          %190 = sbr.rel (%p188) target = $region36
        $region35: #{one_model_forward.89} parent=27 // pred_region
          %s191 = sand.u32 %s47, 1
          %s192 = sand.u32 %s47, 1
          %s193 = smul.addr %s192, 96
          %s194 = scalar_lea.vmem [#allocation2], %s193
          %s195 = smul.addr %s11, 2
          %s196 = smul.addr %s195, 8
          %s197 = scalar_lea.vmem %s1, %s196
          // Predicated region
          $region37: #{one_model_forward.89} parent=35 // pred_check
            _
          $region38: #{one_model_forward.89} parent=35 // pred_check_branch
            %199 = sbr.rel (0) target = $region40
          $region39: #{one_model_forward.89} parent=35 // pred_region
            // Predicated region
            $region41: #{one_model_forward.89} parent=39 // pred_check
              _
            $region42: #{one_model_forward.89} parent=39 // pred_check_branch
              %201 = sbr.rel (0) target = $region44
            $region43: #{one_model_forward.89} parent=39 // pred_region
              // Predicated region
              $region56: #{one_model_forward.89} parent=43 // pred_check
                _
              $region57: #{one_model_forward.89} parent=43 // pred_check_branch
                %239 = sbr.rel (0) target = $region59
              $region58: #{one_model_forward.89} parent=43 // pred_region
                loop: start=0, step=1, limit=1
                $region60: #{one_model_forward.89} parent=58 // loop_pre_header
                  _
                $region61: #{one_model_forward.89} parent=58 // loop_header
                  %s241 = sphi 0, %s245
                  %p242 = scmp.ge.s32.totalorder %s241, 1
                  %s246 = sphi %s197, %s197
                  %s247 = sphi %s194, %s194
                $region62: #{one_model_forward.89} parent=58 // loop_header_branch
                  %244 = sbr.rel (%p242) target = $region66
                $region63: #{one_model_forward.89} parent=58 // loop_body
                  %v248 = vld [vmem:[%s246] sm:$0xff]
                  %249 = vst [vmem:[%s247] sm:$0xff] %v248
                  %v250 = vld [vmem:[%s246 + $0x8] sm:$0xff]
                  %251 = vst [vmem:[%s247 + $0x8] sm:$0xff] %v250
                  %v252 = vld [vmem:[%s246 + $0x20] sm:$0xff]
                  %253 = vst [vmem:[%s247 + $0x10] sm:$0xff] %v252
                  %v254 = vld [vmem:[%s246 + $0x28] sm:$0xff]
                  %255 = vst [vmem:[%s247 + $0x18] sm:$0xff] %v254
                  %v256 = vld [vmem:[%s246 + $0x40] sm:$0xff]
                  %257 = vst [vmem:[%s247 + $0x20] sm:$0xff] %v256
                  %v258 = vld [vmem:[%s246 + $0x48] sm:$0xff]
                  %259 = vst [vmem:[%s247 + $0x28] sm:$0xff] %v258
                  %v260 = vld [vmem:[%s246 + $0x60] sm:$0xff]
                  %261 = vst [vmem:[%s247 + $0x30] sm:$0xff] %v260
                  %v262 = vld [vmem:[%s246 + $0x68] sm:$0xff]
                  %263 = vst [vmem:[%s247 + $0x38] sm:$0xff] %v262
                  %v264 = vld [vmem:[%s246 + $0x80] sm:$0xff]
                  %265 = vst [vmem:[%s247 + $0x40] sm:$0xff] %v264
                  %v266 = vld [vmem:[%s246 + $0x88] sm:$0xff]
                  %267 = vst [vmem:[%s247 + $0x48] sm:$0xff] %v266
                  %v268 = vld [vmem:[%s246 + $0xa0] sm:$0xff]
                  %269 = vst [vmem:[%s247 + $0x50] sm:$0xff] %v268
                  %v270 = vld [vmem:[%s246 + $0xa8] sm:$0xff]
                  %271 = vst [vmem:[%s247 + $0x58] sm:$0xff] %v270
                $region64: #{one_model_forward.89} parent=58 // loop_footer
                  %s245 = sadd.s32 1, %s241
                $region65: #{one_model_forward.89} parent=58 // loop_footer_branch
                  %240 = sbr.rel target = $region61
                $region66: #{one_model_forward.89} parent=58 // loop_exit
                  _
              $region59: #{one_model_forward.89} parent=43 // pred_fallthru
                _
              // Predicated region
              $region67: #{one_model_forward.89} parent=43 // pred_check
                _
              $region68: #{one_model_forward.89} parent=43 // pred_check_branch
                %273 = sbr.rel target = $region70
              $region69: #{one_model_forward.89} parent=43 // pred_region
                _
              $region70: #{one_model_forward.89} parent=43 // pred_fallthru
                _
            $region44: #{one_model_forward.89} parent=39 // pred_fallthru
              _
            // Predicated region
            $region45: #{one_model_forward.89} parent=39 // pred_check
              _
            $region46: #{one_model_forward.89} parent=39 // pred_check_branch
              %203 = sbr.rel target = $region48
            $region47: #{one_model_forward.89} parent=39 // pred_region
              %s205 = ssub.s32 256, 1
              loop: start=0, step=1, limit=1
              $region49: #{one_model_forward.89} parent=47 // loop_pre_header
                _
              $region50: #{one_model_forward.89} parent=47 // loop_header
                %s207 = sphi 0, %s211
                %p208 = scmp.ge.s32.totalorder %s207, 1
                %s212 = sphi %s197, %s197
                %s213 = sphi %s194, %s194
              $region51: #{one_model_forward.89} parent=47 // loop_header_branch
                %210 = sbr.rel (%p208) target = $region55
              $region52: #{one_model_forward.89} parent=47 // loop_body
                %v214 = vld [vmem:[%s212] sm:%s205]
                %215 = vst [vmem:[%s213] sm:%s205] %v214
                %v216 = vld [vmem:[%s212 + $0x8] sm:%s205]
                %217 = vst [vmem:[%s213 + $0x8] sm:%s205] %v216
                %v218 = vld [vmem:[%s212 + $0x20] sm:%s205]
                %219 = vst [vmem:[%s213 + $0x10] sm:%s205] %v218
                %v220 = vld [vmem:[%s212 + $0x28] sm:%s205]
                %221 = vst [vmem:[%s213 + $0x18] sm:%s205] %v220
                %v222 = vld [vmem:[%s212 + $0x40] sm:%s205]
                %223 = vst [vmem:[%s213 + $0x20] sm:%s205] %v222
                %v224 = vld [vmem:[%s212 + $0x48] sm:%s205]
                %225 = vst [vmem:[%s213 + $0x28] sm:%s205] %v224
                %v226 = vld [vmem:[%s212 + $0x60] sm:%s205]
                %227 = vst [vmem:[%s213 + $0x30] sm:%s205] %v226
                %v228 = vld [vmem:[%s212 + $0x68] sm:%s205]
                %229 = vst [vmem:[%s213 + $0x38] sm:%s205] %v228
                %v230 = vld [vmem:[%s212 + $0x80] sm:%s205]
                %231 = vst [vmem:[%s213 + $0x40] sm:%s205] %v230
                %v232 = vld [vmem:[%s212 + $0x88] sm:%s205]
                %233 = vst [vmem:[%s213 + $0x48] sm:%s205] %v232
                %v234 = vld [vmem:[%s212 + $0xa0] sm:%s205]
                %235 = vst [vmem:[%s213 + $0x50] sm:%s205] %v234
                %v236 = vld [vmem:[%s212 + $0xa8] sm:%s205]
                %237 = vst [vmem:[%s213 + $0x58] sm:%s205] %v236
              $region53: #{one_model_forward.89} parent=47 // loop_footer
                %s211 = sadd.s32 1, %s207
              $region54: #{one_model_forward.89} parent=47 // loop_footer_branch
                %206 = sbr.rel target = $region50
              $region55: #{one_model_forward.89} parent=47 // loop_exit
                _
            $region48: #{one_model_forward.89} parent=39 // pred_fallthru
              _
          $region40: #{one_model_forward.89} parent=35 // pred_fallthru
            _
          %274 = vnop
        $region36: #{one_model_forward.89} parent=27 // pred_fallthru
          _
      $region28: #{one_model_forward.89} parent=5 // pred_fallthru
        _
      %p275 = scmp.le.s32.totalorder 1, %s11
      %p276 = scmp.lt.s32.totalorder %s11, 3
      %p277 = pnand %p275, %p276
      %p278 = pneg %p277
      // Predicated region
      $region71: #{one_model_forward.89} parent=5 // pred_check
        _
      $region72: #{one_model_forward.89} parent=5 // pred_check_branch
        %280 = sbr.rel (%p277) target = $region74
      $region73: #{one_model_forward.89} parent=5 // pred_region
        %s281 = ssub.s32 %s11, 1
        %s282 = sand.u32 %s50, 1
        %s283 = sand.u32 %s50, 1
        %s284 = smul.addr %s283, 96
        %s285 = scalar_lea.vmem [#allocation2], %s284
        // Predicated region
        $region75: #{one_model_forward.89} parent=73 // pred_check
          %p286 = pneg %p63
        $region76: #{one_model_forward.89} parent=73 // pred_check_branch
          %288 = sbr.rel (%p286) target = $region78
        $region77: #{one_model_forward.89} parent=73 // pred_region
          _
        $region78: #{one_model_forward.89} parent=73 // pred_fallthru
          _
        %p289 = scmp.lt.s32.totalorder %s16, 1
        %s290 = scalar_select %p289, %s16, 1
        %s291 = smul.addr %s290, 8
        %s292 = smul.addr %s291, 8
        %s293 = scalar_lea.vmem %s0, %s292
        %p294 = pneg %p37
        %p295 = pneg %p34
        %s296 = sand.u32 %s50, 1
        %s297 = sand.u32 %s50, 1
        %s298 = smul.addr %s297, 96
        %s299 = scalar_lea.vmem [#allocation2], %s298
        %p300 = pneg %p63
        %p301 = pneg %p60
        %p302 = pneg %p84
        %p303 = pneg %p81
        %p304 = pneg %p105
        %p305 = pneg %p102
        %p306 = pneg %p126
        %p307 = pneg %p123
        %p308 = pneg %p152
        %p309 = pneg %p149
        %p310 = scmp.lt.s32.totalorder %s16, 1
        %s311 = scalar_select %p310, %s16, 1
        %s312 = smul.addr %s311, 8
        %s313 = smul.addr %s312, 4
        %s314 = scalar_lea.vmem %s5, %s313
        %p315 = scmp.lt.s32.totalorder %s16, 1
        %s316 = scalar_select %p315, %s16, 1
        %s317 = smul.addr %s316, 8
        %s318 = smul.addr %s317, 8
        %s319 = scalar_lea.vmem %s0, %s318
        %p320 = scmp.lt.s32.totalorder %s16, 1
        %s321 = scalar_select %p320, %s16, 1
        %s322 = smul.addr %s321, 8
        %s323 = smul.addr %s322, 4
        %s324 = scalar_lea.vmem %s5, %s323
        %v325 = vld [vmem:[%s319] sm:$0xff]
        %v326 = vld [vmem:[%s319 + $0x8] sm:$0xff]
        %v327 = vld [vmem:[%s319 + $0x10] sm:$0xff]
        %v328 = vld [vmem:[%s319 + $0x18] sm:$0xff]
        %v329 = vld [vmem:[%s319 + $0x20] sm:$0xff]
        %v330 = vld [vmem:[%s319 + $0x28] sm:$0xff]
        %v331 = vld [vmem:[%s319 + $0x30] sm:$0xff]
        %v332 = vld [vmem:[%s319 + $0x38] sm:$0xff]
        %v333 = vld [vmem:[%s3] sm:$0x1]
        %v334 = vld [vmem:[%s4] sm:$0x1]
        %v335 = vld [vmem:[%s2] sm:$0xff]
        %v336 = vld [vmem:[%s2 + $0x8] sm:$0xff]
        %v337 = vld [vmem:[%s2 + $0x10] sm:$0xff]
        %v338 = vld [vmem:[%s2 + $0x18] sm:$0xff]
        %v339 = vld [vmem:[%s2 + $0x20] sm:$0xff]
        %v340 = vld [vmem:[%s2 + $0x28] sm:$0xff]
        %v341 = vld [vmem:[%s2 + $0x30] sm:$0xff]
        %v342 = vld [vmem:[%s2 + $0x38] sm:$0xff]
        %v343 = vld [vmem:[%s285] sm:$0xff]
        %v344 = vld [vmem:[%s285 + $0x8] sm:$0x1]
        %vm345 = vcmask 72704
        %v347 = vsel %vm345, %v335, 0
        %v350 = vsel %vm345, %v336, 0
        %v353 = vsel %vm345, %v337, 0
        %v356 = vsel %vm345, %v338, 0
        %v359 = vsel %vm345, %v339, 0
        %v362 = vsel %vm345, %v340, 0
        %v365 = vsel %vm345, %v341, 0
        %v368 = vsel %vm345, %v342, 0
        %vm370 = vcmask 1040384
        %v372 = vsel %vm370, %v344, 0
        %374 = vmatprep.subr.mxu0 0.0
        %375 = vmatpush1.msra.mxu0 0.0
        %376 = vmatprep.subr.mxu0 0.0
        %377 = vmatpush1.msra.mxu0 0.0
        %378 = vmatprep.subr.mxu0 0.0
        %379 = vmatpush1.msra.mxu0 0.0
        %380 = vmatprep.subr.mxu0 0.0
        %381 = vmatpush1.msra.mxu0 0.0
        %382 = vmatprep.subr.mxu0 0.0
        %383 = vmatpush1.msra.mxu0 0.0
        %384 = vmatprep.subr.mxu0 0.0
        %385 = vmatpush1.msra.mxu0 0.0
        %386 = vmatprep.subr.mxu0 0.0
        %387 = vmatpush1.msra.mxu0 0.0
        %388 = vmatprep.subr.mxu0 0.0
        %389 = vmatpush1.msra.mxu0 0.0
        %390 = vmatprep.subr.mxu0 0.0
        %391 = vmatpush1.msra.mxu0 0.0
        %392 = vmatprep.subr.mxu0 0.0
        %393 = vmatpush1.msra.mxu0 0.0
        %394 = vmatprep.subr.mxu0 0.0
        %395 = vmatpush1.msra.mxu0 0.0
        %396 = vmatprep.subr.mxu0 0.0
        %397 = vmatpush1.msra.mxu0 0.0
        %398 = vmatprep.subr.mxu0 0.0
        %399 = vmatpush1.msra.mxu0 0.0
        %400 = vmatprep.subr.mxu0 0.0
        %401 = vmatpush1.msra.mxu0 0.0
        %402 = vmatprep.subr.mxu0 0.0
        %403 = vmatpush1.msra.mxu0 %v372
        %404 = vmatprep.subr.mxu0 0.0
        %405 = vmatpush1.msra.mxu0 %v343
        %406 = vmatprep.subr.mxu0 0.0
        %407 = vmatpush2.msra.mxu0 0.0
        %408 = vmatprep.subr.mxu0 0.0
        %409 = vmatpush2.msra.mxu0 0.0
        %410 = vmatprep.subr.mxu0 0.0
        %411 = vmatpush2.msra.mxu0 0.0
        %412 = vmatprep.subr.mxu0 0.0
        %413 = vmatpush2.msra.mxu0 0.0
        %414 = vmatprep.subr.mxu0 0.0
        %415 = vmatpush2.msra.mxu0 0.0
        %416 = vmatprep.subr.mxu0 0.0
        %417 = vmatpush2.msra.mxu0 0.0
        %418 = vmatprep.subr.mxu0 0.0
        %419 = vmatpush2.msra.mxu0 0.0
        %420 = vmatprep.subr.mxu0 0.0
        %421 = vmatpush2.msra.mxu0 0.0
        %422 = vmatprep.subr.mxu0 0.0
        %423 = vmatpush2.msra.mxu0 0.0
        %424 = vmatprep.subr.mxu0 0.0
        %425 = vmatpush2.msra.mxu0 0.0
        %426 = vmatprep.subr.mxu0 0.0
        %427 = vmatpush2.msra.mxu0 0.0
        %428 = vmatprep.subr.mxu0 0.0
        %429 = vmatpush2.msra.mxu0 0.0
        %430 = vmatprep.subr.mxu0 0.0
        %431 = vmatpush2.msra.mxu0 0.0
        %432 = vmatprep.subr.mxu0 0.0
        %433 = vmatpush2.msra.mxu0 0.0
        %434 = vmatprep.subr.mxu0 0.0
        %435 = vmatpush2.msra.mxu0 0.0
        %436 = vmatprep.subr.mxu0 0.0
        %437 = vmatpush2.msra.mxu0 0.0
        %438 = vmatprep.mubr.f32.mxu0 0.0
        %439 = vmatmul.mubr.f32.gmra.mxu0 %v347
        %v440 = vpop.f32.mrf.mxu0
        %v441 = vadd.f32 0.0, %v440
        %v442 = vpop.f32.mrf.mxu0
        %443 = vmatprep.mubr.f32.mxu0 0.0
        %444 = vmatmul.mubr.f32.gmra.mxu0 %v350
        %v445 = vpop.f32.mrf.mxu0
        %v446 = vadd.f32 0.0, %v445
        %v447 = vpop.f32.mrf.mxu0
        %448 = vmatprep.mubr.f32.mxu0 0.0
        %449 = vmatmul.mubr.f32.gmra.mxu0 %v353
        %v450 = vpop.f32.mrf.mxu0
        %v451 = vadd.f32 0.0, %v450
        %v452 = vpop.f32.mrf.mxu0
        %453 = vmatprep.mubr.f32.mxu0 0.0
        %454 = vmatmul.mubr.f32.gmra.mxu0 %v356
        %v455 = vpop.f32.mrf.mxu0
        %v456 = vadd.f32 0.0, %v455
        %v457 = vpop.f32.mrf.mxu0
        %458 = vmatprep.mubr.f32.mxu0 0.0
        %459 = vmatmul.mubr.f32.gmra.mxu0 %v359
        %v460 = vpop.f32.mrf.mxu0
        %v461 = vadd.f32 0.0, %v460
        %v462 = vpop.f32.mrf.mxu0
        %463 = vmatprep.mubr.f32.mxu0 0.0
        %464 = vmatmul.mubr.f32.gmra.mxu0 %v362
        %v465 = vpop.f32.mrf.mxu0
        %v466 = vadd.f32 0.0, %v465
        %v467 = vpop.f32.mrf.mxu0
        %468 = vmatprep.mubr.f32.mxu0 0.0
        %469 = vmatmul.mubr.f32.gmra.mxu0 %v365
        %v470 = vpop.f32.mrf.mxu0
        %v471 = vadd.f32 0.0, %v470
        %v472 = vpop.f32.mrf.mxu0
        %473 = vmatprep.mubr.f32.mxu0 0.0
        %474 = vmatmul.mubr.f32.gmra.mxu0 %v368
        %v475 = vpop.f32.mrf.mxu0
        %v476 = vadd.f32 0.0, %v475
        %v477 = vpop.f32.mrf.mxu0
        %478 = vdwg.mxu0
        %v479 = vadd.f32 %v325, %v441
        %v480 = vadd.f32 %v326, %v446
        %v481 = vadd.f32 %v327, %v451
        %v482 = vadd.f32 %v328, %v456
        %v483 = vadd.f32 %v329, %v461
        %v484 = vadd.f32 %v330, %v466
        %v485 = vadd.f32 %v331, %v471
        %v486 = vadd.f32 %v332, %v476
        %v488 = vlaneseq
        %v489 = vshrl.u32 %v488, 7
        %v490 = vsub.s32 0, %v489
        %v491 = vrot.slane %v333, %v490
        %v493 = vmul.f32 %v479, %v491
        %v494 = vmul.f32 %v480, %v491
        %v495 = vmul.f32 %v481, %v491
        %v496 = vmul.f32 %v482, %v491
        %v497 = vmul.f32 %v483, %v491
        %v498 = vmul.f32 %v484, %v491
        %v499 = vmul.f32 %v485, %v491
        %v500 = vmul.f32 %v486, %v491
        %v502 = vlaneseq
        %v503 = vshrl.u32 %v502, 7
        %v504 = vsub.s32 0, %v503
        %v505 = vrot.slane %v334, %v504
        %v507 = vadd.f32 %v493, %v505
        %v508 = vadd.f32 %v494, %v505
        %v509 = vadd.f32 %v495, %v505
        %v510 = vadd.f32 %v496, %v505
        %v511 = vadd.f32 %v497, %v505
        %v512 = vadd.f32 %v498, %v505
        %v513 = vadd.f32 %v499, %v505
        %v514 = vadd.f32 %v500, %v505
        %v515 = vmax.f32 %v507, 0.0
        %v516 = vmax.f32 %v508, 0.0
        %v517 = vmax.f32 %v509, 0.0
        %v518 = vmax.f32 %v510, 0.0
        %v519 = vmax.f32 %v511, 0.0
        %v520 = vmax.f32 %v512, 0.0
        %v521 = vmax.f32 %v513, 0.0
        %v522 = vmax.f32 %v514, 0.0
        %v523 = vadd.f32 %v515, 0.0
        %v524 = vadd.f32 %v516, 0.0
        %v525 = vadd.f32 %v517, 0.0
        %v526 = vadd.f32 %v518, 0.0
        %v527 = vadd.f32 %v519, 0.0
        %v528 = vadd.f32 %v520, 0.0
        %v529 = vadd.f32 %v521, 0.0
        %v530 = vadd.f32 %v522, 0.0
        %s531 = scalar_lea.vmem %s285, 16 [#allocation2]
        %v532 = vld [vmem:[%s531] sm:$0xff]
        %v533 = vld [vmem:[%s531 + $0x8] sm:$0x1]
        %v535 = vsel %vm370, %v533, 0
        %537 = vmatprep.subr.mxu0 0.0
        %538 = vmatpush1.msra.mxu0 0.0
        %539 = vmatprep.subr.mxu0 0.0
        %540 = vmatpush1.msra.mxu0 0.0
        %541 = vmatprep.subr.mxu0 0.0
        %542 = vmatpush1.msra.mxu0 0.0
        %543 = vmatprep.subr.mxu0 0.0
        %544 = vmatpush1.msra.mxu0 0.0
        %545 = vmatprep.subr.mxu0 0.0
        %546 = vmatpush1.msra.mxu0 0.0
        %547 = vmatprep.subr.mxu0 0.0
        %548 = vmatpush1.msra.mxu0 0.0
        %549 = vmatprep.subr.mxu0 0.0
        %550 = vmatpush1.msra.mxu0 0.0
        %551 = vmatprep.subr.mxu0 0.0
        %552 = vmatpush1.msra.mxu0 0.0
        %553 = vmatprep.subr.mxu0 0.0
        %554 = vmatpush1.msra.mxu0 0.0
        %555 = vmatprep.subr.mxu0 0.0
        %556 = vmatpush1.msra.mxu0 0.0
        %557 = vmatprep.subr.mxu0 0.0
        %558 = vmatpush1.msra.mxu0 0.0
        %559 = vmatprep.subr.mxu0 0.0
        %560 = vmatpush1.msra.mxu0 0.0
        %561 = vmatprep.subr.mxu0 0.0
        %562 = vmatpush1.msra.mxu0 0.0
        %563 = vmatprep.subr.mxu0 0.0
        %564 = vmatpush1.msra.mxu0 0.0
        %565 = vmatprep.subr.mxu0 0.0
        %566 = vmatpush1.msra.mxu0 %v535
        %567 = vmatprep.subr.mxu0 0.0
        %568 = vmatpush1.msra.mxu0 %v532
        %569 = vmatprep.subr.mxu0 0.0
        %570 = vmatpush2.msra.mxu0 0.0
        %571 = vmatprep.subr.mxu0 0.0
        %572 = vmatpush2.msra.mxu0 0.0
        %573 = vmatprep.subr.mxu0 0.0
        %574 = vmatpush2.msra.mxu0 0.0
        %575 = vmatprep.subr.mxu0 0.0
        %576 = vmatpush2.msra.mxu0 0.0
        %577 = vmatprep.subr.mxu0 0.0
        %578 = vmatpush2.msra.mxu0 0.0
        %579 = vmatprep.subr.mxu0 0.0
        %580 = vmatpush2.msra.mxu0 0.0
        %581 = vmatprep.subr.mxu0 0.0
        %582 = vmatpush2.msra.mxu0 0.0
        %583 = vmatprep.subr.mxu0 0.0
        %584 = vmatpush2.msra.mxu0 0.0
        %585 = vmatprep.subr.mxu0 0.0
        %586 = vmatpush2.msra.mxu0 0.0
        %587 = vmatprep.subr.mxu0 0.0
        %588 = vmatpush2.msra.mxu0 0.0
        %589 = vmatprep.subr.mxu0 0.0
        %590 = vmatpush2.msra.mxu0 0.0
        %591 = vmatprep.subr.mxu0 0.0
        %592 = vmatpush2.msra.mxu0 0.0
        %593 = vmatprep.subr.mxu0 0.0
        %594 = vmatpush2.msra.mxu0 0.0
        %595 = vmatprep.subr.mxu0 0.0
        %596 = vmatpush2.msra.mxu0 0.0
        %597 = vmatprep.subr.mxu0 0.0
        %598 = vmatpush2.msra.mxu0 0.0
        %599 = vmatprep.subr.mxu0 0.0
        %600 = vmatpush2.msra.mxu0 0.0
        %601 = vmatprep.mubr.f32.mxu0 0.0
        %602 = vmatmul.mubr.f32.gmra.mxu0 %v347
        %v603 = vpop.f32.mrf.mxu0
        %v604 = vadd.f32 0.0, %v603
        %v605 = vpop.f32.mrf.mxu0
        %606 = vmatprep.mubr.f32.mxu0 0.0
        %607 = vmatmul.mubr.f32.gmra.mxu0 %v350
        %v608 = vpop.f32.mrf.mxu0
        %v609 = vadd.f32 0.0, %v608
        %v610 = vpop.f32.mrf.mxu0
        %611 = vmatprep.mubr.f32.mxu0 0.0
        %612 = vmatmul.mubr.f32.gmra.mxu0 %v353
        %v613 = vpop.f32.mrf.mxu0
        %v614 = vadd.f32 0.0, %v613
        %v615 = vpop.f32.mrf.mxu0
        %616 = vmatprep.mubr.f32.mxu0 0.0
        %617 = vmatmul.mubr.f32.gmra.mxu0 %v356
        %v618 = vpop.f32.mrf.mxu0
        %v619 = vadd.f32 0.0, %v618
        %v620 = vpop.f32.mrf.mxu0
        %621 = vmatprep.mubr.f32.mxu0 0.0
        %622 = vmatmul.mubr.f32.gmra.mxu0 %v359
        %v623 = vpop.f32.mrf.mxu0
        %v624 = vadd.f32 0.0, %v623
        %v625 = vpop.f32.mrf.mxu0
        %626 = vmatprep.mubr.f32.mxu0 0.0
        %627 = vmatmul.mubr.f32.gmra.mxu0 %v362
        %v628 = vpop.f32.mrf.mxu0
        %v629 = vadd.f32 0.0, %v628
        %v630 = vpop.f32.mrf.mxu0
        %631 = vmatprep.mubr.f32.mxu0 0.0
        %632 = vmatmul.mubr.f32.gmra.mxu0 %v365
        %v633 = vpop.f32.mrf.mxu0
        %v634 = vadd.f32 0.0, %v633
        %v635 = vpop.f32.mrf.mxu0
        %636 = vmatprep.mubr.f32.mxu0 0.0
        %637 = vmatmul.mubr.f32.gmra.mxu0 %v368
        %v638 = vpop.f32.mrf.mxu0
        %v639 = vadd.f32 0.0, %v638
        %v640 = vpop.f32.mrf.mxu0
        %641 = vdwg.mxu0
        %v642 = vadd.f32 %v325, %v604
        %v643 = vadd.f32 %v326, %v609
        %v644 = vadd.f32 %v327, %v614
        %v645 = vadd.f32 %v328, %v619
        %v646 = vadd.f32 %v329, %v624
        %v647 = vadd.f32 %v330, %v629
        %v648 = vadd.f32 %v331, %v634
        %v649 = vadd.f32 %v332, %v639
        %v650 = vmul.f32 %v642, %v491
        %v651 = vmul.f32 %v643, %v491
        %v652 = vmul.f32 %v644, %v491
        %v653 = vmul.f32 %v645, %v491
        %v654 = vmul.f32 %v646, %v491
        %v655 = vmul.f32 %v647, %v491
        %v656 = vmul.f32 %v648, %v491
        %v657 = vmul.f32 %v649, %v491
        %v658 = vadd.f32 %v650, %v505
        %v659 = vadd.f32 %v651, %v505
        %v660 = vadd.f32 %v652, %v505
        %v661 = vadd.f32 %v653, %v505
        %v662 = vadd.f32 %v654, %v505
        %v663 = vadd.f32 %v655, %v505
        %v664 = vadd.f32 %v656, %v505
        %v665 = vadd.f32 %v657, %v505
        %v666 = vmax.f32 %v658, 0.0
        %v667 = vmax.f32 %v659, 0.0
        %v668 = vmax.f32 %v660, 0.0
        %v669 = vmax.f32 %v661, 0.0
        %v670 = vmax.f32 %v662, 0.0
        %v671 = vmax.f32 %v663, 0.0
        %v672 = vmax.f32 %v664, 0.0
        %v673 = vmax.f32 %v665, 0.0
        %v674 = vadd.f32 %v523, %v666
        %v675 = vadd.f32 %v524, %v667
        %v676 = vadd.f32 %v525, %v668
        %v677 = vadd.f32 %v526, %v669
        %v678 = vadd.f32 %v527, %v670
        %v679 = vadd.f32 %v528, %v671
        %v680 = vadd.f32 %v529, %v672
        %v681 = vadd.f32 %v530, %v673
        %s682 = scalar_lea.vmem %s285, 32 [#allocation2]
        %v683 = vld [vmem:[%s682] sm:$0xff]
        %v684 = vld [vmem:[%s682 + $0x8] sm:$0x1]
        %v686 = vsel %vm370, %v684, 0
        %688 = vmatprep.subr.mxu0 0.0
        %689 = vmatpush1.msra.mxu0 0.0
        %690 = vmatprep.subr.mxu0 0.0
        %691 = vmatpush1.msra.mxu0 0.0
        %692 = vmatprep.subr.mxu0 0.0
        %693 = vmatpush1.msra.mxu0 0.0
        %694 = vmatprep.subr.mxu0 0.0
        %695 = vmatpush1.msra.mxu0 0.0
        %696 = vmatprep.subr.mxu0 0.0
        %697 = vmatpush1.msra.mxu0 0.0
        %698 = vmatprep.subr.mxu0 0.0
        %699 = vmatpush1.msra.mxu0 0.0
        %700 = vmatprep.subr.mxu0 0.0
        %701 = vmatpush1.msra.mxu0 0.0
        %702 = vmatprep.subr.mxu0 0.0
        %703 = vmatpush1.msra.mxu0 0.0
        %704 = vmatprep.subr.mxu0 0.0
        %705 = vmatpush1.msra.mxu0 0.0
        %706 = vmatprep.subr.mxu0 0.0
        %707 = vmatpush1.msra.mxu0 0.0
        %708 = vmatprep.subr.mxu0 0.0
        %709 = vmatpush1.msra.mxu0 0.0
        %710 = vmatprep.subr.mxu0 0.0
        %711 = vmatpush1.msra.mxu0 0.0
        %712 = vmatprep.subr.mxu0 0.0
        %713 = vmatpush1.msra.mxu0 0.0
        %714 = vmatprep.subr.mxu0 0.0
        %715 = vmatpush1.msra.mxu0 0.0
        %716 = vmatprep.subr.mxu0 0.0
        %717 = vmatpush1.msra.mxu0 %v686
        %718 = vmatprep.subr.mxu0 0.0
        %719 = vmatpush1.msra.mxu0 %v683
        %720 = vmatprep.subr.mxu0 0.0
        %721 = vmatpush2.msra.mxu0 0.0
        %722 = vmatprep.subr.mxu0 0.0
        %723 = vmatpush2.msra.mxu0 0.0
        %724 = vmatprep.subr.mxu0 0.0
        %725 = vmatpush2.msra.mxu0 0.0
        %726 = vmatprep.subr.mxu0 0.0
        %727 = vmatpush2.msra.mxu0 0.0
        %728 = vmatprep.subr.mxu0 0.0
        %729 = vmatpush2.msra.mxu0 0.0
        %730 = vmatprep.subr.mxu0 0.0
        %731 = vmatpush2.msra.mxu0 0.0
        %732 = vmatprep.subr.mxu0 0.0
        %733 = vmatpush2.msra.mxu0 0.0
        %734 = vmatprep.subr.mxu0 0.0
        %735 = vmatpush2.msra.mxu0 0.0
        %736 = vmatprep.subr.mxu0 0.0
        %737 = vmatpush2.msra.mxu0 0.0
        %738 = vmatprep.subr.mxu0 0.0
        %739 = vmatpush2.msra.mxu0 0.0
        %740 = vmatprep.subr.mxu0 0.0
        %741 = vmatpush2.msra.mxu0 0.0
        %742 = vmatprep.subr.mxu0 0.0
        %743 = vmatpush2.msra.mxu0 0.0
        %744 = vmatprep.subr.mxu0 0.0
        %745 = vmatpush2.msra.mxu0 0.0
        %746 = vmatprep.subr.mxu0 0.0
        %747 = vmatpush2.msra.mxu0 0.0
        %748 = vmatprep.subr.mxu0 0.0
        %749 = vmatpush2.msra.mxu0 0.0
        %750 = vmatprep.subr.mxu0 0.0
        %751 = vmatpush2.msra.mxu0 0.0
        %752 = vmatprep.mubr.f32.mxu0 0.0
        %753 = vmatmul.mubr.f32.gmra.mxu0 %v347
        %v754 = vpop.f32.mrf.mxu0
        %v755 = vadd.f32 0.0, %v754
        %v756 = vpop.f32.mrf.mxu0
        %757 = vmatprep.mubr.f32.mxu0 0.0
        %758 = vmatmul.mubr.f32.gmra.mxu0 %v350
        %v759 = vpop.f32.mrf.mxu0
        %v760 = vadd.f32 0.0, %v759
        %v761 = vpop.f32.mrf.mxu0
        %762 = vmatprep.mubr.f32.mxu0 0.0
        %763 = vmatmul.mubr.f32.gmra.mxu0 %v353
        %v764 = vpop.f32.mrf.mxu0
        %v765 = vadd.f32 0.0, %v764
        %v766 = vpop.f32.mrf.mxu0
        %767 = vmatprep.mubr.f32.mxu0 0.0
        %768 = vmatmul.mubr.f32.gmra.mxu0 %v356
        %v769 = vpop.f32.mrf.mxu0
        %v770 = vadd.f32 0.0, %v769
        %v771 = vpop.f32.mrf.mxu0
        %772 = vmatprep.mubr.f32.mxu0 0.0
        %773 = vmatmul.mubr.f32.gmra.mxu0 %v359
        %v774 = vpop.f32.mrf.mxu0
        %v775 = vadd.f32 0.0, %v774
        %v776 = vpop.f32.mrf.mxu0
        %777 = vmatprep.mubr.f32.mxu0 0.0
        %778 = vmatmul.mubr.f32.gmra.mxu0 %v362
        %v779 = vpop.f32.mrf.mxu0
        %v780 = vadd.f32 0.0, %v779
        %v781 = vpop.f32.mrf.mxu0
        %782 = vmatprep.mubr.f32.mxu0 0.0
        %783 = vmatmul.mubr.f32.gmra.mxu0 %v365
        %v784 = vpop.f32.mrf.mxu0
        %v785 = vadd.f32 0.0, %v784
        %v786 = vpop.f32.mrf.mxu0
        %787 = vmatprep.mubr.f32.mxu0 0.0
        %788 = vmatmul.mubr.f32.gmra.mxu0 %v368
        %v789 = vpop.f32.mrf.mxu0
        %v790 = vadd.f32 0.0, %v789
        %v791 = vpop.f32.mrf.mxu0
        %792 = vdwg.mxu0
        %v793 = vadd.f32 %v325, %v755
        %v794 = vadd.f32 %v326, %v760
        %v795 = vadd.f32 %v327, %v765
        %v796 = vadd.f32 %v328, %v770
        %v797 = vadd.f32 %v329, %v775
        %v798 = vadd.f32 %v330, %v780
        %v799 = vadd.f32 %v331, %v785
        %v800 = vadd.f32 %v332, %v790
        %v801 = vmul.f32 %v793, %v491
        %v802 = vmul.f32 %v794, %v491
        %v803 = vmul.f32 %v795, %v491
        %v804 = vmul.f32 %v796, %v491
        %v805 = vmul.f32 %v797, %v491
        %v806 = vmul.f32 %v798, %v491
        %v807 = vmul.f32 %v799, %v491
        %v808 = vmul.f32 %v800, %v491
        %v809 = vadd.f32 %v801, %v505
        %v810 = vadd.f32 %v802, %v505
        %v811 = vadd.f32 %v803, %v505
        %v812 = vadd.f32 %v804, %v505
        %v813 = vadd.f32 %v805, %v505
        %v814 = vadd.f32 %v806, %v505
        %v815 = vadd.f32 %v807, %v505
        %v816 = vadd.f32 %v808, %v505
        %v817 = vmax.f32 %v809, 0.0
        %v818 = vmax.f32 %v810, 0.0
        %v819 = vmax.f32 %v811, 0.0
        %v820 = vmax.f32 %v812, 0.0
        %v821 = vmax.f32 %v813, 0.0
        %v822 = vmax.f32 %v814, 0.0
        %v823 = vmax.f32 %v815, 0.0
        %v824 = vmax.f32 %v816, 0.0
        %v825 = vadd.f32 %v674, %v817
        %v826 = vadd.f32 %v675, %v818
        %v827 = vadd.f32 %v676, %v819
        %v828 = vadd.f32 %v677, %v820
        %v829 = vadd.f32 %v678, %v821
        %v830 = vadd.f32 %v679, %v822
        %v831 = vadd.f32 %v680, %v823
        %v832 = vadd.f32 %v681, %v824
        %s833 = scalar_lea.vmem %s285, 48 [#allocation2]
        %v834 = vld [vmem:[%s833] sm:$0xff]
        %v835 = vld [vmem:[%s833 + $0x8] sm:$0x1]
        %v837 = vsel %vm370, %v835, 0
        %839 = vmatprep.subr.mxu0 0.0
        %840 = vmatpush1.msra.mxu0 0.0
        %841 = vmatprep.subr.mxu0 0.0
        %842 = vmatpush1.msra.mxu0 0.0
        %843 = vmatprep.subr.mxu0 0.0
        %844 = vmatpush1.msra.mxu0 0.0
        %845 = vmatprep.subr.mxu0 0.0
        %846 = vmatpush1.msra.mxu0 0.0
        %847 = vmatprep.subr.mxu0 0.0
        %848 = vmatpush1.msra.mxu0 0.0
        %849 = vmatprep.subr.mxu0 0.0
        %850 = vmatpush1.msra.mxu0 0.0
        %851 = vmatprep.subr.mxu0 0.0
        %852 = vmatpush1.msra.mxu0 0.0
        %853 = vmatprep.subr.mxu0 0.0
        %854 = vmatpush1.msra.mxu0 0.0
        %855 = vmatprep.subr.mxu0 0.0
        %856 = vmatpush1.msra.mxu0 0.0
        %857 = vmatprep.subr.mxu0 0.0
        %858 = vmatpush1.msra.mxu0 0.0
        %859 = vmatprep.subr.mxu0 0.0
        %860 = vmatpush1.msra.mxu0 0.0
        %861 = vmatprep.subr.mxu0 0.0
        %862 = vmatpush1.msra.mxu0 0.0
        %863 = vmatprep.subr.mxu0 0.0
        %864 = vmatpush1.msra.mxu0 0.0
        %865 = vmatprep.subr.mxu0 0.0
        %866 = vmatpush1.msra.mxu0 0.0
        %867 = vmatprep.subr.mxu0 0.0
        %868 = vmatpush1.msra.mxu0 %v837
        %869 = vmatprep.subr.mxu0 0.0
        %870 = vmatpush1.msra.mxu0 %v834
        %871 = vmatprep.subr.mxu0 0.0
        %872 = vmatpush2.msra.mxu0 0.0
        %873 = vmatprep.subr.mxu0 0.0
        %874 = vmatpush2.msra.mxu0 0.0
        %875 = vmatprep.subr.mxu0 0.0
        %876 = vmatpush2.msra.mxu0 0.0
        %877 = vmatprep.subr.mxu0 0.0
        %878 = vmatpush2.msra.mxu0 0.0
        %879 = vmatprep.subr.mxu0 0.0
        %880 = vmatpush2.msra.mxu0 0.0
        %881 = vmatprep.subr.mxu0 0.0
        %882 = vmatpush2.msra.mxu0 0.0
        %883 = vmatprep.subr.mxu0 0.0
        %884 = vmatpush2.msra.mxu0 0.0
        %885 = vmatprep.subr.mxu0 0.0
        %886 = vmatpush2.msra.mxu0 0.0
        %887 = vmatprep.subr.mxu0 0.0
        %888 = vmatpush2.msra.mxu0 0.0
        %889 = vmatprep.subr.mxu0 0.0
        %890 = vmatpush2.msra.mxu0 0.0
        %891 = vmatprep.subr.mxu0 0.0
        %892 = vmatpush2.msra.mxu0 0.0
        %893 = vmatprep.subr.mxu0 0.0
        %894 = vmatpush2.msra.mxu0 0.0
        %895 = vmatprep.subr.mxu0 0.0
        %896 = vmatpush2.msra.mxu0 0.0
        %897 = vmatprep.subr.mxu0 0.0
        %898 = vmatpush2.msra.mxu0 0.0
        %899 = vmatprep.subr.mxu0 0.0
        %900 = vmatpush2.msra.mxu0 0.0
        %901 = vmatprep.subr.mxu0 0.0
        %902 = vmatpush2.msra.mxu0 0.0
        %903 = vmatprep.mubr.f32.mxu0 0.0
        %904 = vmatmul.mubr.f32.gmra.mxu0 %v347
        %v905 = vpop.f32.mrf.mxu0
        %v906 = vadd.f32 0.0, %v905
        %v907 = vpop.f32.mrf.mxu0
        %908 = vmatprep.mubr.f32.mxu0 0.0
        %909 = vmatmul.mubr.f32.gmra.mxu0 %v350
        %v910 = vpop.f32.mrf.mxu0
        %v911 = vadd.f32 0.0, %v910
        %v912 = vpop.f32.mrf.mxu0
        %913 = vmatprep.mubr.f32.mxu0 0.0
        %914 = vmatmul.mubr.f32.gmra.mxu0 %v353
        %v915 = vpop.f32.mrf.mxu0
        %v916 = vadd.f32 0.0, %v915
        %v917 = vpop.f32.mrf.mxu0
        %918 = vmatprep.mubr.f32.mxu0 0.0
        %919 = vmatmul.mubr.f32.gmra.mxu0 %v356
        %v920 = vpop.f32.mrf.mxu0
        %v921 = vadd.f32 0.0, %v920
        %v922 = vpop.f32.mrf.mxu0
        %923 = vmatprep.mubr.f32.mxu0 0.0
        %924 = vmatmul.mubr.f32.gmra.mxu0 %v359
        %v925 = vpop.f32.mrf.mxu0
        %v926 = vadd.f32 0.0, %v925
        %v927 = vpop.f32.mrf.mxu0
        %928 = vmatprep.mubr.f32.mxu0 0.0
        %929 = vmatmul.mubr.f32.gmra.mxu0 %v362
        %v930 = vpop.f32.mrf.mxu0
        %v931 = vadd.f32 0.0, %v930
        %v932 = vpop.f32.mrf.mxu0
        %933 = vmatprep.mubr.f32.mxu0 0.0
        %934 = vmatmul.mubr.f32.gmra.mxu0 %v365
        %v935 = vpop.f32.mrf.mxu0
        %v936 = vadd.f32 0.0, %v935
        %v937 = vpop.f32.mrf.mxu0
        %938 = vmatprep.mubr.f32.mxu0 0.0
        %939 = vmatmul.mubr.f32.gmra.mxu0 %v368
        %v940 = vpop.f32.mrf.mxu0
        %v941 = vadd.f32 0.0, %v940
        %v942 = vpop.f32.mrf.mxu0
        %943 = vdwg.mxu0
        %v944 = vadd.f32 %v325, %v906
        %v945 = vadd.f32 %v326, %v911
        %v946 = vadd.f32 %v327, %v916
        %v947 = vadd.f32 %v328, %v921
        %v948 = vadd.f32 %v329, %v926
        %v949 = vadd.f32 %v330, %v931
        %v950 = vadd.f32 %v331, %v936
        %v951 = vadd.f32 %v332, %v941
        %v952 = vmul.f32 %v944, %v491
        %v953 = vmul.f32 %v945, %v491
        %v954 = vmul.f32 %v946, %v491
        %v955 = vmul.f32 %v947, %v491
        %v956 = vmul.f32 %v948, %v491
        %v957 = vmul.f32 %v949, %v491
        %v958 = vmul.f32 %v950, %v491
        %v959 = vmul.f32 %v951, %v491
        %v960 = vadd.f32 %v952, %v505
        %v961 = vadd.f32 %v953, %v505
        %v962 = vadd.f32 %v954, %v505
        %v963 = vadd.f32 %v955, %v505
        %v964 = vadd.f32 %v956, %v505
        %v965 = vadd.f32 %v957, %v505
        %v966 = vadd.f32 %v958, %v505
        %v967 = vadd.f32 %v959, %v505
        %v968 = vmax.f32 %v960, 0.0
        %v969 = vmax.f32 %v961, 0.0
        %v970 = vmax.f32 %v962, 0.0
        %v971 = vmax.f32 %v963, 0.0
        %v972 = vmax.f32 %v964, 0.0
        %v973 = vmax.f32 %v965, 0.0
        %v974 = vmax.f32 %v966, 0.0
        %v975 = vmax.f32 %v967, 0.0
        %v976 = vadd.f32 %v825, %v968
        %v977 = vadd.f32 %v826, %v969
        %v978 = vadd.f32 %v827, %v970
        %v979 = vadd.f32 %v828, %v971
        %v980 = vadd.f32 %v829, %v972
        %v981 = vadd.f32 %v830, %v973
        %v982 = vadd.f32 %v831, %v974
        %v983 = vadd.f32 %v832, %v975
        %s984 = scalar_lea.vmem %s285, 64 [#allocation2]
        %v985 = vld [vmem:[%s984] sm:$0xff]
        %v986 = vld [vmem:[%s984 + $0x8] sm:$0x1]
        %v988 = vsel %vm370, %v986, 0
        %990 = vmatprep.subr.mxu0 0.0
        %991 = vmatpush1.msra.mxu0 0.0
        %992 = vmatprep.subr.mxu0 0.0
        %993 = vmatpush1.msra.mxu0 0.0
        %994 = vmatprep.subr.mxu0 0.0
        %995 = vmatpush1.msra.mxu0 0.0
        %996 = vmatprep.subr.mxu0 0.0
        %997 = vmatpush1.msra.mxu0 0.0
        %998 = vmatprep.subr.mxu0 0.0
        %999 = vmatpush1.msra.mxu0 0.0
        %1000 = vmatprep.subr.mxu0 0.0
        %1001 = vmatpush1.msra.mxu0 0.0
        %1002 = vmatprep.subr.mxu0 0.0
        %1003 = vmatpush1.msra.mxu0 0.0
        %1004 = vmatprep.subr.mxu0 0.0
        %1005 = vmatpush1.msra.mxu0 0.0
        %1006 = vmatprep.subr.mxu0 0.0
        %1007 = vmatpush1.msra.mxu0 0.0
        %1008 = vmatprep.subr.mxu0 0.0
        %1009 = vmatpush1.msra.mxu0 0.0
        %1010 = vmatprep.subr.mxu0 0.0
        %1011 = vmatpush1.msra.mxu0 0.0
        %1012 = vmatprep.subr.mxu0 0.0
        %1013 = vmatpush1.msra.mxu0 0.0
        %1014 = vmatprep.subr.mxu0 0.0
        %1015 = vmatpush1.msra.mxu0 0.0
        %1016 = vmatprep.subr.mxu0 0.0
        %1017 = vmatpush1.msra.mxu0 0.0
        %1018 = vmatprep.subr.mxu0 0.0
        %1019 = vmatpush1.msra.mxu0 %v988
        %1020 = vmatprep.subr.mxu0 0.0
        %1021 = vmatpush1.msra.mxu0 %v985
        %1022 = vmatprep.subr.mxu0 0.0
        %1023 = vmatpush2.msra.mxu0 0.0
        %1024 = vmatprep.subr.mxu0 0.0
        %1025 = vmatpush2.msra.mxu0 0.0
        %1026 = vmatprep.subr.mxu0 0.0
        %1027 = vmatpush2.msra.mxu0 0.0
        %1028 = vmatprep.subr.mxu0 0.0
        %1029 = vmatpush2.msra.mxu0 0.0
        %1030 = vmatprep.subr.mxu0 0.0
        %1031 = vmatpush2.msra.mxu0 0.0
        %1032 = vmatprep.subr.mxu0 0.0
        %1033 = vmatpush2.msra.mxu0 0.0
        %1034 = vmatprep.subr.mxu0 0.0
        %1035 = vmatpush2.msra.mxu0 0.0
        %1036 = vmatprep.subr.mxu0 0.0
        %1037 = vmatpush2.msra.mxu0 0.0
        %1038 = vmatprep.subr.mxu0 0.0
        %1039 = vmatpush2.msra.mxu0 0.0
        %1040 = vmatprep.subr.mxu0 0.0
        %1041 = vmatpush2.msra.mxu0 0.0
        %1042 = vmatprep.subr.mxu0 0.0
        %1043 = vmatpush2.msra.mxu0 0.0
        %1044 = vmatprep.subr.mxu0 0.0
        %1045 = vmatpush2.msra.mxu0 0.0
        %1046 = vmatprep.subr.mxu0 0.0
        %1047 = vmatpush2.msra.mxu0 0.0
        %1048 = vmatprep.subr.mxu0 0.0
        %1049 = vmatpush2.msra.mxu0 0.0
        %1050 = vmatprep.subr.mxu0 0.0
        %1051 = vmatpush2.msra.mxu0 0.0
        %1052 = vmatprep.subr.mxu0 0.0
        %1053 = vmatpush2.msra.mxu0 0.0
        %1054 = vmatprep.mubr.f32.mxu0 0.0
        %1055 = vmatmul.mubr.f32.gmra.mxu0 %v347
        %v1056 = vpop.f32.mrf.mxu0
        %v1057 = vadd.f32 0.0, %v1056
        %v1058 = vpop.f32.mrf.mxu0
        %1059 = vmatprep.mubr.f32.mxu0 0.0
        %1060 = vmatmul.mubr.f32.gmra.mxu0 %v350
        %v1061 = vpop.f32.mrf.mxu0
        %v1062 = vadd.f32 0.0, %v1061
        %v1063 = vpop.f32.mrf.mxu0
        %1064 = vmatprep.mubr.f32.mxu0 0.0
        %1065 = vmatmul.mubr.f32.gmra.mxu0 %v353
        %v1066 = vpop.f32.mrf.mxu0
        %v1067 = vadd.f32 0.0, %v1066
        %v1068 = vpop.f32.mrf.mxu0
        %1069 = vmatprep.mubr.f32.mxu0 0.0
        %1070 = vmatmul.mubr.f32.gmra.mxu0 %v356
        %v1071 = vpop.f32.mrf.mxu0
        %v1072 = vadd.f32 0.0, %v1071
        %v1073 = vpop.f32.mrf.mxu0
        %1074 = vmatprep.mubr.f32.mxu0 0.0
        %1075 = vmatmul.mubr.f32.gmra.mxu0 %v359
        %v1076 = vpop.f32.mrf.mxu0
        %v1077 = vadd.f32 0.0, %v1076
        %v1078 = vpop.f32.mrf.mxu0
        %1079 = vmatprep.mubr.f32.mxu0 0.0
        %1080 = vmatmul.mubr.f32.gmra.mxu0 %v362
        %v1081 = vpop.f32.mrf.mxu0
        %v1082 = vadd.f32 0.0, %v1081
        %v1083 = vpop.f32.mrf.mxu0
        %1084 = vmatprep.mubr.f32.mxu0 0.0
        %1085 = vmatmul.mubr.f32.gmra.mxu0 %v365
        %v1086 = vpop.f32.mrf.mxu0
        %v1087 = vadd.f32 0.0, %v1086
        %v1088 = vpop.f32.mrf.mxu0
        %1089 = vmatprep.mubr.f32.mxu0 0.0
        %1090 = vmatmul.mubr.f32.gmra.mxu0 %v368
        %v1091 = vpop.f32.mrf.mxu0
        %v1092 = vadd.f32 0.0, %v1091
        %v1093 = vpop.f32.mrf.mxu0
        %1094 = vdwg.mxu0
        %v1095 = vadd.f32 %v325, %v1057
        %v1096 = vadd.f32 %v326, %v1062
        %v1097 = vadd.f32 %v327, %v1067
        %v1098 = vadd.f32 %v328, %v1072
        %v1099 = vadd.f32 %v329, %v1077
        %v1100 = vadd.f32 %v330, %v1082
        %v1101 = vadd.f32 %v331, %v1087
        %v1102 = vadd.f32 %v332, %v1092
        %v1103 = vmul.f32 %v1095, %v491
        %v1104 = vmul.f32 %v1096, %v491
        %v1105 = vmul.f32 %v1097, %v491
        %v1106 = vmul.f32 %v1098, %v491
        %v1107 = vmul.f32 %v1099, %v491
        %v1108 = vmul.f32 %v1100, %v491
        %v1109 = vmul.f32 %v1101, %v491
        %v1110 = vmul.f32 %v1102, %v491
        %v1111 = vadd.f32 %v1103, %v505
        %v1112 = vadd.f32 %v1104, %v505
        %v1113 = vadd.f32 %v1105, %v505
        %v1114 = vadd.f32 %v1106, %v505
        %v1115 = vadd.f32 %v1107, %v505
        %v1116 = vadd.f32 %v1108, %v505
        %v1117 = vadd.f32 %v1109, %v505
        %v1118 = vadd.f32 %v1110, %v505
        %v1119 = vmax.f32 %v1111, 0.0
        %v1120 = vmax.f32 %v1112, 0.0
        %v1121 = vmax.f32 %v1113, 0.0
        %v1122 = vmax.f32 %v1114, 0.0
        %v1123 = vmax.f32 %v1115, 0.0
        %v1124 = vmax.f32 %v1116, 0.0
        %v1125 = vmax.f32 %v1117, 0.0
        %v1126 = vmax.f32 %v1118, 0.0
        %v1127 = vadd.f32 %v976, %v1119
        %v1128 = vadd.f32 %v977, %v1120
        %v1129 = vadd.f32 %v978, %v1121
        %v1130 = vadd.f32 %v979, %v1122
        %v1131 = vadd.f32 %v980, %v1123
        %v1132 = vadd.f32 %v981, %v1124
        %v1133 = vadd.f32 %v982, %v1125
        %v1134 = vadd.f32 %v983, %v1126
        %s1135 = scalar_lea.vmem %s285, 80 [#allocation2]
        %v1136 = vld [vmem:[%s1135] sm:$0xff]
        %v1137 = vld [vmem:[%s1135 + $0x8] sm:$0x1]
        %v1139 = vsel %vm370, %v1137, 0
        %1141 = vmatprep.subr.mxu0 0.0
        %1142 = vmatpush1.msra.mxu0 0.0
        %1143 = vmatprep.subr.mxu0 0.0
        %1144 = vmatpush1.msra.mxu0 0.0
        %1145 = vmatprep.subr.mxu0 0.0
        %1146 = vmatpush1.msra.mxu0 0.0
        %1147 = vmatprep.subr.mxu0 0.0
        %1148 = vmatpush1.msra.mxu0 0.0
        %1149 = vmatprep.subr.mxu0 0.0
        %1150 = vmatpush1.msra.mxu0 0.0
        %1151 = vmatprep.subr.mxu0 0.0
        %1152 = vmatpush1.msra.mxu0 0.0
        %1153 = vmatprep.subr.mxu0 0.0
        %1154 = vmatpush1.msra.mxu0 0.0
        %1155 = vmatprep.subr.mxu0 0.0
        %1156 = vmatpush1.msra.mxu0 0.0
        %1157 = vmatprep.subr.mxu0 0.0
        %1158 = vmatpush1.msra.mxu0 0.0
        %1159 = vmatprep.subr.mxu0 0.0
        %1160 = vmatpush1.msra.mxu0 0.0
        %1161 = vmatprep.subr.mxu0 0.0
        %1162 = vmatpush1.msra.mxu0 0.0
        %1163 = vmatprep.subr.mxu0 0.0
        %1164 = vmatpush1.msra.mxu0 0.0
        %1165 = vmatprep.subr.mxu0 0.0
        %1166 = vmatpush1.msra.mxu0 0.0
        %1167 = vmatprep.subr.mxu0 0.0
        %1168 = vmatpush1.msra.mxu0 0.0
        %1169 = vmatprep.subr.mxu0 0.0
        %1170 = vmatpush1.msra.mxu0 %v1139
        %1171 = vmatprep.subr.mxu0 0.0
        %1172 = vmatpush1.msra.mxu0 %v1136
        %1173 = vmatprep.subr.mxu0 0.0
        %1174 = vmatpush2.msra.mxu0 0.0
        %1175 = vmatprep.subr.mxu0 0.0
        %1176 = vmatpush2.msra.mxu0 0.0
        %1177 = vmatprep.subr.mxu0 0.0
        %1178 = vmatpush2.msra.mxu0 0.0
        %1179 = vmatprep.subr.mxu0 0.0
        %1180 = vmatpush2.msra.mxu0 0.0
        %1181 = vmatprep.subr.mxu0 0.0
        %1182 = vmatpush2.msra.mxu0 0.0
        %1183 = vmatprep.subr.mxu0 0.0
        %1184 = vmatpush2.msra.mxu0 0.0
        %1185 = vmatprep.subr.mxu0 0.0
        %1186 = vmatpush2.msra.mxu0 0.0
        %1187 = vmatprep.subr.mxu0 0.0
        %1188 = vmatpush2.msra.mxu0 0.0
        %1189 = vmatprep.subr.mxu0 0.0
        %1190 = vmatpush2.msra.mxu0 0.0
        %1191 = vmatprep.subr.mxu0 0.0
        %1192 = vmatpush2.msra.mxu0 0.0
        %1193 = vmatprep.subr.mxu0 0.0
        %1194 = vmatpush2.msra.mxu0 0.0
        %1195 = vmatprep.subr.mxu0 0.0
        %1196 = vmatpush2.msra.mxu0 0.0
        %1197 = vmatprep.subr.mxu0 0.0
        %1198 = vmatpush2.msra.mxu0 0.0
        %1199 = vmatprep.subr.mxu0 0.0
        %1200 = vmatpush2.msra.mxu0 0.0
        %1201 = vmatprep.subr.mxu0 0.0
        %1202 = vmatpush2.msra.mxu0 0.0
        %1203 = vmatprep.subr.mxu0 0.0
        %1204 = vmatpush2.msra.mxu0 0.0
        %1205 = vmatprep.mubr.f32.mxu0 0.0
        %1206 = vmatmul.mubr.f32.gmra.mxu0 %v347
        %v1207 = vpop.f32.mrf.mxu0
        %v1208 = vadd.f32 0.0, %v1207
        %v1209 = vpop.f32.mrf.mxu0
        %1210 = vmatprep.mubr.f32.mxu0 0.0
        %1211 = vmatmul.mubr.f32.gmra.mxu0 %v350
        %v1212 = vpop.f32.mrf.mxu0
        %v1213 = vadd.f32 0.0, %v1212
        %v1214 = vpop.f32.mrf.mxu0
        %1215 = vmatprep.mubr.f32.mxu0 0.0
        %1216 = vmatmul.mubr.f32.gmra.mxu0 %v353
        %v1217 = vpop.f32.mrf.mxu0
        %v1218 = vadd.f32 0.0, %v1217
        %v1219 = vpop.f32.mrf.mxu0
        %1220 = vmatprep.mubr.f32.mxu0 0.0
        %1221 = vmatmul.mubr.f32.gmra.mxu0 %v356
        %v1222 = vpop.f32.mrf.mxu0
        %v1223 = vadd.f32 0.0, %v1222
        %v1224 = vpop.f32.mrf.mxu0
        %1225 = vmatprep.mubr.f32.mxu0 0.0
        %1226 = vmatmul.mubr.f32.gmra.mxu0 %v359
        %v1227 = vpop.f32.mrf.mxu0
        %v1228 = vadd.f32 0.0, %v1227
        %v1229 = vpop.f32.mrf.mxu0
        %1230 = vmatprep.mubr.f32.mxu0 0.0
        %1231 = vmatmul.mubr.f32.gmra.mxu0 %v362
        %v1232 = vpop.f32.mrf.mxu0
        %v1233 = vadd.f32 0.0, %v1232
        %v1234 = vpop.f32.mrf.mxu0
        %1235 = vmatprep.mubr.f32.mxu0 0.0
        %1236 = vmatmul.mubr.f32.gmra.mxu0 %v365
        %v1237 = vpop.f32.mrf.mxu0
        %v1238 = vadd.f32 0.0, %v1237
        %v1239 = vpop.f32.mrf.mxu0
        %1240 = vmatprep.mubr.f32.mxu0 0.0
        %1241 = vmatmul.mubr.f32.gmra.mxu0 %v368
        %v1242 = vpop.f32.mrf.mxu0
        %v1243 = vadd.f32 0.0, %v1242
        %v1244 = vpop.f32.mrf.mxu0
        %1245 = vdwg.mxu0
        %v1246 = vadd.f32 %v325, %v1208
        %v1247 = vadd.f32 %v326, %v1213
        %v1248 = vadd.f32 %v327, %v1218
        %v1249 = vadd.f32 %v328, %v1223
        %v1250 = vadd.f32 %v329, %v1228
        %v1251 = vadd.f32 %v330, %v1233
        %v1252 = vadd.f32 %v331, %v1238
        %v1253 = vadd.f32 %v332, %v1243
        %v1254 = vmul.f32 %v1246, %v491
        %v1255 = vmul.f32 %v1247, %v491
        %v1256 = vmul.f32 %v1248, %v491
        %v1257 = vmul.f32 %v1249, %v491
        %v1258 = vmul.f32 %v1250, %v491
        %v1259 = vmul.f32 %v1251, %v491
        %v1260 = vmul.f32 %v1252, %v491
        %v1261 = vmul.f32 %v1253, %v491
        %v1262 = vadd.f32 %v1254, %v505
        %v1263 = vadd.f32 %v1255, %v505
        %v1264 = vadd.f32 %v1256, %v505
        %v1265 = vadd.f32 %v1257, %v505
        %v1266 = vadd.f32 %v1258, %v505
        %v1267 = vadd.f32 %v1259, %v505
        %v1268 = vadd.f32 %v1260, %v505
        %v1269 = vadd.f32 %v1261, %v505
        %v1270 = vmax.f32 %v1262, 0.0
        %v1271 = vmax.f32 %v1263, 0.0
        %v1272 = vmax.f32 %v1264, 0.0
        %v1273 = vmax.f32 %v1265, 0.0
        %v1274 = vmax.f32 %v1266, 0.0
        %v1275 = vmax.f32 %v1267, 0.0
        %v1276 = vmax.f32 %v1268, 0.0
        %v1277 = vmax.f32 %v1269, 0.0
        %v1278 = vadd.f32 %v1127, %v1270
        %v1279 = vadd.f32 %v1128, %v1271
        %v1280 = vadd.f32 %v1129, %v1272
        %v1281 = vadd.f32 %v1130, %v1273
        %v1282 = vadd.f32 %v1131, %v1274
        %v1283 = vadd.f32 %v1132, %v1275
        %v1284 = vadd.f32 %v1133, %v1276
        %v1285 = vadd.f32 %v1134, %v1277
        %v1286 = vpack.c.bf16 %v1279, %v1278
        %v1287 = vpack.c.bf16 %v1281, %v1280
        %v1288 = vpack.c.bf16 %v1283, %v1282
        %v1289 = vpack.c.bf16 %v1285, %v1284
        %v1294 = vunpack.c.l.b16 %v1286
        %v1295 = vunpack.c.h.b16 %v1286
        %v1296 = vunpack.c.l.b16 %v1287
        %v1297 = vunpack.c.h.b16 %v1287
        %v1298 = vunpack.c.l.b16 %v1288
        %v1299 = vunpack.c.h.b16 %v1288
        %v1300 = vunpack.c.l.b16 %v1289
        %v1301 = vunpack.c.h.b16 %v1289
        %v1302 = vpack.c.b16 %v1294, %v1294
        %v1303 = vpack.c.b16 %v1295, %v1295
        %v1304 = vpack.c.b16 %v1296, %v1296
        %v1305 = vpack.c.b16 %v1297, %v1297
        %v1306 = vpack.c.b16 %v1298, %v1298
        %v1307 = vpack.c.b16 %v1299, %v1299
        %v1308 = vpack.c.b16 %v1300, %v1300
        %v1309 = vpack.c.b16 %v1301, %v1301
        %1318 = vst [vmem:[%s324] sm:$0xf] %v1302
        %1319 = vst [vmem:[%s324 + $0x4] sm:$0xf] %v1303
        %1320 = vst [vmem:[%s324 + $0x8] sm:$0xf] %v1304
        %1321 = vst [vmem:[%s324 + $0xc] sm:$0xf] %v1305
        %1322 = vst [vmem:[%s324 + $0x10] sm:$0xf] %v1306
        %1323 = vst [vmem:[%s324 + $0x14] sm:$0xf] %v1307
        %1324 = vst [vmem:[%s324 + $0x18] sm:$0xf] %v1308
        %1325 = vst [vmem:[%s324 + $0x1c] sm:$0xf] %v1309
        %p1326 = scmp.lt.s32.totalorder %s16, 1
        %s1327 = scalar_select %p1326, %s16, 1
        %s1328 = smul.addr %s1327, 8
        %s1329 = smul.addr %s1328, 4
        %s1330 = scalar_lea.vmem %s5, %s1329
        // Predicated region
        $region79: #{one_model_forward.89} parent=73 // pred_check
          %p1331 = pneg %p149
        $region80: #{one_model_forward.89} parent=73 // pred_check_branch
          %1333 = sbr.rel (%p1331) target = $region82
        $region81: #{one_model_forward.89} parent=73 // pred_region
          _
        $region82: #{one_model_forward.89} parent=73 // pred_fallthru
          _
      $region74: #{one_model_forward.89} parent=5 // pred_fallthru
        _
      %p1334 = scmp.le.s32.totalorder 2, %s11
      // Predicated region
      $region83: #{one_model_forward.89} parent=5 // pred_check
        %p1335 = pneg %p1334
      $region84: #{one_model_forward.89} parent=5 // pred_check_branch
        %1337 = sbr.rel (%p1335) target = $region86
      $region85: #{one_model_forward.89} parent=5 // pred_region
        %s1338 = ssub.s32 %s11, 2
        // Predicated region
        $region87: #{one_model_forward.89} parent=85 // pred_check
          %p1339 = pneg %p155
        $region88: #{one_model_forward.89} parent=85 // pred_check_branch
          %1341 = sbr.rel (%p1339) target = $region90
        $region89: #{one_model_forward.89} parent=85 // pred_region
          %p1342 = scmp.lt.s32.totalorder %s17, 1
          %s1343 = scalar_select %p1342, %s17, 1
          %s1344 = smul.addr %s1343, 8
          %s1345 = smul.addr %s1344, 4
          %s1346 = scalar_lea.vmem %s5, %s1345
        $region90: #{one_model_forward.89} parent=85 // pred_fallthru
          _
      $region86: #{one_model_forward.89} parent=5 // pred_fallthru
        _
    $region6: #{one_model_forward.89} parent=1 // loop_footer
      %s15 = sadd.s32 1, %s11
    $region7: #{one_model_forward.89} parent=1 // loop_footer_branch
      %10 = sbr.rel target = $region3
    $region8: #{one_model_forward.89} parent=1 // loop_exit
      _

</llo_original>
